<compile_context>
chip_gen: v7x
topology: tpu7x:2x2x1
jax: 0.10.0
libtpu: 0.0.40
codegen_flags: <defaults>
</compile_context>

<pallas_src>
import math

import jax
import jax.numpy as jnp
import numpy as np
from jax.experimental import pallas as pl
from jax.experimental.pallas import tpu as pltpu

# -----------------------------------------------------------------------------
# Small deterministic demo configuration
# -----------------------------------------------------------------------------
B = 2                 # batch
HORIZON = 4           # horizon_steps
TRANSITION_DIM = 8    # transition_dim (action dim per step)
OBS_DIM = 8           # obs_dim
COND_STEPS = 1        # cond_steps
DENOISING_STEPS = 20  # denoising_steps
HIDDEN = 32           # MLP hidden width
TEMB = 16             # sinusoidal time-embedding dim
CLIP = 1.0            # denoised_clip_value

D = HORIZON * TRANSITION_DIM
COND_DIM = COND_STEPS * OBS_DIM
NCOEF = 8  # per-step scalar coefficients (host-side table)


# -----------------------------------------------------------------------------
# DDPM schedule (host glue, numpy) — mirrors cosine_beta_schedule + __init__ buffers
# -----------------------------------------------------------------------------
def cosine_beta_schedule(timesteps, s=0.008):
    steps = timesteps + 1
    x = np.linspace(0, steps, steps)
    alphas_cumprod = np.cos(((x / steps) + s) / (1 + s) * np.pi * 0.5) ** 2
    alphas_cumprod = alphas_cumprod / alphas_cumprod[0]
    betas = 1.0 - (alphas_cumprod[1:] / alphas_cumprod[:-1])
    return np.clip(betas, 0.0, 0.999).astype(np.float32)


def build_ddpm_tables(T):
    betas = cosine_beta_schedule(T).astype(np.float64)
    alphas = 1.0 - betas
    alphas_cumprod = np.cumprod(alphas)
    alphas_cumprod_prev = np.concatenate([[1.0], alphas_cumprod[:-1]])
    sqrt_recip_ac = np.sqrt(1.0 / alphas_cumprod)
    sqrt_recipm1_ac = np.sqrt(1.0 / alphas_cumprod - 1.0)
    ddpm_var = betas * (1.0 - alphas_cumprod_prev) / (1.0 - alphas_cumprod)
    ddpm_logvar_clipped = np.log(np.clip(ddpm_var, 1e-20, None))
    mu_coef1 = betas * np.sqrt(alphas_cumprod_prev) / (1.0 - alphas_cumprod)
    mu_coef2 = (1.0 - alphas_cumprod_prev) * np.sqrt(alphas) / (1.0 - alphas_cumprod)

    # Per-step coefficients, arranged in *loop order* (t = T-1, ..., 0)
    coefs = np.zeros((T, NCOEF), dtype=np.float32)
    for i in range(T):
        t = T - 1 - i
        std = math.exp(0.5 * ddpm_logvar_clipped[t])
        coefs[i, 0] = sqrt_recip_ac[t]     # sqrt(1/alpha_bar_t)
        coefs[i, 1] = sqrt_recipm1_ac[t]   # sqrt(1/alpha_bar_t - 1)
        coefs[i, 2] = mu_coef1[t]
        coefs[i, 3] = mu_coef2[t]
        coefs[i, 4] = std
        coefs[i, 5] = 0.0 if t == 0 else 1.0  # noise[t == 0] = 0
    return coefs


def sinusoidal_time_emb(T, dim):
    # time embeddings for t = T-1, ..., 0 (loop order), shape (T, dim)
    half = dim // 2
    freqs = np.exp(-math.log(10000.0) * np.arange(half) / (half - 1))
    out = np.zeros((T, dim), dtype=np.float32)
    for i in range(T):
        t = float(T - 1 - i)
        arg = t * freqs
        out[i, :half] = np.sin(arg)
        out[i, half:] = np.cos(arg)
    return out


# -----------------------------------------------------------------------------
# Pallas kernel: whole denoising chain in a single invocation (grid=())
# -----------------------------------------------------------------------------
def _mish(h):
    # numerically-safe softplus followed by tanh (EUP ops, co-issue with VPU)
    sp = jnp.where(h > 20.0, h, jnp.log1p(jnp.exp(jnp.minimum(h, 20.0))))
    return h * jnp.tanh(sp)


def make_diffusion_kernel(coefs_np):
    """Bake the (fixed) DDPM schedule into the kernel as compile-time scalars."""
    T = int(coefs_np.shape[0])
    c_recip = [float(coefs_np[i, 0]) for i in range(T)]
    c_recipm1 = [float(coefs_np[i, 1]) for i in range(T)]
    mu1 = [float(coefs_np[i, 2]) for i in range(T)]
    mu2 = [float(coefs_np[i, 3]) for i in range(T)]
    # fold std * noise_mask (noise is zeroed at t == 0)
    std_eff = [float(coefs_np[i, 4] * coefs_np[i, 5]) for i in range(T)]

    def diffusion_kernel(temb_ref, x0_ref, cond_ref, noise_ref,
                         w1x_ref, w1c_ref, w1t_ref, b1_ref,
                         w2_ref, b2_ref, w3_ref, b3_ref,
                         chain_ref):
        # ---- step-invariant layer-1 contributions, computed ONCE ------------
        cond_c = (jnp.dot(cond_ref[...], w1c_ref[...],
                          preferred_element_type=jnp.float32) + b1_ref[...])   # (B, H)
        temb_p = jnp.dot(temb_ref[...], w1t_ref[...],
                         preferred_element_type=jnp.float32)                   # (T, H)
        # Hoist the broadcast out of the loop (JAX does not CSE broadcast_in_dim):
        # bias_all[i] == cond @ w1c + b1 + temb[i] @ w1t, shape (T, B, H).
        bias_all = cond_c[None, :, :] + temb_p[:, None, :]

        w1x = w1x_ref[...]
        w2 = w2_ref[...]
        b2 = b2_ref[...]
        w3 = w3_ref[...]
        b3 = b3_ref[...]

        x = x0_ref[...]                                                        # (B, D)

        # ---- fully unrolled denoising loop (T is a small static constant) ---
        # Unrolling is required anyway to bake the per-step schedule scalars;
        # it also gives the LLO scheduler full visibility of the tiny matmul
        # chain so loads/EUP/VPU work co-issues with MXU pushes.
        for i in range(T):
            # network: eps = MLP([x, cond, temb])  (concat folded into matmuls)
            h = jnp.dot(x, w1x, preferred_element_type=jnp.float32) + bias_all[i]
            h = _mish(h)
            h = _mish(jnp.dot(h, w2, preferred_element_type=jnp.float32) + b2)
            eps = jnp.dot(h, w3, preferred_element_type=jnp.float32) + b3

            # p_mean_var (predict_epsilon=True, DDPM branch) + ancestral step
            x_recon = jnp.clip(c_recip[i] * x - c_recipm1[i] * eps, -CLIP, CLIP)
            x = mu1[i] * x_recon + mu2[i] * x
            if std_eff[i] != 0.0:          # last step (t == 0) adds no noise
                x = x + std_eff[i] * noise_ref[i]

            chain_ref[i] = x               # VMEM-resident output, 1 HBM DMA at the end

    return diffusion_kernel


def diffusion_sample(x_init, cond_flat, noise_all, coefs_np, temb_all, params):
    T = int(coefs_np.shape[0])
    kernel = make_diffusion_kernel(coefs_np)

    vmem = lambda: pl.BlockSpec(memory_space=pltpu.MemorySpace.VMEM)
    chain = pl.pallas_call(
        kernel,
        out_shape=jax.ShapeDtypeStruct((T, B, D), jnp.float32),
        in_specs=[vmem() for _ in range(12)],   # everything full-resident in VMEM
        out_specs=vmem(),
        # TODO(synk): for batched deployments, add a leading "parallel" batch grid
        # axis so megacore/v7x's second TensorCore is used; the denoising axis
        # itself is inherently sequential and stays inside the kernel.
    )(temb_all, x_init, cond_flat, noise_all,
      params["w1x"], params["w1c"], params["w1t"], params["b1"],
      params["w2"], params["b2"], params["w3"], params["b3"])
    return chain  # (T, B, D), chain[i] = x after denoising step i


# -----------------------------------------------------------------------------
# Pure-JAX reference (same math) for a correctness check
# -----------------------------------------------------------------------------
def reference_sample(x_init, cond_flat, noise_all, coefs, temb_all, params):
    def step(x, inp):
        coef, temb, noise = inp
        t_b = jnp.broadcast_to(temb[None, :], (B, TEMB))
        h = (x @ params["w1x"] + cond_flat @ params["w1c"]
             + t_b @ params["w1t"] + params["b1"])
        h = _mish(h)
        h = _mish(h @ params["w2"] + params["b2"])
        eps = h @ params["w3"] + params["b3"]
        x_recon = jnp.clip(coef[0] * x - coef[1] * eps, -CLIP, CLIP)
        mu = coef[2] * x_recon + coef[3] * x
        x_new = mu + coef[4] * coef[5] * noise
        return x_new, x_new

    _, chain = jax.lax.scan(step, x_init, (coefs, temb_all, noise_all))
    return chain


# -----------------------------------------------------------------------------
# Main
# -----------------------------------------------------------------------------
if __name__ == "__main__":
    key = jax.random.PRNGKey(0)
    keys = jax.random.split(key, 12)

    # Deterministic synthetic network parameters (epsilon-network over the
    # flattened trajectory + flattened cond + time embedding).
    scale = 0.1
    params = {
        "w1x": scale * jax.random.normal(keys[0], (D, HIDDEN), jnp.float32),
        "w1c": scale * jax.random.normal(keys[1], (COND_DIM, HIDDEN), jnp.float32),
        "w1t": scale * jax.random.normal(keys[2], (TEMB, HIDDEN), jnp.float32),
        "b1": scale * jax.random.normal(keys[3], (1, HIDDEN), jnp.float32),
        "w2": scale * jax.random.normal(keys[4], (HIDDEN, HIDDEN), jnp.float32),
        "b2": scale * jax.random.normal(keys[5], (1, HIDDEN), jnp.float32),
        "w3": scale * jax.random.normal(keys[6], (HIDDEN, D), jnp.float32),
        "b3": scale * jax.random.normal(keys[7], (1, D), jnp.float32),
    }

    # forward() inputs: cond (B, horizon, obs_dim); glue slices :cond_steps and flattens.
    cond = jax.random.normal(keys[8], (B, HORIZON, OBS_DIM), jnp.float32)
    cond_flat = cond[:, :COND_STEPS].reshape(B, -1)                 # (B, COND_DIM)

    # x ~ N(0, I) initial sample, and the per-step noise draws (host-side RNG,
    # matching torch.randn calls in forward()).
    x_init = jax.random.normal(keys[9], (B, D), jnp.float32)        # (B, D)
    noise_all = jax.random.normal(keys[10], (DENOISING_STEPS, B, D), jnp.float32)

    coefs_np = build_ddpm_tables(DENOISING_STEPS)                   # (T, NCOEF) host table
    temb_all = jnp.asarray(sinusoidal_time_emb(DENOISING_STEPS, TEMB))

    chain_k = diffusion_sample(x_init, cond_flat, noise_all, coefs_np, temb_all, params)
    chain_k = jax.block_until_ready(chain_k)

    # Assemble the Sample namedtuple fields exactly like the PyTorch forward.
    trajectories = chain_k[-1].reshape(B, HORIZON, TRANSITION_DIM)
    values = jnp.zeros((B,), jnp.float32)
    chain_full = jnp.concatenate(
        [x_init[:, None], jnp.transpose(chain_k, (1, 0, 2))], axis=1
    ).reshape(B, DENOISING_STEPS + 1, HORIZON, TRANSITION_DIM)

    # Correctness check against pure-JAX reference.
    chain_ref = jax.block_until_ready(
        reference_sample(x_init, cond_flat, noise_all,
                         jnp.asarray(coefs_np), temb_all, params))
    assert chain_k.shape == (DENOISING_STEPS, B, D)
    assert trajectories.shape == (B, HORIZON, TRANSITION_DIM)
    assert chain_full.shape == (B, DENOISING_STEPS + 1, HORIZON, TRANSITION_DIM)
    assert bool(jnp.all(jnp.isfinite(chain_k)))
    np.testing.assert_allclose(np.asarray(chain_k), np.asarray(chain_ref),
                               rtol=2e-2, atol=2e-2)

    print("KERNEL_OK")
</pallas_src>

<mosaic_0001>
module attributes {stable_mosaic.version = 11 : i64} {
  func.func @diffusion_kernel(%arg0: memref<20x16xf32, #tpu.memory_space<vmem>>, %arg1: memref<2x32xf32, #tpu.memory_space<vmem>>, %arg2: memref<2x8xf32, #tpu.memory_space<vmem>>, %arg3: memref<20x2x32xf32, #tpu.memory_space<vmem>>, %arg4: memref<32x32xf32, #tpu.memory_space<vmem>>, %arg5: memref<8x32xf32, #tpu.memory_space<vmem>>, %arg6: memref<16x32xf32, #tpu.memory_space<vmem>>, %arg7: memref<1x32xf32, #tpu.memory_space<vmem>>, %arg8: memref<32x32xf32, #tpu.memory_space<vmem>>, %arg9: memref<1x32xf32, #tpu.memory_space<vmem>>, %arg10: memref<32x32xf32, #tpu.memory_space<vmem>>, %arg11: memref<1x32xf32, #tpu.memory_space<vmem>>, %arg12: memref<20x2x32xf32, #tpu.memory_space<vmem>>) attributes {dimension_semantics = [], scalar_prefetch = 0 : i64, scratch_operands = 0 : i64, tpu.core_type = #tpu.core_type<tc>} {
    %c0 = arith.constant 0 : index
    %c0_0 = arith.constant 0 : index
    %0 = vector.load %arg2[%c0, %c0_0] : memref<2x8xf32, #tpu.memory_space<vmem>>, vector<2x8xf32>
    %c0_1 = arith.constant 0 : index
    %c0_2 = arith.constant 0 : index
    %1 = vector.load %arg5[%c0_1, %c0_2] : memref<8x32xf32, #tpu.memory_space<vmem>>, vector<8x32xf32>
    %cst = arith.constant dense<0.000000e+00> : vector<2x32xf32>
    %2 = tpu.matmul %0, %1, %cst {dimension_numbers = #tpu.dot_dimension_numbers<[1], [0], [0], [1], [0, 0, 1, 1], [], []>} : vector<2x8xf32>, vector<8x32xf32>, vector<2x32xf32> -> vector<2x32xf32>
    %c0_3 = arith.constant 0 : index
    %c0_4 = arith.constant 0 : index
    %3 = vector.load %arg7[%c0_3, %c0_4] : memref<1x32xf32, #tpu.memory_space<vmem>>, vector<1x32xf32>
    %4 = vector.broadcast %3 : vector<1x32xf32> to vector<2x32xf32>
    %5 = arith.addf %2, %4 : vector<2x32xf32>
    %c0_5 = arith.constant 0 : index
    %c0_6 = arith.constant 0 : index
    %6 = vector.load %arg0[%c0_5, %c0_6] : memref<20x16xf32, #tpu.memory_space<vmem>>, vector<20x16xf32>
    %c0_7 = arith.constant 0 : index
    %c0_8 = arith.constant 0 : index
    %7 = vector.load %arg6[%c0_7, %c0_8] : memref<16x32xf32, #tpu.memory_space<vmem>>, vector<16x32xf32>
    %cst_9 = arith.constant dense<0.000000e+00> : vector<20x32xf32>
    %8 = tpu.matmul %6, %7, %cst_9 {dimension_numbers = #tpu.dot_dimension_numbers<[1], [0], [0], [1], [0, 0, 1, 1], [], []>} : vector<20x16xf32>, vector<16x32xf32>, vector<20x32xf32> -> vector<20x32xf32>
    %9 = vector.shape_cast %5 : vector<2x32xf32> to vector<1x2x32xf32>
    %10 = vector.shape_cast %8 : vector<20x32xf32> to vector<20x1x32xf32>
    %11 = vector.broadcast %9 : vector<1x2x32xf32> to vector<20x2x32xf32>
    %12 = vector.broadcast %10 : vector<20x1x32xf32> to vector<20x2x32xf32>
    %13 = arith.addf %11, %12 : vector<20x2x32xf32>
    %c0_10 = arith.constant 0 : index
    %c0_11 = arith.constant 0 : index
    %14 = vector.load %arg4[%c0_10, %c0_11] : memref<32x32xf32, #tpu.memory_space<vmem>>, vector<32x32xf32>
    %c0_12 = arith.constant 0 : index
    %c0_13 = arith.constant 0 : index
    %15 = vector.load %arg8[%c0_12, %c0_13] : memref<32x32xf32, #tpu.memory_space<vmem>>, vector<32x32xf32>
    %c0_14 = arith.constant 0 : index
    %c0_15 = arith.constant 0 : index
    %16 = vector.load %arg9[%c0_14, %c0_15] : memref<1x32xf32, #tpu.memory_space<vmem>>, vector<1x32xf32>
    %c0_16 = arith.constant 0 : index
    %c0_17 = arith.constant 0 : index
    %17 = vector.load %arg10[%c0_16, %c0_17] : memref<32x32xf32, #tpu.memory_space<vmem>>, vector<32x32xf32>
    %c0_18 = arith.constant 0 : index
    %c0_19 = arith.constant 0 : index
    %18 = vector.load %arg11[%c0_18, %c0_19] : memref<1x32xf32, #tpu.memory_space<vmem>>, vector<1x32xf32>
    %c0_20 = arith.constant 0 : index
    %c0_21 = arith.constant 0 : index
    %19 = vector.load %arg1[%c0_20, %c0_21] : memref<2x32xf32, #tpu.memory_space<vmem>>, vector<2x32xf32>
    %cst_22 = arith.constant dense<0.000000e+00> : vector<2x32xf32>
    %20 = tpu.matmul %19, %14, %cst_22 {dimension_numbers = #tpu.dot_dimension_numbers<[1], [0], [0], [1], [0, 0, 1, 1], [], []>} : vector<2x32xf32>, vector<32x32xf32>, vector<2x32xf32> -> vector<2x32xf32>
    %21 = vector.extract_strided_slice %13 {offsets = [0, 0, 0], sizes = [1, 2, 32], strides = [1, 1, 1]} : vector<20x2x32xf32> to vector<1x2x32xf32>
    %22 = vector.shape_cast %21 : vector<1x2x32xf32> to vector<2x32xf32>
    %23 = arith.addf %20, %22 : vector<2x32xf32>
    %cst_23 = arith.constant 2.000000e+01 : f32
    %24 = vector.broadcast %cst_23 : f32 to vector<2x32xf32>
    %25 = arith.cmpf ogt, %23, %24 : vector<2x32xf32>
    %cst_24 = arith.constant 2.000000e+01 : f32
    %26 = vector.broadcast %cst_24 : f32 to vector<2x32xf32>
    %27 = arith.minimumf %23, %26 : vector<2x32xf32>
    %28 = math.exp %27 : vector<2x32xf32>
    %29 = math.log1p %28 : vector<2x32xf32>
    %30 = arith.select %25, %23, %29 : vector<2x32xi1>, vector<2x32xf32>
    %31 = math.tanh %30 : vector<2x32xf32>
    %32 = arith.mulf %23, %31 : vector<2x32xf32>
    %cst_25 = arith.constant dense<0.000000e+00> : vector<2x32xf32>
    %33 = tpu.matmul %32, %15, %cst_25 {dimension_numbers = #tpu.dot_dimension_numbers<[1], [0], [0], [1], [0, 0, 1, 1], [], []>} : vector<2x32xf32>, vector<32x32xf32>, vector<2x32xf32> -> vector<2x32xf32>
    %34 = vector.broadcast %16 : vector<1x32xf32> to vector<2x32xf32>
    %35 = arith.addf %33, %34 : vector<2x32xf32>
    %cst_26 = arith.constant 2.000000e+01 : f32
    %36 = vector.broadcast %cst_26 : f32 to vector<2x32xf32>
    %37 = arith.cmpf ogt, %35, %36 : vector<2x32xf32>
    %cst_27 = arith.constant 2.000000e+01 : f32
    %38 = vector.broadcast %cst_27 : f32 to vector<2x32xf32>
    %39 = arith.minimumf %35, %38 : vector<2x32xf32>
    %40 = math.exp %39 : vector<2x32xf32>
    %41 = math.log1p %40 : vector<2x32xf32>
    %42 = arith.select %37, %35, %41 : vector<2x32xi1>, vector<2x32xf32>
    %43 = math.tanh %42 : vector<2x32xf32>
    %44 = arith.mulf %35, %43 : vector<2x32xf32>
    %cst_28 = arith.constant dense<0.000000e+00> : vector<2x32xf32>
    %45 = tpu.matmul %44, %17, %cst_28 {dimension_numbers = #tpu.dot_dimension_numbers<[1], [0], [0], [1], [0, 0, 1, 1], [], []>} : vector<2x32xf32>, vector<32x32xf32>, vector<2x32xf32> -> vector<2x32xf32>
    %46 = vector.broadcast %18 : vector<1x32xf32> to vector<2x32xf32>
    %47 = arith.addf %45, %46 : vector<2x32xf32>
    %cst_29 = arith.constant 406.236755 : f32
    %48 = vector.broadcast %cst_29 : f32 to vector<2x32xf32>
    %49 = arith.mulf %48, %19 : vector<2x32xf32>
    %cst_30 = arith.constant 406.235535 : f32
    %50 = vector.broadcast %cst_30 : f32 to vector<2x32xf32>
    %51 = arith.mulf %50, %47 : vector<2x32xf32>
    %52 = arith.subf %49, %51 : vector<2x32xf32>
    %cst_31 = arith.constant -1.000000e+00 : f32
    %cst_32 = arith.constant 1.000000e+00 : f32
    %53 = vector.broadcast %cst_31 : f32 to vector<2x32xf32>
    %54 = arith.maximumf %53, %52 : vector<2x32xf32>
    %55 = vector.broadcast %cst_32 : f32 to vector<2x32xf32>
    %56 = arith.minimumf %55, %54 : vector<2x32xf32>
    %cst_33 = arith.constant 0.077766344 : f32
    %57 = vector.broadcast %cst_33 : f32 to vector<2x32xf32>
    %58 = arith.mulf %57, %56 : vector<2x32xf32>
    %cst_34 = arith.constant 0.0314311422 : f32
    %59 = vector.broadcast %cst_34 : f32 to vector<2x32xf32>
    %60 = arith.mulf %59, %19 : vector<2x32xf32>
    %61 = arith.addf %58, %60 : vector<2x32xf32>
    %c0_35 = arith.constant 0 : index
    %c0_36 = arith.constant 0 : index
    %c0_37 = arith.constant 0 : index
    %62 = vector.load %arg3[%c0_35, %c0_36, %c0_37] : memref<20x2x32xf32, #tpu.memory_space<vmem>>, vector<1x2x32xf32>
    %63 = vector.shape_cast %62 : vector<1x2x32xf32> to vector<2x32xf32>
    %cst_38 = arith.constant 0.996469974 : f32
    %64 = vector.broadcast %cst_38 : f32 to vector<2x32xf32>
    %65 = arith.mulf %64, %63 : vector<2x32xf32>
    %66 = arith.addf %61, %65 : vector<2x32xf32>
    %c0_39 = arith.constant 0 : index
    %c0_40 = arith.constant 0 : index
    %c0_41 = arith.constant 0 : index
    %67 = vector.load %arg12[%c0_39, %c0_40, %c0_41] : memref<20x2x32xf32, #tpu.memory_space<vmem>>, vector<1x2x32xf32>
    %68 = vector.shape_cast %67 : vector<1x2x32xf32> to vector<2x32xf32>
    %69 = vector.shape_cast %66 : vector<2x32xf32> to vector<1x2x32xf32>
    tpu.vector_store %arg12[%c0_39, %c0_40, %c0_41], %69 {strides = array<i32>} : memref<20x2x32xf32, #tpu.memory_space<vmem>>, vector<1x2x32xf32>,
    %cst_42 = arith.constant dense<0.000000e+00> : vector<2x32xf32>
    %70 = tpu.matmul %66, %14, %cst_42 {dimension_numbers = #tpu.dot_dimension_numbers<[1], [0], [0], [1], [0, 0, 1, 1], [], []>} : vector<2x32xf32>, vector<32x32xf32>, vector<2x32xf32> -> vector<2x32xf32>
    %71 = vector.extract_strided_slice %13 {offsets = [1, 0, 0], sizes = [1, 2, 32], strides = [1, 1, 1]} : vector<20x2x32xf32> to vector<1x2x32xf32>
    %72 = vector.shape_cast %71 : vector<1x2x32xf32> to vector<2x32xf32>
    %73 = arith.addf %70, %72 : vector<2x32xf32>
    %cst_43 = arith.constant 2.000000e+01 : f32
    %74 = vector.broadcast %cst_43 : f32 to vector<2x32xf32>
    %75 = arith.cmpf ogt, %73, %74 : vector<2x32xf32>
    %cst_44 = arith.constant 2.000000e+01 : f32
    %76 = vector.broadcast %cst_44 : f32 to vector<2x32xf32>
    %77 = arith.minimumf %73, %76 : vector<2x32xf32>
    %78 = math.exp %77 : vector<2x32xf32>
    %79 = math.log1p %78 : vector<2x32xf32>
    %80 = arith.select %75, %73, %79 : vector<2x32xi1>, vector<2x32xf32>
    %81 = math.tanh %80 : vector<2x32xf32>
    %82 = arith.mulf %73, %81 : vector<2x32xf32>
    %cst_45 = arith.constant dense<0.000000e+00> : vector<2x32xf32>
    %83 = tpu.matmul %82, %15, %cst_45 {dimension_numbers = #tpu.dot_dimension_numbers<[1], [0], [0], [1], [0, 0, 1, 1], [], []>} : vector<2x32xf32>, vector<32x32xf32>, vector<2x32xf32> -> vector<2x32xf32>
    %84 = vector.broadcast %16 : vector<1x32xf32> to vector<2x32xf32>
    %85 = arith.addf %83, %84 : vector<2x32xf32>
    %cst_46 = arith.constant 2.000000e+01 : f32
    %86 = vector.broadcast %cst_46 : f32 to vector<2x32xf32>
    %87 = arith.cmpf ogt, %85, %86 : vector<2x32xf32>
    %cst_47 = arith.constant 2.000000e+01 : f32
    %88 = vector.broadcast %cst_47 : f32 to vector<2x32xf32>
    %89 = arith.minimumf %85, %88 : vector<2x32xf32>
    %90 = math.exp %89 : vector<2x32xf32>
    %91 = math.log1p %90 : vector<2x32xf32>
    %92 = arith.select %87, %85, %91 : vector<2x32xi1>, vector<2x32xf32>
    %93 = math.tanh %92 : vector<2x32xf32>
    %94 = arith.mulf %85, %93 : vector<2x32xf32>
    %cst_48 = arith.constant dense<0.000000e+00> : vector<2x32xf32>
    %95 = tpu.matmul %94, %17, %cst_48 {dimension_numbers = #tpu.dot_dimension_numbers<[1], [0], [0], [1], [0, 0, 1, 1], [], []>} : vector<2x32xf32>, vector<32x32xf32>, vector<2x32xf32> -> vector<2x32xf32>
    %96 = vector.broadcast %18 : vector<1x32xf32> to vector<2x32xf32>
    %97 = arith.addf %95, %96 : vector<2x32xf32>
    %cst_49 = arith.constant 12.8462515 : f32
    %98 = vector.broadcast %cst_49 : f32 to vector<2x32xf32>
    %99 = arith.mulf %98, %66 : vector<2x32xf32>
    %cst_50 = arith.constant 12.807271 : f32
    %100 = vector.broadcast %cst_50 : f32 to vector<2x32xf32>
    %101 = arith.mulf %100, %97 : vector<2x32xf32>
    %102 = arith.subf %99, %101 : vector<2x32xf32>
    %cst_51 = arith.constant -1.000000e+00 : f32
    %cst_52 = arith.constant 1.000000e+00 : f32
    %103 = vector.broadcast %cst_51 : f32 to vector<2x32xf32>
    %104 = arith.maximumf %103, %102 : vector<2x32xf32>
    %105 = vector.broadcast %cst_52 : f32 to vector<2x32xf32>
    %106 = arith.minimumf %105, %104 : vector<2x32xf32>
    %cst_53 = arith.constant 0.116883054 : f32
    %107 = vector.broadcast %cst_53 : f32 to vector<2x32xf32>
    %108 = arith.mulf %107, %106 : vector<2x32xf32>
    %cst_54 = arith.constant 4.924230e-01 : f32
    %109 = vector.broadcast %cst_54 : f32 to vector<2x32xf32>
    %110 = arith.mulf %109, %66 : vector<2x32xf32>
    %111 = arith.addf %108, %110 : vector<2x32xf32>
    %c1 = arith.constant 1 : index
    %c0_55 = arith.constant 0 : index
    %c0_56 = arith.constant 0 : index
    %112 = vector.load %arg3[%c1, %c0_55, %c0_56] : memref<20x2x32xf32, #tpu.memory_space<vmem>>, vector<1x2x32xf32>
    %113 = vector.shape_cast %112 : vector<1x2x32xf32> to vector<2x32xf32>
    %cst_57 = arith.constant 0.857261478 : f32
    %114 = vector.broadcast %cst_57 : f32 to vector<2x32xf32>
    %115 = arith.mulf %114, %113 : vector<2x32xf32>
    %116 = arith.addf %111, %115 : vector<2x32xf32>
    %c1_58 = arith.constant 1 : index
    %c0_59 = arith.constant 0 : index
    %c0_60 = arith.constant 0 : index
    %117 = vector.load %arg12[%c1_58, %c0_59, %c0_60] : memref<20x2x32xf32, #tpu.memory_space<vmem>>, vector<1x2x32xf32>
    %118 = vector.shape_cast %117 : vector<1x2x32xf32> to vector<2x32xf32>
    %119 = vector.shape_cast %116 : vector<2x32xf32> to vector<1x2x32xf32>
    tpu.vector_store %arg12[%c1_58, %c0_59, %c0_60], %119 {strides = array<i32>} : memref<20x2x32xf32, #tpu.memory_space<vmem>>, vector<1x2x32xf32>,
    %cst_61 = arith.constant dense<0.000000e+00> : vector<2x32xf32>
    %120 = tpu.matmul %116, %14, %cst_61 {dimension_numbers = #tpu.dot_dimension_numbers<[1], [0], [0], [1], [0, 0, 1, 1], [], []>} : vector<2x32xf32>, vector<32x32xf32>, vector<2x32xf32> -> vector<2x32xf32>
    %121 = vector.extract_strided_slice %13 {offsets = [2, 0, 0], sizes = [1, 2, 32], strides = [1, 1, 1]} : vector<20x2x32xf32> to vector<1x2x32xf32>
    %122 = vector.shape_cast %121 : vector<1x2x32xf32> to vector<2x32xf32>
    %123 = arith.addf %120, %122 : vector<2x32xf32>
    %cst_62 = arith.constant 2.000000e+01 : f32
    %124 = vector.broadcast %cst_62 : f32 to vector<2x32xf32>
    %125 = arith.cmpf ogt, %123, %124 : vector<2x32xf32>
    %cst_63 = arith.constant 2.000000e+01 : f32
    %126 = vector.broadcast %cst_63 : f32 to vector<2x32xf32>
    %127 = arith.minimumf %123, %126 : vector<2x32xf32>
    %128 = math.exp %127 : vector<2x32xf32>
    %129 = math.log1p %128 : vector<2x32xf32>
    %130 = arith.select %125, %123, %129 : vector<2x32xi1>, vector<2x32xf32>
    %131 = math.tanh %130 : vector<2x32xf32>
    %132 = arith.mulf %123, %131 : vector<2x32xf32>
    %cst_64 = arith.constant dense<0.000000e+00> : vector<2x32xf32>
    %133 = tpu.matmul %132, %15, %cst_64 {dimension_numbers = #tpu.dot_dimension_numbers<[1], [0], [0], [1], [0, 0, 1, 1], [], []>} : vector<2x32xf32>, vector<32x32xf32>, vector<2x32xf32> -> vector<2x32xf32>
    %134 = vector.broadcast %16 : vector<1x32xf32> to vector<2x32xf32>
    %135 = arith.addf %133, %134 : vector<2x32xf32>
    %cst_65 = arith.constant 2.000000e+01 : f32
    %136 = vector.broadcast %cst_65 : f32 to vector<2x32xf32>
    %137 = arith.cmpf ogt, %135, %136 : vector<2x32xf32>
    %cst_66 = arith.constant 2.000000e+01 : f32
    %138 = vector.broadcast %cst_66 : f32 to vector<2x32xf32>
    %139 = arith.minimumf %135, %138 : vector<2x32xf32>
    %140 = math.exp %139 : vector<2x32xf32>
    %141 = math.log1p %140 : vector<2x32xf32>
    %142 = arith.select %137, %135, %141 : vector<2x32xi1>, vector<2x32xf32>
    %143 = math.tanh %142 : vector<2x32xf32>
    %144 = arith.mulf %135, %143 : vector<2x32xf32>
    %cst_67 = arith.constant dense<0.000000e+00> : vector<2x32xf32>
    %145 = tpu.matmul %144, %17, %cst_67 {dimension_numbers = #tpu.dot_dimension_numbers<[1], [0], [0], [1], [0, 0, 1, 1], [], []>} : vector<2x32xf32>, vector<32x32xf32>, vector<2x32xf32> -> vector<2x32xf32>
    %146 = vector.broadcast %18 : vector<1x32xf32> to vector<2x32xf32>
    %147 = arith.addf %145, %146 : vector<2x32xf32>
    %cst_68 = arith.constant 6.44267273 : f32
    %148 = vector.broadcast %cst_68 : f32 to vector<2x32xf32>
    %149 = arith.mulf %148, %116 : vector<2x32xf32>
    %cst_69 = arith.constant 6.36459208 : f32
    %150 = vector.broadcast %cst_69 : f32 to vector<2x32xf32>
    %151 = arith.mulf %150, %147 : vector<2x32xf32>
    %152 = arith.subf %149, %151 : vector<2x32xf32>
    %cst_70 = arith.constant -1.000000e+00 : f32
    %cst_71 = arith.constant 1.000000e+00 : f32
    %153 = vector.broadcast %cst_70 : f32 to vector<2x32xf32>
    %154 = arith.maximumf %153, %152 : vector<2x32xf32>
    %155 = vector.broadcast %cst_71 : f32 to vector<2x32xf32>
    %156 = arith.minimumf %155, %154 : vector<2x32xf32>
    %cst_72 = arith.constant 0.130792707 : f32
    %157 = vector.broadcast %cst_72 : f32 to vector<2x32xf32>
    %158 = arith.mulf %157, %156 : vector<2x32xf32>
    %cst_73 = arith.constant 0.649755895 : f32
    %159 = vector.broadcast %cst_73 : f32 to vector<2x32xf32>
    %160 = arith.mulf %159, %116 : vector<2x32xf32>
    %161 = arith.addf %158, %160 : vector<2x32xf32>
    %c2 = arith.constant 2 : index
    %c0_74 = arith.constant 0 : index
    %c0_75 = arith.constant 0 : index
    %162 = vector.load %arg3[%c2, %c0_74, %c0_75] : memref<20x2x32xf32, #tpu.memory_space<vmem>>, vector<1x2x32xf32>
    %163 = vector.shape_cast %162 : vector<1x2x32xf32> to vector<2x32xf32>
    %cst_76 = arith.constant 0.73097819 : f32
    %164 = vector.broadcast %cst_76 : f32 to vector<2x32xf32>
    %165 = arith.mulf %164, %163 : vector<2x32xf32>
    %166 = arith.addf %161, %165 : vector<2x32xf32>
    %c2_77 = arith.constant 2 : index
    %c0_78 = arith.constant 0 : index
    %c0_79 = arith.constant 0 : index
    %167 = vector.load %arg12[%c2_77, %c0_78, %c0_79] : memref<20x2x32xf32, #tpu.memory_space<vmem>>, vector<1x2x32xf32>
    %168 = vector.shape_cast %167 : vector<1x2x32xf32> to vector<2x32xf32>
    %169 = vector.shape_cast %166 : vector<2x32xf32> to vector<1x2x32xf32>
    tpu.vector_store %arg12[%c2_77, %c0_78, %c0_79], %169 {strides = array<i32>} : memref<20x2x32xf32, #tpu.memory_space<vmem>>, vector<1x2x32xf32>,
    %cst_80 = arith.constant dense<0.000000e+00> : vector<2x32xf32>
    %170 = tpu.matmul %166, %14, %cst_80 {dimension_numbers = #tpu.dot_dimension_numbers<[1], [0], [0], [1], [0, 0, 1, 1], [], []>} : vector<2x32xf32>, vector<32x32xf32>, vector<2x32xf32> -> vector<2x32xf32>
    %171 = vector.extract_strided_slice %13 {offsets = [3, 0, 0], sizes = [1, 2, 32], strides = [1, 1, 1]} : vector<20x2x32xf32> to vector<1x2x32xf32>
    %172 = vector.shape_cast %171 : vector<1x2x32xf32> to vector<2x32xf32>
    %173 = arith.addf %170, %172 : vector<2x32xf32>
    %cst_81 = arith.constant 2.000000e+01 : f32
    %174 = vector.broadcast %cst_81 : f32 to vector<2x32xf32>
    %175 = arith.cmpf ogt, %173, %174 : vector<2x32xf32>
    %cst_82 = arith.constant 2.000000e+01 : f32
    %176 = vector.broadcast %cst_82 : f32 to vector<2x32xf32>
    %177 = arith.minimumf %173, %176 : vector<2x32xf32>
    %178 = math.exp %177 : vector<2x32xf32>
    %179 = math.log1p %178 : vector<2x32xf32>
    %180 = arith.select %175, %173, %179 : vector<2x32xi1>, vector<2x32xf32>
    %181 = math.tanh %180 : vector<2x32xf32>
    %182 = arith.mulf %173, %181 : vector<2x32xf32>
    %cst_83 = arith.constant dense<0.000000e+00> : vector<2x32xf32>
    %183 = tpu.matmul %182, %15, %cst_83 {dimension_numbers = #tpu.dot_dimension_numbers<[1], [0], [0], [1], [0, 0, 1, 1], [], []>} : vector<2x32xf32>, vector<32x32xf32>, vector<2x32xf32> -> vector<2x32xf32>
    %184 = vector.broadcast %16 : vector<1x32xf32> to vector<2x32xf32>
    %185 = arith.addf %183, %184 : vector<2x32xf32>
    %cst_84 = arith.constant 2.000000e+01 : f32
    %186 = vector.broadcast %cst_84 : f32 to vector<2x32xf32>
    %187 = arith.cmpf ogt, %185, %186 : vector<2x32xf32>
    %cst_85 = arith.constant 2.000000e+01 : f32
    %188 = vector.broadcast %cst_85 : f32 to vector<2x32xf32>
    %189 = arith.minimumf %185, %188 : vector<2x32xf32>
    %190 = math.exp %189 : vector<2x32xf32>
    %191 = math.log1p %190 : vector<2x32xf32>
    %192 = arith.select %187, %185, %191 : vector<2x32xi1>, vector<2x32xf32>
    %193 = math.tanh %192 : vector<2x32xf32>
    %194 = arith.mulf %185, %193 : vector<2x32xf32>
    %cst_86 = arith.constant dense<0.000000e+00> : vector<2x32xf32>
    %195 = tpu.matmul %194, %17, %cst_86 {dimension_numbers = #tpu.dot_dimension_numbers<[1], [0], [0], [1], [0, 0, 1, 1], [], []>} : vector<2x32xf32>, vector<32x32xf32>, vector<2x32xf32> -> vector<2x32xf32>
    %196 = vector.broadcast %18 : vector<1x32xf32> to vector<2x32xf32>
    %197 = arith.addf %195, %196 : vector<2x32xf32>
    %cst_87 = arith.constant 4.31695747 : f32
    %198 = vector.broadcast %cst_87 : f32 to vector<2x32xf32>
    %199 = arith.mulf %198, %166 : vector<2x32xf32>
    %cst_88 = arith.constant 4.19953823 : f32
    %200 = vector.broadcast %cst_88 : f32 to vector<2x32xf32>
    %201 = arith.mulf %200, %197 : vector<2x32xf32>
    %202 = arith.subf %199, %201 : vector<2x32xf32>
    %cst_89 = arith.constant -1.000000e+00 : f32
    %cst_90 = arith.constant 1.000000e+00 : f32
    %203 = vector.broadcast %cst_89 : f32 to vector<2x32xf32>
    %204 = arith.maximumf %203, %202 : vector<2x32xf32>
    %205 = vector.broadcast %cst_90 : f32 to vector<2x32xf32>
    %206 = arith.minimumf %205, %204 : vector<2x32xf32>
    %cst_91 = arith.constant 0.13916117 : f32
    %207 = vector.broadcast %cst_91 : f32 to vector<2x32xf32>
    %208 = arith.mulf %207, %206 : vector<2x32xf32>
    %cst_92 = arith.constant 0.723122298 : f32
    %209 = vector.broadcast %cst_92 : f32 to vector<2x32xf32>
    %210 = arith.mulf %209, %166 : vector<2x32xf32>
    %211 = arith.addf %208, %210 : vector<2x32xf32>
    %c3 = arith.constant 3 : index
    %c0_93 = arith.constant 0 : index
    %c0_94 = arith.constant 0 : index
    %212 = vector.load %arg3[%c3, %c0_93, %c0_94] : memref<20x2x32xf32, #tpu.memory_space<vmem>>, vector<1x2x32xf32>
    %213 = vector.shape_cast %212 : vector<1x2x32xf32> to vector<2x32xf32>
    %cst_95 = arith.constant 0.641176462 : f32
    %214 = vector.broadcast %cst_95 : f32 to vector<2x32xf32>
    %215 = arith.mulf %214, %213 : vector<2x32xf32>
    %216 = arith.addf %211, %215 : vector<2x32xf32>
    %c3_96 = arith.constant 3 : index
    %c0_97 = arith.constant 0 : index
    %c0_98 = arith.constant 0 : index
    %217 = vector.load %arg12[%c3_96, %c0_97, %c0_98] : memref<20x2x32xf32, #tpu.memory_space<vmem>>, vector<1x2x32xf32>
    %218 = vector.shape_cast %217 : vector<1x2x32xf32> to vector<2x32xf32>
    %219 = vector.shape_cast %216 : vector<2x32xf32> to vector<1x2x32xf32>
    tpu.vector_store %arg12[%c3_96, %c0_97, %c0_98], %219 {strides = array<i32>} : memref<20x2x32xf32, #tpu.memory_space<vmem>>, vector<1x2x32xf32>,
    %cst_99 = arith.constant dense<0.000000e+00> : vector<2x32xf32>
    %220 = tpu.matmul %216, %14, %cst_99 {dimension_numbers = #tpu.dot_dimension_numbers<[1], [0], [0], [1], [0, 0, 1, 1], [], []>} : vector<2x32xf32>, vector<32x32xf32>, vector<2x32xf32> -> vector<2x32xf32>
    %221 = vector.extract_strided_slice %13 {offsets = [4, 0, 0], sizes = [1, 2, 32], strides = [1, 1, 1]} : vector<20x2x32xf32> to vector<1x2x32xf32>
    %222 = vector.shape_cast %221 : vector<1x2x32xf32> to vector<2x32xf32>
    %223 = arith.addf %220, %222 : vector<2x32xf32>
    %cst_100 = arith.constant 2.000000e+01 : f32
    %224 = vector.broadcast %cst_100 : f32 to vector<2x32xf32>
    %225 = arith.cmpf ogt, %223, %224 : vector<2x32xf32>
    %cst_101 = arith.constant 2.000000e+01 : f32
    %226 = vector.broadcast %cst_101 : f32 to vector<2x32xf32>
    %227 = arith.minimumf %223, %226 : vector<2x32xf32>
    %228 = math.exp %227 : vector<2x32xf32>
    %229 = math.log1p %228 : vector<2x32xf32>
    %230 = arith.select %225, %223, %229 : vector<2x32xi1>, vector<2x32xf32>
    %231 = math.tanh %230 : vector<2x32xf32>
    %232 = arith.mulf %223, %231 : vector<2x32xf32>
    %cst_102 = arith.constant dense<0.000000e+00> : vector<2x32xf32>
    %233 = tpu.matmul %232, %15, %cst_102 {dimension_numbers = #tpu.dot_dimension_numbers<[1], [0], [0], [1], [0, 0, 1, 1], [], []>} : vector<2x32xf32>, vector<32x32xf32>, vector<2x32xf32> -> vector<2x32xf32>
    %234 = vector.broadcast %16 : vector<1x32xf32> to vector<2x32xf32>
    %235 = arith.addf %233, %234 : vector<2x32xf32>
    %cst_103 = arith.constant 2.000000e+01 : f32
    %236 = vector.broadcast %cst_103 : f32 to vector<2x32xf32>
    %237 = arith.cmpf ogt, %235, %236 : vector<2x32xf32>
    %cst_104 = arith.constant 2.000000e+01 : f32
    %238 = vector.broadcast %cst_104 : f32 to vector<2x32xf32>
    %239 = arith.minimumf %235, %238 : vector<2x32xf32>
    %240 = math.exp %239 : vector<2x32xf32>
    %241 = math.log1p %240 : vector<2x32xf32>
    %242 = arith.select %237, %235, %241 : vector<2x32xi1>, vector<2x32xf32>
    %243 = math.tanh %242 : vector<2x32xf32>
    %244 = arith.mulf %235, %243 : vector<2x32xf32>
    %cst_105 = arith.constant dense<0.000000e+00> : vector<2x32xf32>
    %245 = tpu.matmul %244, %17, %cst_105 {dimension_numbers = #tpu.dot_dimension_numbers<[1], [0], [0], [1], [0, 0, 1, 1], [], []>} : vector<2x32xf32>, vector<32x32xf32>, vector<2x32xf32> -> vector<2x32xf32>
    %246 = vector.broadcast %18 : vector<1x32xf32> to vector<2x32xf32>
    %247 = arith.addf %245, %246 : vector<2x32xf32>
    %cst_106 = arith.constant 3.26084924 : f32
    %248 = vector.broadcast %cst_106 : f32 to vector<2x32xf32>
    %249 = arith.mulf %248, %216 : vector<2x32xf32>
    %cst_107 = arith.constant 3.10372972 : f32
    %250 = vector.broadcast %cst_107 : f32 to vector<2x32xf32>
    %251 = arith.mulf %250, %247 : vector<2x32xf32>
    %252 = arith.subf %249, %251 : vector<2x32xf32>
    %cst_108 = arith.constant -1.000000e+00 : f32
    %cst_109 = arith.constant 1.000000e+00 : f32
    %253 = vector.broadcast %cst_108 : f32 to vector<2x32xf32>
    %254 = arith.maximumf %253, %252 : vector<2x32xf32>
    %255 = vector.broadcast %cst_109 : f32 to vector<2x32xf32>
    %256 = arith.minimumf %255, %254 : vector<2x32xf32>
    %cst_110 = arith.constant 0.145960495 : f32
    %257 = vector.broadcast %cst_110 : f32 to vector<2x32xf32>
    %258 = arith.mulf %257, %256 : vector<2x32xf32>
    %cst_111 = arith.constant 0.76261872 : f32
    %259 = vector.broadcast %cst_111 : f32 to vector<2x32xf32>
    %260 = arith.mulf %259, %216 : vector<2x32xf32>
    %261 = arith.addf %258, %260 : vector<2x32xf32>
    %c4 = arith.constant 4 : index
    %c0_112 = arith.constant 0 : index
    %c0_113 = arith.constant 0 : index
    %262 = vector.load %arg3[%c4, %c0_112, %c0_113] : memref<20x2x32xf32, #tpu.memory_space<vmem>>, vector<1x2x32xf32>
    %263 = vector.shape_cast %262 : vector<1x2x32xf32> to vector<2x32xf32>
    %cst_114 = arith.constant 0.573442519 : f32
    %264 = vector.broadcast %cst_114 : f32 to vector<2x32xf32>
    %265 = arith.mulf %264, %263 : vector<2x32xf32>
    %266 = arith.addf %261, %265 : vector<2x32xf32>
    %c4_115 = arith.constant 4 : index
    %c0_116 = arith.constant 0 : index
    %c0_117 = arith.constant 0 : index
    %267 = vector.load %arg12[%c4_115, %c0_116, %c0_117] : memref<20x2x32xf32, #tpu.memory_space<vmem>>, vector<1x2x32xf32>
    %268 = vector.shape_cast %267 : vector<1x2x32xf32> to vector<2x32xf32>
    %269 = vector.shape_cast %266 : vector<2x32xf32> to vector<1x2x32xf32>
    tpu.vector_store %arg12[%c4_115, %c0_116, %c0_117], %269 {strides = array<i32>} : memref<20x2x32xf32, #tpu.memory_space<vmem>>, vector<1x2x32xf32>,
    %cst_118 = arith.constant dense<0.000000e+00> : vector<2x32xf32>
    %270 = tpu.matmul %266, %14, %cst_118 {dimension_numbers = #tpu.dot_dimension_numbers<[1], [0], [0], [1], [0, 0, 1, 1], [], []>} : vector<2x32xf32>, vector<32x32xf32>, vector<2x32xf32> -> vector<2x32xf32>
    %271 = vector.extract_strided_slice %13 {offsets = [5, 0, 0], sizes = [1, 2, 32], strides = [1, 1, 1]} : vector<20x2x32xf32> to vector<1x2x32xf32>
    %272 = vector.shape_cast %271 : vector<1x2x32xf32> to vector<2x32xf32>
    %273 = arith.addf %270, %272 : vector<2x32xf32>
    %cst_119 = arith.constant 2.000000e+01 : f32
    %274 = vector.broadcast %cst_119 : f32 to vector<2x32xf32>
    %275 = arith.cmpf ogt, %273, %274 : vector<2x32xf32>
    %cst_120 = arith.constant 2.000000e+01 : f32
    %276 = vector.broadcast %cst_120 : f32 to vector<2x32xf32>
    %277 = arith.minimumf %273, %276 : vector<2x32xf32>
    %278 = math.exp %277 : vector<2x32xf32>
    %279 = math.log1p %278 : vector<2x32xf32>
    %280 = arith.select %275, %273, %279 : vector<2x32xi1>, vector<2x32xf32>
    %281 = math.tanh %280 : vector<2x32xf32>
    %282 = arith.mulf %273, %281 : vector<2x32xf32>
    %cst_121 = arith.constant dense<0.000000e+00> : vector<2x32xf32>
    %283 = tpu.matmul %282, %15, %cst_121 {dimension_numbers = #tpu.dot_dimension_numbers<[1], [0], [0], [1], [0, 0, 1, 1], [], []>} : vector<2x32xf32>, vector<32x32xf32>, vector<2x32xf32> -> vector<2x32xf32>
    %284 = vector.broadcast %16 : vector<1x32xf32> to vector<2x32xf32>
    %285 = arith.addf %283, %284 : vector<2x32xf32>
    %cst_122 = arith.constant 2.000000e+01 : f32
    %286 = vector.broadcast %cst_122 : f32 to vector<2x32xf32>
    %287 = arith.cmpf ogt, %285, %286 : vector<2x32xf32>
    %cst_123 = arith.constant 2.000000e+01 : f32
    %288 = vector.broadcast %cst_123 : f32 to vector<2x32xf32>
    %289 = arith.minimumf %285, %288 : vector<2x32xf32>
    %290 = math.exp %289 : vector<2x32xf32>
    %291 = math.log1p %290 : vector<2x32xf32>
    %292 = arith.select %287, %285, %291 : vector<2x32xi1>, vector<2x32xf32>
    %293 = math.tanh %292 : vector<2x32xf32>
    %294 = arith.mulf %285, %293 : vector<2x32xf32>
    %cst_124 = arith.constant dense<0.000000e+00> : vector<2x32xf32>
    %295 = tpu.matmul %294, %17, %cst_124 {dimension_numbers = #tpu.dot_dimension_numbers<[1], [0], [0], [1], [0, 0, 1, 1], [], []>} : vector<2x32xf32>, vector<32x32xf32>, vector<2x32xf32> -> vector<2x32xf32>
    %296 = vector.broadcast %18 : vector<1x32xf32> to vector<2x32xf32>
    %297 = arith.addf %295, %296 : vector<2x32xf32>
    %cst_125 = arith.constant 2.63274503 : f32
    %298 = vector.broadcast %cst_125 : f32 to vector<2x32xf32>
    %299 = arith.mulf %298, %266 : vector<2x32xf32>
    %cst_126 = arith.constant 2.43543577 : f32
    %300 = vector.broadcast %cst_126 : f32 to vector<2x32xf32>
    %301 = arith.mulf %300, %297 : vector<2x32xf32>
    %302 = arith.subf %299, %301 : vector<2x32xf32>
    %cst_127 = arith.constant -1.000000e+00 : f32
    %cst_128 = arith.constant 1.000000e+00 : f32
    %303 = vector.broadcast %cst_127 : f32 to vector<2x32xf32>
    %304 = arith.maximumf %303, %302 : vector<2x32xf32>
    %305 = vector.broadcast %cst_128 : f32 to vector<2x32xf32>
    %306 = arith.minimumf %305, %304 : vector<2x32xf32>
    %cst_129 = arith.constant 0.152590752 : f32
    %307 = vector.broadcast %cst_129 : f32 to vector<2x32xf32>
    %308 = arith.mulf %307, %306 : vector<2x32xf32>
    %cst_130 = arith.constant 0.784819365 : f32
    %309 = vector.broadcast %cst_130 : f32 to vector<2x32xf32>
    %310 = arith.mulf %309, %266 : vector<2x32xf32>
    %311 = arith.addf %308, %310 : vector<2x32xf32>
    %c5 = arith.constant 5 : index
    %c0_131 = arith.constant 0 : index
    %c0_132 = arith.constant 0 : index
    %312 = vector.load %arg3[%c5, %c0_131, %c0_132] : memref<20x2x32xf32, #tpu.memory_space<vmem>>, vector<1x2x32xf32>
    %313 = vector.shape_cast %312 : vector<1x2x32xf32> to vector<2x32xf32>
    %cst_133 = arith.constant 5.194230e-01 : f32
    %314 = vector.broadcast %cst_133 : f32 to vector<2x32xf32>
    %315 = arith.mulf %314, %313 : vector<2x32xf32>
    %316 = arith.addf %311, %315 : vector<2x32xf32>
    %c5_134 = arith.constant 5 : index
    %c0_135 = arith.constant 0 : index
    %c0_136 = arith.constant 0 : index
    %317 = vector.load %arg12[%c5_134, %c0_135, %c0_136] : memref<20x2x32xf32, #tpu.memory_space<vmem>>, vector<1x2x32xf32>
    %318 = vector.shape_cast %317 : vector<1x2x32xf32> to vector<2x32xf32>
    %319 = vector.shape_cast %316 : vector<2x32xf32> to vector<1x2x32xf32>
    tpu.vector_store %arg12[%c5_134, %c0_135, %c0_136], %319 {strides = array<i32>} : memref<20x2x32xf32, #tpu.memory_space<vmem>>, vector<1x2x32xf32>,
    %cst_137 = arith.constant dense<0.000000e+00> : vector<2x32xf32>
    %320 = tpu.matmul %316, %14, %cst_137 {dimension_numbers = #tpu.dot_dimension_numbers<[1], [0], [0], [1], [0, 0, 1, 1], [], []>} : vector<2x32xf32>, vector<32x32xf32>, vector<2x32xf32> -> vector<2x32xf32>
    %321 = vector.extract_strided_slice %13 {offsets = [6, 0, 0], sizes = [1, 2, 32], strides = [1, 1, 1]} : vector<20x2x32xf32> to vector<1x2x32xf32>
    %322 = vector.shape_cast %321 : vector<1x2x32xf32> to vector<2x32xf32>
    %323 = arith.addf %320, %322 : vector<2x32xf32>
    %cst_138 = arith.constant 2.000000e+01 : f32
    %324 = vector.broadcast %cst_138 : f32 to vector<2x32xf32>
    %325 = arith.cmpf ogt, %323, %324 : vector<2x32xf32>
    %cst_139 = arith.constant 2.000000e+01 : f32
    %326 = vector.broadcast %cst_139 : f32 to vector<2x32xf32>
    %327 = arith.minimumf %323, %326 : vector<2x32xf32>
    %328 = math.exp %327 : vector<2x32xf32>
    %329 = math.log1p %328 : vector<2x32xf32>
    %330 = arith.select %325, %323, %329 : vector<2x32xi1>, vector<2x32xf32>
    %331 = math.tanh %330 : vector<2x32xf32>
    %332 = arith.mulf %323, %331 : vector<2x32xf32>
    %cst_140 = arith.constant dense<0.000000e+00> : vector<2x32xf32>
    %333 = tpu.matmul %332, %15, %cst_140 {dimension_numbers = #tpu.dot_dimension_numbers<[1], [0], [0], [1], [0, 0, 1, 1], [], []>} : vector<2x32xf32>, vector<32x32xf32>, vector<2x32xf32> -> vector<2x32xf32>
    %334 = vector.broadcast %16 : vector<1x32xf32> to vector<2x32xf32>
    %335 = arith.addf %333, %334 : vector<2x32xf32>
    %cst_141 = arith.constant 2.000000e+01 : f32
    %336 = vector.broadcast %cst_141 : f32 to vector<2x32xf32>
    %337 = arith.cmpf ogt, %335, %336 : vector<2x32xf32>
    %cst_142 = arith.constant 2.000000e+01 : f32
    %338 = vector.broadcast %cst_142 : f32 to vector<2x32xf32>
    %339 = arith.minimumf %335, %338 : vector<2x32xf32>
    %340 = math.exp %339 : vector<2x32xf32>
    %341 = math.log1p %340 : vector<2x32xf32>
    %342 = arith.select %337, %335, %341 : vector<2x32xi1>, vector<2x32xf32>
    %343 = math.tanh %342 : vector<2x32xf32>
    %344 = arith.mulf %335, %343 : vector<2x32xf32>
    %cst_143 = arith.constant dense<0.000000e+00> : vector<2x32xf32>
    %345 = tpu.matmul %344, %17, %cst_143 {dimension_numbers = #tpu.dot_dimension_numbers<[1], [0], [0], [1], [0, 0, 1, 1], [], []>} : vector<2x32xf32>, vector<32x32xf32>, vector<2x32xf32> -> vector<2x32xf32>
    %346 = vector.broadcast %18 : vector<1x32xf32> to vector<2x32xf32>
    %347 = arith.addf %345, %346 : vector<2x32xf32>
    %cst_144 = arith.constant 2.218820e+00 : f32
    %348 = vector.broadcast %cst_144 : f32 to vector<2x32xf32>
    %349 = arith.mulf %348, %316 : vector<2x32xf32>
    %cst_145 = arith.constant 1.98069739 : f32
    %350 = vector.broadcast %cst_145 : f32 to vector<2x32xf32>
    %351 = arith.mulf %350, %347 : vector<2x32xf32>
    %352 = arith.subf %349, %351 : vector<2x32xf32>
    %cst_146 = arith.constant -1.000000e+00 : f32
    %cst_147 = arith.constant 1.000000e+00 : f32
    %353 = vector.broadcast %cst_146 : f32 to vector<2x32xf32>
    %354 = arith.maximumf %353, %352 : vector<2x32xf32>
    %355 = vector.broadcast %cst_147 : f32 to vector<2x32xf32>
    %356 = arith.minimumf %355, %354 : vector<2x32xf32>
    %cst_148 = arith.constant 0.159750924 : f32
    %357 = vector.broadcast %cst_148 : f32 to vector<2x32xf32>
    %358 = arith.mulf %357, %356 : vector<2x32xf32>
    %cst_149 = arith.constant 0.796695411 : f32
    %359 = vector.broadcast %cst_149 : f32 to vector<2x32xf32>
    %360 = arith.mulf %359, %316 : vector<2x32xf32>
    %361 = arith.addf %358, %360 : vector<2x32xf32>
    %c6 = arith.constant 6 : index
    %c0_150 = arith.constant 0 : index
    %c0_151 = arith.constant 0 : index
    %362 = vector.load %arg3[%c6, %c0_150, %c0_151] : memref<20x2x32xf32, #tpu.memory_space<vmem>>, vector<1x2x32xf32>
    %363 = vector.shape_cast %362 : vector<1x2x32xf32> to vector<2x32xf32>
    %cst_152 = arith.constant 0.474378437 : f32
    %364 = vector.broadcast %cst_152 : f32 to vector<2x32xf32>
    %365 = arith.mulf %364, %363 : vector<2x32xf32>
    %366 = arith.addf %361, %365 : vector<2x32xf32>
    %c6_153 = arith.constant 6 : index
    %c0_154 = arith.constant 0 : index
    %c0_155 = arith.constant 0 : index
    %367 = vector.load %arg12[%c6_153, %c0_154, %c0_155] : memref<20x2x32xf32, #tpu.memory_space<vmem>>, vector<1x2x32xf32>
    %368 = vector.shape_cast %367 : vector<1x2x32xf32> to vector<2x32xf32>
    %369 = vector.shape_cast %366 : vector<2x32xf32> to vector<1x2x32xf32>
    tpu.vector_store %arg12[%c6_153, %c0_154, %c0_155], %369 {strides = array<i32>} : memref<20x2x32xf32, #tpu.memory_space<vmem>>, vector<1x2x32xf32>,
    %cst_156 = arith.constant dense<0.000000e+00> : vector<2x32xf32>
    %370 = tpu.matmul %366, %14, %cst_156 {dimension_numbers = #tpu.dot_dimension_numbers<[1], [0], [0], [1], [0, 0, 1, 1], [], []>} : vector<2x32xf32>, vector<32x32xf32>, vector<2x32xf32> -> vector<2x32xf32>
    %371 = vector.extract_strided_slice %13 {offsets = [7, 0, 0], sizes = [1, 2, 32], strides = [1, 1, 1]} : vector<20x2x32xf32> to vector<1x2x32xf32>
    %372 = vector.shape_cast %371 : vector<1x2x32xf32> to vector<2x32xf32>
    %373 = arith.addf %370, %372 : vector<2x32xf32>
    %cst_157 = arith.constant 2.000000e+01 : f32
    %374 = vector.broadcast %cst_157 : f32 to vector<2x32xf32>
    %375 = arith.cmpf ogt, %373, %374 : vector<2x32xf32>
    %cst_158 = arith.constant 2.000000e+01 : f32
    %376 = vector.broadcast %cst_158 : f32 to vector<2x32xf32>
    %377 = arith.minimumf %373, %376 : vector<2x32xf32>
    %378 = math.exp %377 : vector<2x32xf32>
    %379 = math.log1p %378 : vector<2x32xf32>
    %380 = arith.select %375, %373, %379 : vector<2x32xi1>, vector<2x32xf32>
    %381 = math.tanh %380 : vector<2x32xf32>
    %382 = arith.mulf %373, %381 : vector<2x32xf32>
    %cst_159 = arith.constant dense<0.000000e+00> : vector<2x32xf32>
    %383 = tpu.matmul %382, %15, %cst_159 {dimension_numbers = #tpu.dot_dimension_numbers<[1], [0], [0], [1], [0, 0, 1, 1], [], []>} : vector<2x32xf32>, vector<32x32xf32>, vector<2x32xf32> -> vector<2x32xf32>
    %384 = vector.broadcast %16 : vector<1x32xf32> to vector<2x32xf32>
    %385 = arith.addf %383, %384 : vector<2x32xf32>
    %cst_160 = arith.constant 2.000000e+01 : f32
    %386 = vector.broadcast %cst_160 : f32 to vector<2x32xf32>
    %387 = arith.cmpf ogt, %385, %386 : vector<2x32xf32>
    %cst_161 = arith.constant 2.000000e+01 : f32
    %388 = vector.broadcast %cst_161 : f32 to vector<2x32xf32>
    %389 = arith.minimumf %385, %388 : vector<2x32xf32>
    %390 = math.exp %389 : vector<2x32xf32>
    %391 = math.log1p %390 : vector<2x32xf32>
    %392 = arith.select %387, %385, %391 : vector<2x32xi1>, vector<2x32xf32>
    %393 = math.tanh %392 : vector<2x32xf32>
    %394 = arith.mulf %385, %393 : vector<2x32xf32>
    %cst_162 = arith.constant dense<0.000000e+00> : vector<2x32xf32>
    %395 = tpu.matmul %394, %17, %cst_162 {dimension_numbers = #tpu.dot_dimension_numbers<[1], [0], [0], [1], [0, 0, 1, 1], [], []>} : vector<2x32xf32>, vector<32x32xf32>, vector<2x32xf32> -> vector<2x32xf32>
    %396 = vector.broadcast %18 : vector<1x32xf32> to vector<2x32xf32>
    %397 = arith.addf %395, %396 : vector<2x32xf32>
    %cst_163 = arith.constant 1.92747462 : f32
    %398 = vector.broadcast %cst_163 : f32 to vector<2x32xf32>
    %399 = arith.mulf %398, %366 : vector<2x32xf32>
    %cst_164 = arith.constant 1.64777374 : f32
    %400 = vector.broadcast %cst_164 : f32 to vector<2x32xf32>
    %401 = arith.mulf %400, %397 : vector<2x32xf32>
    %402 = arith.subf %399, %401 : vector<2x32xf32>
    %cst_165 = arith.constant -1.000000e+00 : f32
    %cst_166 = arith.constant 1.000000e+00 : f32
    %403 = vector.broadcast %cst_165 : f32 to vector<2x32xf32>
    %404 = arith.maximumf %403, %402 : vector<2x32xf32>
    %405 = vector.broadcast %cst_166 : f32 to vector<2x32xf32>
    %406 = arith.minimumf %405, %404 : vector<2x32xf32>
    %cst_167 = arith.constant 0.167916983 : f32
    %407 = vector.broadcast %cst_167 : f32 to vector<2x32xf32>
    %408 = arith.mulf %407, %406 : vector<2x32xf32>
    %cst_168 = arith.constant 0.801582813 : f32
    %409 = vector.broadcast %cst_168 : f32 to vector<2x32xf32>
    %410 = arith.mulf %409, %366 : vector<2x32xf32>
    %411 = arith.addf %408, %410 : vector<2x32xf32>
    %c7 = arith.constant 7 : index
    %c0_169 = arith.constant 0 : index
    %c0_170 = arith.constant 0 : index
    %412 = vector.load %arg3[%c7, %c0_169, %c0_170] : memref<20x2x32xf32, #tpu.memory_space<vmem>>, vector<1x2x32xf32>
    %413 = vector.shape_cast %412 : vector<1x2x32xf32> to vector<2x32xf32>
    %cst_171 = arith.constant 0.435436428 : f32
    %414 = vector.broadcast %cst_171 : f32 to vector<2x32xf32>
    %415 = arith.mulf %414, %413 : vector<2x32xf32>
    %416 = arith.addf %411, %415 : vector<2x32xf32>
    %c7_172 = arith.constant 7 : index
    %c0_173 = arith.constant 0 : index
    %c0_174 = arith.constant 0 : index
    %417 = vector.load %arg12[%c7_172, %c0_173, %c0_174] : memref<20x2x32xf32, #tpu.memory_space<vmem>>, vector<1x2x32xf32>
    %418 = vector.shape_cast %417 : vector<1x2x32xf32> to vector<2x32xf32>
    %419 = vector.shape_cast %416 : vector<2x32xf32> to vector<1x2x32xf32>
    tpu.vector_store %arg12[%c7_172, %c0_173, %c0_174], %419 {strides = array<i32>} : memref<20x2x32xf32, #tpu.memory_space<vmem>>, vector<1x2x32xf32>,
    %cst_175 = arith.constant dense<0.000000e+00> : vector<2x32xf32>
    %420 = tpu.matmul %416, %14, %cst_175 {dimension_numbers = #tpu.dot_dimension_numbers<[1], [0], [0], [1], [0, 0, 1, 1], [], []>} : vector<2x32xf32>, vector<32x32xf32>, vector<2x32xf32> -> vector<2x32xf32>
    %421 = vector.extract_strided_slice %13 {offsets = [8, 0, 0], sizes = [1, 2, 32], strides = [1, 1, 1]} : vector<20x2x32xf32> to vector<1x2x32xf32>
    %422 = vector.shape_cast %421 : vector<1x2x32xf32> to vector<2x32xf32>
    %423 = arith.addf %420, %422 : vector<2x32xf32>
    %cst_176 = arith.constant 2.000000e+01 : f32
    %424 = vector.broadcast %cst_176 : f32 to vector<2x32xf32>
    %425 = arith.cmpf ogt, %423, %424 : vector<2x32xf32>
    %cst_177 = arith.constant 2.000000e+01 : f32
    %426 = vector.broadcast %cst_177 : f32 to vector<2x32xf32>
    %427 = arith.minimumf %423, %426 : vector<2x32xf32>
    %428 = math.exp %427 : vector<2x32xf32>
    %429 = math.log1p %428 : vector<2x32xf32>
    %430 = arith.select %425, %423, %429 : vector<2x32xi1>, vector<2x32xf32>
    %431 = math.tanh %430 : vector<2x32xf32>
    %432 = arith.mulf %423, %431 : vector<2x32xf32>
    %cst_178 = arith.constant dense<0.000000e+00> : vector<2x32xf32>
    %433 = tpu.matmul %432, %15, %cst_178 {dimension_numbers = #tpu.dot_dimension_numbers<[1], [0], [0], [1], [0, 0, 1, 1], [], []>} : vector<2x32xf32>, vector<32x32xf32>, vector<2x32xf32> -> vector<2x32xf32>
    %434 = vector.broadcast %16 : vector<1x32xf32> to vector<2x32xf32>
    %435 = arith.addf %433, %434 : vector<2x32xf32>
    %cst_179 = arith.constant 2.000000e+01 : f32
    %436 = vector.broadcast %cst_179 : f32 to vector<2x32xf32>
    %437 = arith.cmpf ogt, %435, %436 : vector<2x32xf32>
    %cst_180 = arith.constant 2.000000e+01 : f32
    %438 = vector.broadcast %cst_180 : f32 to vector<2x32xf32>
    %439 = arith.minimumf %435, %438 : vector<2x32xf32>
    %440 = math.exp %439 : vector<2x32xf32>
    %441 = math.log1p %440 : vector<2x32xf32>
    %442 = arith.select %437, %435, %441 : vector<2x32xi1>, vector<2x32xf32>
    %443 = math.tanh %442 : vector<2x32xf32>
    %444 = arith.mulf %435, %443 : vector<2x32xf32>
    %cst_181 = arith.constant dense<0.000000e+00> : vector<2x32xf32>
    %445 = tpu.matmul %444, %17, %cst_181 {dimension_numbers = #tpu.dot_dimension_numbers<[1], [0], [0], [1], [0, 0, 1, 1], [], []>} : vector<2x32xf32>, vector<32x32xf32>, vector<2x32xf32> -> vector<2x32xf32>
    %446 = vector.broadcast %18 : vector<1x32xf32> to vector<2x32xf32>
    %447 = arith.addf %445, %446 : vector<2x32xf32>
    %cst_182 = arith.constant 1.71294761 : f32
    %448 = vector.broadcast %cst_182 : f32 to vector<2x32xf32>
    %449 = arith.mulf %448, %416 : vector<2x32xf32>
    %cst_183 = arith.constant 1.39075136 : f32
    %450 = vector.broadcast %cst_183 : f32 to vector<2x32xf32>
    %451 = arith.mulf %450, %447 : vector<2x32xf32>
    %452 = arith.subf %449, %451 : vector<2x32xf32>
    %cst_184 = arith.constant -1.000000e+00 : f32
    %cst_185 = arith.constant 1.000000e+00 : f32
    %453 = vector.broadcast %cst_184 : f32 to vector<2x32xf32>
    %454 = arith.maximumf %453, %452 : vector<2x32xf32>
    %455 = vector.broadcast %cst_185 : f32 to vector<2x32xf32>
    %456 = arith.minimumf %455, %454 : vector<2x32xf32>
    %cst_186 = arith.constant 0.177516237 : f32
    %457 = vector.broadcast %cst_186 : f32 to vector<2x32xf32>
    %458 = arith.mulf %457, %456 : vector<2x32xf32>
    %cst_187 = arith.constant 0.801155686 : f32
    %459 = vector.broadcast %cst_187 : f32 to vector<2x32xf32>
    %460 = arith.mulf %459, %416 : vector<2x32xf32>
    %461 = arith.addf %458, %460 : vector<2x32xf32>
    %c8 = arith.constant 8 : index
    %c0_188 = arith.constant 0 : index
    %c0_189 = arith.constant 0 : index
    %462 = vector.load %arg3[%c8, %c0_188, %c0_189] : memref<20x2x32xf32, #tpu.memory_space<vmem>>, vector<1x2x32xf32>
    %463 = vector.shape_cast %462 : vector<1x2x32xf32> to vector<2x32xf32>
    %cst_190 = arith.constant 0.400732845 : f32
    %464 = vector.broadcast %cst_190 : f32 to vector<2x32xf32>
    %465 = arith.mulf %464, %463 : vector<2x32xf32>
    %466 = arith.addf %461, %465 : vector<2x32xf32>
    %c8_191 = arith.constant 8 : index
    %c0_192 = arith.constant 0 : index
    %c0_193 = arith.constant 0 : index
    %467 = vector.load %arg12[%c8_191, %c0_192, %c0_193] : memref<20x2x32xf32, #tpu.memory_space<vmem>>, vector<1x2x32xf32>
    %468 = vector.shape_cast %467 : vector<1x2x32xf32> to vector<2x32xf32>
    %469 = vector.shape_cast %466 : vector<2x32xf32> to vector<1x2x32xf32>
    tpu.vector_store %arg12[%c8_191, %c0_192, %c0_193], %469 {strides = array<i32>} : memref<20x2x32xf32, #tpu.memory_space<vmem>>, vector<1x2x32xf32>,
    %cst_194 = arith.constant dense<0.000000e+00> : vector<2x32xf32>
    %470 = tpu.matmul %466, %14, %cst_194 {dimension_numbers = #tpu.dot_dimension_numbers<[1], [0], [0], [1], [0, 0, 1, 1], [], []>} : vector<2x32xf32>, vector<32x32xf32>, vector<2x32xf32> -> vector<2x32xf32>
    %471 = vector.extract_strided_slice %13 {offsets = [9, 0, 0], sizes = [1, 2, 32], strides = [1, 1, 1]} : vector<20x2x32xf32> to vector<1x2x32xf32>
    %472 = vector.shape_cast %471 : vector<1x2x32xf32> to vector<2x32xf32>
    %473 = arith.addf %470, %472 : vector<2x32xf32>
    %cst_195 = arith.constant 2.000000e+01 : f32
    %474 = vector.broadcast %cst_195 : f32 to vector<2x32xf32>
    %475 = arith.cmpf ogt, %473, %474 : vector<2x32xf32>
    %cst_196 = arith.constant 2.000000e+01 : f32
    %476 = vector.broadcast %cst_196 : f32 to vector<2x32xf32>
    %477 = arith.minimumf %473, %476 : vector<2x32xf32>
    %478 = math.exp %477 : vector<2x32xf32>
    %479 = math.log1p %478 : vector<2x32xf32>
    %480 = arith.select %475, %473, %479 : vector<2x32xi1>, vector<2x32xf32>
    %481 = math.tanh %480 : vector<2x32xf32>
    %482 = arith.mulf %473, %481 : vector<2x32xf32>
    %cst_197 = arith.constant dense<0.000000e+00> : vector<2x32xf32>
    %483 = tpu.matmul %482, %15, %cst_197 {dimension_numbers = #tpu.dot_dimension_numbers<[1], [0], [0], [1], [0, 0, 1, 1], [], []>} : vector<2x32xf32>, vector<32x32xf32>, vector<2x32xf32> -> vector<2x32xf32>
    %484 = vector.broadcast %16 : vector<1x32xf32> to vector<2x32xf32>
    %485 = arith.addf %483, %484 : vector<2x32xf32>
    %cst_198 = arith.constant 2.000000e+01 : f32
    %486 = vector.broadcast %cst_198 : f32 to vector<2x32xf32>
    %487 = arith.cmpf ogt, %485, %486 : vector<2x32xf32>
    %cst_199 = arith.constant 2.000000e+01 : f32
    %488 = vector.broadcast %cst_199 : f32 to vector<2x32xf32>
    %489 = arith.minimumf %485, %488 : vector<2x32xf32>
    %490 = math.exp %489 : vector<2x32xf32>
    %491 = math.log1p %490 : vector<2x32xf32>
    %492 = arith.select %487, %485, %491 : vector<2x32xi1>, vector<2x32xf32>
    %493 = math.tanh %492 : vector<2x32xf32>
    %494 = arith.mulf %485, %493 : vector<2x32xf32>
    %cst_200 = arith.constant dense<0.000000e+00> : vector<2x32xf32>
    %495 = tpu.matmul %494, %17, %cst_200 {dimension_numbers = #tpu.dot_dimension_numbers<[1], [0], [0], [1], [0, 0, 1, 1], [], []>} : vector<2x32xf32>, vector<32x32xf32>, vector<2x32xf32> -> vector<2x32xf32>
    %496 = vector.broadcast %18 : vector<1x32xf32> to vector<2x32xf32>
    %497 = arith.addf %495, %496 : vector<2x32xf32>
    %cst_201 = arith.constant 1.5498538 : f32
    %498 = vector.broadcast %cst_201 : f32 to vector<2x32xf32>
    %499 = arith.mulf %498, %466 : vector<2x32xf32>
    %cst_202 = arith.constant 1.1840806 : f32
    %500 = vector.broadcast %cst_202 : f32 to vector<2x32xf32>
    %501 = arith.mulf %500, %497 : vector<2x32xf32>
    %502 = arith.subf %499, %501 : vector<2x32xf32>
    %cst_203 = arith.constant -1.000000e+00 : f32
    %cst_204 = arith.constant 1.000000e+00 : f32
    %503 = vector.broadcast %cst_203 : f32 to vector<2x32xf32>
    %504 = arith.maximumf %503, %502 : vector<2x32xf32>
    %505 = vector.broadcast %cst_204 : f32 to vector<2x32xf32>
    %506 = arith.minimumf %505, %504 : vector<2x32xf32>
    %cst_205 = arith.constant 0.189018905 : f32
    %507 = vector.broadcast %cst_205 : f32 to vector<2x32xf32>
    %508 = arith.mulf %507, %506 : vector<2x32xf32>
    %cst_206 = arith.constant 0.796192705 : f32
    %509 = vector.broadcast %cst_206 : f32 to vector<2x32xf32>
    %510 = arith.mulf %509, %466 : vector<2x32xf32>
    %511 = arith.addf %508, %510 : vector<2x32xf32>
    %c9 = arith.constant 9 : index
    %c0_207 = arith.constant 0 : index
    %c0_208 = arith.constant 0 : index
    %512 = vector.load %arg3[%c9, %c0_207, %c0_208] : memref<20x2x32xf32, #tpu.memory_space<vmem>>, vector<1x2x32xf32>
    %513 = vector.shape_cast %512 : vector<1x2x32xf32> to vector<2x32xf32>
    %cst_209 = arith.constant 0.36897558 : f32
    %514 = vector.broadcast %cst_209 : f32 to vector<2x32xf32>
    %515 = arith.mulf %514, %513 : vector<2x32xf32>
    %516 = arith.addf %511, %515 : vector<2x32xf32>
    %c9_210 = arith.constant 9 : index
    %c0_211 = arith.constant 0 : index
    %c0_212 = arith.constant 0 : index
    %517 = vector.load %arg12[%c9_210, %c0_211, %c0_212] : memref<20x2x32xf32, #tpu.memory_space<vmem>>, vector<1x2x32xf32>
    %518 = vector.shape_cast %517 : vector<1x2x32xf32> to vector<2x32xf32>
    %519 = vector.shape_cast %516 : vector<2x32xf32> to vector<1x2x32xf32>
    tpu.vector_store %arg12[%c9_210, %c0_211, %c0_212], %519 {strides = array<i32>} : memref<20x2x32xf32, #tpu.memory_space<vmem>>, vector<1x2x32xf32>,
    %cst_213 = arith.constant dense<0.000000e+00> : vector<2x32xf32>
    %520 = tpu.matmul %516, %14, %cst_213 {dimension_numbers = #tpu.dot_dimension_numbers<[1], [0], [0], [1], [0, 0, 1, 1], [], []>} : vector<2x32xf32>, vector<32x32xf32>, vector<2x32xf32> -> vector<2x32xf32>
    %521 = vector.extract_strided_slice %13 {offsets = [10, 0, 0], sizes = [1, 2, 32], strides = [1, 1, 1]} : vector<20x2x32xf32> to vector<1x2x32xf32>
    %522 = vector.shape_cast %521 : vector<1x2x32xf32> to vector<2x32xf32>
    %523 = arith.addf %520, %522 : vector<2x32xf32>
    %cst_214 = arith.constant 2.000000e+01 : f32
    %524 = vector.broadcast %cst_214 : f32 to vector<2x32xf32>
    %525 = arith.cmpf ogt, %523, %524 : vector<2x32xf32>
    %cst_215 = arith.constant 2.000000e+01 : f32
    %526 = vector.broadcast %cst_215 : f32 to vector<2x32xf32>
    %527 = arith.minimumf %523, %526 : vector<2x32xf32>
    %528 = math.exp %527 : vector<2x32xf32>
    %529 = math.log1p %528 : vector<2x32xf32>
    %530 = arith.select %525, %523, %529 : vector<2x32xi1>, vector<2x32xf32>
    %531 = math.tanh %530 : vector<2x32xf32>
    %532 = arith.mulf %523, %531 : vector<2x32xf32>
    %cst_216 = arith.constant dense<0.000000e+00> : vector<2x32xf32>
    %533 = tpu.matmul %532, %15, %cst_216 {dimension_numbers = #tpu.dot_dimension_numbers<[1], [0], [0], [1], [0, 0, 1, 1], [], []>} : vector<2x32xf32>, vector<32x32xf32>, vector<2x32xf32> -> vector<2x32xf32>
    %534 = vector.broadcast %16 : vector<1x32xf32> to vector<2x32xf32>
    %535 = arith.addf %533, %534 : vector<2x32xf32>
    %cst_217 = arith.constant 2.000000e+01 : f32
    %536 = vector.broadcast %cst_217 : f32 to vector<2x32xf32>
    %537 = arith.cmpf ogt, %535, %536 : vector<2x32xf32>
    %cst_218 = arith.constant 2.000000e+01 : f32
    %538 = vector.broadcast %cst_218 : f32 to vector<2x32xf32>
    %539 = arith.minimumf %535, %538 : vector<2x32xf32>
    %540 = math.exp %539 : vector<2x32xf32>
    %541 = math.log1p %540 : vector<2x32xf32>
    %542 = arith.select %537, %535, %541 : vector<2x32xi1>, vector<2x32xf32>
    %543 = math.tanh %542 : vector<2x32xf32>
    %544 = arith.mulf %535, %543 : vector<2x32xf32>
    %cst_219 = arith.constant dense<0.000000e+00> : vector<2x32xf32>
    %545 = tpu.matmul %544, %17, %cst_219 {dimension_numbers = #tpu.dot_dimension_numbers<[1], [0], [0], [1], [0, 0, 1, 1], [], []>} : vector<2x32xf32>, vector<32x32xf32>, vector<2x32xf32> -> vector<2x32xf32>
    %546 = vector.broadcast %18 : vector<1x32xf32> to vector<2x32xf32>
    %547 = arith.addf %545, %546 : vector<2x32xf32>
    %cst_220 = arith.constant 1.42300129 : f32
    %548 = vector.broadcast %cst_220 : f32 to vector<2x32xf32>
    %549 = arith.mulf %548, %516 : vector<2x32xf32>
    %cst_221 = arith.constant 1.01238954 : f32
    %550 = vector.broadcast %cst_221 : f32 to vector<2x32xf32>
    %551 = arith.mulf %550, %547 : vector<2x32xf32>
    %552 = arith.subf %549, %551 : vector<2x32xf32>
    %cst_222 = arith.constant -1.000000e+00 : f32
    %cst_223 = arith.constant 1.000000e+00 : f32
    %553 = vector.broadcast %cst_222 : f32 to vector<2x32xf32>
    %554 = arith.maximumf %553, %552 : vector<2x32xf32>
    %555 = vector.broadcast %cst_223 : f32 to vector<2x32xf32>
    %556 = arith.minimumf %555, %554 : vector<2x32xf32>
    %cst_224 = arith.constant 0.203012824 : f32
    %557 = vector.broadcast %cst_224 : f32 to vector<2x32xf32>
    %558 = arith.mulf %557, %556 : vector<2x32xf32>
    %cst_225 = arith.constant 0.786892712 : f32
    %559 = vector.broadcast %cst_225 : f32 to vector<2x32xf32>
    %560 = arith.mulf %559, %516 : vector<2x32xf32>
    %561 = arith.addf %558, %560 : vector<2x32xf32>
    %c10 = arith.constant 10 : index
    %c0_226 = arith.constant 0 : index
    %c0_227 = arith.constant 0 : index
    %562 = vector.load %arg3[%c10, %c0_226, %c0_227] : memref<20x2x32xf32, #tpu.memory_space<vmem>>, vector<1x2x32xf32>
    %563 = vector.shape_cast %562 : vector<1x2x32xf32> to vector<2x32xf32>
    %cst_228 = arith.constant 0.339206755 : f32
    %564 = vector.broadcast %cst_228 : f32 to vector<2x32xf32>
    %565 = arith.mulf %564, %563 : vector<2x32xf32>
    %566 = arith.addf %561, %565 : vector<2x32xf32>
    %c10_229 = arith.constant 10 : index
    %c0_230 = arith.constant 0 : index
    %c0_231 = arith.constant 0 : index
    %567 = vector.load %arg12[%c10_229, %c0_230, %c0_231] : memref<20x2x32xf32, #tpu.memory_space<vmem>>, vector<1x2x32xf32>
    %568 = vector.shape_cast %567 : vector<1x2x32xf32> to vector<2x32xf32>
    %569 = vector.shape_cast %566 : vector<2x32xf32> to vector<1x2x32xf32>
    tpu.vector_store %arg12[%c10_229, %c0_230, %c0_231], %569 {strides = array<i32>} : memref<20x2x32xf32, #tpu.memory_space<vmem>>, vector<1x2x32xf32>,
    %cst_232 = arith.constant dense<0.000000e+00> : vector<2x32xf32>
    %570 = tpu.matmul %566, %14, %cst_232 {dimension_numbers = #tpu.dot_dimension_numbers<[1], [0], [0], [1], [0, 0, 1, 1], [], []>} : vector<2x32xf32>, vector<32x32xf32>, vector<2x32xf32> -> vector<2x32xf32>
    %571 = vector.extract_strided_slice %13 {offsets = [11, 0, 0], sizes = [1, 2, 32], strides = [1, 1, 1]} : vector<20x2x32xf32> to vector<1x2x32xf32>
    %572 = vector.shape_cast %571 : vector<1x2x32xf32> to vector<2x32xf32>
    %573 = arith.addf %570, %572 : vector<2x32xf32>
    %cst_233 = arith.constant 2.000000e+01 : f32
    %574 = vector.broadcast %cst_233 : f32 to vector<2x32xf32>
    %575 = arith.cmpf ogt, %573, %574 : vector<2x32xf32>
    %cst_234 = arith.constant 2.000000e+01 : f32
    %576 = vector.broadcast %cst_234 : f32 to vector<2x32xf32>
    %577 = arith.minimumf %573, %576 : vector<2x32xf32>
    %578 = math.exp %577 : vector<2x32xf32>
    %579 = math.log1p %578 : vector<2x32xf32>
    %580 = arith.select %575, %573, %579 : vector<2x32xi1>, vector<2x32xf32>
    %581 = math.tanh %580 : vector<2x32xf32>
    %582 = arith.mulf %573, %581 : vector<2x32xf32>
    %cst_235 = arith.constant dense<0.000000e+00> : vector<2x32xf32>
    %583 = tpu.matmul %582, %15, %cst_235 {dimension_numbers = #tpu.dot_dimension_numbers<[1], [0], [0], [1], [0, 0, 1, 1], [], []>} : vector<2x32xf32>, vector<32x32xf32>, vector<2x32xf32> -> vector<2x32xf32>
    %584 = vector.broadcast %16 : vector<1x32xf32> to vector<2x32xf32>
    %585 = arith.addf %583, %584 : vector<2x32xf32>
    %cst_236 = arith.constant 2.000000e+01 : f32
    %586 = vector.broadcast %cst_236 : f32 to vector<2x32xf32>
    %587 = arith.cmpf ogt, %585, %586 : vector<2x32xf32>
    %cst_237 = arith.constant 2.000000e+01 : f32
    %588 = vector.broadcast %cst_237 : f32 to vector<2x32xf32>
    %589 = arith.minimumf %585, %588 : vector<2x32xf32>
    %590 = math.exp %589 : vector<2x32xf32>
    %591 = math.log1p %590 : vector<2x32xf32>
    %592 = arith.select %587, %585, %591 : vector<2x32xi1>, vector<2x32xf32>
    %593 = math.tanh %592 : vector<2x32xf32>
    %594 = arith.mulf %585, %593 : vector<2x32xf32>
    %cst_238 = arith.constant dense<0.000000e+00> : vector<2x32xf32>
    %595 = tpu.matmul %594, %17, %cst_238 {dimension_numbers = #tpu.dot_dimension_numbers<[1], [0], [0], [1], [0, 0, 1, 1], [], []>} : vector<2x32xf32>, vector<32x32xf32>, vector<2x32xf32> -> vector<2x32xf32>
    %596 = vector.broadcast %18 : vector<1x32xf32> to vector<2x32xf32>
    %597 = arith.addf %595, %596 : vector<2x32xf32>
    %cst_239 = arith.constant 1.32276213 : f32
    %598 = vector.broadcast %cst_239 : f32 to vector<2x32xf32>
    %599 = arith.mulf %598, %566 : vector<2x32xf32>
    %cst_240 = arith.constant 0.865851938 : f32
    %600 = vector.broadcast %cst_240 : f32 to vector<2x32xf32>
    %601 = arith.mulf %600, %597 : vector<2x32xf32>
    %602 = arith.subf %599, %601 : vector<2x32xf32>
    %cst_241 = arith.constant -1.000000e+00 : f32
    %cst_242 = arith.constant 1.000000e+00 : f32
    %603 = vector.broadcast %cst_241 : f32 to vector<2x32xf32>
    %604 = arith.maximumf %603, %602 : vector<2x32xf32>
    %605 = vector.broadcast %cst_242 : f32 to vector<2x32xf32>
    %606 = arith.minimumf %605, %604 : vector<2x32xf32>
    %cst_243 = arith.constant 0.220292747 : f32
    %607 = vector.broadcast %cst_243 : f32 to vector<2x32xf32>
    %608 = arith.mulf %607, %606 : vector<2x32xf32>
    %cst_244 = arith.constant 0.772979259 : f32
    %609 = vector.broadcast %cst_244 : f32 to vector<2x32xf32>
    %610 = arith.mulf %609, %566 : vector<2x32xf32>
    %611 = arith.addf %608, %610 : vector<2x32xf32>
    %c11 = arith.constant 11 : index
    %c0_245 = arith.constant 0 : index
    %c0_246 = arith.constant 0 : index
    %612 = vector.load %arg3[%c11, %c0_245, %c0_246] : memref<20x2x32xf32, #tpu.memory_space<vmem>>, vector<1x2x32xf32>
    %613 = vector.shape_cast %612 : vector<1x2x32xf32> to vector<2x32xf32>
    %cst_247 = arith.constant 0.310661048 : f32
    %614 = vector.broadcast %cst_247 : f32 to vector<2x32xf32>
    %615 = arith.mulf %614, %613 : vector<2x32xf32>
    %616 = arith.addf %611, %615 : vector<2x32xf32>
    %c11_248 = arith.constant 11 : index
    %c0_249 = arith.constant 0 : index
    %c0_250 = arith.constant 0 : index
    %617 = vector.load %arg12[%c11_248, %c0_249, %c0_250] : memref<20x2x32xf32, #tpu.memory_space<vmem>>, vector<1x2x32xf32>
    %618 = vector.shape_cast %617 : vector<1x2x32xf32> to vector<2x32xf32>
    %619 = vector.shape_cast %616 : vector<2x32xf32> to vector<1x2x32xf32>
    tpu.vector_store %arg12[%c11_248, %c0_249, %c0_250], %619 {strides = array<i32>} : memref<20x2x32xf32, #tpu.memory_space<vmem>>, vector<1x2x32xf32>,
    %cst_251 = arith.constant dense<0.000000e+00> : vector<2x32xf32>
    %620 = tpu.matmul %616, %14, %cst_251 {dimension_numbers = #tpu.dot_dimension_numbers<[1], [0], [0], [1], [0, 0, 1, 1], [], []>} : vector<2x32xf32>, vector<32x32xf32>, vector<2x32xf32> -> vector<2x32xf32>
    %621 = vector.extract_strided_slice %13 {offsets = [12, 0, 0], sizes = [1, 2, 32], strides = [1, 1, 1]} : vector<20x2x32xf32> to vector<1x2x32xf32>
    %622 = vector.shape_cast %621 : vector<1x2x32xf32> to vector<2x32xf32>
    %623 = arith.addf %620, %622 : vector<2x32xf32>
    %cst_252 = arith.constant 2.000000e+01 : f32
    %624 = vector.broadcast %cst_252 : f32 to vector<2x32xf32>
    %625 = arith.cmpf ogt, %623, %624 : vector<2x32xf32>
    %cst_253 = arith.constant 2.000000e+01 : f32
    %626 = vector.broadcast %cst_253 : f32 to vector<2x32xf32>
    %627 = arith.minimumf %623, %626 : vector<2x32xf32>
    %628 = math.exp %627 : vector<2x32xf32>
    %629 = math.log1p %628 : vector<2x32xf32>
    %630 = arith.select %625, %623, %629 : vector<2x32xi1>, vector<2x32xf32>
    %631 = math.tanh %630 : vector<2x32xf32>
    %632 = arith.mulf %623, %631 : vector<2x32xf32>
    %cst_254 = arith.constant dense<0.000000e+00> : vector<2x32xf32>
    %633 = tpu.matmul %632, %15, %cst_254 {dimension_numbers = #tpu.dot_dimension_numbers<[1], [0], [0], [1], [0, 0, 1, 1], [], []>} : vector<2x32xf32>, vector<32x32xf32>, vector<2x32xf32> -> vector<2x32xf32>
    %634 = vector.broadcast %16 : vector<1x32xf32> to vector<2x32xf32>
    %635 = arith.addf %633, %634 : vector<2x32xf32>
    %cst_255 = arith.constant 2.000000e+01 : f32
    %636 = vector.broadcast %cst_255 : f32 to vector<2x32xf32>
    %637 = arith.cmpf ogt, %635, %636 : vector<2x32xf32>
    %cst_256 = arith.constant 2.000000e+01 : f32
    %638 = vector.broadcast %cst_256 : f32 to vector<2x32xf32>
    %639 = arith.minimumf %635, %638 : vector<2x32xf32>
    %640 = math.exp %639 : vector<2x32xf32>
    %641 = math.log1p %640 : vector<2x32xf32>
    %642 = arith.select %637, %635, %641 : vector<2x32xi1>, vector<2x32xf32>
    %643 = math.tanh %642 : vector<2x32xf32>
    %644 = arith.mulf %635, %643 : vector<2x32xf32>
    %cst_257 = arith.constant dense<0.000000e+00> : vector<2x32xf32>
    %645 = tpu.matmul %644, %17, %cst_257 {dimension_numbers = #tpu.dot_dimension_numbers<[1], [0], [0], [1], [0, 0, 1, 1], [], []>} : vector<2x32xf32>, vector<32x32xf32>, vector<2x32xf32> -> vector<2x32xf32>
    %646 = vector.broadcast %18 : vector<1x32xf32> to vector<2x32xf32>
    %647 = arith.addf %645, %646 : vector<2x32xf32>
    %cst_258 = arith.constant 1.24276042 : f32
    %648 = vector.broadcast %cst_258 : f32 to vector<2x32xf32>
    %649 = arith.mulf %648, %616 : vector<2x32xf32>
    %cst_259 = arith.constant 0.737870932 : f32
    %650 = vector.broadcast %cst_259 : f32 to vector<2x32xf32>
    %651 = arith.mulf %650, %647 : vector<2x32xf32>
    %652 = arith.subf %649, %651 : vector<2x32xf32>
    %cst_260 = arith.constant -1.000000e+00 : f32
    %cst_261 = arith.constant 1.000000e+00 : f32
    %653 = vector.broadcast %cst_260 : f32 to vector<2x32xf32>
    %654 = arith.maximumf %653, %652 : vector<2x32xf32>
    %655 = vector.broadcast %cst_261 : f32 to vector<2x32xf32>
    %656 = arith.minimumf %655, %654 : vector<2x32xf32>
    %cst_262 = arith.constant 0.241994336 : f32
    %657 = vector.broadcast %cst_262 : f32 to vector<2x32xf32>
    %658 = arith.mulf %657, %656 : vector<2x32xf32>
    %cst_263 = arith.constant 0.753671885 : f32
    %659 = vector.broadcast %cst_263 : f32 to vector<2x32xf32>
    %660 = arith.mulf %659, %616 : vector<2x32xf32>
    %661 = arith.addf %658, %660 : vector<2x32xf32>
    %c12 = arith.constant 12 : index
    %c0_264 = arith.constant 0 : index
    %c0_265 = arith.constant 0 : index
    %662 = vector.load %arg3[%c12, %c0_264, %c0_265] : memref<20x2x32xf32, #tpu.memory_space<vmem>>, vector<1x2x32xf32>
    %663 = vector.shape_cast %662 : vector<1x2x32xf32> to vector<2x32xf32>
    %cst_266 = arith.constant 0.282670468 : f32
    %664 = vector.broadcast %cst_266 : f32 to vector<2x32xf32>
    %665 = arith.mulf %664, %663 : vector<2x32xf32>
    %666 = arith.addf %661, %665 : vector<2x32xf32>
    %c12_267 = arith.constant 12 : index
    %c0_268 = arith.constant 0 : index
    %c0_269 = arith.constant 0 : index
    %667 = vector.load %arg12[%c12_267, %c0_268, %c0_269] : memref<20x2x32xf32, #tpu.memory_space<vmem>>, vector<1x2x32xf32>
    %668 = vector.shape_cast %667 : vector<1x2x32xf32> to vector<2x32xf32>
    %669 = vector.shape_cast %666 : vector<2x32xf32> to vector<1x2x32xf32>
    tpu.vector_store %arg12[%c12_267, %c0_268, %c0_269], %669 {strides = array<i32>} : memref<20x2x32xf32, #tpu.memory_space<vmem>>, vector<1x2x32xf32>,
    %cst_270 = arith.constant dense<0.000000e+00> : vector<2x32xf32>
    %670 = tpu.matmul %666, %14, %cst_270 {dimension_numbers = #tpu.dot_dimension_numbers<[1], [0], [0], [1], [0, 0, 1, 1], [], []>} : vector<2x32xf32>, vector<32x32xf32>, vector<2x32xf32> -> vector<2x32xf32>
    %671 = vector.extract_strided_slice %13 {offsets = [13, 0, 0], sizes = [1, 2, 32], strides = [1, 1, 1]} : vector<20x2x32xf32> to vector<1x2x32xf32>
    %672 = vector.shape_cast %671 : vector<1x2x32xf32> to vector<2x32xf32>
    %673 = arith.addf %670, %672 : vector<2x32xf32>
    %cst_271 = arith.constant 2.000000e+01 : f32
    %674 = vector.broadcast %cst_271 : f32 to vector<2x32xf32>
    %675 = arith.cmpf ogt, %673, %674 : vector<2x32xf32>
    %cst_272 = arith.constant 2.000000e+01 : f32
    %676 = vector.broadcast %cst_272 : f32 to vector<2x32xf32>
    %677 = arith.minimumf %673, %676 : vector<2x32xf32>
    %678 = math.exp %677 : vector<2x32xf32>
    %679 = math.log1p %678 : vector<2x32xf32>
    %680 = arith.select %675, %673, %679 : vector<2x32xi1>, vector<2x32xf32>
    %681 = math.tanh %680 : vector<2x32xf32>
    %682 = arith.mulf %673, %681 : vector<2x32xf32>
    %cst_273 = arith.constant dense<0.000000e+00> : vector<2x32xf32>
    %683 = tpu.matmul %682, %15, %cst_273 {dimension_numbers = #tpu.dot_dimension_numbers<[1], [0], [0], [1], [0, 0, 1, 1], [], []>} : vector<2x32xf32>, vector<32x32xf32>, vector<2x32xf32> -> vector<2x32xf32>
    %684 = vector.broadcast %16 : vector<1x32xf32> to vector<2x32xf32>
    %685 = arith.addf %683, %684 : vector<2x32xf32>
    %cst_274 = arith.constant 2.000000e+01 : f32
    %686 = vector.broadcast %cst_274 : f32 to vector<2x32xf32>
    %687 = arith.cmpf ogt, %685, %686 : vector<2x32xf32>
    %cst_275 = arith.constant 2.000000e+01 : f32
    %688 = vector.broadcast %cst_275 : f32 to vector<2x32xf32>
    %689 = arith.minimumf %685, %688 : vector<2x32xf32>
    %690 = math.exp %689 : vector<2x32xf32>
    %691 = math.log1p %690 : vector<2x32xf32>
    %692 = arith.select %687, %685, %691 : vector<2x32xi1>, vector<2x32xf32>
    %693 = math.tanh %692 : vector<2x32xf32>
    %694 = arith.mulf %685, %693 : vector<2x32xf32>
    %cst_276 = arith.constant dense<0.000000e+00> : vector<2x32xf32>
    %695 = tpu.matmul %694, %17, %cst_276 {dimension_numbers = #tpu.dot_dimension_numbers<[1], [0], [0], [1], [0, 0, 1, 1], [], []>} : vector<2x32xf32>, vector<32x32xf32>, vector<2x32xf32> -> vector<2x32xf32>
    %696 = vector.broadcast %18 : vector<1x32xf32> to vector<2x32xf32>
    %697 = arith.addf %695, %696 : vector<2x32xf32>
    %cst_277 = arith.constant 1.17862797 : f32
    %698 = vector.broadcast %cst_277 : f32 to vector<2x32xf32>
    %699 = arith.mulf %698, %666 : vector<2x32xf32>
    %cst_278 = arith.constant 0.623829901 : f32
    %700 = vector.broadcast %cst_278 : f32 to vector<2x32xf32>
    %701 = arith.mulf %700, %697 : vector<2x32xf32>
    %702 = arith.subf %699, %701 : vector<2x32xf32>
    %cst_279 = arith.constant -1.000000e+00 : f32
    %cst_280 = arith.constant 1.000000e+00 : f32
    %703 = vector.broadcast %cst_279 : f32 to vector<2x32xf32>
    %704 = arith.maximumf %703, %702 : vector<2x32xf32>
    %705 = vector.broadcast %cst_280 : f32 to vector<2x32xf32>
    %706 = arith.minimumf %705, %704 : vector<2x32xf32>
    %cst_281 = arith.constant 0.269821465 : f32
    %707 = vector.broadcast %cst_281 : f32 to vector<2x32xf32>
    %708 = arith.mulf %707, %706 : vector<2x32xf32>
    %cst_282 = arith.constant 0.727517843 : f32
    %709 = vector.broadcast %cst_282 : f32 to vector<2x32xf32>
    %710 = arith.mulf %709, %666 : vector<2x32xf32>
    %711 = arith.addf %708, %710 : vector<2x32xf32>
    %c13 = arith.constant 13 : index
    %c0_283 = arith.constant 0 : index
    %c0_284 = arith.constant 0 : index
    %712 = vector.load %arg3[%c13, %c0_283, %c0_284] : memref<20x2x32xf32, #tpu.memory_space<vmem>>, vector<1x2x32xf32>
    %713 = vector.shape_cast %712 : vector<1x2x32xf32> to vector<2x32xf32>
    %cst_285 = arith.constant 2.545880e-01 : f32
    %714 = vector.broadcast %cst_285 : f32 to vector<2x32xf32>
    %715 = arith.mulf %714, %713 : vector<2x32xf32>
    %716 = arith.addf %711, %715 : vector<2x32xf32>
    %c13_286 = arith.constant 13 : index
    %c0_287 = arith.constant 0 : index
    %c0_288 = arith.constant 0 : index
    %717 = vector.load %arg12[%c13_286, %c0_287, %c0_288] : memref<20x2x32xf32, #tpu.memory_space<vmem>>, vector<1x2x32xf32>
    %718 = vector.shape_cast %717 : vector<1x2x32xf32> to vector<2x32xf32>
    %719 = vector.shape_cast %716 : vector<2x32xf32> to vector<1x2x32xf32>
    tpu.vector_store %arg12[%c13_286, %c0_287, %c0_288], %719 {strides = array<i32>} : memref<20x2x32xf32, #tpu.memory_space<vmem>>, vector<1x2x32xf32>,
    %cst_289 = arith.constant dense<0.000000e+00> : vector<2x32xf32>
    %720 = tpu.matmul %716, %14, %cst_289 {dimension_numbers = #tpu.dot_dimension_numbers<[1], [0], [0], [1], [0, 0, 1, 1], [], []>} : vector<2x32xf32>, vector<32x32xf32>, vector<2x32xf32> -> vector<2x32xf32>
    %721 = vector.extract_strided_slice %13 {offsets = [14, 0, 0], sizes = [1, 2, 32], strides = [1, 1, 1]} : vector<20x2x32xf32> to vector<1x2x32xf32>
    %722 = vector.shape_cast %721 : vector<1x2x32xf32> to vector<2x32xf32>
    %723 = arith.addf %720, %722 : vector<2x32xf32>
    %cst_290 = arith.constant 2.000000e+01 : f32
    %724 = vector.broadcast %cst_290 : f32 to vector<2x32xf32>
    %725 = arith.cmpf ogt, %723, %724 : vector<2x32xf32>
    %cst_291 = arith.constant 2.000000e+01 : f32
    %726 = vector.broadcast %cst_291 : f32 to vector<2x32xf32>
    %727 = arith.minimumf %723, %726 : vector<2x32xf32>
    %728 = math.exp %727 : vector<2x32xf32>
    %729 = math.log1p %728 : vector<2x32xf32>
    %730 = arith.select %725, %723, %729 : vector<2x32xi1>, vector<2x32xf32>
    %731 = math.tanh %730 : vector<2x32xf32>
    %732 = arith.mulf %723, %731 : vector<2x32xf32>
    %cst_292 = arith.constant dense<0.000000e+00> : vector<2x32xf32>
    %733 = tpu.matmul %732, %15, %cst_292 {dimension_numbers = #tpu.dot_dimension_numbers<[1], [0], [0], [1], [0, 0, 1, 1], [], []>} : vector<2x32xf32>, vector<32x32xf32>, vector<2x32xf32> -> vector<2x32xf32>
    %734 = vector.broadcast %16 : vector<1x32xf32> to vector<2x32xf32>
    %735 = arith.addf %733, %734 : vector<2x32xf32>
    %cst_293 = arith.constant 2.000000e+01 : f32
    %736 = vector.broadcast %cst_293 : f32 to vector<2x32xf32>
    %737 = arith.cmpf ogt, %735, %736 : vector<2x32xf32>
    %cst_294 = arith.constant 2.000000e+01 : f32
    %738 = vector.broadcast %cst_294 : f32 to vector<2x32xf32>
    %739 = arith.minimumf %735, %738 : vector<2x32xf32>
    %740 = math.exp %739 : vector<2x32xf32>
    %741 = math.log1p %740 : vector<2x32xf32>
    %742 = arith.select %737, %735, %741 : vector<2x32xi1>, vector<2x32xf32>
    %743 = math.tanh %742 : vector<2x32xf32>
    %744 = arith.mulf %735, %743 : vector<2x32xf32>
    %cst_295 = arith.constant dense<0.000000e+00> : vector<2x32xf32>
    %745 = tpu.matmul %744, %17, %cst_295 {dimension_numbers = #tpu.dot_dimension_numbers<[1], [0], [0], [1], [0, 0, 1, 1], [], []>} : vector<2x32xf32>, vector<32x32xf32>, vector<2x32xf32> -> vector<2x32xf32>
    %746 = vector.broadcast %18 : vector<1x32xf32> to vector<2x32xf32>
    %747 = arith.addf %745, %746 : vector<2x32xf32>
    %cst_296 = arith.constant 1.1272943 : f32
    %748 = vector.broadcast %cst_296 : f32 to vector<2x32xf32>
    %749 = arith.mulf %748, %716 : vector<2x32xf32>
    %cst_297 = arith.constant 0.520377278 : f32
    %750 = vector.broadcast %cst_297 : f32 to vector<2x32xf32>
    %751 = arith.mulf %750, %747 : vector<2x32xf32>
    %752 = arith.subf %749, %751 : vector<2x32xf32>
    %cst_298 = arith.constant -1.000000e+00 : f32
    %cst_299 = arith.constant 1.000000e+00 : f32
    %753 = vector.broadcast %cst_298 : f32 to vector<2x32xf32>
    %754 = arith.maximumf %753, %752 : vector<2x32xf32>
    %755 = vector.broadcast %cst_299 : f32 to vector<2x32xf32>
    %756 = arith.minimumf %755, %754 : vector<2x32xf32>
    %cst_300 = arith.constant 0.306464046 : f32
    %757 = vector.broadcast %cst_300 : f32 to vector<2x32xf32>
    %758 = arith.mulf %757, %756 : vector<2x32xf32>
    %cst_301 = arith.constant 0.692010581 : f32
    %759 = vector.broadcast %cst_301 : f32 to vector<2x32xf32>
    %760 = arith.mulf %759, %716 : vector<2x32xf32>
    %761 = arith.addf %758, %760 : vector<2x32xf32>
    %c14 = arith.constant 14 : index
    %c0_302 = arith.constant 0 : index
    %c0_303 = arith.constant 0 : index
    %762 = vector.load %arg3[%c14, %c0_302, %c0_303] : memref<20x2x32xf32, #tpu.memory_space<vmem>>, vector<1x2x32xf32>
    %763 = vector.shape_cast %762 : vector<1x2x32xf32> to vector<2x32xf32>
    %cst_304 = arith.constant 0.225707412 : f32
    %764 = vector.broadcast %cst_304 : f32 to vector<2x32xf32>
    %765 = arith.mulf %764, %763 : vector<2x32xf32>
    %766 = arith.addf %761, %765 : vector<2x32xf32>
    %c14_305 = arith.constant 14 : index
    %c0_306 = arith.constant 0 : index
    %c0_307 = arith.constant 0 : index
    %767 = vector.load %arg12[%c14_305, %c0_306, %c0_307] : memref<20x2x32xf32, #tpu.memory_space<vmem>>, vector<1x2x32xf32>
    %768 = vector.shape_cast %767 : vector<1x2x32xf32> to vector<2x32xf32>
    %769 = vector.shape_cast %766 : vector<2x32xf32> to vector<1x2x32xf32>
    tpu.vector_store %arg12[%c14_305, %c0_306, %c0_307], %769 {strides = array<i32>} : memref<20x2x32xf32, #tpu.memory_space<vmem>>, vector<1x2x32xf32>,
    %cst_308 = arith.constant dense<0.000000e+00> : vector<2x32xf32>
    %770 = tpu.matmul %766, %14, %cst_308 {dimension_numbers = #tpu.dot_dimension_numbers<[1], [0], [0], [1], [0, 0, 1, 1], [], []>} : vector<2x32xf32>, vector<32x32xf32>, vector<2x32xf32> -> vector<2x32xf32>
    %771 = vector.extract_strided_slice %13 {offsets = [15, 0, 0], sizes = [1, 2, 32], strides = [1, 1, 1]} : vector<20x2x32xf32> to vector<1x2x32xf32>
    %772 = vector.shape_cast %771 : vector<1x2x32xf32> to vector<2x32xf32>
    %773 = arith.addf %770, %772 : vector<2x32xf32>
    %cst_309 = arith.constant 2.000000e+01 : f32
    %774 = vector.broadcast %cst_309 : f32 to vector<2x32xf32>
    %775 = arith.cmpf ogt, %773, %774 : vector<2x32xf32>
    %cst_310 = arith.constant 2.000000e+01 : f32
    %776 = vector.broadcast %cst_310 : f32 to vector<2x32xf32>
    %777 = arith.minimumf %773, %776 : vector<2x32xf32>
    %778 = math.exp %777 : vector<2x32xf32>
    %779 = math.log1p %778 : vector<2x32xf32>
    %780 = arith.select %775, %773, %779 : vector<2x32xi1>, vector<2x32xf32>
    %781 = math.tanh %780 : vector<2x32xf32>
    %782 = arith.mulf %773, %781 : vector<2x32xf32>
    %cst_311 = arith.constant dense<0.000000e+00> : vector<2x32xf32>
    %783 = tpu.matmul %782, %15, %cst_311 {dimension_numbers = #tpu.dot_dimension_numbers<[1], [0], [0], [1], [0, 0, 1, 1], [], []>} : vector<2x32xf32>, vector<32x32xf32>, vector<2x32xf32> -> vector<2x32xf32>
    %784 = vector.broadcast %16 : vector<1x32xf32> to vector<2x32xf32>
    %785 = arith.addf %783, %784 : vector<2x32xf32>
    %cst_312 = arith.constant 2.000000e+01 : f32
    %786 = vector.broadcast %cst_312 : f32 to vector<2x32xf32>
    %787 = arith.cmpf ogt, %785, %786 : vector<2x32xf32>
    %cst_313 = arith.constant 2.000000e+01 : f32
    %788 = vector.broadcast %cst_313 : f32 to vector<2x32xf32>
    %789 = arith.minimumf %785, %788 : vector<2x32xf32>
    %790 = math.exp %789 : vector<2x32xf32>
    %791 = math.log1p %790 : vector<2x32xf32>
    %792 = arith.select %787, %785, %791 : vector<2x32xi1>, vector<2x32xf32>
    %793 = math.tanh %792 : vector<2x32xf32>
    %794 = arith.mulf %785, %793 : vector<2x32xf32>
    %cst_314 = arith.constant dense<0.000000e+00> : vector<2x32xf32>
    %795 = tpu.matmul %794, %17, %cst_314 {dimension_numbers = #tpu.dot_dimension_numbers<[1], [0], [0], [1], [0, 0, 1, 1], [], []>} : vector<2x32xf32>, vector<32x32xf32>, vector<2x32xf32> -> vector<2x32xf32>
    %796 = vector.broadcast %18 : vector<1x32xf32> to vector<2x32xf32>
    %797 = arith.addf %795, %796 : vector<2x32xf32>
    %cst_315 = arith.constant 1.08656371 : f32
    %798 = vector.broadcast %cst_315 : f32 to vector<2x32xf32>
    %799 = arith.mulf %798, %766 : vector<2x32xf32>
    %cst_316 = arith.constant 0.424994826 : f32
    %800 = vector.broadcast %cst_316 : f32 to vector<2x32xf32>
    %801 = arith.mulf %800, %797 : vector<2x32xf32>
    %802 = arith.subf %799, %801 : vector<2x32xf32>
    %cst_317 = arith.constant -1.000000e+00 : f32
    %cst_318 = arith.constant 1.000000e+00 : f32
    %803 = vector.broadcast %cst_317 : f32 to vector<2x32xf32>
    %804 = arith.maximumf %803, %802 : vector<2x32xf32>
    %805 = vector.broadcast %cst_318 : f32 to vector<2x32xf32>
    %806 = arith.minimumf %805, %804 : vector<2x32xf32>
    %cst_319 = arith.constant 0.356428504 : f32
    %807 = vector.broadcast %cst_319 : f32 to vector<2x32xf32>
    %808 = arith.mulf %807, %806 : vector<2x32xf32>
    %cst_320 = arith.constant 0.642781198 : f32
    %809 = vector.broadcast %cst_320 : f32 to vector<2x32xf32>
    %810 = arith.mulf %809, %766 : vector<2x32xf32>
    %811 = arith.addf %808, %810 : vector<2x32xf32>
    %c15 = arith.constant 15 : index
    %c0_321 = arith.constant 0 : index
    %c0_322 = arith.constant 0 : index
    %812 = vector.load %arg3[%c15, %c0_321, %c0_322] : memref<20x2x32xf32, #tpu.memory_space<vmem>>, vector<1x2x32xf32>
    %813 = vector.shape_cast %812 : vector<1x2x32xf32> to vector<2x32xf32>
    %cst_323 = arith.constant 0.195152372 : f32
    %814 = vector.broadcast %cst_323 : f32 to vector<2x32xf32>
    %815 = arith.mulf %814, %813 : vector<2x32xf32>
    %816 = arith.addf %811, %815 : vector<2x32xf32>
    %c15_324 = arith.constant 15 : index
    %c0_325 = arith.constant 0 : index
    %c0_326 = arith.constant 0 : index
    %817 = vector.load %arg12[%c15_324, %c0_325, %c0_326] : memref<20x2x32xf32, #tpu.memory_space<vmem>>, vector<1x2x32xf32>
    %818 = vector.shape_cast %817 : vector<1x2x32xf32> to vector<2x32xf32>
    %819 = vector.shape_cast %816 : vector<2x32xf32> to vector<1x2x32xf32>
    tpu.vector_store %arg12[%c15_324, %c0_325, %c0_326], %819 {strides = array<i32>} : memref<20x2x32xf32, #tpu.memory_space<vmem>>, vector<1x2x32xf32>,
    %cst_327 = arith.constant dense<0.000000e+00> : vector<2x32xf32>
    %820 = tpu.matmul %816, %14, %cst_327 {dimension_numbers = #tpu.dot_dimension_numbers<[1], [0], [0], [1], [0, 0, 1, 1], [], []>} : vector<2x32xf32>, vector<32x32xf32>, vector<2x32xf32> -> vector<2x32xf32>
    %821 = vector.extract_strided_slice %13 {offsets = [16, 0, 0], sizes = [1, 2, 32], strides = [1, 1, 1]} : vector<20x2x32xf32> to vector<1x2x32xf32>
    %822 = vector.shape_cast %821 : vector<1x2x32xf32> to vector<2x32xf32>
    %823 = arith.addf %820, %822 : vector<2x32xf32>
    %cst_328 = arith.constant 2.000000e+01 : f32
    %824 = vector.broadcast %cst_328 : f32 to vector<2x32xf32>
    %825 = arith.cmpf ogt, %823, %824 : vector<2x32xf32>
    %cst_329 = arith.constant 2.000000e+01 : f32
    %826 = vector.broadcast %cst_329 : f32 to vector<2x32xf32>
    %827 = arith.minimumf %823, %826 : vector<2x32xf32>
    %828 = math.exp %827 : vector<2x32xf32>
    %829 = math.log1p %828 : vector<2x32xf32>
    %830 = arith.select %825, %823, %829 : vector<2x32xi1>, vector<2x32xf32>
    %831 = math.tanh %830 : vector<2x32xf32>
    %832 = arith.mulf %823, %831 : vector<2x32xf32>
    %cst_330 = arith.constant dense<0.000000e+00> : vector<2x32xf32>
    %833 = tpu.matmul %832, %15, %cst_330 {dimension_numbers = #tpu.dot_dimension_numbers<[1], [0], [0], [1], [0, 0, 1, 1], [], []>} : vector<2x32xf32>, vector<32x32xf32>, vector<2x32xf32> -> vector<2x32xf32>
    %834 = vector.broadcast %16 : vector<1x32xf32> to vector<2x32xf32>
    %835 = arith.addf %833, %834 : vector<2x32xf32>
    %cst_331 = arith.constant 2.000000e+01 : f32
    %836 = vector.broadcast %cst_331 : f32 to vector<2x32xf32>
    %837 = arith.cmpf ogt, %835, %836 : vector<2x32xf32>
    %cst_332 = arith.constant 2.000000e+01 : f32
    %838 = vector.broadcast %cst_332 : f32 to vector<2x32xf32>
    %839 = arith.minimumf %835, %838 : vector<2x32xf32>
    %840 = math.exp %839 : vector<2x32xf32>
    %841 = math.log1p %840 : vector<2x32xf32>
    %842 = arith.select %837, %835, %841 : vector<2x32xi1>, vector<2x32xf32>
    %843 = math.tanh %842 : vector<2x32xf32>
    %844 = arith.mulf %835, %843 : vector<2x32xf32>
    %cst_333 = arith.constant dense<0.000000e+00> : vector<2x32xf32>
    %845 = tpu.matmul %844, %17, %cst_333 {dimension_numbers = #tpu.dot_dimension_numbers<[1], [0], [0], [1], [0, 0, 1, 1], [], []>} : vector<2x32xf32>, vector<32x32xf32>, vector<2x32xf32> -> vector<2x32xf32>
    %846 = vector.broadcast %18 : vector<1x32xf32> to vector<2x32xf32>
    %847 = arith.addf %845, %846 : vector<2x32xf32>
    %cst_334 = arith.constant 1.05485117 : f32
    %848 = vector.broadcast %cst_334 : f32 to vector<2x32xf32>
    %849 = arith.mulf %848, %816 : vector<2x32xf32>
    %cst_335 = arith.constant 0.335724652 : f32
    %850 = vector.broadcast %cst_335 : f32 to vector<2x32xf32>
    %851 = arith.mulf %850, %847 : vector<2x32xf32>
    %852 = arith.subf %849, %851 : vector<2x32xf32>
    %cst_336 = arith.constant -1.000000e+00 : f32
    %cst_337 = arith.constant 1.000000e+00 : f32
    %853 = vector.broadcast %cst_336 : f32 to vector<2x32xf32>
    %854 = arith.maximumf %853, %852 : vector<2x32xf32>
    %855 = vector.broadcast %cst_337 : f32 to vector<2x32xf32>
    %856 = arith.minimumf %855, %854 : vector<2x32xf32>
    %cst_338 = arith.constant 0.427831322 : f32
    %857 = vector.broadcast %cst_338 : f32 to vector<2x32xf32>
    %858 = arith.mulf %857, %856 : vector<2x32xf32>
    %cst_339 = arith.constant 0.571819723 : f32
    %859 = vector.broadcast %cst_339 : f32 to vector<2x32xf32>
    %860 = arith.mulf %859, %816 : vector<2x32xf32>
    %861 = arith.addf %858, %860 : vector<2x32xf32>
    %c16 = arith.constant 16 : index
    %c0_340 = arith.constant 0 : index
    %c0_341 = arith.constant 0 : index
    %862 = vector.load %arg3[%c16, %c0_340, %c0_341] : memref<20x2x32xf32, #tpu.memory_space<vmem>>, vector<1x2x32xf32>
    %863 = vector.shape_cast %862 : vector<1x2x32xf32> to vector<2x32xf32>
    %cst_342 = arith.constant 0.161678955 : f32
    %864 = vector.broadcast %cst_342 : f32 to vector<2x32xf32>
    %865 = arith.mulf %864, %863 : vector<2x32xf32>
    %866 = arith.addf %861, %865 : vector<2x32xf32>
    %c16_343 = arith.constant 16 : index
    %c0_344 = arith.constant 0 : index
    %c0_345 = arith.constant 0 : index
    %867 = vector.load %arg12[%c16_343, %c0_344, %c0_345] : memref<20x2x32xf32, #tpu.memory_space<vmem>>, vector<1x2x32xf32>
    %868 = vector.shape_cast %867 : vector<1x2x32xf32> to vector<2x32xf32>
    %869 = vector.shape_cast %866 : vector<2x32xf32> to vector<1x2x32xf32>
    tpu.vector_store %arg12[%c16_343, %c0_344, %c0_345], %869 {strides = array<i32>} : memref<20x2x32xf32, #tpu.memory_space<vmem>>, vector<1x2x32xf32>,
    %cst_346 = arith.constant dense<0.000000e+00> : vector<2x32xf32>
    %870 = tpu.matmul %866, %14, %cst_346 {dimension_numbers = #tpu.dot_dimension_numbers<[1], [0], [0], [1], [0, 0, 1, 1], [], []>} : vector<2x32xf32>, vector<32x32xf32>, vector<2x32xf32> -> vector<2x32xf32>
    %871 = vector.extract_strided_slice %13 {offsets = [17, 0, 0], sizes = [1, 2, 32], strides = [1, 1, 1]} : vector<20x2x32xf32> to vector<1x2x32xf32>
    %872 = vector.shape_cast %871 : vector<1x2x32xf32> to vector<2x32xf32>
    %873 = arith.addf %870, %872 : vector<2x32xf32>
    %cst_347 = arith.constant 2.000000e+01 : f32
    %874 = vector.broadcast %cst_347 : f32 to vector<2x32xf32>
    %875 = arith.cmpf ogt, %873, %874 : vector<2x32xf32>
    %cst_348 = arith.constant 2.000000e+01 : f32
    %876 = vector.broadcast %cst_348 : f32 to vector<2x32xf32>
    %877 = arith.minimumf %873, %876 : vector<2x32xf32>
    %878 = math.exp %877 : vector<2x32xf32>
    %879 = math.log1p %878 : vector<2x32xf32>
    %880 = arith.select %875, %873, %879 : vector<2x32xi1>, vector<2x32xf32>
    %881 = math.tanh %880 : vector<2x32xf32>
    %882 = arith.mulf %873, %881 : vector<2x32xf32>
    %cst_349 = arith.constant dense<0.000000e+00> : vector<2x32xf32>
    %883 = tpu.matmul %882, %15, %cst_349 {dimension_numbers = #tpu.dot_dimension_numbers<[1], [0], [0], [1], [0, 0, 1, 1], [], []>} : vector<2x32xf32>, vector<32x32xf32>, vector<2x32xf32> -> vector<2x32xf32>
    %884 = vector.broadcast %16 : vector<1x32xf32> to vector<2x32xf32>
    %885 = arith.addf %883, %884 : vector<2x32xf32>
    %cst_350 = arith.constant 2.000000e+01 : f32
    %886 = vector.broadcast %cst_350 : f32 to vector<2x32xf32>
    %887 = arith.cmpf ogt, %885, %886 : vector<2x32xf32>
    %cst_351 = arith.constant 2.000000e+01 : f32
    %888 = vector.broadcast %cst_351 : f32 to vector<2x32xf32>
    %889 = arith.minimumf %885, %888 : vector<2x32xf32>
    %890 = math.exp %889 : vector<2x32xf32>
    %891 = math.log1p %890 : vector<2x32xf32>
    %892 = arith.select %887, %885, %891 : vector<2x32xi1>, vector<2x32xf32>
    %893 = math.tanh %892 : vector<2x32xf32>
    %894 = arith.mulf %885, %893 : vector<2x32xf32>
    %cst_352 = arith.constant dense<0.000000e+00> : vector<2x32xf32>
    %895 = tpu.matmul %894, %17, %cst_352 {dimension_numbers = #tpu.dot_dimension_numbers<[1], [0], [0], [1], [0, 0, 1, 1], [], []>} : vector<2x32xf32>, vector<32x32xf32>, vector<2x32xf32> -> vector<2x32xf32>
    %896 = vector.broadcast %18 : vector<1x32xf32> to vector<2x32xf32>
    %897 = arith.addf %895, %896 : vector<2x32xf32>
    %cst_353 = arith.constant 1.03101599 : f32
    %898 = vector.broadcast %cst_353 : f32 to vector<2x32xf32>
    %899 = arith.mulf %898, %866 : vector<2x32xf32>
    %cst_354 = arith.constant 0.250986248 : f32
    %900 = vector.broadcast %cst_354 : f32 to vector<2x32xf32>
    %901 = arith.mulf %900, %897 : vector<2x32xf32>
    %902 = arith.subf %899, %901 : vector<2x32xf32>
    %cst_355 = arith.constant -1.000000e+00 : f32
    %cst_356 = arith.constant 1.000000e+00 : f32
    %903 = vector.broadcast %cst_355 : f32 to vector<2x32xf32>
    %904 = arith.maximumf %903, %902 : vector<2x32xf32>
    %905 = vector.broadcast %cst_356 : f32 to vector<2x32xf32>
    %906 = arith.minimumf %905, %904 : vector<2x32xf32>
    %cst_357 = arith.constant 0.536619544 : f32
    %907 = vector.broadcast %cst_357 : f32 to vector<2x32xf32>
    %908 = arith.mulf %907, %906 : vector<2x32xf32>
    %cst_358 = arith.constant 0.463264465 : f32
    %909 = vector.broadcast %cst_358 : f32 to vector<2x32xf32>
    %910 = arith.mulf %909, %866 : vector<2x32xf32>
    %911 = arith.addf %908, %910 : vector<2x32xf32>
    %c17 = arith.constant 17 : index
    %c0_359 = arith.constant 0 : index
    %c0_360 = arith.constant 0 : index
    %912 = vector.load %arg3[%c17, %c0_359, %c0_360] : memref<20x2x32xf32, #tpu.memory_space<vmem>>, vector<1x2x32xf32>
    %913 = vector.shape_cast %912 : vector<1x2x32xf32> to vector<2x32xf32>
    %cst_361 = arith.constant 0.123243757 : f32
    %914 = vector.broadcast %cst_361 : f32 to vector<2x32xf32>
    %915 = arith.mulf %914, %913 : vector<2x32xf32>
    %916 = arith.addf %911, %915 : vector<2x32xf32>
    %c17_362 = arith.constant 17 : index
    %c0_363 = arith.constant 0 : index
    %c0_364 = arith.constant 0 : index
    %917 = vector.load %arg12[%c17_362, %c0_363, %c0_364] : memref<20x2x32xf32, #tpu.memory_space<vmem>>, vector<1x2x32xf32>
    %918 = vector.shape_cast %917 : vector<1x2x32xf32> to vector<2x32xf32>
    %919 = vector.shape_cast %916 : vector<2x32xf32> to vector<1x2x32xf32>
    tpu.vector_store %arg12[%c17_362, %c0_363, %c0_364], %919 {strides = array<i32>} : memref<20x2x32xf32, #tpu.memory_space<vmem>>, vector<1x2x32xf32>,
    %cst_365 = arith.constant dense<0.000000e+00> : vector<2x32xf32>
    %920 = tpu.matmul %916, %14, %cst_365 {dimension_numbers = #tpu.dot_dimension_numbers<[1], [0], [0], [1], [0, 0, 1, 1], [], []>} : vector<2x32xf32>, vector<32x32xf32>, vector<2x32xf32> -> vector<2x32xf32>
    %921 = vector.extract_strided_slice %13 {offsets = [18, 0, 0], sizes = [1, 2, 32], strides = [1, 1, 1]} : vector<20x2x32xf32> to vector<1x2x32xf32>
    %922 = vector.shape_cast %921 : vector<1x2x32xf32> to vector<2x32xf32>
    %923 = arith.addf %920, %922 : vector<2x32xf32>
    %cst_366 = arith.constant 2.000000e+01 : f32
    %924 = vector.broadcast %cst_366 : f32 to vector<2x32xf32>
    %925 = arith.cmpf ogt, %923, %924 : vector<2x32xf32>
    %cst_367 = arith.constant 2.000000e+01 : f32
    %926 = vector.broadcast %cst_367 : f32 to vector<2x32xf32>
    %927 = arith.minimumf %923, %926 : vector<2x32xf32>
    %928 = math.exp %927 : vector<2x32xf32>
    %929 = math.log1p %928 : vector<2x32xf32>
    %930 = arith.select %925, %923, %929 : vector<2x32xi1>, vector<2x32xf32>
    %931 = math.tanh %930 : vector<2x32xf32>
    %932 = arith.mulf %923, %931 : vector<2x32xf32>
    %cst_368 = arith.constant dense<0.000000e+00> : vector<2x32xf32>
    %933 = tpu.matmul %932, %15, %cst_368 {dimension_numbers = #tpu.dot_dimension_numbers<[1], [0], [0], [1], [0, 0, 1, 1], [], []>} : vector<2x32xf32>, vector<32x32xf32>, vector<2x32xf32> -> vector<2x32xf32>
    %934 = vector.broadcast %16 : vector<1x32xf32> to vector<2x32xf32>
    %935 = arith.addf %933, %934 : vector<2x32xf32>
    %cst_369 = arith.constant 2.000000e+01 : f32
    %936 = vector.broadcast %cst_369 : f32 to vector<2x32xf32>
    %937 = arith.cmpf ogt, %935, %936 : vector<2x32xf32>
    %cst_370 = arith.constant 2.000000e+01 : f32
    %938 = vector.broadcast %cst_370 : f32 to vector<2x32xf32>
    %939 = arith.minimumf %935, %938 : vector<2x32xf32>
    %940 = math.exp %939 : vector<2x32xf32>
    %941 = math.log1p %940 : vector<2x32xf32>
    %942 = arith.select %937, %935, %941 : vector<2x32xi1>, vector<2x32xf32>
    %943 = math.tanh %942 : vector<2x32xf32>
    %944 = arith.mulf %935, %943 : vector<2x32xf32>
    %cst_371 = arith.constant dense<0.000000e+00> : vector<2x32xf32>
    %945 = tpu.matmul %944, %17, %cst_371 {dimension_numbers = #tpu.dot_dimension_numbers<[1], [0], [0], [1], [0, 0, 1, 1], [], []>} : vector<2x32xf32>, vector<32x32xf32>, vector<2x32xf32> -> vector<2x32xf32>
    %946 = vector.broadcast %18 : vector<1x32xf32> to vector<2x32xf32>
    %947 = arith.addf %945, %946 : vector<2x32xf32>
    %cst_372 = arith.constant 1.01425266 : f32
    %948 = vector.broadcast %cst_372 : f32 to vector<2x32xf32>
    %949 = arith.mulf %948, %916 : vector<2x32xf32>
    %cst_373 = arith.constant 0.169435635 : f32
    %950 = vector.broadcast %cst_373 : f32 to vector<2x32xf32>
    %951 = arith.mulf %950, %947 : vector<2x32xf32>
    %952 = arith.subf %949, %951 : vector<2x32xf32>
    %cst_374 = arith.constant -1.000000e+00 : f32
    %cst_375 = arith.constant 1.000000e+00 : f32
    %953 = vector.broadcast %cst_374 : f32 to vector<2x32xf32>
    %954 = arith.maximumf %953, %952 : vector<2x32xf32>
    %955 = vector.broadcast %cst_375 : f32 to vector<2x32xf32>
    %956 = arith.minimumf %955, %954 : vector<2x32xf32>
    %cst_376 = arith.constant 0.716466069 : f32
    %957 = vector.broadcast %cst_376 : f32 to vector<2x32xf32>
    %958 = arith.mulf %957, %956 : vector<2x32xf32>
    %cst_377 = arith.constant 0.283513576 : f32
    %959 = vector.broadcast %cst_377 : f32 to vector<2x32xf32>
    %960 = arith.mulf %959, %916 : vector<2x32xf32>
    %961 = arith.addf %958, %960 : vector<2x32xf32>
    %c18 = arith.constant 18 : index
    %c0_378 = arith.constant 0 : index
    %c0_379 = arith.constant 0 : index
    %962 = vector.load %arg3[%c18, %c0_378, %c0_379] : memref<20x2x32xf32, #tpu.memory_space<vmem>>, vector<1x2x32xf32>
    %963 = vector.shape_cast %962 : vector<1x2x32xf32> to vector<2x32xf32>
    %cst_380 = arith.constant 7.582570e-02 : f32
    %964 = vector.broadcast %cst_380 : f32 to vector<2x32xf32>
    %965 = arith.mulf %964, %963 : vector<2x32xf32>
    %966 = arith.addf %961, %965 : vector<2x32xf32>
    %c18_381 = arith.constant 18 : index
    %c0_382 = arith.constant 0 : index
    %c0_383 = arith.constant 0 : index
    %967 = vector.load %arg12[%c18_381, %c0_382, %c0_383] : memref<20x2x32xf32, #tpu.memory_space<vmem>>, vector<1x2x32xf32>
    %968 = vector.shape_cast %967 : vector<1x2x32xf32> to vector<2x32xf32>
    %969 = vector.shape_cast %966 : vector<2x32xf32> to vector<1x2x32xf32>
    tpu.vector_store %arg12[%c18_381, %c0_382, %c0_383], %969 {strides = array<i32>} : memref<20x2x32xf32, #tpu.memory_space<vmem>>, vector<1x2x32xf32>,
    %cst_384 = arith.constant dense<0.000000e+00> : vector<2x32xf32>
    %970 = tpu.matmul %966, %14, %cst_384 {dimension_numbers = #tpu.dot_dimension_numbers<[1], [0], [0], [1], [0, 0, 1, 1], [], []>} : vector<2x32xf32>, vector<32x32xf32>, vector<2x32xf32> -> vector<2x32xf32>
    %971 = vector.extract_strided_slice %13 {offsets = [19, 0, 0], sizes = [1, 2, 32], strides = [1, 1, 1]} : vector<20x2x32xf32> to vector<1x2x32xf32>
    %972 = vector.shape_cast %971 : vector<1x2x32xf32> to vector<2x32xf32>
    %973 = arith.addf %970, %972 : vector<2x32xf32>
    %cst_385 = arith.constant 2.000000e+01 : f32
    %974 = vector.broadcast %cst_385 : f32 to vector<2x32xf32>
    %975 = arith.cmpf ogt, %973, %974 : vector<2x32xf32>
    %cst_386 = arith.constant 2.000000e+01 : f32
    %976 = vector.broadcast %cst_386 : f32 to vector<2x32xf32>
    %977 = arith.minimumf %973, %976 : vector<2x32xf32>
    %978 = math.exp %977 : vector<2x32xf32>
    %979 = math.log1p %978 : vector<2x32xf32>
    %980 = arith.select %975, %973, %979 : vector<2x32xi1>, vector<2x32xf32>
    %981 = math.tanh %980 : vector<2x32xf32>
    %982 = arith.mulf %973, %981 : vector<2x32xf32>
    %cst_387 = arith.constant dense<0.000000e+00> : vector<2x32xf32>
    %983 = tpu.matmul %982, %15, %cst_387 {dimension_numbers = #tpu.dot_dimension_numbers<[1], [0], [0], [1], [0, 0, 1, 1], [], []>} : vector<2x32xf32>, vector<32x32xf32>, vector<2x32xf32> -> vector<2x32xf32>
    %984 = vector.broadcast %16 : vector<1x32xf32> to vector<2x32xf32>
    %985 = arith.addf %983, %984 : vector<2x32xf32>
    %cst_388 = arith.constant 2.000000e+01 : f32
    %986 = vector.broadcast %cst_388 : f32 to vector<2x32xf32>
    %987 = arith.cmpf ogt, %985, %986 : vector<2x32xf32>
    %cst_389 = arith.constant 2.000000e+01 : f32
    %988 = vector.broadcast %cst_389 : f32 to vector<2x32xf32>
    %989 = arith.minimumf %985, %988 : vector<2x32xf32>
    %990 = math.exp %989 : vector<2x32xf32>
    %991 = math.log1p %990 : vector<2x32xf32>
    %992 = arith.select %987, %985, %991 : vector<2x32xi1>, vector<2x32xf32>
    %993 = math.tanh %992 : vector<2x32xf32>
    %994 = arith.mulf %985, %993 : vector<2x32xf32>
    %cst_390 = arith.constant dense<0.000000e+00> : vector<2x32xf32>
    %995 = tpu.matmul %994, %17, %cst_390 {dimension_numbers = #tpu.dot_dimension_numbers<[1], [0], [0], [1], [0, 0, 1, 1], [], []>} : vector<2x32xf32>, vector<32x32xf32>, vector<2x32xf32> -> vector<2x32xf32>
    %996 = vector.broadcast %18 : vector<1x32xf32> to vector<2x32xf32>
    %997 = arith.addf %995, %996 : vector<2x32xf32>
    %cst_391 = arith.constant 1.00402045 : f32
    %998 = vector.broadcast %cst_391 : f32 to vector<2x32xf32>
    %999 = arith.mulf %998, %966 : vector<2x32xf32>
    %cst_392 = arith.constant 0.0897614583 : f32
    %1000 = vector.broadcast %cst_392 : f32 to vector<2x32xf32>
    %1001 = arith.mulf %1000, %997 : vector<2x32xf32>
    %1002 = arith.subf %999, %1001 : vector<2x32xf32>
    %cst_393 = arith.constant -1.000000e+00 : f32
    %cst_394 = arith.constant 1.000000e+00 : f32
    %1003 = vector.broadcast %cst_393 : f32 to vector<2x32xf32>
    %1004 = arith.maximumf %1003, %1002 : vector<2x32xf32>
    %1005 = vector.broadcast %cst_394 : f32 to vector<2x32xf32>
    %1006 = arith.minimumf %1005, %1004 : vector<2x32xf32>
    %cst_395 = arith.constant 1.000000e+00 : f32
    %1007 = vector.broadcast %cst_395 : f32 to vector<2x32xf32>
    %1008 = arith.mulf %1007, %1006 : vector<2x32xf32>
    %cst_396 = arith.constant 0.000000e+00 : f32
    %1009 = vector.broadcast %cst_396 : f32 to vector<2x32xf32>
    %1010 = arith.mulf %1009, %966 : vector<2x32xf32>
    %1011 = arith.addf %1008, %1010 : vector<2x32xf32>
    %c19 = arith.constant 19 : index
    %c0_397 = arith.constant 0 : index
    %c0_398 = arith.constant 0 : index
    %1012 = vector.load %arg12[%c19, %c0_397, %c0_398] : memref<20x2x32xf32, #tpu.memory_space<vmem>>, vector<1x2x32xf32>
    %1013 = vector.shape_cast %1012 : vector<1x2x32xf32> to vector<2x32xf32>
    %1014 = vector.shape_cast %1011 : vector<2x32xf32> to vector<1x2x32xf32>
    tpu.vector_store %arg12[%c19, %c0_397, %c0_398], %1014 {strides = array<i32>} : memref<20x2x32xf32, #tpu.memory_space<vmem>>, vector<1x2x32xf32>,
    return
  }
}

</mosaic_0001>

<llo_original>
// kernel: tpu_custom_call.1
$region0: #{tpu_custom_call.1}
  #allocation0 [shape = 'u32[]', space=smem, size = 0x4, offset = 0x4, fixed_abs, tag = 'smem constant byte address 0x4 - core index']
  #allocation1 [shape = 'u32[144,128]{1,0:T(1,128)}', space=vmem, size = 0x12000, scoped, tag = 'internal scratch']
  %s0 = inlined_call_operand.vmem [shape: f32[20,16], index: 0, kind: input, shape index: {}]
  %s1 = inlined_call_operand.vmem [shape: f32[2,32], index: 1, kind: input, shape index: {}]
  %s2 = inlined_call_operand.hbm [shape: f32[2,8], index: 2, kind: input, shape index: {}]
  %s3 = inlined_call_operand.vmem [shape: f32[20,2,32], index: 3, kind: input, shape index: {}]
  %s4 = inlined_call_operand.hbm [shape: f32[32,32], index: 4, kind: input, shape index: {}]
  %s5 = inlined_call_operand.hbm [shape: f32[8,32], index: 5, kind: input, shape index: {}]
  %s6 = inlined_call_operand.hbm [shape: f32[16,32], index: 6, kind: input, shape index: {}]
  %s7 = inlined_call_operand.hbm [shape: f32[1,32], index: 7, kind: input, shape index: {}]
  %s8 = inlined_call_operand.hbm [shape: f32[32,32], index: 8, kind: input, shape index: {}]
  %s9 = inlined_call_operand.hbm [shape: f32[1,32], index: 9, kind: input, shape index: {}]
  %s10 = inlined_call_operand.vmem [shape: f32[32,32], index: 10, kind: input, shape index: {}]
  %s11 = inlined_call_operand.vmem [shape: f32[1,32], index: 11, kind: input, shape index: {}]
  %s12 = inlined_call_operand.hbm [shape: f32[20,2,32], index: 12, kind: output, shape index: {}]
  %s13 = sld [smem:[#allocation0]]
  $region86: #{tpu_custom_call.1} parent=0
    _
  %s15 = ssub.s32 1, %s13
  %s16 = scalar_select 0, %s15, %s13
  $region1: #{tpu_custom_call.1} parent=0
    #allocation2 [shape = 'u8[1024]{0}', space=vmem, size = 0x400, scoped, tag = 'input window, operand 2, single buffered']
    #allocation3 [shape = 's32[1]{0}', space=sflag, size = 0x4, scoped, tag = 'scoped memory for tpu_custom_call.1']
    #allocation4 [shape = 's32[1]{0}', space=sflag, size = 0x4, scoped, tag = 'scoped memory for tpu_custom_call.1']
    #allocation5 [shape = 'u8[16384]{0}', space=vmem, size = 0x4000, scoped, tag = 'input window, operand 4, single buffered']
    #allocation6 [shape = 's32[1]{0}', space=sflag, size = 0x4, scoped, tag = 'scoped memory for tpu_custom_call.1']
    #allocation7 [shape = 'u8[4096]{0}', space=vmem, size = 0x1000, scoped, tag = 'input window, operand 5, single buffered']
    #allocation8 [shape = 'u8[8192]{0}', space=vmem, size = 0x2000, scoped, tag = 'input window, operand 6, single buffered']
    #allocation9 [shape = 's32[1]{0}', space=sflag, size = 0x4, scoped, tag = 'scoped memory for tpu_custom_call.1']
    #allocation10 [shape = 'u8[512]{0}', space=vmem, size = 0x400, scoped, tag = 'input window, operand 7, single buffered']
    #allocation11 [shape = 'u8[16384]{0}', space=vmem, size = 0x4000, scoped, tag = 'input window, operand 8, single buffered']
    #allocation12 [shape = 's32[1]{0}', space=sflag, size = 0x4, scoped, tag = 'scoped memory for tpu_custom_call.1']
    #allocation13 [shape = 'u8[512]{0}', space=vmem, size = 0x400, scoped, tag = 'input window, operand 9, single buffered']
    #allocation14 [shape = 'u8[20480]{0}', space=vmem, size = 0x5000, scoped, tag = 'output window, operand 0, single buffered']
    %17 = vsyncpa [#allocation3], 0
    %18 = vsyncpa [#allocation6], 0
    %19 = vsyncpa [#allocation9], 0
    %20 = vsyncpa [#allocation12], 0
    %21 = vsyncpa [#allocation4], 0
    // Predicated region
    $region2: #{tpu_custom_call.1} parent=1 // pred_check
      _
    $region3: #{tpu_custom_call.1} parent=1 // pred_check_branch
      %23 = sbr.rel (0) target = $region5
    $region4: #{tpu_custom_call.1} parent=1 // pred_region
      _
    $region5: #{tpu_custom_call.1} parent=1 // pred_fallthru
      _
    // Predicated region
    $region6: #{tpu_custom_call.1} parent=1 // pred_check
      _
    $region7: #{tpu_custom_call.1} parent=1 // pred_check_branch
      %25 = sbr.rel (0) target = $region9
    $region8: #{tpu_custom_call.1} parent=1 // pred_region
      _
    $region9: #{tpu_custom_call.1} parent=1 // pred_fallthru
      _
    // Predicated region
    $region10: #{tpu_custom_call.1} parent=1 // pred_check
      _
    $region11: #{tpu_custom_call.1} parent=1 // pred_check_branch
      %27 = sbr.rel (0) target = $region13
    $region12: #{tpu_custom_call.1} parent=1 // pred_region
      %s29 = ssub.s32 32, 32
      %30 = vsyncadd [#allocation3], %s29
      %s32 = sshll.u32 [#allocation2], 4
      %s33 = int_to_ptr.vmem [resolvable:$true] %s32
      %35 = dma.hbm_to_vmem [thread:$0]  %s2, 32, %s33, [#allocation3]
    $region13: #{tpu_custom_call.1} parent=1 // pred_fallthru
      _
    // Predicated region
    $region14: #{tpu_custom_call.1} parent=1 // pred_check
      _
    $region15: #{tpu_custom_call.1} parent=1 // pred_check_branch
      %37 = sbr.rel (0) target = $region17
    $region16: #{tpu_custom_call.1} parent=1 // pred_region
      _
    $region17: #{tpu_custom_call.1} parent=1 // pred_fallthru
      _
    // Predicated region
    $region18: #{tpu_custom_call.1} parent=1 // pred_check
      _
    $region19: #{tpu_custom_call.1} parent=1 // pred_check_branch
      %39 = sbr.rel (0) target = $region21
    $region20: #{tpu_custom_call.1} parent=1 // pred_region
      %s41 = ssub.s32 512, 512
      %42 = vsyncadd [#allocation6], %s41
      %s43 = sshll.u32 [#allocation5], 4
      %s44 = int_to_ptr.vmem [resolvable:$true] %s43
      %49 = dma.hbm_to_vmem [thread:$0]  %s4, 512, %s44, [#allocation6], 128, 128, 8
    $region21: #{tpu_custom_call.1} parent=1 // pred_fallthru
      _
    // Predicated region
    $region22: #{tpu_custom_call.1} parent=1 // pred_check
      _
    $region23: #{tpu_custom_call.1} parent=1 // pred_check_branch
      %51 = sbr.rel (0) target = $region25
    $region24: #{tpu_custom_call.1} parent=1 // pred_region
      %s53 = ssub.s32 128, 128
      %54 = vsyncadd [#allocation6], %s53
      %s56 = sshll.u32 [#allocation7], 4
      %s57 = int_to_ptr.vmem [resolvable:$true] %s56
      %59 = dma.hbm_to_vmem [thread:$0]  %s5, 128, %s57, [#allocation6]
    $region25: #{tpu_custom_call.1} parent=1 // pred_fallthru
      _
    // Predicated region
    $region26: #{tpu_custom_call.1} parent=1 // pred_check
      _
    $region27: #{tpu_custom_call.1} parent=1 // pred_check_branch
      %61 = sbr.rel (0) target = $region29
    $region28: #{tpu_custom_call.1} parent=1 // pred_region
      %s63 = ssub.s32 256, 256
      %64 = vsyncadd [#allocation9], %s63
      %s65 = sshll.u32 [#allocation8], 4
      %s66 = int_to_ptr.vmem [resolvable:$true] %s65
      %71 = dma.hbm_to_vmem [thread:$0]  %s6, 256, %s66, [#allocation9], 128, 128, 8
    $region29: #{tpu_custom_call.1} parent=1 // pred_fallthru
      _
    // Predicated region
    $region30: #{tpu_custom_call.1} parent=1 // pred_check
      _
    $region31: #{tpu_custom_call.1} parent=1 // pred_check_branch
      %73 = sbr.rel (0) target = $region33
    $region32: #{tpu_custom_call.1} parent=1 // pred_region
      %s75 = ssub.s32 16, 16
      %76 = vsyncadd [#allocation9], %s75
      %s78 = sshll.u32 [#allocation10], 4
      %s79 = int_to_ptr.vmem [resolvable:$true] %s78
      %81 = dma.hbm_to_vmem [thread:$0]  %s7, 16, %s79, [#allocation9]
    $region33: #{tpu_custom_call.1} parent=1 // pred_fallthru
      _
    // Predicated region
    $region34: #{tpu_custom_call.1} parent=1 // pred_check
      _
    $region35: #{tpu_custom_call.1} parent=1 // pred_check_branch
      %83 = sbr.rel (0) target = $region37
    $region36: #{tpu_custom_call.1} parent=1 // pred_region
      %s85 = ssub.s32 512, 512
      %86 = vsyncadd [#allocation12], %s85
      %s87 = sshll.u32 [#allocation11], 4
      %s88 = int_to_ptr.vmem [resolvable:$true] %s87
      %93 = dma.hbm_to_vmem [thread:$0]  %s8, 512, %s88, [#allocation12], 128, 128, 8
    $region37: #{tpu_custom_call.1} parent=1 // pred_fallthru
      _
    // Predicated region
    $region38: #{tpu_custom_call.1} parent=1 // pred_check
      _
    $region39: #{tpu_custom_call.1} parent=1 // pred_check_branch
      %95 = sbr.rel (0) target = $region41
    $region40: #{tpu_custom_call.1} parent=1 // pred_region
      %s97 = ssub.s32 16, 16
      %98 = vsyncadd [#allocation12], %s97
      %s100 = sshll.u32 [#allocation13], 4
      %s101 = int_to_ptr.vmem [resolvable:$true] %s100
      %103 = dma.hbm_to_vmem [thread:$0]  %s9, 16, %s101, [#allocation12]
    $region41: #{tpu_custom_call.1} parent=1 // pred_fallthru
      _
    // Predicated region
    $region42: #{tpu_custom_call.1} parent=1 // pred_check
      _
    $region43: #{tpu_custom_call.1} parent=1 // pred_check_branch
      %105 = sbr.rel (0) target = $region45
    $region44: #{tpu_custom_call.1} parent=1 // pred_region
      _
    $region45: #{tpu_custom_call.1} parent=1 // pred_fallthru
      _
    // Predicated region
    $region46: #{tpu_custom_call.1} parent=1 // pred_check
      _
    $region47: #{tpu_custom_call.1} parent=1 // pred_check_branch
      %107 = sbr.rel (0) target = $region49
    $region48: #{tpu_custom_call.1} parent=1 // pred_region
      _
    $region49: #{tpu_custom_call.1} parent=1 // pred_fallthru
      _
    // Predicated region
    $region50: #{tpu_custom_call.1} parent=1 // pred_check
      _
    $region51: #{tpu_custom_call.1} parent=1 // pred_check_branch
      %109 = sbr.rel (0) target = $region53
    $region52: #{tpu_custom_call.1} parent=1 // pred_region
      %110 = dma.done [#allocation3], 32
    $region53: #{tpu_custom_call.1} parent=1 // pred_fallthru
      _
    // Predicated region
    $region54: #{tpu_custom_call.1} parent=1 // pred_check
      _
    $region55: #{tpu_custom_call.1} parent=1 // pred_check_branch
      %112 = sbr.rel (0) target = $region57
    $region56: #{tpu_custom_call.1} parent=1 // pred_region
      %113 = dma.done [#allocation6], 512
    $region57: #{tpu_custom_call.1} parent=1 // pred_fallthru
      _
    // Predicated region
    $region58: #{tpu_custom_call.1} parent=1 // pred_check
      _
    $region59: #{tpu_custom_call.1} parent=1 // pred_check_branch
      %115 = sbr.rel (0) target = $region61
    $region60: #{tpu_custom_call.1} parent=1 // pred_region
      %116 = dma.done [#allocation6], 128
    $region61: #{tpu_custom_call.1} parent=1 // pred_fallthru
      _
    // Predicated region
    $region62: #{tpu_custom_call.1} parent=1 // pred_check
      _
    $region63: #{tpu_custom_call.1} parent=1 // pred_check_branch
      %118 = sbr.rel (0) target = $region65
    $region64: #{tpu_custom_call.1} parent=1 // pred_region
      %119 = dma.done [#allocation9], 256
    $region65: #{tpu_custom_call.1} parent=1 // pred_fallthru
      _
    // Predicated region
    $region66: #{tpu_custom_call.1} parent=1 // pred_check
      _
    $region67: #{tpu_custom_call.1} parent=1 // pred_check_branch
      %121 = sbr.rel (0) target = $region69
    $region68: #{tpu_custom_call.1} parent=1 // pred_region
      %122 = dma.done [#allocation9], 16
    $region69: #{tpu_custom_call.1} parent=1 // pred_fallthru
      _
    // Predicated region
    $region70: #{tpu_custom_call.1} parent=1 // pred_check
      _
    $region71: #{tpu_custom_call.1} parent=1 // pred_check_branch
      %124 = sbr.rel (0) target = $region73
    $region72: #{tpu_custom_call.1} parent=1 // pred_region
      %125 = dma.done [#allocation12], 512
    $region73: #{tpu_custom_call.1} parent=1 // pred_fallthru
      _
    // Predicated region
    $region74: #{tpu_custom_call.1} parent=1 // pred_check
      _
    $region75: #{tpu_custom_call.1} parent=1 // pred_check_branch
      %127 = sbr.rel (0) target = $region77
    $region76: #{tpu_custom_call.1} parent=1 // pred_region
      %128 = dma.done [#allocation12], 16
    $region77: #{tpu_custom_call.1} parent=1 // pred_fallthru
      _
    %v129 = vld [vmem:[#allocation2] sm:$0x3]
    %v130 = vld [vmem:[#allocation7] sm:$0xff]
    %v131 = vld [vmem:[#allocation10] sm:$0x1]
    %v133 = vlaneseq
    %v134 = vshrl.u32 %v133, 7
    %v135 = vsub.s32 0, %v134
    %v136 = vrot.slane %v131, %v135
    %vm138 = vcmask 64512
    %v140 = vsel %vm138, %v129, 0
    %142 = vmatprep.subr.mxu0 0.0
    %143 = vmatpush1.msra.mxu0 %v130
    %144 = vmatprep.subr.mxu0 0.0
    %145 = vmatpush1.msra.mxu0 0.0
    %146 = vmatprep.subr.mxu0 0.0
    %147 = vmatpush1.msra.mxu0 0.0
    %148 = vmatprep.subr.mxu0 0.0
    %149 = vmatpush1.msra.mxu0 0.0
    %150 = vmatprep.subr.mxu0 0.0
    %151 = vmatpush1.msra.mxu0 0.0
    %152 = vmatprep.subr.mxu0 0.0
    %153 = vmatpush1.msra.mxu0 0.0
    %154 = vmatprep.subr.mxu0 0.0
    %155 = vmatpush1.msra.mxu0 0.0
    %156 = vmatprep.subr.mxu0 0.0
    %157 = vmatpush1.msra.mxu0 0.0
    %158 = vmatprep.subr.mxu0 0.0
    %159 = vmatpush1.msra.mxu0 0.0
    %160 = vmatprep.subr.mxu0 0.0
    %161 = vmatpush1.msra.mxu0 0.0
    %162 = vmatprep.subr.mxu0 0.0
    %163 = vmatpush1.msra.mxu0 0.0
    %164 = vmatprep.subr.mxu0 0.0
    %165 = vmatpush1.msra.mxu0 0.0
    %166 = vmatprep.subr.mxu0 0.0
    %167 = vmatpush1.msra.mxu0 0.0
    %168 = vmatprep.subr.mxu0 0.0
    %169 = vmatpush1.msra.mxu0 0.0
    %170 = vmatprep.subr.mxu0 0.0
    %171 = vmatpush1.msra.mxu0 0.0
    %172 = vmatprep.subr.mxu0 0.0
    %173 = vmatpush1.msra.mxu0 0.0
    %174 = vmatprep.subr.mxu0 0.0
    %175 = vmatpush1.msra.mxu0 0.0
    %176 = vmatprep.subr.mxu0 0.0
    %177 = vmatpush1.msra.mxu0 0.0
    %178 = vmatprep.subr.mxu0 0.0
    %179 = vmatpush1.msra.mxu0 0.0
    %180 = vmatprep.subr.mxu0 0.0
    %181 = vmatpush1.msra.mxu0 0.0
    %182 = vmatprep.subr.mxu0 0.0
    %183 = vmatpush1.msra.mxu0 0.0
    %184 = vmatprep.subr.mxu0 0.0
    %185 = vmatpush1.msra.mxu0 0.0
    %186 = vmatprep.subr.mxu0 0.0
    %187 = vmatpush1.msra.mxu0 0.0
    %188 = vmatprep.subr.mxu0 0.0
    %189 = vmatpush1.msra.mxu0 0.0
    %190 = vmatprep.subr.mxu0 0.0
    %191 = vmatpush1.msra.mxu0 0.0
    %192 = vmatprep.subr.mxu0 0.0
    %193 = vmatpush1.msra.mxu0 0.0
    %194 = vmatprep.subr.mxu0 0.0
    %195 = vmatpush1.msra.mxu0 0.0
    %196 = vmatprep.subr.mxu0 0.0
    %197 = vmatpush1.msra.mxu0 0.0
    %198 = vmatprep.subr.mxu0 0.0
    %199 = vmatpush1.msra.mxu0 0.0
    %200 = vmatprep.subr.mxu0 0.0
    %201 = vmatpush1.msra.mxu0 0.0
    %202 = vmatprep.subr.mxu0 0.0
    %203 = vmatpush1.msra.mxu0 0.0
    %204 = vmatprep.subr.mxu0 0.0
    %205 = vmatpush1.msra.mxu0 0.0
    %206 = vmatprep.mubr.f32.mxu0 0.0
    %207 = vmatmul.mubr.f32.gmra.mrb[0].mxu0 %v140
    %v208 = vpop.f32.mrb[0].mxu0
    %v209 = vadd.f32 %v136, %v208
    %v210 = vpop.f32.mrb[0].mxu0
    %211 = vdwg.mxu0
    %v212 = vld [vmem:[%s0] sm:$0xff]
    %v213 = vld [vmem:[%s0 + $0x8] sm:$0xff]
    %v214 = vld [vmem:[%s0 + $0x10] sm:$0xf]
    %v215 = vld [vmem:[#allocation8] sm:$0xff]
    %v216 = vld [vmem:[#allocation8 + $0x8] sm:$0xff]
    %vm217 = vcmask 130048
    %v219 = vsel %vm217, %v212, 0
    %v222 = vsel %vm217, %v213, 0
    %v225 = vsel %vm217, %v214, 0
    %227 = vmatprep.subr.mxu0 0.0
    %228 = vmatpush1.msra.mxu0 %v215
    %229 = vmatprep.subr.mxu0 0.0
    %230 = vmatpush1.msra.mxu0 %v216
    %231 = vmatprep.subr.mxu0 0.0
    %232 = vmatpush1.msra.mxu0 0.0
    %233 = vmatprep.subr.mxu0 0.0
    %234 = vmatpush1.msra.mxu0 0.0
    %235 = vmatprep.subr.mxu0 0.0
    %236 = vmatpush1.msra.mxu0 0.0
    %237 = vmatprep.subr.mxu0 0.0
    %238 = vmatpush1.msra.mxu0 0.0
    %239 = vmatprep.subr.mxu0 0.0
    %240 = vmatpush1.msra.mxu0 0.0
    %241 = vmatprep.subr.mxu0 0.0
    %242 = vmatpush1.msra.mxu0 0.0
    %243 = vmatprep.subr.mxu0 0.0
    %244 = vmatpush1.msra.mxu0 0.0
    %245 = vmatprep.subr.mxu0 0.0
    %246 = vmatpush1.msra.mxu0 0.0
    %247 = vmatprep.subr.mxu0 0.0
    %248 = vmatpush1.msra.mxu0 0.0
    %249 = vmatprep.subr.mxu0 0.0
    %250 = vmatpush1.msra.mxu0 0.0
    %251 = vmatprep.subr.mxu0 0.0
    %252 = vmatpush1.msra.mxu0 0.0
    %253 = vmatprep.subr.mxu0 0.0
    %254 = vmatpush1.msra.mxu0 0.0
    %255 = vmatprep.subr.mxu0 0.0
    %256 = vmatpush1.msra.mxu0 0.0
    %257 = vmatprep.subr.mxu0 0.0
    %258 = vmatpush1.msra.mxu0 0.0
    %259 = vmatprep.subr.mxu0 0.0
    %260 = vmatpush1.msra.mxu0 0.0
    %261 = vmatprep.subr.mxu0 0.0
    %262 = vmatpush1.msra.mxu0 0.0
    %263 = vmatprep.subr.mxu0 0.0
    %264 = vmatpush1.msra.mxu0 0.0
    %265 = vmatprep.subr.mxu0 0.0
    %266 = vmatpush1.msra.mxu0 0.0
    %267 = vmatprep.subr.mxu0 0.0
    %268 = vmatpush1.msra.mxu0 0.0
    %269 = vmatprep.subr.mxu0 0.0
    %270 = vmatpush1.msra.mxu0 0.0
    %271 = vmatprep.subr.mxu0 0.0
    %272 = vmatpush1.msra.mxu0 0.0
    %273 = vmatprep.subr.mxu0 0.0
    %274 = vmatpush1.msra.mxu0 0.0
    %275 = vmatprep.subr.mxu0 0.0
    %276 = vmatpush1.msra.mxu0 0.0
    %277 = vmatprep.subr.mxu0 0.0
    %278 = vmatpush1.msra.mxu0 0.0
    %279 = vmatprep.subr.mxu0 0.0
    %280 = vmatpush1.msra.mxu0 0.0
    %281 = vmatprep.subr.mxu0 0.0
    %282 = vmatpush1.msra.mxu0 0.0
    %283 = vmatprep.subr.mxu0 0.0
    %284 = vmatpush1.msra.mxu0 0.0
    %285 = vmatprep.subr.mxu0 0.0
    %286 = vmatpush1.msra.mxu0 0.0
    %287 = vmatprep.subr.mxu0 0.0
    %288 = vmatpush1.msra.mxu0 0.0
    %289 = vmatprep.subr.mxu0 0.0
    %290 = vmatpush1.msra.mxu0 0.0
    %291 = vmatprep.mubr.f32.mxu0 0.0
    %292 = vmatmul.mubr.f32.gmra.mrb[0].mxu0 %v219
    %v293 = vpop.f32.mrb[0].mxu0
    %v294 = vadd.f32 0.0, %v293
    %v295 = vpop.f32.mrb[0].mxu0
    %296 = vmatprep.mubr.f32.mxu0 0.0
    %297 = vmatmul.mubr.f32.gmra.mrb[0].mxu0 %v222
    %v298 = vpop.f32.mrb[0].mxu0
    %v299 = vadd.f32 0.0, %v298
    %v300 = vpop.f32.mrb[0].mxu0
    %301 = vmatprep.mubr.f32.mxu0 0.0
    %302 = vmatmul.mubr.f32.gmra.mrb[0].mxu0 %v225
    %v303 = vpop.f32.mrb[0].mxu0
    %v304 = vadd.f32 0.0, %v303
    %v305 = vpop.f32.mrb[0].mxu0
    %306 = vdwg.mxu0
    %v310 = vcombine.high %v294, %v294
    %v312 = vunpack.c.l.s4 1966171168
    %v313 = vunpack.c.0.s8 %v312
    %v314 = vlaneseq
    %v315 = vshrl.u32 %v314, 7
    %v316 = vsub.s32 %v313, %v315
    %v317 = vrot.slane %v294, %v316
    %v319 = vunpack.c.l.s4 1966171168
    %v320 = vunpack.c.0.s8 %v319
    %v321 = vlaneseq
    %v322 = vshrl.u32 %v321, 7
    %v323 = vsub.s32 %v320, %v322
    %v324 = vrot.slane %v310, %v323
    %v325 = vcombine.high %v317, %v317
    %v326 = vcombine.high %v324, %v324
    %v328 = vunpack.c.l.s4 1966171168
    %v329 = vunpack.c.0.s8 %v328
    %v330 = vlaneseq
    %v331 = vshrl.u32 %v330, 7
    %v332 = vsub.s32 %v329, %v331
    %v333 = vrot.slane %v317, %v332
    %v335 = vunpack.c.l.s4 1966171168
    %v336 = vunpack.c.0.s8 %v335
    %v337 = vlaneseq
    %v338 = vshrl.u32 %v337, 7
    %v339 = vsub.s32 %v336, %v338
    %v340 = vrot.slane %v324, %v339
    %v342 = vunpack.c.l.s4 1966171168
    %v343 = vunpack.c.0.s8 %v342
    %v344 = vlaneseq
    %v345 = vshrl.u32 %v344, 7
    %v346 = vsub.s32 %v343, %v345
    %v347 = vrot.slane %v325, %v346
    %v349 = vunpack.c.l.s4 1966171168
    %v350 = vunpack.c.0.s8 %v349
    %v351 = vlaneseq
    %v352 = vshrl.u32 %v351, 7
    %v353 = vsub.s32 %v350, %v352
    %v354 = vrot.slane %v326, %v353
    %v355 = vcombine.high %v333, %v333
    %v356 = vcombine.high %v340, %v340
    %v357 = vcombine.high %v347, %v347
    %v358 = vcombine.high %v354, %v354
    %v359 = vcombine.high %v299, %v299
    %v361 = vunpack.c.l.s4 1966171168
    %v362 = vunpack.c.0.s8 %v361
    %v363 = vlaneseq
    %v364 = vshrl.u32 %v363, 7
    %v365 = vsub.s32 %v362, %v364
    %v366 = vrot.slane %v299, %v365
    %v368 = vunpack.c.l.s4 1966171168
    %v369 = vunpack.c.0.s8 %v368
    %v370 = vlaneseq
    %v371 = vshrl.u32 %v370, 7
    %v372 = vsub.s32 %v369, %v371
    %v373 = vrot.slane %v359, %v372
    %v374 = vcombine.high %v366, %v366
    %v375 = vcombine.high %v373, %v373
    %v377 = vunpack.c.l.s4 1966171168
    %v378 = vunpack.c.0.s8 %v377
    %v379 = vlaneseq
    %v380 = vshrl.u32 %v379, 7
    %v381 = vsub.s32 %v378, %v380
    %v382 = vrot.slane %v366, %v381
    %v384 = vunpack.c.l.s4 1966171168
    %v385 = vunpack.c.0.s8 %v384
    %v386 = vlaneseq
    %v387 = vshrl.u32 %v386, 7
    %v388 = vsub.s32 %v385, %v387
    %v389 = vrot.slane %v373, %v388
    %v391 = vunpack.c.l.s4 1966171168
    %v392 = vunpack.c.0.s8 %v391
    %v393 = vlaneseq
    %v394 = vshrl.u32 %v393, 7
    %v395 = vsub.s32 %v392, %v394
    %v396 = vrot.slane %v374, %v395
    %v398 = vunpack.c.l.s4 1966171168
    %v399 = vunpack.c.0.s8 %v398
    %v400 = vlaneseq
    %v401 = vshrl.u32 %v400, 7
    %v402 = vsub.s32 %v399, %v401
    %v403 = vrot.slane %v375, %v402
    %v404 = vcombine.high %v382, %v382
    %v405 = vcombine.high %v389, %v389
    %v406 = vcombine.high %v396, %v396
    %v407 = vcombine.high %v403, %v403
    %v409 = vunpack.c.l.s4 1966171168
    %v410 = vunpack.c.0.s8 %v409
    %v411 = vlaneseq
    %v412 = vshrl.u32 %v411, 7
    %v413 = vsub.s32 %v410, %v412
    %v414 = vrot.slane %v304, %v413
    %v415 = vcombine.high %v414, %v414
    %v417 = vunpack.c.l.s4 1966171168
    %v418 = vunpack.c.0.s8 %v417
    %v419 = vlaneseq
    %v420 = vshrl.u32 %v419, 7
    %v421 = vsub.s32 %v418, %v420
    %v422 = vrot.slane %v414, %v421
    %v424 = vunpack.c.l.s4 1966171168
    %v425 = vunpack.c.0.s8 %v424
    %v426 = vlaneseq
    %v427 = vshrl.u32 %v426, 7
    %v428 = vsub.s32 %v425, %v427
    %v429 = vrot.slane %v415, %v428
    %v430 = vcombine.high %v422, %v422
    %v431 = vcombine.high %v429, %v429
    %v432 = vlaneseq
    %v433 = vshrl.u32 %v432, 7
    %v434 = vsub.s32 0, %v433
    %v435 = vrot.slane %v333, %v434
    %v436 = vlaneseq
    %v437 = vshrl.u32 %v436, 7
    %v438 = vsub.s32 0, %v437
    %v439 = vrot.slane %v347, %v438
    %v440 = vlaneseq
    %v441 = vshrl.u32 %v440, 7
    %v442 = vsub.s32 0, %v441
    %v443 = vrot.slane %v355, %v442
    %v444 = vlaneseq
    %v445 = vshrl.u32 %v444, 7
    %v446 = vsub.s32 0, %v445
    %v447 = vrot.slane %v357, %v446
    %v448 = vlaneseq
    %v449 = vshrl.u32 %v448, 7
    %v450 = vsub.s32 0, %v449
    %v451 = vrot.slane %v340, %v450
    %v452 = vlaneseq
    %v453 = vshrl.u32 %v452, 7
    %v454 = vsub.s32 0, %v453
    %v455 = vrot.slane %v354, %v454
    %v456 = vlaneseq
    %v457 = vshrl.u32 %v456, 7
    %v458 = vsub.s32 0, %v457
    %v459 = vrot.slane %v356, %v458
    %v460 = vlaneseq
    %v461 = vshrl.u32 %v460, 7
    %v462 = vsub.s32 0, %v461
    %v463 = vrot.slane %v358, %v462
    %v464 = vlaneseq
    %v465 = vshrl.u32 %v464, 7
    %v466 = vsub.s32 0, %v465
    %v467 = vrot.slane %v382, %v466
    %v468 = vlaneseq
    %v469 = vshrl.u32 %v468, 7
    %v470 = vsub.s32 0, %v469
    %v471 = vrot.slane %v396, %v470
    %v472 = vlaneseq
    %v473 = vshrl.u32 %v472, 7
    %v474 = vsub.s32 0, %v473
    %v475 = vrot.slane %v404, %v474
    %v476 = vlaneseq
    %v477 = vshrl.u32 %v476, 7
    %v478 = vsub.s32 0, %v477
    %v479 = vrot.slane %v406, %v478
    %v480 = vlaneseq
    %v481 = vshrl.u32 %v480, 7
    %v482 = vsub.s32 0, %v481
    %v483 = vrot.slane %v389, %v482
    %v484 = vlaneseq
    %v485 = vshrl.u32 %v484, 7
    %v486 = vsub.s32 0, %v485
    %v487 = vrot.slane %v403, %v486
    %v488 = vlaneseq
    %v489 = vshrl.u32 %v488, 7
    %v490 = vsub.s32 0, %v489
    %v491 = vrot.slane %v405, %v490
    %v492 = vlaneseq
    %v493 = vshrl.u32 %v492, 7
    %v494 = vsub.s32 0, %v493
    %v495 = vrot.slane %v407, %v494
    %v496 = vlaneseq
    %v497 = vshrl.u32 %v496, 7
    %v498 = vsub.s32 0, %v497
    %v499 = vrot.slane %v422, %v498
    %v500 = vlaneseq
    %v501 = vshrl.u32 %v500, 7
    %v502 = vsub.s32 0, %v501
    %v503 = vrot.slane %v429, %v502
    %v504 = vlaneseq
    %v505 = vshrl.u32 %v504, 7
    %v506 = vsub.s32 0, %v505
    %v507 = vrot.slane %v430, %v506
    %v508 = vlaneseq
    %v509 = vshrl.u32 %v508, 7
    %v510 = vsub.s32 0, %v509
    %v511 = vrot.slane %v431, %v510
    %v532 = vadd.f32 %v209, %v435
    %v533 = vadd.f32 %v209, %v439
    %v534 = vadd.f32 %v209, %v443
    %v535 = vadd.f32 %v209, %v447
    %v536 = vadd.f32 %v209, %v451
    %v537 = vadd.f32 %v209, %v455
    %v538 = vadd.f32 %v209, %v459
    %v539 = vadd.f32 %v209, %v463
    %v540 = vadd.f32 %v209, %v467
    %v541 = vadd.f32 %v209, %v471
    %v542 = vadd.f32 %v209, %v475
    %v543 = vadd.f32 %v209, %v479
    %v544 = vadd.f32 %v209, %v483
    %v545 = vadd.f32 %v209, %v487
    %v546 = vadd.f32 %v209, %v491
    %v547 = vadd.f32 %v209, %v495
    %v548 = vadd.f32 %v209, %v499
    %v549 = vadd.f32 %v209, %v503
    %v550 = vadd.f32 %v209, %v507
    %v551 = vadd.f32 %v209, %v511
    %v552 = vld [vmem:[#allocation5] sm:$0xff]
    %v553 = vld [vmem:[#allocation5 + $0x8] sm:$0xff]
    %v554 = vld [vmem:[#allocation5 + $0x10] sm:$0xff]
    %v555 = vld [vmem:[#allocation5 + $0x18] sm:$0xff]
    %v556 = vld [vmem:[#allocation11] sm:$0xff]
    %v557 = vld [vmem:[#allocation11 + $0x8] sm:$0xff]
    %v558 = vld [vmem:[#allocation11 + $0x10] sm:$0xff]
    %v559 = vld [vmem:[#allocation11 + $0x18] sm:$0xff]
    %v560 = vld [vmem:[#allocation13] sm:$0x1]
    %v561 = vld [vmem:[%s10] sm:$0xff]
    %v562 = vld [vmem:[%s10 + $0x8] sm:$0xff]
    %v563 = vld [vmem:[%s10 + $0x10] sm:$0xff]
    %v564 = vld [vmem:[%s10 + $0x18] sm:$0xff]
    %v565 = vld [vmem:[%s11] sm:$0x1]
    %v566 = vld [vmem:[%s1] sm:$0x3]
    %vm567 = vcmask 261120
    %v569 = vsel %vm567, %v566, 0
    %571 = vmatprep.subr.mxu0 0.0
    %572 = vmatpush1.msra.mxu0 %v552
    %573 = vmatprep.subr.mxu0 0.0
    %574 = vmatpush1.msra.mxu0 %v553
    %575 = vmatprep.subr.mxu0 0.0
    %576 = vmatpush1.msra.mxu0 %v554
    %577 = vmatprep.subr.mxu0 0.0
    %578 = vmatpush1.msra.mxu0 %v555
    %579 = vmatprep.subr.mxu0 0.0
    %580 = vmatpush1.msra.mxu0 0.0
    %581 = vmatprep.subr.mxu0 0.0
    %582 = vmatpush1.msra.mxu0 0.0
    %583 = vmatprep.subr.mxu0 0.0
    %584 = vmatpush1.msra.mxu0 0.0
    %585 = vmatprep.subr.mxu0 0.0
    %586 = vmatpush1.msra.mxu0 0.0
    %587 = vmatprep.subr.mxu0 0.0
    %588 = vmatpush1.msra.mxu0 0.0
    %589 = vmatprep.subr.mxu0 0.0
    %590 = vmatpush1.msra.mxu0 0.0
    %591 = vmatprep.subr.mxu0 0.0
    %592 = vmatpush1.msra.mxu0 0.0
    %593 = vmatprep.subr.mxu0 0.0
    %594 = vmatpush1.msra.mxu0 0.0
    %595 = vmatprep.subr.mxu0 0.0
    %596 = vmatpush1.msra.mxu0 0.0
    %597 = vmatprep.subr.mxu0 0.0
    %598 = vmatpush1.msra.mxu0 0.0
    %599 = vmatprep.subr.mxu0 0.0
    %600 = vmatpush1.msra.mxu0 0.0
    %601 = vmatprep.subr.mxu0 0.0
    %602 = vmatpush1.msra.mxu0 0.0
    %603 = vmatprep.subr.mxu0 0.0
    %604 = vmatpush1.msra.mxu0 0.0
    %605 = vmatprep.subr.mxu0 0.0
    %606 = vmatpush1.msra.mxu0 0.0
    %607 = vmatprep.subr.mxu0 0.0
    %608 = vmatpush1.msra.mxu0 0.0
    %609 = vmatprep.subr.mxu0 0.0
    %610 = vmatpush1.msra.mxu0 0.0
    %611 = vmatprep.subr.mxu0 0.0
    %612 = vmatpush1.msra.mxu0 0.0
    %613 = vmatprep.subr.mxu0 0.0
    %614 = vmatpush1.msra.mxu0 0.0
    %615 = vmatprep.subr.mxu0 0.0
    %616 = vmatpush1.msra.mxu0 0.0
    %617 = vmatprep.subr.mxu0 0.0
    %618 = vmatpush1.msra.mxu0 0.0
    %619 = vmatprep.subr.mxu0 0.0
    %620 = vmatpush1.msra.mxu0 0.0
    %621 = vmatprep.subr.mxu0 0.0
    %622 = vmatpush1.msra.mxu0 0.0
    %623 = vmatprep.subr.mxu0 0.0
    %624 = vmatpush1.msra.mxu0 0.0
    %625 = vmatprep.subr.mxu0 0.0
    %626 = vmatpush1.msra.mxu0 0.0
    %627 = vmatprep.subr.mxu0 0.0
    %628 = vmatpush1.msra.mxu0 0.0
    %629 = vmatprep.subr.mxu0 0.0
    %630 = vmatpush1.msra.mxu0 0.0
    %631 = vmatprep.subr.mxu0 0.0
    %632 = vmatpush1.msra.mxu0 0.0
    %633 = vmatprep.subr.mxu0 0.0
    %634 = vmatpush1.msra.mxu0 0.0
    %635 = vmatprep.mubr.f32.mxu0 0.0
    %636 = vmatmul.mubr.f32.gmra.mrb[0].mxu0 %v569
    %v637 = vpop.f32.mrb[0].mxu0
    %v638 = vadd.f32 %v532, %v637
    %v639 = vpop.f32.mrb[0].mxu0
    %640 = vdwg.mxu0
    %vm641 = vcmp.gt.f32.partialorder %v638, 20.0
    %v642 = vmin.f32 %v638, 20.0
    %v643 = vmul.f32 %v642, 1.442695
    %v644 = vpow.pop %v643
    %v645 = vadd.f32 %v644, 1.0
    %v646 = vlog2.pop %v645
    %v647 = vmul.f32 %v646, 0.6931472
    %v648 = vmul.f32 -0.5, %v644
    %v649 = vadd.f32 %v648, 1.0
    %v650 = vmul.f32 %v649, %v644
    %v651 = vand.u32 2147483647, %v644
    %vm652 = vcmp.lt.f32.partialorder %v651, 0.0004427343
    %v653 = vsel %vm652, %v650, %v647
    %v654 = vsel %vm641, %v638, %v653
    %v655 = vtanh.pop %v654
    %v656 = vmul.f32 %v638, %v655
    %v658 = vlaneseq
    %v659 = vshrl.u32 %v658, 7
    %v660 = vsub.s32 0, %v659
    %v661 = vrot.slane %v560, %v660
    %v664 = vsel %vm567, %v656, 0
    %666 = vmatprep.subr.mxu0 0.0
    %667 = vmatpush1.msra.mxu0 %v556
    %668 = vmatprep.subr.mxu0 0.0
    %669 = vmatpush1.msra.mxu0 %v557
    %670 = vmatprep.subr.mxu0 0.0
    %671 = vmatpush1.msra.mxu0 %v558
    %672 = vmatprep.subr.mxu0 0.0
    %673 = vmatpush1.msra.mxu0 %v559
    %674 = vmatprep.subr.mxu0 0.0
    %675 = vmatpush1.msra.mxu0 0.0
    %676 = vmatprep.subr.mxu0 0.0
    %677 = vmatpush1.msra.mxu0 0.0
    %678 = vmatprep.subr.mxu0 0.0
    %679 = vmatpush1.msra.mxu0 0.0
    %680 = vmatprep.subr.mxu0 0.0
    %681 = vmatpush1.msra.mxu0 0.0
    %682 = vmatprep.subr.mxu0 0.0
    %683 = vmatpush1.msra.mxu0 0.0
    %684 = vmatprep.subr.mxu0 0.0
    %685 = vmatpush1.msra.mxu0 0.0
    %686 = vmatprep.subr.mxu0 0.0
    %687 = vmatpush1.msra.mxu0 0.0
    %688 = vmatprep.subr.mxu0 0.0
    %689 = vmatpush1.msra.mxu0 0.0
    %690 = vmatprep.subr.mxu0 0.0
    %691 = vmatpush1.msra.mxu0 0.0
    %692 = vmatprep.subr.mxu0 0.0
    %693 = vmatpush1.msra.mxu0 0.0
    %694 = vmatprep.subr.mxu0 0.0
    %695 = vmatpush1.msra.mxu0 0.0
    %696 = vmatprep.subr.mxu0 0.0
    %697 = vmatpush1.msra.mxu0 0.0
    %698 = vmatprep.subr.mxu0 0.0
    %699 = vmatpush1.msra.mxu0 0.0
    %700 = vmatprep.subr.mxu0 0.0
    %701 = vmatpush1.msra.mxu0 0.0
    %702 = vmatprep.subr.mxu0 0.0
    %703 = vmatpush1.msra.mxu0 0.0
    %704 = vmatprep.subr.mxu0 0.0
    %705 = vmatpush1.msra.mxu0 0.0
    %706 = vmatprep.subr.mxu0 0.0
    %707 = vmatpush1.msra.mxu0 0.0
    %708 = vmatprep.subr.mxu0 0.0
    %709 = vmatpush1.msra.mxu0 0.0
    %710 = vmatprep.subr.mxu0 0.0
    %711 = vmatpush1.msra.mxu0 0.0
    %712 = vmatprep.subr.mxu0 0.0
    %713 = vmatpush1.msra.mxu0 0.0
    %714 = vmatprep.subr.mxu0 0.0
    %715 = vmatpush1.msra.mxu0 0.0
    %716 = vmatprep.subr.mxu0 0.0
    %717 = vmatpush1.msra.mxu0 0.0
    %718 = vmatprep.subr.mxu0 0.0
    %719 = vmatpush1.msra.mxu0 0.0
    %720 = vmatprep.subr.mxu0 0.0
    %721 = vmatpush1.msra.mxu0 0.0
    %722 = vmatprep.subr.mxu0 0.0
    %723 = vmatpush1.msra.mxu0 0.0
    %724 = vmatprep.subr.mxu0 0.0
    %725 = vmatpush1.msra.mxu0 0.0
    %726 = vmatprep.subr.mxu0 0.0
    %727 = vmatpush1.msra.mxu0 0.0
    %728 = vmatprep.subr.mxu0 0.0
    %729 = vmatpush1.msra.mxu0 0.0
    %730 = vmatprep.mubr.f32.mxu0 0.0
    %731 = vmatmul.mubr.f32.gmra.mrb[0].mxu0 %v664
    %v732 = vpop.f32.mrb[0].mxu0
    %v733 = vadd.f32 %v661, %v732
    %v734 = vpop.f32.mrb[0].mxu0
    %735 = vdwg.mxu0
    %vm736 = vcmp.gt.f32.partialorder %v733, 20.0
    %v737 = vmin.f32 %v733, 20.0
    %v738 = vmul.f32 %v737, 1.442695
    %v739 = vpow.pop %v738
    %v740 = vadd.f32 %v739, 1.0
    %v741 = vlog2.pop %v740
    %v742 = vmul.f32 %v741, 0.6931472
    %v743 = vmul.f32 -0.5, %v739
    %v744 = vadd.f32 %v743, 1.0
    %v745 = vmul.f32 %v744, %v739
    %v746 = vand.u32 2147483647, %v739
    %vm747 = vcmp.lt.f32.partialorder %v746, 0.0004427343
    %v748 = vsel %vm747, %v745, %v742
    %v749 = vsel %vm736, %v733, %v748
    %v750 = vtanh.pop %v749
    %v751 = vmul.f32 %v733, %v750
    %v753 = vlaneseq
    %v754 = vshrl.u32 %v753, 7
    %v755 = vsub.s32 0, %v754
    %v756 = vrot.slane %v565, %v755
    %v759 = vsel %vm567, %v751, 0
    %761 = vmatprep.subr.mxu0 0.0
    %762 = vmatpush1.msra.mxu0 %v561
    %763 = vmatprep.subr.mxu0 0.0
    %764 = vmatpush1.msra.mxu0 %v562
    %765 = vmatprep.subr.mxu0 0.0
    %766 = vmatpush1.msra.mxu0 %v563
    %767 = vmatprep.subr.mxu0 0.0
    %768 = vmatpush1.msra.mxu0 %v564
    %769 = vmatprep.subr.mxu0 0.0
    %770 = vmatpush1.msra.mxu0 0.0
    %771 = vmatprep.subr.mxu0 0.0
    %772 = vmatpush1.msra.mxu0 0.0
    %773 = vmatprep.subr.mxu0 0.0
    %774 = vmatpush1.msra.mxu0 0.0
    %775 = vmatprep.subr.mxu0 0.0
    %776 = vmatpush1.msra.mxu0 0.0
    %777 = vmatprep.subr.mxu0 0.0
    %778 = vmatpush1.msra.mxu0 0.0
    %779 = vmatprep.subr.mxu0 0.0
    %780 = vmatpush1.msra.mxu0 0.0
    %781 = vmatprep.subr.mxu0 0.0
    %782 = vmatpush1.msra.mxu0 0.0
    %783 = vmatprep.subr.mxu0 0.0
    %784 = vmatpush1.msra.mxu0 0.0
    %785 = vmatprep.subr.mxu0 0.0
    %786 = vmatpush1.msra.mxu0 0.0
    %787 = vmatprep.subr.mxu0 0.0
    %788 = vmatpush1.msra.mxu0 0.0
    %789 = vmatprep.subr.mxu0 0.0
    %790 = vmatpush1.msra.mxu0 0.0
    %791 = vmatprep.subr.mxu0 0.0
    %792 = vmatpush1.msra.mxu0 0.0
    %793 = vmatprep.subr.mxu0 0.0
    %794 = vmatpush1.msra.mxu0 0.0
    %795 = vmatprep.subr.mxu0 0.0
    %796 = vmatpush1.msra.mxu0 0.0
    %797 = vmatprep.subr.mxu0 0.0
    %798 = vmatpush1.msra.mxu0 0.0
    %799 = vmatprep.subr.mxu0 0.0
    %800 = vmatpush1.msra.mxu0 0.0
    %801 = vmatprep.subr.mxu0 0.0
    %802 = vmatpush1.msra.mxu0 0.0
    %803 = vmatprep.subr.mxu0 0.0
    %804 = vmatpush1.msra.mxu0 0.0
    %805 = vmatprep.subr.mxu0 0.0
    %806 = vmatpush1.msra.mxu0 0.0
    %807 = vmatprep.subr.mxu0 0.0
    %808 = vmatpush1.msra.mxu0 0.0
    %809 = vmatprep.subr.mxu0 0.0
    %810 = vmatpush1.msra.mxu0 0.0
    %811 = vmatprep.subr.mxu0 0.0
    %812 = vmatpush1.msra.mxu0 0.0
    %813 = vmatprep.subr.mxu0 0.0
    %814 = vmatpush1.msra.mxu0 0.0
    %815 = vmatprep.subr.mxu0 0.0
    %816 = vmatpush1.msra.mxu0 0.0
    %817 = vmatprep.subr.mxu0 0.0
    %818 = vmatpush1.msra.mxu0 0.0
    %819 = vmatprep.subr.mxu0 0.0
    %820 = vmatpush1.msra.mxu0 0.0
    %821 = vmatprep.subr.mxu0 0.0
    %822 = vmatpush1.msra.mxu0 0.0
    %823 = vmatprep.subr.mxu0 0.0
    %824 = vmatpush1.msra.mxu0 0.0
    %825 = vmatprep.mubr.f32.mxu0 0.0
    %826 = vmatmul.mubr.f32.gmra.mrb[0].mxu0 %v759
    %v827 = vpop.f32.mrb[0].mxu0
    %v828 = vadd.f32 %v756, %v827
    %v829 = vpop.f32.mrb[0].mxu0
    %830 = vdwg.mxu0
    %v831 = vmul.f32 %v566, 406.23676
    %v832 = vmul.f32 %v828, 406.23553
    %v833 = vsub.f32 %v831, %v832
    %v834 = vmax.f32 %v833, -1.0
    %v835 = vmin.f32 %v834, 1.0
    %v836 = vmul.f32 %v835, 0.077766344
    %v837 = vmul.f32 %v566, 0.031431142
    %v838 = vadd.f32 %v836, %v837
    %v839 = vld [vmem:[%s3] sm:$0x3]
    %v840 = vmul.f32 %v839, 0.99647
    %v841 = vadd.f32 %v838, %v840
    %vm842 = vcmask 254976
    %843 = vst.msk [vmem:[#allocation14] sm:$0x3] %vm842, %v841
    %v845 = vsel %vm567, %v841, 0
    %847 = vmatprep.subr.mxu0 0.0
    %848 = vmatpush1.msra.mxu0 %v552
    %849 = vmatprep.subr.mxu0 0.0
    %850 = vmatpush1.msra.mxu0 %v553
    %851 = vmatprep.subr.mxu0 0.0
    %852 = vmatpush1.msra.mxu0 %v554
    %853 = vmatprep.subr.mxu0 0.0
    %854 = vmatpush1.msra.mxu0 %v555
    %855 = vmatprep.subr.mxu0 0.0
    %856 = vmatpush1.msra.mxu0 0.0
    %857 = vmatprep.subr.mxu0 0.0
    %858 = vmatpush1.msra.mxu0 0.0
    %859 = vmatprep.subr.mxu0 0.0
    %860 = vmatpush1.msra.mxu0 0.0
    %861 = vmatprep.subr.mxu0 0.0
    %862 = vmatpush1.msra.mxu0 0.0
    %863 = vmatprep.subr.mxu0 0.0
    %864 = vmatpush1.msra.mxu0 0.0
    %865 = vmatprep.subr.mxu0 0.0
    %866 = vmatpush1.msra.mxu0 0.0
    %867 = vmatprep.subr.mxu0 0.0
    %868 = vmatpush1.msra.mxu0 0.0
    %869 = vmatprep.subr.mxu0 0.0
    %870 = vmatpush1.msra.mxu0 0.0
    %871 = vmatprep.subr.mxu0 0.0
    %872 = vmatpush1.msra.mxu0 0.0
    %873 = vmatprep.subr.mxu0 0.0
    %874 = vmatpush1.msra.mxu0 0.0
    %875 = vmatprep.subr.mxu0 0.0
    %876 = vmatpush1.msra.mxu0 0.0
    %877 = vmatprep.subr.mxu0 0.0
    %878 = vmatpush1.msra.mxu0 0.0
    %879 = vmatprep.subr.mxu0 0.0
    %880 = vmatpush1.msra.mxu0 0.0
    %881 = vmatprep.subr.mxu0 0.0
    %882 = vmatpush1.msra.mxu0 0.0
    %883 = vmatprep.subr.mxu0 0.0
    %884 = vmatpush1.msra.mxu0 0.0
    %885 = vmatprep.subr.mxu0 0.0
    %886 = vmatpush1.msra.mxu0 0.0
    %887 = vmatprep.subr.mxu0 0.0
    %888 = vmatpush1.msra.mxu0 0.0
    %889 = vmatprep.subr.mxu0 0.0
    %890 = vmatpush1.msra.mxu0 0.0
    %891 = vmatprep.subr.mxu0 0.0
    %892 = vmatpush1.msra.mxu0 0.0
    %893 = vmatprep.subr.mxu0 0.0
    %894 = vmatpush1.msra.mxu0 0.0
    %895 = vmatprep.subr.mxu0 0.0
    %896 = vmatpush1.msra.mxu0 0.0
    %897 = vmatprep.subr.mxu0 0.0
    %898 = vmatpush1.msra.mxu0 0.0
    %899 = vmatprep.subr.mxu0 0.0
    %900 = vmatpush1.msra.mxu0 0.0
    %901 = vmatprep.subr.mxu0 0.0
    %902 = vmatpush1.msra.mxu0 0.0
    %903 = vmatprep.subr.mxu0 0.0
    %904 = vmatpush1.msra.mxu0 0.0
    %905 = vmatprep.subr.mxu0 0.0
    %906 = vmatpush1.msra.mxu0 0.0
    %907 = vmatprep.subr.mxu0 0.0
    %908 = vmatpush1.msra.mxu0 0.0
    %909 = vmatprep.subr.mxu0 0.0
    %910 = vmatpush1.msra.mxu0 0.0
    %911 = vmatprep.mubr.f32.mxu0 0.0
    %912 = vmatmul.mubr.f32.gmra.mrb[0].mxu0 %v845
    %v913 = vpop.f32.mrb[0].mxu0
    %v914 = vadd.f32 %v533, %v913
    %v915 = vpop.f32.mrb[0].mxu0
    %916 = vdwg.mxu0
    %vm917 = vcmp.gt.f32.partialorder %v914, 20.0
    %v918 = vmin.f32 %v914, 20.0
    %v919 = vmul.f32 %v918, 1.442695
    %v920 = vpow.pop %v919
    %v921 = vadd.f32 %v920, 1.0
    %v922 = vlog2.pop %v921
    %v923 = vmul.f32 %v922, 0.6931472
    %v924 = vmul.f32 -0.5, %v920
    %v925 = vadd.f32 %v924, 1.0
    %v926 = vmul.f32 %v925, %v920
    %v927 = vand.u32 2147483647, %v920
    %vm928 = vcmp.lt.f32.partialorder %v927, 0.0004427343
    %v929 = vsel %vm928, %v926, %v923
    %v930 = vsel %vm917, %v914, %v929
    %v931 = vtanh.pop %v930
    %v932 = vmul.f32 %v914, %v931
    %v934 = vsel %vm567, %v932, 0
    %936 = vmatprep.subr.mxu0 0.0
    %937 = vmatpush1.msra.mxu0 %v556
    %938 = vmatprep.subr.mxu0 0.0
    %939 = vmatpush1.msra.mxu0 %v557
    %940 = vmatprep.subr.mxu0 0.0
    %941 = vmatpush1.msra.mxu0 %v558
    %942 = vmatprep.subr.mxu0 0.0
    %943 = vmatpush1.msra.mxu0 %v559
    %944 = vmatprep.subr.mxu0 0.0
    %945 = vmatpush1.msra.mxu0 0.0
    %946 = vmatprep.subr.mxu0 0.0
    %947 = vmatpush1.msra.mxu0 0.0
    %948 = vmatprep.subr.mxu0 0.0
    %949 = vmatpush1.msra.mxu0 0.0
    %950 = vmatprep.subr.mxu0 0.0
    %951 = vmatpush1.msra.mxu0 0.0
    %952 = vmatprep.subr.mxu0 0.0
    %953 = vmatpush1.msra.mxu0 0.0
    %954 = vmatprep.subr.mxu0 0.0
    %955 = vmatpush1.msra.mxu0 0.0
    %956 = vmatprep.subr.mxu0 0.0
    %957 = vmatpush1.msra.mxu0 0.0
    %958 = vmatprep.subr.mxu0 0.0
    %959 = vmatpush1.msra.mxu0 0.0
    %960 = vmatprep.subr.mxu0 0.0
    %961 = vmatpush1.msra.mxu0 0.0
    %962 = vmatprep.subr.mxu0 0.0
    %963 = vmatpush1.msra.mxu0 0.0
    %964 = vmatprep.subr.mxu0 0.0
    %965 = vmatpush1.msra.mxu0 0.0
    %966 = vmatprep.subr.mxu0 0.0
    %967 = vmatpush1.msra.mxu0 0.0
    %968 = vmatprep.subr.mxu0 0.0
    %969 = vmatpush1.msra.mxu0 0.0
    %970 = vmatprep.subr.mxu0 0.0
    %971 = vmatpush1.msra.mxu0 0.0
    %972 = vmatprep.subr.mxu0 0.0
    %973 = vmatpush1.msra.mxu0 0.0
    %974 = vmatprep.subr.mxu0 0.0
    %975 = vmatpush1.msra.mxu0 0.0
    %976 = vmatprep.subr.mxu0 0.0
    %977 = vmatpush1.msra.mxu0 0.0
    %978 = vmatprep.subr.mxu0 0.0
    %979 = vmatpush1.msra.mxu0 0.0
    %980 = vmatprep.subr.mxu0 0.0
    %981 = vmatpush1.msra.mxu0 0.0
    %982 = vmatprep.subr.mxu0 0.0
    %983 = vmatpush1.msra.mxu0 0.0
    %984 = vmatprep.subr.mxu0 0.0
    %985 = vmatpush1.msra.mxu0 0.0
    %986 = vmatprep.subr.mxu0 0.0
    %987 = vmatpush1.msra.mxu0 0.0
    %988 = vmatprep.subr.mxu0 0.0
    %989 = vmatpush1.msra.mxu0 0.0
    %990 = vmatprep.subr.mxu0 0.0
    %991 = vmatpush1.msra.mxu0 0.0
    %992 = vmatprep.subr.mxu0 0.0
    %993 = vmatpush1.msra.mxu0 0.0
    %994 = vmatprep.subr.mxu0 0.0
    %995 = vmatpush1.msra.mxu0 0.0
    %996 = vmatprep.subr.mxu0 0.0
    %997 = vmatpush1.msra.mxu0 0.0
    %998 = vmatprep.subr.mxu0 0.0
    %999 = vmatpush1.msra.mxu0 0.0
    %1000 = vmatprep.mubr.f32.mxu0 0.0
    %1001 = vmatmul.mubr.f32.gmra.mrb[0].mxu0 %v934
    %v1002 = vpop.f32.mrb[0].mxu0
    %v1003 = vadd.f32 %v661, %v1002
    %v1004 = vpop.f32.mrb[0].mxu0
    %1005 = vdwg.mxu0
    %vm1006 = vcmp.gt.f32.partialorder %v1003, 20.0
    %v1007 = vmin.f32 %v1003, 20.0
    %v1008 = vmul.f32 %v1007, 1.442695
    %v1009 = vpow.pop %v1008
    %v1010 = vadd.f32 %v1009, 1.0
    %v1011 = vlog2.pop %v1010
    %v1012 = vmul.f32 %v1011, 0.6931472
    %v1013 = vmul.f32 -0.5, %v1009
    %v1014 = vadd.f32 %v1013, 1.0
    %v1015 = vmul.f32 %v1014, %v1009
    %v1016 = vand.u32 2147483647, %v1009
    %vm1017 = vcmp.lt.f32.partialorder %v1016, 0.0004427343
    %v1018 = vsel %vm1017, %v1015, %v1012
    %v1019 = vsel %vm1006, %v1003, %v1018
    %v1020 = vtanh.pop %v1019
    %v1021 = vmul.f32 %v1003, %v1020
    %v1023 = vsel %vm567, %v1021, 0
    %1025 = vmatprep.subr.mxu0 0.0
    %1026 = vmatpush1.msra.mxu0 %v561
    %1027 = vmatprep.subr.mxu0 0.0
    %1028 = vmatpush1.msra.mxu0 %v562
    %1029 = vmatprep.subr.mxu0 0.0
    %1030 = vmatpush1.msra.mxu0 %v563
    %1031 = vmatprep.subr.mxu0 0.0
    %1032 = vmatpush1.msra.mxu0 %v564
    %1033 = vmatprep.subr.mxu0 0.0
    %1034 = vmatpush1.msra.mxu0 0.0
    %1035 = vmatprep.subr.mxu0 0.0
    %1036 = vmatpush1.msra.mxu0 0.0
    %1037 = vmatprep.subr.mxu0 0.0
    %1038 = vmatpush1.msra.mxu0 0.0
    %1039 = vmatprep.subr.mxu0 0.0
    %1040 = vmatpush1.msra.mxu0 0.0
    %1041 = vmatprep.subr.mxu0 0.0
    %1042 = vmatpush1.msra.mxu0 0.0
    %1043 = vmatprep.subr.mxu0 0.0
    %1044 = vmatpush1.msra.mxu0 0.0
    %1045 = vmatprep.subr.mxu0 0.0
    %1046 = vmatpush1.msra.mxu0 0.0
    %1047 = vmatprep.subr.mxu0 0.0
    %1048 = vmatpush1.msra.mxu0 0.0
    %1049 = vmatprep.subr.mxu0 0.0
    %1050 = vmatpush1.msra.mxu0 0.0
    %1051 = vmatprep.subr.mxu0 0.0
    %1052 = vmatpush1.msra.mxu0 0.0
    %1053 = vmatprep.subr.mxu0 0.0
    %1054 = vmatpush1.msra.mxu0 0.0
    %1055 = vmatprep.subr.mxu0 0.0
    %1056 = vmatpush1.msra.mxu0 0.0
    %1057 = vmatprep.subr.mxu0 0.0
    %1058 = vmatpush1.msra.mxu0 0.0
    %1059 = vmatprep.subr.mxu0 0.0
    %1060 = vmatpush1.msra.mxu0 0.0
    %1061 = vmatprep.subr.mxu0 0.0
    %1062 = vmatpush1.msra.mxu0 0.0
    %1063 = vmatprep.subr.mxu0 0.0
    %1064 = vmatpush1.msra.mxu0 0.0
    %1065 = vmatprep.subr.mxu0 0.0
    %1066 = vmatpush1.msra.mxu0 0.0
    %1067 = vmatprep.subr.mxu0 0.0
    %1068 = vmatpush1.msra.mxu0 0.0
    %1069 = vmatprep.subr.mxu0 0.0
    %1070 = vmatpush1.msra.mxu0 0.0
    %1071 = vmatprep.subr.mxu0 0.0
    %1072 = vmatpush1.msra.mxu0 0.0
    %1073 = vmatprep.subr.mxu0 0.0
    %1074 = vmatpush1.msra.mxu0 0.0
    %1075 = vmatprep.subr.mxu0 0.0
    %1076 = vmatpush1.msra.mxu0 0.0
    %1077 = vmatprep.subr.mxu0 0.0
    %1078 = vmatpush1.msra.mxu0 0.0
    %1079 = vmatprep.subr.mxu0 0.0
    %1080 = vmatpush1.msra.mxu0 0.0
    %1081 = vmatprep.subr.mxu0 0.0
    %1082 = vmatpush1.msra.mxu0 0.0
    %1083 = vmatprep.subr.mxu0 0.0
    %1084 = vmatpush1.msra.mxu0 0.0
    %1085 = vmatprep.subr.mxu0 0.0
    %1086 = vmatpush1.msra.mxu0 0.0
    %1087 = vmatprep.subr.mxu0 0.0
    %1088 = vmatpush1.msra.mxu0 0.0
    %1089 = vmatprep.mubr.f32.mxu0 0.0
    %1090 = vmatmul.mubr.f32.gmra.mrb[0].mxu0 %v1023
    %v1091 = vpop.f32.mrb[0].mxu0
    %v1092 = vadd.f32 %v756, %v1091
    %v1093 = vpop.f32.mrb[0].mxu0
    %1094 = vdwg.mxu0
    %v1095 = vmul.f32 %v841, 12.8462515
    %v1096 = vmul.f32 %v1092, 12.807271
    %v1097 = vsub.f32 %v1095, %v1096
    %v1098 = vmax.f32 %v1097, -1.0
    %v1099 = vmin.f32 %v1098, 1.0
    %v1100 = vmul.f32 %v1099, 0.116883054
    %v1101 = vmul.f32 %v841, 0.492423
    %v1102 = vadd.f32 %v1100, %v1101
    %s1103 = scalar_lea.vmem %s3, 2
    %v1104 = vld [vmem:[%s1103] sm:$0x3]
    %v1105 = vmul.f32 %v1104, 0.8572615
    %v1106 = vadd.f32 %v1102, %v1105
    %s1107 = scalar_lea.vmem [#allocation14], 2
    %1108 = vst.msk [vmem:[%s1107] sm:$0x3] %vm842, %v1106
    %v1110 = vsel %vm567, %v1106, 0
    %1112 = vmatprep.subr.mxu0 0.0
    %1113 = vmatpush1.msra.mxu0 %v552
    %1114 = vmatprep.subr.mxu0 0.0
    %1115 = vmatpush1.msra.mxu0 %v553
    %1116 = vmatprep.subr.mxu0 0.0
    %1117 = vmatpush1.msra.mxu0 %v554
    %1118 = vmatprep.subr.mxu0 0.0
    %1119 = vmatpush1.msra.mxu0 %v555
    %1120 = vmatprep.subr.mxu0 0.0
    %1121 = vmatpush1.msra.mxu0 0.0
    %1122 = vmatprep.subr.mxu0 0.0
    %1123 = vmatpush1.msra.mxu0 0.0
    %1124 = vmatprep.subr.mxu0 0.0
    %1125 = vmatpush1.msra.mxu0 0.0
    %1126 = vmatprep.subr.mxu0 0.0
    %1127 = vmatpush1.msra.mxu0 0.0
    %1128 = vmatprep.subr.mxu0 0.0
    %1129 = vmatpush1.msra.mxu0 0.0
    %1130 = vmatprep.subr.mxu0 0.0
    %1131 = vmatpush1.msra.mxu0 0.0
    %1132 = vmatprep.subr.mxu0 0.0
    %1133 = vmatpush1.msra.mxu0 0.0
    %1134 = vmatprep.subr.mxu0 0.0
    %1135 = vmatpush1.msra.mxu0 0.0
    %1136 = vmatprep.subr.mxu0 0.0
    %1137 = vmatpush1.msra.mxu0 0.0
    %1138 = vmatprep.subr.mxu0 0.0
    %1139 = vmatpush1.msra.mxu0 0.0
    %1140 = vmatprep.subr.mxu0 0.0
    %1141 = vmatpush1.msra.mxu0 0.0
    %1142 = vmatprep.subr.mxu0 0.0
    %1143 = vmatpush1.msra.mxu0 0.0
    %1144 = vmatprep.subr.mxu0 0.0
    %1145 = vmatpush1.msra.mxu0 0.0
    %1146 = vmatprep.subr.mxu0 0.0
    %1147 = vmatpush1.msra.mxu0 0.0
    %1148 = vmatprep.subr.mxu0 0.0
    %1149 = vmatpush1.msra.mxu0 0.0
    %1150 = vmatprep.subr.mxu0 0.0
    %1151 = vmatpush1.msra.mxu0 0.0
    %1152 = vmatprep.subr.mxu0 0.0
    %1153 = vmatpush1.msra.mxu0 0.0
    %1154 = vmatprep.subr.mxu0 0.0
    %1155 = vmatpush1.msra.mxu0 0.0
    %1156 = vmatprep.subr.mxu0 0.0
    %1157 = vmatpush1.msra.mxu0 0.0
    %1158 = vmatprep.subr.mxu0 0.0
    %1159 = vmatpush1.msra.mxu0 0.0
    %1160 = vmatprep.subr.mxu0 0.0
    %1161 = vmatpush1.msra.mxu0 0.0
    %1162 = vmatprep.subr.mxu0 0.0
    %1163 = vmatpush1.msra.mxu0 0.0
    %1164 = vmatprep.subr.mxu0 0.0
    %1165 = vmatpush1.msra.mxu0 0.0
    %1166 = vmatprep.subr.mxu0 0.0
    %1167 = vmatpush1.msra.mxu0 0.0
    %1168 = vmatprep.subr.mxu0 0.0
    %1169 = vmatpush1.msra.mxu0 0.0
    %1170 = vmatprep.subr.mxu0 0.0
    %1171 = vmatpush1.msra.mxu0 0.0
    %1172 = vmatprep.subr.mxu0 0.0
    %1173 = vmatpush1.msra.mxu0 0.0
    %1174 = vmatprep.subr.mxu0 0.0
    %1175 = vmatpush1.msra.mxu0 0.0
    %1176 = vmatprep.mubr.f32.mxu0 0.0
    %1177 = vmatmul.mubr.f32.gmra.mrb[0].mxu0 %v1110
    %v1178 = vpop.f32.mrb[0].mxu0
    %v1179 = vadd.f32 %v534, %v1178
    %v1180 = vpop.f32.mrb[0].mxu0
    %1181 = vdwg.mxu0
    %vm1182 = vcmp.gt.f32.partialorder %v1179, 20.0
    %v1183 = vmin.f32 %v1179, 20.0
    %v1184 = vmul.f32 %v1183, 1.442695
    %v1185 = vpow.pop %v1184
    %v1186 = vadd.f32 %v1185, 1.0
    %v1187 = vlog2.pop %v1186
    %v1188 = vmul.f32 %v1187, 0.6931472
    %v1189 = vmul.f32 -0.5, %v1185
    %v1190 = vadd.f32 %v1189, 1.0
    %v1191 = vmul.f32 %v1190, %v1185
    %v1192 = vand.u32 2147483647, %v1185
    %vm1193 = vcmp.lt.f32.partialorder %v1192, 0.0004427343
    %v1194 = vsel %vm1193, %v1191, %v1188
    %v1195 = vsel %vm1182, %v1179, %v1194
    %v1196 = vtanh.pop %v1195
    %v1197 = vmul.f32 %v1179, %v1196
    %v1199 = vsel %vm567, %v1197, 0
    %1201 = vmatprep.subr.mxu0 0.0
    %1202 = vmatpush1.msra.mxu0 %v556
    %1203 = vmatprep.subr.mxu0 0.0
    %1204 = vmatpush1.msra.mxu0 %v557
    %1205 = vmatprep.subr.mxu0 0.0
    %1206 = vmatpush1.msra.mxu0 %v558
    %1207 = vmatprep.subr.mxu0 0.0
    %1208 = vmatpush1.msra.mxu0 %v559
    %1209 = vmatprep.subr.mxu0 0.0
    %1210 = vmatpush1.msra.mxu0 0.0
    %1211 = vmatprep.subr.mxu0 0.0
    %1212 = vmatpush1.msra.mxu0 0.0
    %1213 = vmatprep.subr.mxu0 0.0
    %1214 = vmatpush1.msra.mxu0 0.0
    %1215 = vmatprep.subr.mxu0 0.0
    %1216 = vmatpush1.msra.mxu0 0.0
    %1217 = vmatprep.subr.mxu0 0.0
    %1218 = vmatpush1.msra.mxu0 0.0
    %1219 = vmatprep.subr.mxu0 0.0
    %1220 = vmatpush1.msra.mxu0 0.0
    %1221 = vmatprep.subr.mxu0 0.0
    %1222 = vmatpush1.msra.mxu0 0.0
    %1223 = vmatprep.subr.mxu0 0.0
    %1224 = vmatpush1.msra.mxu0 0.0
    %1225 = vmatprep.subr.mxu0 0.0
    %1226 = vmatpush1.msra.mxu0 0.0
    %1227 = vmatprep.subr.mxu0 0.0
    %1228 = vmatpush1.msra.mxu0 0.0
    %1229 = vmatprep.subr.mxu0 0.0
    %1230 = vmatpush1.msra.mxu0 0.0
    %1231 = vmatprep.subr.mxu0 0.0
    %1232 = vmatpush1.msra.mxu0 0.0
    %1233 = vmatprep.subr.mxu0 0.0
    %1234 = vmatpush1.msra.mxu0 0.0
    %1235 = vmatprep.subr.mxu0 0.0
    %1236 = vmatpush1.msra.mxu0 0.0
    %1237 = vmatprep.subr.mxu0 0.0
    %1238 = vmatpush1.msra.mxu0 0.0
    %1239 = vmatprep.subr.mxu0 0.0
    %1240 = vmatpush1.msra.mxu0 0.0
    %1241 = vmatprep.subr.mxu0 0.0
    %1242 = vmatpush1.msra.mxu0 0.0
    %1243 = vmatprep.subr.mxu0 0.0
    %1244 = vmatpush1.msra.mxu0 0.0
    %1245 = vmatprep.subr.mxu0 0.0
    %1246 = vmatpush1.msra.mxu0 0.0
    %1247 = vmatprep.subr.mxu0 0.0
    %1248 = vmatpush1.msra.mxu0 0.0
    %1249 = vmatprep.subr.mxu0 0.0
    %1250 = vmatpush1.msra.mxu0 0.0
    %1251 = vmatprep.subr.mxu0 0.0
    %1252 = vmatpush1.msra.mxu0 0.0
    %1253 = vmatprep.subr.mxu0 0.0
    %1254 = vmatpush1.msra.mxu0 0.0
    %1255 = vmatprep.subr.mxu0 0.0
    %1256 = vmatpush1.msra.mxu0 0.0
    %1257 = vmatprep.subr.mxu0 0.0
    %1258 = vmatpush1.msra.mxu0 0.0
    %1259 = vmatprep.subr.mxu0 0.0
    %1260 = vmatpush1.msra.mxu0 0.0
    %1261 = vmatprep.subr.mxu0 0.0
    %1262 = vmatpush1.msra.mxu0 0.0
    %1263 = vmatprep.subr.mxu0 0.0
    %1264 = vmatpush1.msra.mxu0 0.0
    %1265 = vmatprep.mubr.f32.mxu0 0.0
    %1266 = vmatmul.mubr.f32.gmra.mrb[0].mxu0 %v1199
    %v1267 = vpop.f32.mrb[0].mxu0
    %v1268 = vadd.f32 %v661, %v1267
    %v1269 = vpop.f32.mrb[0].mxu0
    %1270 = vdwg.mxu0
    %vm1271 = vcmp.gt.f32.partialorder %v1268, 20.0
    %v1272 = vmin.f32 %v1268, 20.0
    %v1273 = vmul.f32 %v1272, 1.442695
    %v1274 = vpow.pop %v1273
    %v1275 = vadd.f32 %v1274, 1.0
    %v1276 = vlog2.pop %v1275
    %v1277 = vmul.f32 %v1276, 0.6931472
    %v1278 = vmul.f32 -0.5, %v1274
    %v1279 = vadd.f32 %v1278, 1.0
    %v1280 = vmul.f32 %v1279, %v1274
    %v1281 = vand.u32 2147483647, %v1274
    %vm1282 = vcmp.lt.f32.partialorder %v1281, 0.0004427343
    %v1283 = vsel %vm1282, %v1280, %v1277
    %v1284 = vsel %vm1271, %v1268, %v1283
    %v1285 = vtanh.pop %v1284
    %v1286 = vmul.f32 %v1268, %v1285
    %v1288 = vsel %vm567, %v1286, 0
    %1290 = vmatprep.subr.mxu0 0.0
    %1291 = vmatpush1.msra.mxu0 %v561
    %1292 = vmatprep.subr.mxu0 0.0
    %1293 = vmatpush1.msra.mxu0 %v562
    %1294 = vmatprep.subr.mxu0 0.0
    %1295 = vmatpush1.msra.mxu0 %v563
    %1296 = vmatprep.subr.mxu0 0.0
    %1297 = vmatpush1.msra.mxu0 %v564
    %1298 = vmatprep.subr.mxu0 0.0
    %1299 = vmatpush1.msra.mxu0 0.0
    %1300 = vmatprep.subr.mxu0 0.0
    %1301 = vmatpush1.msra.mxu0 0.0
    %1302 = vmatprep.subr.mxu0 0.0
    %1303 = vmatpush1.msra.mxu0 0.0
    %1304 = vmatprep.subr.mxu0 0.0
    %1305 = vmatpush1.msra.mxu0 0.0
    %1306 = vmatprep.subr.mxu0 0.0
    %1307 = vmatpush1.msra.mxu0 0.0
    %1308 = vmatprep.subr.mxu0 0.0
    %1309 = vmatpush1.msra.mxu0 0.0
    %1310 = vmatprep.subr.mxu0 0.0
    %1311 = vmatpush1.msra.mxu0 0.0
    %1312 = vmatprep.subr.mxu0 0.0
    %1313 = vmatpush1.msra.mxu0 0.0
    %1314 = vmatprep.subr.mxu0 0.0
    %1315 = vmatpush1.msra.mxu0 0.0
    %1316 = vmatprep.subr.mxu0 0.0
    %1317 = vmatpush1.msra.mxu0 0.0
    %1318 = vmatprep.subr.mxu0 0.0
    %1319 = vmatpush1.msra.mxu0 0.0
    %1320 = vmatprep.subr.mxu0 0.0
    %1321 = vmatpush1.msra.mxu0 0.0
    %1322 = vmatprep.subr.mxu0 0.0
    %1323 = vmatpush1.msra.mxu0 0.0
    %1324 = vmatprep.subr.mxu0 0.0
    %1325 = vmatpush1.msra.mxu0 0.0
    %1326 = vmatprep.subr.mxu0 0.0
    %1327 = vmatpush1.msra.mxu0 0.0
    %1328 = vmatprep.subr.mxu0 0.0
    %1329 = vmatpush1.msra.mxu0 0.0
    %1330 = vmatprep.subr.mxu0 0.0
    %1331 = vmatpush1.msra.mxu0 0.0
    %1332 = vmatprep.subr.mxu0 0.0
    %1333 = vmatpush1.msra.mxu0 0.0
    %1334 = vmatprep.subr.mxu0 0.0
    %1335 = vmatpush1.msra.mxu0 0.0
    %1336 = vmatprep.subr.mxu0 0.0
    %1337 = vmatpush1.msra.mxu0 0.0
    %1338 = vmatprep.subr.mxu0 0.0
    %1339 = vmatpush1.msra.mxu0 0.0
    %1340 = vmatprep.subr.mxu0 0.0
    %1341 = vmatpush1.msra.mxu0 0.0
    %1342 = vmatprep.subr.mxu0 0.0
    %1343 = vmatpush1.msra.mxu0 0.0
    %1344 = vmatprep.subr.mxu0 0.0
    %1345 = vmatpush1.msra.mxu0 0.0
    %1346 = vmatprep.subr.mxu0 0.0
    %1347 = vmatpush1.msra.mxu0 0.0
    %1348 = vmatprep.subr.mxu0 0.0
    %1349 = vmatpush1.msra.mxu0 0.0
    %1350 = vmatprep.subr.mxu0 0.0
    %1351 = vmatpush1.msra.mxu0 0.0
    %1352 = vmatprep.subr.mxu0 0.0
    %1353 = vmatpush1.msra.mxu0 0.0
    %1354 = vmatprep.mubr.f32.mxu0 0.0
    %1355 = vmatmul.mubr.f32.gmra.mrb[0].mxu0 %v1288
    %v1356 = vpop.f32.mrb[0].mxu0
    %v1357 = vadd.f32 %v756, %v1356
    %v1358 = vpop.f32.mrb[0].mxu0
    %1359 = vdwg.mxu0
    %v1360 = vmul.f32 %v1106, 6.4426727
    %v1361 = vmul.f32 %v1357, 6.364592
    %v1362 = vsub.f32 %v1360, %v1361
    %v1363 = vmax.f32 %v1362, -1.0
    %v1364 = vmin.f32 %v1363, 1.0
    %v1365 = vmul.f32 %v1364, 0.1307927
    %v1366 = vmul.f32 %v1106, 0.6497559
    %v1367 = vadd.f32 %v1365, %v1366
    %s1368 = scalar_lea.vmem %s3, 4
    %v1369 = vld [vmem:[%s1368] sm:$0x3]
    %v1370 = vmul.f32 %v1369, 0.7309782
    %v1371 = vadd.f32 %v1367, %v1370
    %s1372 = scalar_lea.vmem [#allocation14], 4
    %1373 = vst.msk [vmem:[%s1372] sm:$0x3] %vm842, %v1371
    %v1375 = vsel %vm567, %v1371, 0
    %1377 = vmatprep.subr.mxu0 0.0
    %1378 = vmatpush1.msra.mxu0 %v552
    %1379 = vmatprep.subr.mxu0 0.0
    %1380 = vmatpush1.msra.mxu0 %v553
    %1381 = vmatprep.subr.mxu0 0.0
    %1382 = vmatpush1.msra.mxu0 %v554
    %1383 = vmatprep.subr.mxu0 0.0
    %1384 = vmatpush1.msra.mxu0 %v555
    %1385 = vmatprep.subr.mxu0 0.0
    %1386 = vmatpush1.msra.mxu0 0.0
    %1387 = vmatprep.subr.mxu0 0.0
    %1388 = vmatpush1.msra.mxu0 0.0
    %1389 = vmatprep.subr.mxu0 0.0
    %1390 = vmatpush1.msra.mxu0 0.0
    %1391 = vmatprep.subr.mxu0 0.0
    %1392 = vmatpush1.msra.mxu0 0.0
    %1393 = vmatprep.subr.mxu0 0.0
    %1394 = vmatpush1.msra.mxu0 0.0
    %1395 = vmatprep.subr.mxu0 0.0
    %1396 = vmatpush1.msra.mxu0 0.0
    %1397 = vmatprep.subr.mxu0 0.0
    %1398 = vmatpush1.msra.mxu0 0.0
    %1399 = vmatprep.subr.mxu0 0.0
    %1400 = vmatpush1.msra.mxu0 0.0
    %1401 = vmatprep.subr.mxu0 0.0
    %1402 = vmatpush1.msra.mxu0 0.0
    %1403 = vmatprep.subr.mxu0 0.0
    %1404 = vmatpush1.msra.mxu0 0.0
    %1405 = vmatprep.subr.mxu0 0.0
    %1406 = vmatpush1.msra.mxu0 0.0
    %1407 = vmatprep.subr.mxu0 0.0
    %1408 = vmatpush1.msra.mxu0 0.0
    %1409 = vmatprep.subr.mxu0 0.0
    %1410 = vmatpush1.msra.mxu0 0.0
    %1411 = vmatprep.subr.mxu0 0.0
    %1412 = vmatpush1.msra.mxu0 0.0
    %1413 = vmatprep.subr.mxu0 0.0
    %1414 = vmatpush1.msra.mxu0 0.0
    %1415 = vmatprep.subr.mxu0 0.0
    %1416 = vmatpush1.msra.mxu0 0.0
    %1417 = vmatprep.subr.mxu0 0.0
    %1418 = vmatpush1.msra.mxu0 0.0
    %1419 = vmatprep.subr.mxu0 0.0
    %1420 = vmatpush1.msra.mxu0 0.0
    %1421 = vmatprep.subr.mxu0 0.0
    %1422 = vmatpush1.msra.mxu0 0.0
    %1423 = vmatprep.subr.mxu0 0.0
    %1424 = vmatpush1.msra.mxu0 0.0
    %1425 = vmatprep.subr.mxu0 0.0
    %1426 = vmatpush1.msra.mxu0 0.0
    %1427 = vmatprep.subr.mxu0 0.0
    %1428 = vmatpush1.msra.mxu0 0.0
    %1429 = vmatprep.subr.mxu0 0.0
    %1430 = vmatpush1.msra.mxu0 0.0
    %1431 = vmatprep.subr.mxu0 0.0
    %1432 = vmatpush1.msra.mxu0 0.0
    %1433 = vmatprep.subr.mxu0 0.0
    %1434 = vmatpush1.msra.mxu0 0.0
    %1435 = vmatprep.subr.mxu0 0.0
    %1436 = vmatpush1.msra.mxu0 0.0
    %1437 = vmatprep.subr.mxu0 0.0
    %1438 = vmatpush1.msra.mxu0 0.0
    %1439 = vmatprep.subr.mxu0 0.0
    %1440 = vmatpush1.msra.mxu0 0.0
    %1441 = vmatprep.mubr.f32.mxu0 0.0
    %1442 = vmatmul.mubr.f32.gmra.mrb[0].mxu0 %v1375
    %v1443 = vpop.f32.mrb[0].mxu0
    %v1444 = vadd.f32 %v535, %v1443
    %v1445 = vpop.f32.mrb[0].mxu0
    %1446 = vdwg.mxu0
    %vm1447 = vcmp.gt.f32.partialorder %v1444, 20.0
    %v1448 = vmin.f32 %v1444, 20.0
    %v1449 = vmul.f32 %v1448, 1.442695
    %v1450 = vpow.pop %v1449
    %v1451 = vadd.f32 %v1450, 1.0
    %v1452 = vlog2.pop %v1451
    %v1453 = vmul.f32 %v1452, 0.6931472
    %v1454 = vmul.f32 -0.5, %v1450
    %v1455 = vadd.f32 %v1454, 1.0
    %v1456 = vmul.f32 %v1455, %v1450
    %v1457 = vand.u32 2147483647, %v1450
    %vm1458 = vcmp.lt.f32.partialorder %v1457, 0.0004427343
    %v1459 = vsel %vm1458, %v1456, %v1453
    %v1460 = vsel %vm1447, %v1444, %v1459
    %v1461 = vtanh.pop %v1460
    %v1462 = vmul.f32 %v1444, %v1461
    %v1464 = vsel %vm567, %v1462, 0
    %1466 = vmatprep.subr.mxu0 0.0
    %1467 = vmatpush1.msra.mxu0 %v556
    %1468 = vmatprep.subr.mxu0 0.0
    %1469 = vmatpush1.msra.mxu0 %v557
    %1470 = vmatprep.subr.mxu0 0.0
    %1471 = vmatpush1.msra.mxu0 %v558
    %1472 = vmatprep.subr.mxu0 0.0
    %1473 = vmatpush1.msra.mxu0 %v559
    %1474 = vmatprep.subr.mxu0 0.0
    %1475 = vmatpush1.msra.mxu0 0.0
    %1476 = vmatprep.subr.mxu0 0.0
    %1477 = vmatpush1.msra.mxu0 0.0
    %1478 = vmatprep.subr.mxu0 0.0
    %1479 = vmatpush1.msra.mxu0 0.0
    %1480 = vmatprep.subr.mxu0 0.0
    %1481 = vmatpush1.msra.mxu0 0.0
    %1482 = vmatprep.subr.mxu0 0.0
    %1483 = vmatpush1.msra.mxu0 0.0
    %1484 = vmatprep.subr.mxu0 0.0
    %1485 = vmatpush1.msra.mxu0 0.0
    %1486 = vmatprep.subr.mxu0 0.0
    %1487 = vmatpush1.msra.mxu0 0.0
    %1488 = vmatprep.subr.mxu0 0.0
    %1489 = vmatpush1.msra.mxu0 0.0
    %1490 = vmatprep.subr.mxu0 0.0
    %1491 = vmatpush1.msra.mxu0 0.0
    %1492 = vmatprep.subr.mxu0 0.0
    %1493 = vmatpush1.msra.mxu0 0.0
    %1494 = vmatprep.subr.mxu0 0.0
    %1495 = vmatpush1.msra.mxu0 0.0
    %1496 = vmatprep.subr.mxu0 0.0
    %1497 = vmatpush1.msra.mxu0 0.0
    %1498 = vmatprep.subr.mxu0 0.0
    %1499 = vmatpush1.msra.mxu0 0.0
    %1500 = vmatprep.subr.mxu0 0.0
    %1501 = vmatpush1.msra.mxu0 0.0
    %1502 = vmatprep.subr.mxu0 0.0
    %1503 = vmatpush1.msra.mxu0 0.0
    %1504 = vmatprep.subr.mxu0 0.0
    %1505 = vmatpush1.msra.mxu0 0.0
    %1506 = vmatprep.subr.mxu0 0.0
    %1507 = vmatpush1.msra.mxu0 0.0
    %1508 = vmatprep.subr.mxu0 0.0
    %1509 = vmatpush1.msra.mxu0 0.0
    %1510 = vmatprep.subr.mxu0 0.0
    %1511 = vmatpush1.msra.mxu0 0.0
    %1512 = vmatprep.subr.mxu0 0.0
    %1513 = vmatpush1.msra.mxu0 0.0
    %1514 = vmatprep.subr.mxu0 0.0
    %1515 = vmatpush1.msra.mxu0 0.0
    %1516 = vmatprep.subr.mxu0 0.0
    %1517 = vmatpush1.msra.mxu0 0.0
    %1518 = vmatprep.subr.mxu0 0.0
    %1519 = vmatpush1.msra.mxu0 0.0
    %1520 = vmatprep.subr.mxu0 0.0
    %1521 = vmatpush1.msra.mxu0 0.0
    %1522 = vmatprep.subr.mxu0 0.0
    %1523 = vmatpush1.msra.mxu0 0.0
    %1524 = vmatprep.subr.mxu0 0.0
    %1525 = vmatpush1.msra.mxu0 0.0
    %1526 = vmatprep.subr.mxu0 0.0
    %1527 = vmatpush1.msra.mxu0 0.0
    %1528 = vmatprep.subr.mxu0 0.0
    %1529 = vmatpush1.msra.mxu0 0.0
    %1530 = vmatprep.mubr.f32.mxu0 0.0
    %1531 = vmatmul.mubr.f32.gmra.mrb[0].mxu0 %v1464
    %v1532 = vpop.f32.mrb[0].mxu0
    %v1533 = vadd.f32 %v661, %v1532
    %v1534 = vpop.f32.mrb[0].mxu0
    %1535 = vdwg.mxu0
    %vm1536 = vcmp.gt.f32.partialorder %v1533, 20.0
    %v1537 = vmin.f32 %v1533, 20.0
    %v1538 = vmul.f32 %v1537, 1.442695
    %v1539 = vpow.pop %v1538
    %v1540 = vadd.f32 %v1539, 1.0
    %v1541 = vlog2.pop %v1540
    %v1542 = vmul.f32 %v1541, 0.6931472
    %v1543 = vmul.f32 -0.5, %v1539
    %v1544 = vadd.f32 %v1543, 1.0
    %v1545 = vmul.f32 %v1544, %v1539
    %v1546 = vand.u32 2147483647, %v1539
    %vm1547 = vcmp.lt.f32.partialorder %v1546, 0.0004427343
    %v1548 = vsel %vm1547, %v1545, %v1542
    %v1549 = vsel %vm1536, %v1533, %v1548
    %v1550 = vtanh.pop %v1549
    %v1551 = vmul.f32 %v1533, %v1550
    %v1553 = vsel %vm567, %v1551, 0
    %1555 = vmatprep.subr.mxu0 0.0
    %1556 = vmatpush1.msra.mxu0 %v561
    %1557 = vmatprep.subr.mxu0 0.0
    %1558 = vmatpush1.msra.mxu0 %v562
    %1559 = vmatprep.subr.mxu0 0.0
    %1560 = vmatpush1.msra.mxu0 %v563
    %1561 = vmatprep.subr.mxu0 0.0
    %1562 = vmatpush1.msra.mxu0 %v564
    %1563 = vmatprep.subr.mxu0 0.0
    %1564 = vmatpush1.msra.mxu0 0.0
    %1565 = vmatprep.subr.mxu0 0.0
    %1566 = vmatpush1.msra.mxu0 0.0
    %1567 = vmatprep.subr.mxu0 0.0
    %1568 = vmatpush1.msra.mxu0 0.0
    %1569 = vmatprep.subr.mxu0 0.0
    %1570 = vmatpush1.msra.mxu0 0.0
    %1571 = vmatprep.subr.mxu0 0.0
    %1572 = vmatpush1.msra.mxu0 0.0
    %1573 = vmatprep.subr.mxu0 0.0
    %1574 = vmatpush1.msra.mxu0 0.0
    %1575 = vmatprep.subr.mxu0 0.0
    %1576 = vmatpush1.msra.mxu0 0.0
    %1577 = vmatprep.subr.mxu0 0.0
    %1578 = vmatpush1.msra.mxu0 0.0
    %1579 = vmatprep.subr.mxu0 0.0
    %1580 = vmatpush1.msra.mxu0 0.0
    %1581 = vmatprep.subr.mxu0 0.0
    %1582 = vmatpush1.msra.mxu0 0.0
    %1583 = vmatprep.subr.mxu0 0.0
    %1584 = vmatpush1.msra.mxu0 0.0
    %1585 = vmatprep.subr.mxu0 0.0
    %1586 = vmatpush1.msra.mxu0 0.0
    %1587 = vmatprep.subr.mxu0 0.0
    %1588 = vmatpush1.msra.mxu0 0.0
    %1589 = vmatprep.subr.mxu0 0.0
    %1590 = vmatpush1.msra.mxu0 0.0
    %1591 = vmatprep.subr.mxu0 0.0
    %1592 = vmatpush1.msra.mxu0 0.0
    %1593 = vmatprep.subr.mxu0 0.0
    %1594 = vmatpush1.msra.mxu0 0.0
    %1595 = vmatprep.subr.mxu0 0.0
    %1596 = vmatpush1.msra.mxu0 0.0
    %1597 = vmatprep.subr.mxu0 0.0
    %1598 = vmatpush1.msra.mxu0 0.0
    %1599 = vmatprep.subr.mxu0 0.0
    %1600 = vmatpush1.msra.mxu0 0.0
    %1601 = vmatprep.subr.mxu0 0.0
    %1602 = vmatpush1.msra.mxu0 0.0
    %1603 = vmatprep.subr.mxu0 0.0
    %1604 = vmatpush1.msra.mxu0 0.0
    %1605 = vmatprep.subr.mxu0 0.0
    %1606 = vmatpush1.msra.mxu0 0.0
    %1607 = vmatprep.subr.mxu0 0.0
    %1608 = vmatpush1.msra.mxu0 0.0
    %1609 = vmatprep.subr.mxu0 0.0
    %1610 = vmatpush1.msra.mxu0 0.0
    %1611 = vmatprep.subr.mxu0 0.0
    %1612 = vmatpush1.msra.mxu0 0.0
    %1613 = vmatprep.subr.mxu0 0.0
    %1614 = vmatpush1.msra.mxu0 0.0
    %1615 = vmatprep.subr.mxu0 0.0
    %1616 = vmatpush1.msra.mxu0 0.0
    %1617 = vmatprep.subr.mxu0 0.0
    %1618 = vmatpush1.msra.mxu0 0.0
    %1619 = vmatprep.mubr.f32.mxu0 0.0
    %1620 = vmatmul.mubr.f32.gmra.mrb[0].mxu0 %v1553
    %v1621 = vpop.f32.mrb[0].mxu0
    %v1622 = vadd.f32 %v756, %v1621
    %v1623 = vpop.f32.mrb[0].mxu0
    %1624 = vdwg.mxu0
    %v1625 = vmul.f32 %v1371, 4.3169575
    %v1626 = vmul.f32 %v1622, 4.199538
    %v1627 = vsub.f32 %v1625, %v1626
    %v1628 = vmax.f32 %v1627, -1.0
    %v1629 = vmin.f32 %v1628, 1.0
    %v1630 = vmul.f32 %v1629, 0.13916117
    %v1631 = vmul.f32 %v1371, 0.7231223
    %v1632 = vadd.f32 %v1630, %v1631
    %s1633 = scalar_lea.vmem %s3, 6
    %v1634 = vld [vmem:[%s1633] sm:$0x3]
    %v1635 = vmul.f32 %v1634, 0.64117646
    %v1636 = vadd.f32 %v1632, %v1635
    %s1637 = scalar_lea.vmem [#allocation14], 6
    %1638 = vst.msk [vmem:[%s1637] sm:$0x3] %vm842, %v1636
    %v1640 = vsel %vm567, %v1636, 0
    %1642 = vmatprep.subr.mxu0 0.0
    %1643 = vmatpush1.msra.mxu0 %v552
    %1644 = vmatprep.subr.mxu0 0.0
    %1645 = vmatpush1.msra.mxu0 %v553
    %1646 = vmatprep.subr.mxu0 0.0
    %1647 = vmatpush1.msra.mxu0 %v554
    %1648 = vmatprep.subr.mxu0 0.0
    %1649 = vmatpush1.msra.mxu0 %v555
    %1650 = vmatprep.subr.mxu0 0.0
    %1651 = vmatpush1.msra.mxu0 0.0
    %1652 = vmatprep.subr.mxu0 0.0
    %1653 = vmatpush1.msra.mxu0 0.0
    %1654 = vmatprep.subr.mxu0 0.0
    %1655 = vmatpush1.msra.mxu0 0.0
    %1656 = vmatprep.subr.mxu0 0.0
    %1657 = vmatpush1.msra.mxu0 0.0
    %1658 = vmatprep.subr.mxu0 0.0
    %1659 = vmatpush1.msra.mxu0 0.0
    %1660 = vmatprep.subr.mxu0 0.0
    %1661 = vmatpush1.msra.mxu0 0.0
    %1662 = vmatprep.subr.mxu0 0.0
    %1663 = vmatpush1.msra.mxu0 0.0
    %1664 = vmatprep.subr.mxu0 0.0
    %1665 = vmatpush1.msra.mxu0 0.0
    %1666 = vmatprep.subr.mxu0 0.0
    %1667 = vmatpush1.msra.mxu0 0.0
    %1668 = vmatprep.subr.mxu0 0.0
    %1669 = vmatpush1.msra.mxu0 0.0
    %1670 = vmatprep.subr.mxu0 0.0
    %1671 = vmatpush1.msra.mxu0 0.0
    %1672 = vmatprep.subr.mxu0 0.0
    %1673 = vmatpush1.msra.mxu0 0.0
    %1674 = vmatprep.subr.mxu0 0.0
    %1675 = vmatpush1.msra.mxu0 0.0
    %1676 = vmatprep.subr.mxu0 0.0
    %1677 = vmatpush1.msra.mxu0 0.0
    %1678 = vmatprep.subr.mxu0 0.0
    %1679 = vmatpush1.msra.mxu0 0.0
    %1680 = vmatprep.subr.mxu0 0.0
    %1681 = vmatpush1.msra.mxu0 0.0
    %1682 = vmatprep.subr.mxu0 0.0
    %1683 = vmatpush1.msra.mxu0 0.0
    %1684 = vmatprep.subr.mxu0 0.0
    %1685 = vmatpush1.msra.mxu0 0.0
    %1686 = vmatprep.subr.mxu0 0.0
    %1687 = vmatpush1.msra.mxu0 0.0
    %1688 = vmatprep.subr.mxu0 0.0
    %1689 = vmatpush1.msra.mxu0 0.0
    %1690 = vmatprep.subr.mxu0 0.0
    %1691 = vmatpush1.msra.mxu0 0.0
    %1692 = vmatprep.subr.mxu0 0.0
    %1693 = vmatpush1.msra.mxu0 0.0
    %1694 = vmatprep.subr.mxu0 0.0
    %1695 = vmatpush1.msra.mxu0 0.0
    %1696 = vmatprep.subr.mxu0 0.0
    %1697 = vmatpush1.msra.mxu0 0.0
    %1698 = vmatprep.subr.mxu0 0.0
    %1699 = vmatpush1.msra.mxu0 0.0
    %1700 = vmatprep.subr.mxu0 0.0
    %1701 = vmatpush1.msra.mxu0 0.0
    %1702 = vmatprep.subr.mxu0 0.0
    %1703 = vmatpush1.msra.mxu0 0.0
    %1704 = vmatprep.subr.mxu0 0.0
    %1705 = vmatpush1.msra.mxu0 0.0
    %1706 = vmatprep.mubr.f32.mxu0 0.0
    %1707 = vmatmul.mubr.f32.gmra.mrb[0].mxu0 %v1640
    %v1708 = vpop.f32.mrb[0].mxu0
    %v1709 = vadd.f32 %v536, %v1708
    %v1710 = vpop.f32.mrb[0].mxu0
    %1711 = vdwg.mxu0
    %vm1712 = vcmp.gt.f32.partialorder %v1709, 20.0
    %v1713 = vmin.f32 %v1709, 20.0
    %v1714 = vmul.f32 %v1713, 1.442695
    %v1715 = vpow.pop %v1714
    %v1716 = vadd.f32 %v1715, 1.0
    %v1717 = vlog2.pop %v1716
    %v1718 = vmul.f32 %v1717, 0.6931472
    %v1719 = vmul.f32 -0.5, %v1715
    %v1720 = vadd.f32 %v1719, 1.0
    %v1721 = vmul.f32 %v1720, %v1715
    %v1722 = vand.u32 2147483647, %v1715
    %vm1723 = vcmp.lt.f32.partialorder %v1722, 0.0004427343
    %v1724 = vsel %vm1723, %v1721, %v1718
    %v1725 = vsel %vm1712, %v1709, %v1724
    %v1726 = vtanh.pop %v1725
    %v1727 = vmul.f32 %v1709, %v1726
    %v1729 = vsel %vm567, %v1727, 0
    %1731 = vmatprep.subr.mxu0 0.0
    %1732 = vmatpush1.msra.mxu0 %v556
    %1733 = vmatprep.subr.mxu0 0.0
    %1734 = vmatpush1.msra.mxu0 %v557
    %1735 = vmatprep.subr.mxu0 0.0
    %1736 = vmatpush1.msra.mxu0 %v558
    %1737 = vmatprep.subr.mxu0 0.0
    %1738 = vmatpush1.msra.mxu0 %v559
    %1739 = vmatprep.subr.mxu0 0.0
    %1740 = vmatpush1.msra.mxu0 0.0
    %1741 = vmatprep.subr.mxu0 0.0
    %1742 = vmatpush1.msra.mxu0 0.0
    %1743 = vmatprep.subr.mxu0 0.0
    %1744 = vmatpush1.msra.mxu0 0.0
    %1745 = vmatprep.subr.mxu0 0.0
    %1746 = vmatpush1.msra.mxu0 0.0
    %1747 = vmatprep.subr.mxu0 0.0
    %1748 = vmatpush1.msra.mxu0 0.0
    %1749 = vmatprep.subr.mxu0 0.0
    %1750 = vmatpush1.msra.mxu0 0.0
    %1751 = vmatprep.subr.mxu0 0.0
    %1752 = vmatpush1.msra.mxu0 0.0
    %1753 = vmatprep.subr.mxu0 0.0
    %1754 = vmatpush1.msra.mxu0 0.0
    %1755 = vmatprep.subr.mxu0 0.0
    %1756 = vmatpush1.msra.mxu0 0.0
    %1757 = vmatprep.subr.mxu0 0.0
    %1758 = vmatpush1.msra.mxu0 0.0
    %1759 = vmatprep.subr.mxu0 0.0
    %1760 = vmatpush1.msra.mxu0 0.0
    %1761 = vmatprep.subr.mxu0 0.0
    %1762 = vmatpush1.msra.mxu0 0.0
    %1763 = vmatprep.subr.mxu0 0.0
    %1764 = vmatpush1.msra.mxu0 0.0
    %1765 = vmatprep.subr.mxu0 0.0
    %1766 = vmatpush1.msra.mxu0 0.0
    %1767 = vmatprep.subr.mxu0 0.0
    %1768 = vmatpush1.msra.mxu0 0.0
    %1769 = vmatprep.subr.mxu0 0.0
    %1770 = vmatpush1.msra.mxu0 0.0
    %1771 = vmatprep.subr.mxu0 0.0
    %1772 = vmatpush1.msra.mxu0 0.0
    %1773 = vmatprep.subr.mxu0 0.0
    %1774 = vmatpush1.msra.mxu0 0.0
    %1775 = vmatprep.subr.mxu0 0.0
    %1776 = vmatpush1.msra.mxu0 0.0
    %1777 = vmatprep.subr.mxu0 0.0
    %1778 = vmatpush1.msra.mxu0 0.0
    %1779 = vmatprep.subr.mxu0 0.0
    %1780 = vmatpush1.msra.mxu0 0.0
    %1781 = vmatprep.subr.mxu0 0.0
    %1782 = vmatpush1.msra.mxu0 0.0
    %1783 = vmatprep.subr.mxu0 0.0
    %1784 = vmatpush1.msra.mxu0 0.0
    %1785 = vmatprep.subr.mxu0 0.0
    %1786 = vmatpush1.msra.mxu0 0.0
    %1787 = vmatprep.subr.mxu0 0.0
    %1788 = vmatpush1.msra.mxu0 0.0
    %1789 = vmatprep.subr.mxu0 0.0
    %1790 = vmatpush1.msra.mxu0 0.0
    %1791 = vmatprep.subr.mxu0 0.0
    %1792 = vmatpush1.msra.mxu0 0.0
    %1793 = vmatprep.subr.mxu0 0.0
    %1794 = vmatpush1.msra.mxu0 0.0
    %1795 = vmatprep.mubr.f32.mxu0 0.0
    %1796 = vmatmul.mubr.f32.gmra.mrb[0].mxu0 %v1729
    %v1797 = vpop.f32.mrb[0].mxu0
    %v1798 = vadd.f32 %v661, %v1797
    %v1799 = vpop.f32.mrb[0].mxu0
    %1800 = vdwg.mxu0
    %vm1801 = vcmp.gt.f32.partialorder %v1798, 20.0
    %v1802 = vmin.f32 %v1798, 20.0
    %v1803 = vmul.f32 %v1802, 1.442695
    %v1804 = vpow.pop %v1803
    %v1805 = vadd.f32 %v1804, 1.0
    %v1806 = vlog2.pop %v1805
    %v1807 = vmul.f32 %v1806, 0.6931472
    %v1808 = vmul.f32 -0.5, %v1804
    %v1809 = vadd.f32 %v1808, 1.0
    %v1810 = vmul.f32 %v1809, %v1804
    %v1811 = vand.u32 2147483647, %v1804
    %vm1812 = vcmp.lt.f32.partialorder %v1811, 0.0004427343
    %v1813 = vsel %vm1812, %v1810, %v1807
    %v1814 = vsel %vm1801, %v1798, %v1813
    %v1815 = vtanh.pop %v1814
    %v1816 = vmul.f32 %v1798, %v1815
    %v1818 = vsel %vm567, %v1816, 0
    %1820 = vmatprep.subr.mxu0 0.0
    %1821 = vmatpush1.msra.mxu0 %v561
    %1822 = vmatprep.subr.mxu0 0.0
    %1823 = vmatpush1.msra.mxu0 %v562
    %1824 = vmatprep.subr.mxu0 0.0
    %1825 = vmatpush1.msra.mxu0 %v563
    %1826 = vmatprep.subr.mxu0 0.0
    %1827 = vmatpush1.msra.mxu0 %v564
    %1828 = vmatprep.subr.mxu0 0.0
    %1829 = vmatpush1.msra.mxu0 0.0
    %1830 = vmatprep.subr.mxu0 0.0
    %1831 = vmatpush1.msra.mxu0 0.0
    %1832 = vmatprep.subr.mxu0 0.0
    %1833 = vmatpush1.msra.mxu0 0.0
    %1834 = vmatprep.subr.mxu0 0.0
    %1835 = vmatpush1.msra.mxu0 0.0
    %1836 = vmatprep.subr.mxu0 0.0
    %1837 = vmatpush1.msra.mxu0 0.0
    %1838 = vmatprep.subr.mxu0 0.0
    %1839 = vmatpush1.msra.mxu0 0.0
    %1840 = vmatprep.subr.mxu0 0.0
    %1841 = vmatpush1.msra.mxu0 0.0
    %1842 = vmatprep.subr.mxu0 0.0
    %1843 = vmatpush1.msra.mxu0 0.0
    %1844 = vmatprep.subr.mxu0 0.0
    %1845 = vmatpush1.msra.mxu0 0.0
    %1846 = vmatprep.subr.mxu0 0.0
    %1847 = vmatpush1.msra.mxu0 0.0
    %1848 = vmatprep.subr.mxu0 0.0
    %1849 = vmatpush1.msra.mxu0 0.0
    %1850 = vmatprep.subr.mxu0 0.0
    %1851 = vmatpush1.msra.mxu0 0.0
    %1852 = vmatprep.subr.mxu0 0.0
    %1853 = vmatpush1.msra.mxu0 0.0
    %1854 = vmatprep.subr.mxu0 0.0
    %1855 = vmatpush1.msra.mxu0 0.0
    %1856 = vmatprep.subr.mxu0 0.0
    %1857 = vmatpush1.msra.mxu0 0.0
    %1858 = vmatprep.subr.mxu0 0.0
    %1859 = vmatpush1.msra.mxu0 0.0
    %1860 = vmatprep.subr.mxu0 0.0
    %1861 = vmatpush1.msra.mxu0 0.0
    %1862 = vmatprep.subr.mxu0 0.0
    %1863 = vmatpush1.msra.mxu0 0.0
    %1864 = vmatprep.subr.mxu0 0.0
    %1865 = vmatpush1.msra.mxu0 0.0
    %1866 = vmatprep.subr.mxu0 0.0
    %1867 = vmatpush1.msra.mxu0 0.0
    %1868 = vmatprep.subr.mxu0 0.0
    %1869 = vmatpush1.msra.mxu0 0.0
    %1870 = vmatprep.subr.mxu0 0.0
    %1871 = vmatpush1.msra.mxu0 0.0
    %1872 = vmatprep.subr.mxu0 0.0
    %1873 = vmatpush1.msra.mxu0 0.0
    %1874 = vmatprep.subr.mxu0 0.0
    %1875 = vmatpush1.msra.mxu0 0.0
    %1876 = vmatprep.subr.mxu0 0.0
    %1877 = vmatpush1.msra.mxu0 0.0
    %1878 = vmatprep.subr.mxu0 0.0
    %1879 = vmatpush1.msra.mxu0 0.0
    %1880 = vmatprep.subr.mxu0 0.0
    %1881 = vmatpush1.msra.mxu0 0.0
    %1882 = vmatprep.subr.mxu0 0.0
    %1883 = vmatpush1.msra.mxu0 0.0
    %1884 = vmatprep.mubr.f32.mxu0 0.0
    %1885 = vmatmul.mubr.f32.gmra.mrb[0].mxu0 %v1818
    %v1886 = vpop.f32.mrb[0].mxu0
    %v1887 = vadd.f32 %v756, %v1886
    %v1888 = vpop.f32.mrb[0].mxu0
    %1889 = vdwg.mxu0
    %v1890 = vmul.f32 %v1636, 3.2608492
    %v1891 = vmul.f32 %v1887, 3.1037297
    %v1892 = vsub.f32 %v1890, %v1891
    %v1893 = vmax.f32 %v1892, -1.0
    %v1894 = vmin.f32 %v1893, 1.0
    %v1895 = vmul.f32 %v1894, 0.1459605
    %v1896 = vmul.f32 %v1636, 0.7626187
    %v1897 = vadd.f32 %v1895, %v1896
    %s1898 = scalar_lea.vmem %s3, 8
    %v1899 = vld [vmem:[%s1898] sm:$0x3]
    %v1900 = vmul.f32 %v1899, 0.5734425
    %v1901 = vadd.f32 %v1897, %v1900
    %s1902 = scalar_lea.vmem [#allocation14], 8
    %1903 = vst.msk [vmem:[%s1902] sm:$0x3] %vm842, %v1901
    %v1905 = vsel %vm567, %v1901, 0
    %1907 = vmatprep.subr.mxu0 0.0
    %1908 = vmatpush1.msra.mxu0 %v552
    %1909 = vmatprep.subr.mxu0 0.0
    %1910 = vmatpush1.msra.mxu0 %v553
    %1911 = vmatprep.subr.mxu0 0.0
    %1912 = vmatpush1.msra.mxu0 %v554
    %1913 = vmatprep.subr.mxu0 0.0
    %1914 = vmatpush1.msra.mxu0 %v555
    %1915 = vmatprep.subr.mxu0 0.0
    %1916 = vmatpush1.msra.mxu0 0.0
    %1917 = vmatprep.subr.mxu0 0.0
    %1918 = vmatpush1.msra.mxu0 0.0
    %1919 = vmatprep.subr.mxu0 0.0
    %1920 = vmatpush1.msra.mxu0 0.0
    %1921 = vmatprep.subr.mxu0 0.0
    %1922 = vmatpush1.msra.mxu0 0.0
    %1923 = vmatprep.subr.mxu0 0.0
    %1924 = vmatpush1.msra.mxu0 0.0
    %1925 = vmatprep.subr.mxu0 0.0
    %1926 = vmatpush1.msra.mxu0 0.0
    %1927 = vmatprep.subr.mxu0 0.0
    %1928 = vmatpush1.msra.mxu0 0.0
    %1929 = vmatprep.subr.mxu0 0.0
    %1930 = vmatpush1.msra.mxu0 0.0
    %1931 = vmatprep.subr.mxu0 0.0
    %1932 = vmatpush1.msra.mxu0 0.0
    %1933 = vmatprep.subr.mxu0 0.0
    %1934 = vmatpush1.msra.mxu0 0.0
    %1935 = vmatprep.subr.mxu0 0.0
    %1936 = vmatpush1.msra.mxu0 0.0
    %1937 = vmatprep.subr.mxu0 0.0
    %1938 = vmatpush1.msra.mxu0 0.0
    %1939 = vmatprep.subr.mxu0 0.0
    %1940 = vmatpush1.msra.mxu0 0.0
    %1941 = vmatprep.subr.mxu0 0.0
    %1942 = vmatpush1.msra.mxu0 0.0
    %1943 = vmatprep.subr.mxu0 0.0
    %1944 = vmatpush1.msra.mxu0 0.0
    %1945 = vmatprep.subr.mxu0 0.0
    %1946 = vmatpush1.msra.mxu0 0.0
    %1947 = vmatprep.subr.mxu0 0.0
    %1948 = vmatpush1.msra.mxu0 0.0
    %1949 = vmatprep.subr.mxu0 0.0
    %1950 = vmatpush1.msra.mxu0 0.0
    %1951 = vmatprep.subr.mxu0 0.0
    %1952 = vmatpush1.msra.mxu0 0.0
    %1953 = vmatprep.subr.mxu0 0.0
    %1954 = vmatpush1.msra.mxu0 0.0
    %1955 = vmatprep.subr.mxu0 0.0
    %1956 = vmatpush1.msra.mxu0 0.0
    %1957 = vmatprep.subr.mxu0 0.0
    %1958 = vmatpush1.msra.mxu0 0.0
    %1959 = vmatprep.subr.mxu0 0.0
    %1960 = vmatpush1.msra.mxu0 0.0
    %1961 = vmatprep.subr.mxu0 0.0
    %1962 = vmatpush1.msra.mxu0 0.0
    %1963 = vmatprep.subr.mxu0 0.0
    %1964 = vmatpush1.msra.mxu0 0.0
    %1965 = vmatprep.subr.mxu0 0.0
    %1966 = vmatpush1.msra.mxu0 0.0
    %1967 = vmatprep.subr.mxu0 0.0
    %1968 = vmatpush1.msra.mxu0 0.0
    %1969 = vmatprep.subr.mxu0 0.0
    %1970 = vmatpush1.msra.mxu0 0.0
    %1971 = vmatprep.mubr.f32.mxu0 0.0
    %1972 = vmatmul.mubr.f32.gmra.mrb[0].mxu0 %v1905
    %v1973 = vpop.f32.mrb[0].mxu0
    %v1974 = vadd.f32 %v537, %v1973
    %v1975 = vpop.f32.mrb[0].mxu0
    %1976 = vdwg.mxu0
    %vm1977 = vcmp.gt.f32.partialorder %v1974, 20.0
    %v1978 = vmin.f32 %v1974, 20.0
    %v1979 = vmul.f32 %v1978, 1.442695
    %v1980 = vpow.pop %v1979
    %v1981 = vadd.f32 %v1980, 1.0
    %v1982 = vlog2.pop %v1981
    %v1983 = vmul.f32 %v1982, 0.6931472
    %v1984 = vmul.f32 -0.5, %v1980
    %v1985 = vadd.f32 %v1984, 1.0
    %v1986 = vmul.f32 %v1985, %v1980
    %v1987 = vand.u32 2147483647, %v1980
    %vm1988 = vcmp.lt.f32.partialorder %v1987, 0.0004427343
    %v1989 = vsel %vm1988, %v1986, %v1983
    %v1990 = vsel %vm1977, %v1974, %v1989
    %v1991 = vtanh.pop %v1990
    %v1992 = vmul.f32 %v1974, %v1991
    %v1994 = vsel %vm567, %v1992, 0
    %1996 = vmatprep.subr.mxu0 0.0
    %1997 = vmatpush1.msra.mxu0 %v556
    %1998 = vmatprep.subr.mxu0 0.0
    %1999 = vmatpush1.msra.mxu0 %v557
    %2000 = vmatprep.subr.mxu0 0.0
    %2001 = vmatpush1.msra.mxu0 %v558
    %2002 = vmatprep.subr.mxu0 0.0
    %2003 = vmatpush1.msra.mxu0 %v559
    %2004 = vmatprep.subr.mxu0 0.0
    %2005 = vmatpush1.msra.mxu0 0.0
    %2006 = vmatprep.subr.mxu0 0.0
    %2007 = vmatpush1.msra.mxu0 0.0
    %2008 = vmatprep.subr.mxu0 0.0
    %2009 = vmatpush1.msra.mxu0 0.0
    %2010 = vmatprep.subr.mxu0 0.0
    %2011 = vmatpush1.msra.mxu0 0.0
    %2012 = vmatprep.subr.mxu0 0.0
    %2013 = vmatpush1.msra.mxu0 0.0
    %2014 = vmatprep.subr.mxu0 0.0
    %2015 = vmatpush1.msra.mxu0 0.0
    %2016 = vmatprep.subr.mxu0 0.0
    %2017 = vmatpush1.msra.mxu0 0.0
    %2018 = vmatprep.subr.mxu0 0.0
    %2019 = vmatpush1.msra.mxu0 0.0
    %2020 = vmatprep.subr.mxu0 0.0
    %2021 = vmatpush1.msra.mxu0 0.0
    %2022 = vmatprep.subr.mxu0 0.0
    %2023 = vmatpush1.msra.mxu0 0.0
    %2024 = vmatprep.subr.mxu0 0.0
    %2025 = vmatpush1.msra.mxu0 0.0
    %2026 = vmatprep.subr.mxu0 0.0
    %2027 = vmatpush1.msra.mxu0 0.0
    %2028 = vmatprep.subr.mxu0 0.0
    %2029 = vmatpush1.msra.mxu0 0.0
    %2030 = vmatprep.subr.mxu0 0.0
    %2031 = vmatpush1.msra.mxu0 0.0
    %2032 = vmatprep.subr.mxu0 0.0
    %2033 = vmatpush1.msra.mxu0 0.0
    %2034 = vmatprep.subr.mxu0 0.0
    %2035 = vmatpush1.msra.mxu0 0.0
    %2036 = vmatprep.subr.mxu0 0.0
    %2037 = vmatpush1.msra.mxu0 0.0
    %2038 = vmatprep.subr.mxu0 0.0
    %2039 = vmatpush1.msra.mxu0 0.0
    %2040 = vmatprep.subr.mxu0 0.0
    %2041 = vmatpush1.msra.mxu0 0.0
    %2042 = vmatprep.subr.mxu0 0.0
    %2043 = vmatpush1.msra.mxu0 0.0
    %2044 = vmatprep.subr.mxu0 0.0
    %2045 = vmatpush1.msra.mxu0 0.0
    %2046 = vmatprep.subr.mxu0 0.0
    %2047 = vmatpush1.msra.mxu0 0.0
    %2048 = vmatprep.subr.mxu0 0.0
    %2049 = vmatpush1.msra.mxu0 0.0
    %2050 = vmatprep.subr.mxu0 0.0
    %2051 = vmatpush1.msra.mxu0 0.0
    %2052 = vmatprep.subr.mxu0 0.0
    %2053 = vmatpush1.msra.mxu0 0.0
    %2054 = vmatprep.subr.mxu0 0.0
    %2055 = vmatpush1.msra.mxu0 0.0
    %2056 = vmatprep.subr.mxu0 0.0
    %2057 = vmatpush1.msra.mxu0 0.0
    %2058 = vmatprep.subr.mxu0 0.0
    %2059 = vmatpush1.msra.mxu0 0.0
    %2060 = vmatprep.mubr.f32.mxu0 0.0
    %2061 = vmatmul.mubr.f32.gmra.mrb[0].mxu0 %v1994
    %v2062 = vpop.f32.mrb[0].mxu0
    %v2063 = vadd.f32 %v661, %v2062
    %v2064 = vpop.f32.mrb[0].mxu0
    %2065 = vdwg.mxu0
    %vm2066 = vcmp.gt.f32.partialorder %v2063, 20.0
    %v2067 = vmin.f32 %v2063, 20.0
    %v2068 = vmul.f32 %v2067, 1.442695
    %v2069 = vpow.pop %v2068
    %v2070 = vadd.f32 %v2069, 1.0
    %v2071 = vlog2.pop %v2070
    %v2072 = vmul.f32 %v2071, 0.6931472
    %v2073 = vmul.f32 -0.5, %v2069
    %v2074 = vadd.f32 %v2073, 1.0
    %v2075 = vmul.f32 %v2074, %v2069
    %v2076 = vand.u32 2147483647, %v2069
    %vm2077 = vcmp.lt.f32.partialorder %v2076, 0.0004427343
    %v2078 = vsel %vm2077, %v2075, %v2072
    %v2079 = vsel %vm2066, %v2063, %v2078
    %v2080 = vtanh.pop %v2079
    %v2081 = vmul.f32 %v2063, %v2080
    %v2083 = vsel %vm567, %v2081, 0
    %2085 = vmatprep.subr.mxu0 0.0
    %2086 = vmatpush1.msra.mxu0 %v561
    %2087 = vmatprep.subr.mxu0 0.0
    %2088 = vmatpush1.msra.mxu0 %v562
    %2089 = vmatprep.subr.mxu0 0.0
    %2090 = vmatpush1.msra.mxu0 %v563
    %2091 = vmatprep.subr.mxu0 0.0
    %2092 = vmatpush1.msra.mxu0 %v564
    %2093 = vmatprep.subr.mxu0 0.0
    %2094 = vmatpush1.msra.mxu0 0.0
    %2095 = vmatprep.subr.mxu0 0.0
    %2096 = vmatpush1.msra.mxu0 0.0
    %2097 = vmatprep.subr.mxu0 0.0
    %2098 = vmatpush1.msra.mxu0 0.0
    %2099 = vmatprep.subr.mxu0 0.0
    %2100 = vmatpush1.msra.mxu0 0.0
    %2101 = vmatprep.subr.mxu0 0.0
    %2102 = vmatpush1.msra.mxu0 0.0
    %2103 = vmatprep.subr.mxu0 0.0
    %2104 = vmatpush1.msra.mxu0 0.0
    %2105 = vmatprep.subr.mxu0 0.0
    %2106 = vmatpush1.msra.mxu0 0.0
    %2107 = vmatprep.subr.mxu0 0.0
    %2108 = vmatpush1.msra.mxu0 0.0
    %2109 = vmatprep.subr.mxu0 0.0
    %2110 = vmatpush1.msra.mxu0 0.0
    %2111 = vmatprep.subr.mxu0 0.0
    %2112 = vmatpush1.msra.mxu0 0.0
    %2113 = vmatprep.subr.mxu0 0.0
    %2114 = vmatpush1.msra.mxu0 0.0
    %2115 = vmatprep.subr.mxu0 0.0
    %2116 = vmatpush1.msra.mxu0 0.0
    %2117 = vmatprep.subr.mxu0 0.0
    %2118 = vmatpush1.msra.mxu0 0.0
    %2119 = vmatprep.subr.mxu0 0.0
    %2120 = vmatpush1.msra.mxu0 0.0
    %2121 = vmatprep.subr.mxu0 0.0
    %2122 = vmatpush1.msra.mxu0 0.0
    %2123 = vmatprep.subr.mxu0 0.0
    %2124 = vmatpush1.msra.mxu0 0.0
    %2125 = vmatprep.subr.mxu0 0.0
    %2126 = vmatpush1.msra.mxu0 0.0
    %2127 = vmatprep.subr.mxu0 0.0
    %2128 = vmatpush1.msra.mxu0 0.0
    %2129 = vmatprep.subr.mxu0 0.0
    %2130 = vmatpush1.msra.mxu0 0.0
    %2131 = vmatprep.subr.mxu0 0.0
    %2132 = vmatpush1.msra.mxu0 0.0
    %2133 = vmatprep.subr.mxu0 0.0
    %2134 = vmatpush1.msra.mxu0 0.0
    %2135 = vmatprep.subr.mxu0 0.0
    %2136 = vmatpush1.msra.mxu0 0.0
    %2137 = vmatprep.subr.mxu0 0.0
    %2138 = vmatpush1.msra.mxu0 0.0
    %2139 = vmatprep.subr.mxu0 0.0
    %2140 = vmatpush1.msra.mxu0 0.0
    %2141 = vmatprep.subr.mxu0 0.0
    %2142 = vmatpush1.msra.mxu0 0.0
    %2143 = vmatprep.subr.mxu0 0.0
    %2144 = vmatpush1.msra.mxu0 0.0
    %2145 = vmatprep.subr.mxu0 0.0
    %2146 = vmatpush1.msra.mxu0 0.0
    %2147 = vmatprep.subr.mxu0 0.0
    %2148 = vmatpush1.msra.mxu0 0.0
    %2149 = vmatprep.mubr.f32.mxu0 0.0
    %2150 = vmatmul.mubr.f32.gmra.mrb[0].mxu0 %v2083
    %v2151 = vpop.f32.mrb[0].mxu0
    %v2152 = vadd.f32 %v756, %v2151
    %v2153 = vpop.f32.mrb[0].mxu0
    %2154 = vdwg.mxu0
    %v2155 = vmul.f32 %v1901, 2.632745
    %v2156 = vmul.f32 %v2152, 2.4354358
    %v2157 = vsub.f32 %v2155, %v2156
    %v2158 = vmax.f32 %v2157, -1.0
    %v2159 = vmin.f32 %v2158, 1.0
    %v2160 = vmul.f32 %v2159, 0.15259075
    %v2161 = vmul.f32 %v1901, 0.78481936
    %v2162 = vadd.f32 %v2160, %v2161
    %s2163 = scalar_lea.vmem %s3, 10
    %v2164 = vld [vmem:[%s2163] sm:$0x3]
    %v2165 = vmul.f32 %v2164, 0.519423
    %v2166 = vadd.f32 %v2162, %v2165
    %s2167 = scalar_lea.vmem [#allocation14], 10
    %2168 = vst.msk [vmem:[%s2167] sm:$0x3] %vm842, %v2166
    %v2170 = vsel %vm567, %v2166, 0
    %2172 = vmatprep.subr.mxu0 0.0
    %2173 = vmatpush1.msra.mxu0 %v552
    %2174 = vmatprep.subr.mxu0 0.0
    %2175 = vmatpush1.msra.mxu0 %v553
    %2176 = vmatprep.subr.mxu0 0.0
    %2177 = vmatpush1.msra.mxu0 %v554
    %2178 = vmatprep.subr.mxu0 0.0
    %2179 = vmatpush1.msra.mxu0 %v555
    %2180 = vmatprep.subr.mxu0 0.0
    %2181 = vmatpush1.msra.mxu0 0.0
    %2182 = vmatprep.subr.mxu0 0.0
    %2183 = vmatpush1.msra.mxu0 0.0
    %2184 = vmatprep.subr.mxu0 0.0
    %2185 = vmatpush1.msra.mxu0 0.0
    %2186 = vmatprep.subr.mxu0 0.0
    %2187 = vmatpush1.msra.mxu0 0.0
    %2188 = vmatprep.subr.mxu0 0.0
    %2189 = vmatpush1.msra.mxu0 0.0
    %2190 = vmatprep.subr.mxu0 0.0
    %2191 = vmatpush1.msra.mxu0 0.0
    %2192 = vmatprep.subr.mxu0 0.0
    %2193 = vmatpush1.msra.mxu0 0.0
    %2194 = vmatprep.subr.mxu0 0.0
    %2195 = vmatpush1.msra.mxu0 0.0
    %2196 = vmatprep.subr.mxu0 0.0
    %2197 = vmatpush1.msra.mxu0 0.0
    %2198 = vmatprep.subr.mxu0 0.0
    %2199 = vmatpush1.msra.mxu0 0.0
    %2200 = vmatprep.subr.mxu0 0.0
    %2201 = vmatpush1.msra.mxu0 0.0
    %2202 = vmatprep.subr.mxu0 0.0
    %2203 = vmatpush1.msra.mxu0 0.0
    %2204 = vmatprep.subr.mxu0 0.0
    %2205 = vmatpush1.msra.mxu0 0.0
    %2206 = vmatprep.subr.mxu0 0.0
    %2207 = vmatpush1.msra.mxu0 0.0
    %2208 = vmatprep.subr.mxu0 0.0
    %2209 = vmatpush1.msra.mxu0 0.0
    %2210 = vmatprep.subr.mxu0 0.0
    %2211 = vmatpush1.msra.mxu0 0.0
    %2212 = vmatprep.subr.mxu0 0.0
    %2213 = vmatpush1.msra.mxu0 0.0
    %2214 = vmatprep.subr.mxu0 0.0
    %2215 = vmatpush1.msra.mxu0 0.0
    %2216 = vmatprep.subr.mxu0 0.0
    %2217 = vmatpush1.msra.mxu0 0.0
    %2218 = vmatprep.subr.mxu0 0.0
    %2219 = vmatpush1.msra.mxu0 0.0
    %2220 = vmatprep.subr.mxu0 0.0
    %2221 = vmatpush1.msra.mxu0 0.0
    %2222 = vmatprep.subr.mxu0 0.0
    %2223 = vmatpush1.msra.mxu0 0.0
    %2224 = vmatprep.subr.mxu0 0.0
    %2225 = vmatpush1.msra.mxu0 0.0
    %2226 = vmatprep.subr.mxu0 0.0
    %2227 = vmatpush1.msra.mxu0 0.0
    %2228 = vmatprep.subr.mxu0 0.0
    %2229 = vmatpush1.msra.mxu0 0.0
    %2230 = vmatprep.subr.mxu0 0.0
    %2231 = vmatpush1.msra.mxu0 0.0
    %2232 = vmatprep.subr.mxu0 0.0
    %2233 = vmatpush1.msra.mxu0 0.0
    %2234 = vmatprep.subr.mxu0 0.0
    %2235 = vmatpush1.msra.mxu0 0.0
    %2236 = vmatprep.mubr.f32.mxu0 0.0
    %2237 = vmatmul.mubr.f32.gmra.mrb[0].mxu0 %v2170
    %v2238 = vpop.f32.mrb[0].mxu0
    %v2239 = vadd.f32 %v538, %v2238
    %v2240 = vpop.f32.mrb[0].mxu0
    %2241 = vdwg.mxu0
    %vm2242 = vcmp.gt.f32.partialorder %v2239, 20.0
    %v2243 = vmin.f32 %v2239, 20.0
    %v2244 = vmul.f32 %v2243, 1.442695
    %v2245 = vpow.pop %v2244
    %v2246 = vadd.f32 %v2245, 1.0
    %v2247 = vlog2.pop %v2246
    %v2248 = vmul.f32 %v2247, 0.6931472
    %v2249 = vmul.f32 -0.5, %v2245
    %v2250 = vadd.f32 %v2249, 1.0
    %v2251 = vmul.f32 %v2250, %v2245
    %v2252 = vand.u32 2147483647, %v2245
    %vm2253 = vcmp.lt.f32.partialorder %v2252, 0.0004427343
    %v2254 = vsel %vm2253, %v2251, %v2248
    %v2255 = vsel %vm2242, %v2239, %v2254
    %v2256 = vtanh.pop %v2255
    %v2257 = vmul.f32 %v2239, %v2256
    %v2259 = vsel %vm567, %v2257, 0
    %2261 = vmatprep.subr.mxu0 0.0
    %2262 = vmatpush1.msra.mxu0 %v556
    %2263 = vmatprep.subr.mxu0 0.0
    %2264 = vmatpush1.msra.mxu0 %v557
    %2265 = vmatprep.subr.mxu0 0.0
    %2266 = vmatpush1.msra.mxu0 %v558
    %2267 = vmatprep.subr.mxu0 0.0
    %2268 = vmatpush1.msra.mxu0 %v559
    %2269 = vmatprep.subr.mxu0 0.0
    %2270 = vmatpush1.msra.mxu0 0.0
    %2271 = vmatprep.subr.mxu0 0.0
    %2272 = vmatpush1.msra.mxu0 0.0
    %2273 = vmatprep.subr.mxu0 0.0
    %2274 = vmatpush1.msra.mxu0 0.0
    %2275 = vmatprep.subr.mxu0 0.0
    %2276 = vmatpush1.msra.mxu0 0.0
    %2277 = vmatprep.subr.mxu0 0.0
    %2278 = vmatpush1.msra.mxu0 0.0
    %2279 = vmatprep.subr.mxu0 0.0
    %2280 = vmatpush1.msra.mxu0 0.0
    %2281 = vmatprep.subr.mxu0 0.0
    %2282 = vmatpush1.msra.mxu0 0.0
    %2283 = vmatprep.subr.mxu0 0.0
    %2284 = vmatpush1.msra.mxu0 0.0
    %2285 = vmatprep.subr.mxu0 0.0
    %2286 = vmatpush1.msra.mxu0 0.0
    %2287 = vmatprep.subr.mxu0 0.0
    %2288 = vmatpush1.msra.mxu0 0.0
    %2289 = vmatprep.subr.mxu0 0.0
    %2290 = vmatpush1.msra.mxu0 0.0
    %2291 = vmatprep.subr.mxu0 0.0
    %2292 = vmatpush1.msra.mxu0 0.0
    %2293 = vmatprep.subr.mxu0 0.0
    %2294 = vmatpush1.msra.mxu0 0.0
    %2295 = vmatprep.subr.mxu0 0.0
    %2296 = vmatpush1.msra.mxu0 0.0
    %2297 = vmatprep.subr.mxu0 0.0
    %2298 = vmatpush1.msra.mxu0 0.0
    %2299 = vmatprep.subr.mxu0 0.0
    %2300 = vmatpush1.msra.mxu0 0.0
    %2301 = vmatprep.subr.mxu0 0.0
    %2302 = vmatpush1.msra.mxu0 0.0
    %2303 = vmatprep.subr.mxu0 0.0
    %2304 = vmatpush1.msra.mxu0 0.0
    %2305 = vmatprep.subr.mxu0 0.0
    %2306 = vmatpush1.msra.mxu0 0.0
    %2307 = vmatprep.subr.mxu0 0.0
    %2308 = vmatpush1.msra.mxu0 0.0
    %2309 = vmatprep.subr.mxu0 0.0
    %2310 = vmatpush1.msra.mxu0 0.0
    %2311 = vmatprep.subr.mxu0 0.0
    %2312 = vmatpush1.msra.mxu0 0.0
    %2313 = vmatprep.subr.mxu0 0.0
    %2314 = vmatpush1.msra.mxu0 0.0
    %2315 = vmatprep.subr.mxu0 0.0
    %2316 = vmatpush1.msra.mxu0 0.0
    %2317 = vmatprep.subr.mxu0 0.0
    %2318 = vmatpush1.msra.mxu0 0.0
    %2319 = vmatprep.subr.mxu0 0.0
    %2320 = vmatpush1.msra.mxu0 0.0
    %2321 = vmatprep.subr.mxu0 0.0
    %2322 = vmatpush1.msra.mxu0 0.0
    %2323 = vmatprep.subr.mxu0 0.0
    %2324 = vmatpush1.msra.mxu0 0.0
    %2325 = vmatprep.mubr.f32.mxu0 0.0
    %2326 = vmatmul.mubr.f32.gmra.mrb[0].mxu0 %v2259
    %v2327 = vpop.f32.mrb[0].mxu0
    %v2328 = vadd.f32 %v661, %v2327
    %v2329 = vpop.f32.mrb[0].mxu0
    %2330 = vdwg.mxu0
    %vm2331 = vcmp.gt.f32.partialorder %v2328, 20.0
    %v2332 = vmin.f32 %v2328, 20.0
    %v2333 = vmul.f32 %v2332, 1.442695
    %v2334 = vpow.pop %v2333
    %v2335 = vadd.f32 %v2334, 1.0
    %v2336 = vlog2.pop %v2335
    %v2337 = vmul.f32 %v2336, 0.6931472
    %v2338 = vmul.f32 -0.5, %v2334
    %v2339 = vadd.f32 %v2338, 1.0
    %v2340 = vmul.f32 %v2339, %v2334
    %v2341 = vand.u32 2147483647, %v2334
    %vm2342 = vcmp.lt.f32.partialorder %v2341, 0.0004427343
    %v2343 = vsel %vm2342, %v2340, %v2337
    %v2344 = vsel %vm2331, %v2328, %v2343
    %v2345 = vtanh.pop %v2344
    %v2346 = vmul.f32 %v2328, %v2345
    %v2348 = vsel %vm567, %v2346, 0
    %2350 = vmatprep.subr.mxu0 0.0
    %2351 = vmatpush1.msra.mxu0 %v561
    %2352 = vmatprep.subr.mxu0 0.0
    %2353 = vmatpush1.msra.mxu0 %v562
    %2354 = vmatprep.subr.mxu0 0.0
    %2355 = vmatpush1.msra.mxu0 %v563
    %2356 = vmatprep.subr.mxu0 0.0
    %2357 = vmatpush1.msra.mxu0 %v564
    %2358 = vmatprep.subr.mxu0 0.0
    %2359 = vmatpush1.msra.mxu0 0.0
    %2360 = vmatprep.subr.mxu0 0.0
    %2361 = vmatpush1.msra.mxu0 0.0
    %2362 = vmatprep.subr.mxu0 0.0
    %2363 = vmatpush1.msra.mxu0 0.0
    %2364 = vmatprep.subr.mxu0 0.0
    %2365 = vmatpush1.msra.mxu0 0.0
    %2366 = vmatprep.subr.mxu0 0.0
    %2367 = vmatpush1.msra.mxu0 0.0
    %2368 = vmatprep.subr.mxu0 0.0
    %2369 = vmatpush1.msra.mxu0 0.0
    %2370 = vmatprep.subr.mxu0 0.0
    %2371 = vmatpush1.msra.mxu0 0.0
    %2372 = vmatprep.subr.mxu0 0.0
    %2373 = vmatpush1.msra.mxu0 0.0
    %2374 = vmatprep.subr.mxu0 0.0
    %2375 = vmatpush1.msra.mxu0 0.0
    %2376 = vmatprep.subr.mxu0 0.0
    %2377 = vmatpush1.msra.mxu0 0.0
    %2378 = vmatprep.subr.mxu0 0.0
    %2379 = vmatpush1.msra.mxu0 0.0
    %2380 = vmatprep.subr.mxu0 0.0
    %2381 = vmatpush1.msra.mxu0 0.0
    %2382 = vmatprep.subr.mxu0 0.0
    %2383 = vmatpush1.msra.mxu0 0.0
    %2384 = vmatprep.subr.mxu0 0.0
    %2385 = vmatpush1.msra.mxu0 0.0
    %2386 = vmatprep.subr.mxu0 0.0
    %2387 = vmatpush1.msra.mxu0 0.0
    %2388 = vmatprep.subr.mxu0 0.0
    %2389 = vmatpush1.msra.mxu0 0.0
    %2390 = vmatprep.subr.mxu0 0.0
    %2391 = vmatpush1.msra.mxu0 0.0
    %2392 = vmatprep.subr.mxu0 0.0
    %2393 = vmatpush1.msra.mxu0 0.0
    %2394 = vmatprep.subr.mxu0 0.0
    %2395 = vmatpush1.msra.mxu0 0.0
    %2396 = vmatprep.subr.mxu0 0.0
    %2397 = vmatpush1.msra.mxu0 0.0
    %2398 = vmatprep.subr.mxu0 0.0
    %2399 = vmatpush1.msra.mxu0 0.0
    %2400 = vmatprep.subr.mxu0 0.0
    %2401 = vmatpush1.msra.mxu0 0.0
    %2402 = vmatprep.subr.mxu0 0.0
    %2403 = vmatpush1.msra.mxu0 0.0
    %2404 = vmatprep.subr.mxu0 0.0
    %2405 = vmatpush1.msra.mxu0 0.0
    %2406 = vmatprep.subr.mxu0 0.0
    %2407 = vmatpush1.msra.mxu0 0.0
    %2408 = vmatprep.subr.mxu0 0.0
    %2409 = vmatpush1.msra.mxu0 0.0
    %2410 = vmatprep.subr.mxu0 0.0
    %2411 = vmatpush1.msra.mxu0 0.0
    %2412 = vmatprep.subr.mxu0 0.0
    %2413 = vmatpush1.msra.mxu0 0.0
    %2414 = vmatprep.mubr.f32.mxu0 0.0
    %2415 = vmatmul.mubr.f32.gmra.mrb[0].mxu0 %v2348
    %v2416 = vpop.f32.mrb[0].mxu0
    %v2417 = vadd.f32 %v756, %v2416
    %v2418 = vpop.f32.mrb[0].mxu0
    %2419 = vdwg.mxu0
    %v2420 = vmul.f32 %v2166, 2.21882
    %v2421 = vmul.f32 %v2417, 1.9806974
    %v2422 = vsub.f32 %v2420, %v2421
    %v2423 = vmax.f32 %v2422, -1.0
    %v2424 = vmin.f32 %v2423, 1.0
    %v2425 = vmul.f32 %v2424, 0.15975092
    %v2426 = vmul.f32 %v2166, 0.7966954
    %v2427 = vadd.f32 %v2425, %v2426
    %s2428 = scalar_lea.vmem %s3, 12
    %v2429 = vld [vmem:[%s2428] sm:$0x3]
    %v2430 = vmul.f32 %v2429, 0.47437844
    %v2431 = vadd.f32 %v2427, %v2430
    %s2432 = scalar_lea.vmem [#allocation14], 12
    %2433 = vst.msk [vmem:[%s2432] sm:$0x3] %vm842, %v2431
    %v2435 = vsel %vm567, %v2431, 0
    %2437 = vmatprep.subr.mxu0 0.0
    %2438 = vmatpush1.msra.mxu0 %v552
    %2439 = vmatprep.subr.mxu0 0.0
    %2440 = vmatpush1.msra.mxu0 %v553
    %2441 = vmatprep.subr.mxu0 0.0
    %2442 = vmatpush1.msra.mxu0 %v554
    %2443 = vmatprep.subr.mxu0 0.0
    %2444 = vmatpush1.msra.mxu0 %v555
    %2445 = vmatprep.subr.mxu0 0.0
    %2446 = vmatpush1.msra.mxu0 0.0
    %2447 = vmatprep.subr.mxu0 0.0
    %2448 = vmatpush1.msra.mxu0 0.0
    %2449 = vmatprep.subr.mxu0 0.0
    %2450 = vmatpush1.msra.mxu0 0.0
    %2451 = vmatprep.subr.mxu0 0.0
    %2452 = vmatpush1.msra.mxu0 0.0
    %2453 = vmatprep.subr.mxu0 0.0
    %2454 = vmatpush1.msra.mxu0 0.0
    %2455 = vmatprep.subr.mxu0 0.0
    %2456 = vmatpush1.msra.mxu0 0.0
    %2457 = vmatprep.subr.mxu0 0.0
    %2458 = vmatpush1.msra.mxu0 0.0
    %2459 = vmatprep.subr.mxu0 0.0
    %2460 = vmatpush1.msra.mxu0 0.0
    %2461 = vmatprep.subr.mxu0 0.0
    %2462 = vmatpush1.msra.mxu0 0.0
    %2463 = vmatprep.subr.mxu0 0.0
    %2464 = vmatpush1.msra.mxu0 0.0
    %2465 = vmatprep.subr.mxu0 0.0
    %2466 = vmatpush1.msra.mxu0 0.0
    %2467 = vmatprep.subr.mxu0 0.0
    %2468 = vmatpush1.msra.mxu0 0.0
    %2469 = vmatprep.subr.mxu0 0.0
    %2470 = vmatpush1.msra.mxu0 0.0
    %2471 = vmatprep.subr.mxu0 0.0
    %2472 = vmatpush1.msra.mxu0 0.0
    %2473 = vmatprep.subr.mxu0 0.0
    %2474 = vmatpush1.msra.mxu0 0.0
    %2475 = vmatprep.subr.mxu0 0.0
    %2476 = vmatpush1.msra.mxu0 0.0
    %2477 = vmatprep.subr.mxu0 0.0
    %2478 = vmatpush1.msra.mxu0 0.0
    %2479 = vmatprep.subr.mxu0 0.0
    %2480 = vmatpush1.msra.mxu0 0.0
    %2481 = vmatprep.subr.mxu0 0.0
    %2482 = vmatpush1.msra.mxu0 0.0
    %2483 = vmatprep.subr.mxu0 0.0
    %2484 = vmatpush1.msra.mxu0 0.0
    %2485 = vmatprep.subr.mxu0 0.0
    %2486 = vmatpush1.msra.mxu0 0.0
    %2487 = vmatprep.subr.mxu0 0.0
    %2488 = vmatpush1.msra.mxu0 0.0
    %2489 = vmatprep.subr.mxu0 0.0
    %2490 = vmatpush1.msra.mxu0 0.0
    %2491 = vmatprep.subr.mxu0 0.0
    %2492 = vmatpush1.msra.mxu0 0.0
    %2493 = vmatprep.subr.mxu0 0.0
    %2494 = vmatpush1.msra.mxu0 0.0
    %2495 = vmatprep.subr.mxu0 0.0
    %2496 = vmatpush1.msra.mxu0 0.0
    %2497 = vmatprep.subr.mxu0 0.0
    %2498 = vmatpush1.msra.mxu0 0.0
    %2499 = vmatprep.subr.mxu0 0.0
    %2500 = vmatpush1.msra.mxu0 0.0
    %2501 = vmatprep.mubr.f32.mxu0 0.0
    %2502 = vmatmul.mubr.f32.gmra.mrb[0].mxu0 %v2435
    %v2503 = vpop.f32.mrb[0].mxu0
    %v2504 = vadd.f32 %v539, %v2503
    %v2505 = vpop.f32.mrb[0].mxu0
    %2506 = vdwg.mxu0
    %vm2507 = vcmp.gt.f32.partialorder %v2504, 20.0
    %v2508 = vmin.f32 %v2504, 20.0
    %v2509 = vmul.f32 %v2508, 1.442695
    %v2510 = vpow.pop %v2509
    %v2511 = vadd.f32 %v2510, 1.0
    %v2512 = vlog2.pop %v2511
    %v2513 = vmul.f32 %v2512, 0.6931472
    %v2514 = vmul.f32 -0.5, %v2510
    %v2515 = vadd.f32 %v2514, 1.0
    %v2516 = vmul.f32 %v2515, %v2510
    %v2517 = vand.u32 2147483647, %v2510
    %vm2518 = vcmp.lt.f32.partialorder %v2517, 0.0004427343
    %v2519 = vsel %vm2518, %v2516, %v2513
    %v2520 = vsel %vm2507, %v2504, %v2519
    %v2521 = vtanh.pop %v2520
    %v2522 = vmul.f32 %v2504, %v2521
    %v2524 = vsel %vm567, %v2522, 0
    %2526 = vmatprep.subr.mxu0 0.0
    %2527 = vmatpush1.msra.mxu0 %v556
    %2528 = vmatprep.subr.mxu0 0.0
    %2529 = vmatpush1.msra.mxu0 %v557
    %2530 = vmatprep.subr.mxu0 0.0
    %2531 = vmatpush1.msra.mxu0 %v558
    %2532 = vmatprep.subr.mxu0 0.0
    %2533 = vmatpush1.msra.mxu0 %v559
    %2534 = vmatprep.subr.mxu0 0.0
    %2535 = vmatpush1.msra.mxu0 0.0
    %2536 = vmatprep.subr.mxu0 0.0
    %2537 = vmatpush1.msra.mxu0 0.0
    %2538 = vmatprep.subr.mxu0 0.0
    %2539 = vmatpush1.msra.mxu0 0.0
    %2540 = vmatprep.subr.mxu0 0.0
    %2541 = vmatpush1.msra.mxu0 0.0
    %2542 = vmatprep.subr.mxu0 0.0
    %2543 = vmatpush1.msra.mxu0 0.0
    %2544 = vmatprep.subr.mxu0 0.0
    %2545 = vmatpush1.msra.mxu0 0.0
    %2546 = vmatprep.subr.mxu0 0.0
    %2547 = vmatpush1.msra.mxu0 0.0
    %2548 = vmatprep.subr.mxu0 0.0
    %2549 = vmatpush1.msra.mxu0 0.0
    %2550 = vmatprep.subr.mxu0 0.0
    %2551 = vmatpush1.msra.mxu0 0.0
    %2552 = vmatprep.subr.mxu0 0.0
    %2553 = vmatpush1.msra.mxu0 0.0
    %2554 = vmatprep.subr.mxu0 0.0
    %2555 = vmatpush1.msra.mxu0 0.0
    %2556 = vmatprep.subr.mxu0 0.0
    %2557 = vmatpush1.msra.mxu0 0.0
    %2558 = vmatprep.subr.mxu0 0.0
    %2559 = vmatpush1.msra.mxu0 0.0
    %2560 = vmatprep.subr.mxu0 0.0
    %2561 = vmatpush1.msra.mxu0 0.0
    %2562 = vmatprep.subr.mxu0 0.0
    %2563 = vmatpush1.msra.mxu0 0.0
    %2564 = vmatprep.subr.mxu0 0.0
    %2565 = vmatpush1.msra.mxu0 0.0
    %2566 = vmatprep.subr.mxu0 0.0
    %2567 = vmatpush1.msra.mxu0 0.0
    %2568 = vmatprep.subr.mxu0 0.0
    %2569 = vmatpush1.msra.mxu0 0.0
    %2570 = vmatprep.subr.mxu0 0.0
    %2571 = vmatpush1.msra.mxu0 0.0
    %2572 = vmatprep.subr.mxu0 0.0
    %2573 = vmatpush1.msra.mxu0 0.0
    %2574 = vmatprep.subr.mxu0 0.0
    %2575 = vmatpush1.msra.mxu0 0.0
    %2576 = vmatprep.subr.mxu0 0.0
    %2577 = vmatpush1.msra.mxu0 0.0
    %2578 = vmatprep.subr.mxu0 0.0
    %2579 = vmatpush1.msra.mxu0 0.0
    %2580 = vmatprep.subr.mxu0 0.0
    %2581 = vmatpush1.msra.mxu0 0.0
    %2582 = vmatprep.subr.mxu0 0.0
    %2583 = vmatpush1.msra.mxu0 0.0
    %2584 = vmatprep.subr.mxu0 0.0
    %2585 = vmatpush1.msra.mxu0 0.0
    %2586 = vmatprep.subr.mxu0 0.0
    %2587 = vmatpush1.msra.mxu0 0.0
    %2588 = vmatprep.subr.mxu0 0.0
    %2589 = vmatpush1.msra.mxu0 0.0
    %2590 = vmatprep.mubr.f32.mxu0 0.0
    %2591 = vmatmul.mubr.f32.gmra.mrb[0].mxu0 %v2524
    %v2592 = vpop.f32.mrb[0].mxu0
    %v2593 = vadd.f32 %v661, %v2592
    %v2594 = vpop.f32.mrb[0].mxu0
    %2595 = vdwg.mxu0
    %vm2596 = vcmp.gt.f32.partialorder %v2593, 20.0
    %v2597 = vmin.f32 %v2593, 20.0
    %v2598 = vmul.f32 %v2597, 1.442695
    %v2599 = vpow.pop %v2598
    %v2600 = vadd.f32 %v2599, 1.0
    %v2601 = vlog2.pop %v2600
    %v2602 = vmul.f32 %v2601, 0.6931472
    %v2603 = vmul.f32 -0.5, %v2599
    %v2604 = vadd.f32 %v2603, 1.0
    %v2605 = vmul.f32 %v2604, %v2599
    %v2606 = vand.u32 2147483647, %v2599
    %vm2607 = vcmp.lt.f32.partialorder %v2606, 0.0004427343
    %v2608 = vsel %vm2607, %v2605, %v2602
    %v2609 = vsel %vm2596, %v2593, %v2608
    %v2610 = vtanh.pop %v2609
    %v2611 = vmul.f32 %v2593, %v2610
    %v2613 = vsel %vm567, %v2611, 0
    %2615 = vmatprep.subr.mxu0 0.0
    %2616 = vmatpush1.msra.mxu0 %v561
    %2617 = vmatprep.subr.mxu0 0.0
    %2618 = vmatpush1.msra.mxu0 %v562
    %2619 = vmatprep.subr.mxu0 0.0
    %2620 = vmatpush1.msra.mxu0 %v563
    %2621 = vmatprep.subr.mxu0 0.0
    %2622 = vmatpush1.msra.mxu0 %v564
    %2623 = vmatprep.subr.mxu0 0.0
    %2624 = vmatpush1.msra.mxu0 0.0
    %2625 = vmatprep.subr.mxu0 0.0
    %2626 = vmatpush1.msra.mxu0 0.0
    %2627 = vmatprep.subr.mxu0 0.0
    %2628 = vmatpush1.msra.mxu0 0.0
    %2629 = vmatprep.subr.mxu0 0.0
    %2630 = vmatpush1.msra.mxu0 0.0
    %2631 = vmatprep.subr.mxu0 0.0
    %2632 = vmatpush1.msra.mxu0 0.0
    %2633 = vmatprep.subr.mxu0 0.0
    %2634 = vmatpush1.msra.mxu0 0.0
    %2635 = vmatprep.subr.mxu0 0.0
    %2636 = vmatpush1.msra.mxu0 0.0
    %2637 = vmatprep.subr.mxu0 0.0
    %2638 = vmatpush1.msra.mxu0 0.0
    %2639 = vmatprep.subr.mxu0 0.0
    %2640 = vmatpush1.msra.mxu0 0.0
    %2641 = vmatprep.subr.mxu0 0.0
    %2642 = vmatpush1.msra.mxu0 0.0
    %2643 = vmatprep.subr.mxu0 0.0
    %2644 = vmatpush1.msra.mxu0 0.0
    %2645 = vmatprep.subr.mxu0 0.0
    %2646 = vmatpush1.msra.mxu0 0.0
    %2647 = vmatprep.subr.mxu0 0.0
    %2648 = vmatpush1.msra.mxu0 0.0
    %2649 = vmatprep.subr.mxu0 0.0
    %2650 = vmatpush1.msra.mxu0 0.0
    %2651 = vmatprep.subr.mxu0 0.0
    %2652 = vmatpush1.msra.mxu0 0.0
    %2653 = vmatprep.subr.mxu0 0.0
    %2654 = vmatpush1.msra.mxu0 0.0
    %2655 = vmatprep.subr.mxu0 0.0
    %2656 = vmatpush1.msra.mxu0 0.0
    %2657 = vmatprep.subr.mxu0 0.0
    %2658 = vmatpush1.msra.mxu0 0.0
    %2659 = vmatprep.subr.mxu0 0.0
    %2660 = vmatpush1.msra.mxu0 0.0
    %2661 = vmatprep.subr.mxu0 0.0
    %2662 = vmatpush1.msra.mxu0 0.0
    %2663 = vmatprep.subr.mxu0 0.0
    %2664 = vmatpush1.msra.mxu0 0.0
    %2665 = vmatprep.subr.mxu0 0.0
    %2666 = vmatpush1.msra.mxu0 0.0
    %2667 = vmatprep.subr.mxu0 0.0
    %2668 = vmatpush1.msra.mxu0 0.0
    %2669 = vmatprep.subr.mxu0 0.0
    %2670 = vmatpush1.msra.mxu0 0.0
    %2671 = vmatprep.subr.mxu0 0.0
    %2672 = vmatpush1.msra.mxu0 0.0
    %2673 = vmatprep.subr.mxu0 0.0
    %2674 = vmatpush1.msra.mxu0 0.0
    %2675 = vmatprep.subr.mxu0 0.0
    %2676 = vmatpush1.msra.mxu0 0.0
    %2677 = vmatprep.subr.mxu0 0.0
    %2678 = vmatpush1.msra.mxu0 0.0
    %2679 = vmatprep.mubr.f32.mxu0 0.0
    %2680 = vmatmul.mubr.f32.gmra.mrb[0].mxu0 %v2613
    %v2681 = vpop.f32.mrb[0].mxu0
    %v2682 = vadd.f32 %v756, %v2681
    %v2683 = vpop.f32.mrb[0].mxu0
    %2684 = vdwg.mxu0
    %v2685 = vmul.f32 %v2431, 1.9274746
    %v2686 = vmul.f32 %v2682, 1.6477737
    %v2687 = vsub.f32 %v2685, %v2686
    %v2688 = vmax.f32 %v2687, -1.0
    %v2689 = vmin.f32 %v2688, 1.0
    %v2690 = vmul.f32 %v2689, 0.16791698
    %v2691 = vmul.f32 %v2431, 0.8015828
    %v2692 = vadd.f32 %v2690, %v2691
    %s2693 = scalar_lea.vmem %s3, 14
    %v2694 = vld [vmem:[%s2693] sm:$0x3]
    %v2695 = vmul.f32 %v2694, 0.43543643
    %v2696 = vadd.f32 %v2692, %v2695
    %s2697 = scalar_lea.vmem [#allocation14], 14
    %2698 = vst.msk [vmem:[%s2697] sm:$0x3] %vm842, %v2696
    %v2700 = vsel %vm567, %v2696, 0
    %2702 = vmatprep.subr.mxu0 0.0
    %2703 = vmatpush1.msra.mxu0 %v552
    %2704 = vmatprep.subr.mxu0 0.0
    %2705 = vmatpush1.msra.mxu0 %v553
    %2706 = vmatprep.subr.mxu0 0.0
    %2707 = vmatpush1.msra.mxu0 %v554
    %2708 = vmatprep.subr.mxu0 0.0
    %2709 = vmatpush1.msra.mxu0 %v555
    %2710 = vmatprep.subr.mxu0 0.0
    %2711 = vmatpush1.msra.mxu0 0.0
    %2712 = vmatprep.subr.mxu0 0.0
    %2713 = vmatpush1.msra.mxu0 0.0
    %2714 = vmatprep.subr.mxu0 0.0
    %2715 = vmatpush1.msra.mxu0 0.0
    %2716 = vmatprep.subr.mxu0 0.0
    %2717 = vmatpush1.msra.mxu0 0.0
    %2718 = vmatprep.subr.mxu0 0.0
    %2719 = vmatpush1.msra.mxu0 0.0
    %2720 = vmatprep.subr.mxu0 0.0
    %2721 = vmatpush1.msra.mxu0 0.0
    %2722 = vmatprep.subr.mxu0 0.0
    %2723 = vmatpush1.msra.mxu0 0.0
    %2724 = vmatprep.subr.mxu0 0.0
    %2725 = vmatpush1.msra.mxu0 0.0
    %2726 = vmatprep.subr.mxu0 0.0
    %2727 = vmatpush1.msra.mxu0 0.0
    %2728 = vmatprep.subr.mxu0 0.0
    %2729 = vmatpush1.msra.mxu0 0.0
    %2730 = vmatprep.subr.mxu0 0.0
    %2731 = vmatpush1.msra.mxu0 0.0
    %2732 = vmatprep.subr.mxu0 0.0
    %2733 = vmatpush1.msra.mxu0 0.0
    %2734 = vmatprep.subr.mxu0 0.0
    %2735 = vmatpush1.msra.mxu0 0.0
    %2736 = vmatprep.subr.mxu0 0.0
    %2737 = vmatpush1.msra.mxu0 0.0
    %2738 = vmatprep.subr.mxu0 0.0
    %2739 = vmatpush1.msra.mxu0 0.0
    %2740 = vmatprep.subr.mxu0 0.0
    %2741 = vmatpush1.msra.mxu0 0.0
    %2742 = vmatprep.subr.mxu0 0.0
    %2743 = vmatpush1.msra.mxu0 0.0
    %2744 = vmatprep.subr.mxu0 0.0
    %2745 = vmatpush1.msra.mxu0 0.0
    %2746 = vmatprep.subr.mxu0 0.0
    %2747 = vmatpush1.msra.mxu0 0.0
    %2748 = vmatprep.subr.mxu0 0.0
    %2749 = vmatpush1.msra.mxu0 0.0
    %2750 = vmatprep.subr.mxu0 0.0
    %2751 = vmatpush1.msra.mxu0 0.0
    %2752 = vmatprep.subr.mxu0 0.0
    %2753 = vmatpush1.msra.mxu0 0.0
    %2754 = vmatprep.subr.mxu0 0.0
    %2755 = vmatpush1.msra.mxu0 0.0
    %2756 = vmatprep.subr.mxu0 0.0
    %2757 = vmatpush1.msra.mxu0 0.0
    %2758 = vmatprep.subr.mxu0 0.0
    %2759 = vmatpush1.msra.mxu0 0.0
    %2760 = vmatprep.subr.mxu0 0.0
    %2761 = vmatpush1.msra.mxu0 0.0
    %2762 = vmatprep.subr.mxu0 0.0
    %2763 = vmatpush1.msra.mxu0 0.0
    %2764 = vmatprep.subr.mxu0 0.0
    %2765 = vmatpush1.msra.mxu0 0.0
    %2766 = vmatprep.mubr.f32.mxu0 0.0
    %2767 = vmatmul.mubr.f32.gmra.mrb[0].mxu0 %v2700
    %v2768 = vpop.f32.mrb[0].mxu0
    %v2769 = vadd.f32 %v540, %v2768
    %v2770 = vpop.f32.mrb[0].mxu0
    %2771 = vdwg.mxu0
    %vm2772 = vcmp.gt.f32.partialorder %v2769, 20.0
    %v2773 = vmin.f32 %v2769, 20.0
    %v2774 = vmul.f32 %v2773, 1.442695
    %v2775 = vpow.pop %v2774
    %v2776 = vadd.f32 %v2775, 1.0
    %v2777 = vlog2.pop %v2776
    %v2778 = vmul.f32 %v2777, 0.6931472
    %v2779 = vmul.f32 -0.5, %v2775
    %v2780 = vadd.f32 %v2779, 1.0
    %v2781 = vmul.f32 %v2780, %v2775
    %v2782 = vand.u32 2147483647, %v2775
    %vm2783 = vcmp.lt.f32.partialorder %v2782, 0.0004427343
    %v2784 = vsel %vm2783, %v2781, %v2778
    %v2785 = vsel %vm2772, %v2769, %v2784
    %v2786 = vtanh.pop %v2785
    %v2787 = vmul.f32 %v2769, %v2786
    %v2789 = vsel %vm567, %v2787, 0
    %2791 = vmatprep.subr.mxu0 0.0
    %2792 = vmatpush1.msra.mxu0 %v556
    %2793 = vmatprep.subr.mxu0 0.0
    %2794 = vmatpush1.msra.mxu0 %v557
    %2795 = vmatprep.subr.mxu0 0.0
    %2796 = vmatpush1.msra.mxu0 %v558
    %2797 = vmatprep.subr.mxu0 0.0
    %2798 = vmatpush1.msra.mxu0 %v559
    %2799 = vmatprep.subr.mxu0 0.0
    %2800 = vmatpush1.msra.mxu0 0.0
    %2801 = vmatprep.subr.mxu0 0.0
    %2802 = vmatpush1.msra.mxu0 0.0
    %2803 = vmatprep.subr.mxu0 0.0
    %2804 = vmatpush1.msra.mxu0 0.0
    %2805 = vmatprep.subr.mxu0 0.0
    %2806 = vmatpush1.msra.mxu0 0.0
    %2807 = vmatprep.subr.mxu0 0.0
    %2808 = vmatpush1.msra.mxu0 0.0
    %2809 = vmatprep.subr.mxu0 0.0
    %2810 = vmatpush1.msra.mxu0 0.0
    %2811 = vmatprep.subr.mxu0 0.0
    %2812 = vmatpush1.msra.mxu0 0.0
    %2813 = vmatprep.subr.mxu0 0.0
    %2814 = vmatpush1.msra.mxu0 0.0
    %2815 = vmatprep.subr.mxu0 0.0
    %2816 = vmatpush1.msra.mxu0 0.0
    %2817 = vmatprep.subr.mxu0 0.0
    %2818 = vmatpush1.msra.mxu0 0.0
    %2819 = vmatprep.subr.mxu0 0.0
    %2820 = vmatpush1.msra.mxu0 0.0
    %2821 = vmatprep.subr.mxu0 0.0
    %2822 = vmatpush1.msra.mxu0 0.0
    %2823 = vmatprep.subr.mxu0 0.0
    %2824 = vmatpush1.msra.mxu0 0.0
    %2825 = vmatprep.subr.mxu0 0.0
    %2826 = vmatpush1.msra.mxu0 0.0
    %2827 = vmatprep.subr.mxu0 0.0
    %2828 = vmatpush1.msra.mxu0 0.0
    %2829 = vmatprep.subr.mxu0 0.0
    %2830 = vmatpush1.msra.mxu0 0.0
    %2831 = vmatprep.subr.mxu0 0.0
    %2832 = vmatpush1.msra.mxu0 0.0
    %2833 = vmatprep.subr.mxu0 0.0
    %2834 = vmatpush1.msra.mxu0 0.0
    %2835 = vmatprep.subr.mxu0 0.0
    %2836 = vmatpush1.msra.mxu0 0.0
    %2837 = vmatprep.subr.mxu0 0.0
    %2838 = vmatpush1.msra.mxu0 0.0
    %2839 = vmatprep.subr.mxu0 0.0
    %2840 = vmatpush1.msra.mxu0 0.0
    %2841 = vmatprep.subr.mxu0 0.0
    %2842 = vmatpush1.msra.mxu0 0.0
    %2843 = vmatprep.subr.mxu0 0.0
    %2844 = vmatpush1.msra.mxu0 0.0
    %2845 = vmatprep.subr.mxu0 0.0
    %2846 = vmatpush1.msra.mxu0 0.0
    %2847 = vmatprep.subr.mxu0 0.0
    %2848 = vmatpush1.msra.mxu0 0.0
    %2849 = vmatprep.subr.mxu0 0.0
    %2850 = vmatpush1.msra.mxu0 0.0
    %2851 = vmatprep.subr.mxu0 0.0
    %2852 = vmatpush1.msra.mxu0 0.0
    %2853 = vmatprep.subr.mxu0 0.0
    %2854 = vmatpush1.msra.mxu0 0.0
    %2855 = vmatprep.mubr.f32.mxu0 0.0
    %2856 = vmatmul.mubr.f32.gmra.mrb[0].mxu0 %v2789
    %v2857 = vpop.f32.mrb[0].mxu0
    %v2858 = vadd.f32 %v661, %v2857
    %v2859 = vpop.f32.mrb[0].mxu0
    %2860 = vdwg.mxu0
    %vm2861 = vcmp.gt.f32.partialorder %v2858, 20.0
    %v2862 = vmin.f32 %v2858, 20.0
    %v2863 = vmul.f32 %v2862, 1.442695
    %v2864 = vpow.pop %v2863
    %v2865 = vadd.f32 %v2864, 1.0
    %v2866 = vlog2.pop %v2865
    %v2867 = vmul.f32 %v2866, 0.6931472
    %v2868 = vmul.f32 -0.5, %v2864
    %v2869 = vadd.f32 %v2868, 1.0
    %v2870 = vmul.f32 %v2869, %v2864
    %v2871 = vand.u32 2147483647, %v2864
    %vm2872 = vcmp.lt.f32.partialorder %v2871, 0.0004427343
    %v2873 = vsel %vm2872, %v2870, %v2867
    %v2874 = vsel %vm2861, %v2858, %v2873
    %v2875 = vtanh.pop %v2874
    %v2876 = vmul.f32 %v2858, %v2875
    %v2878 = vsel %vm567, %v2876, 0
    %2880 = vmatprep.subr.mxu0 0.0
    %2881 = vmatpush1.msra.mxu0 %v561
    %2882 = vmatprep.subr.mxu0 0.0
    %2883 = vmatpush1.msra.mxu0 %v562
    %2884 = vmatprep.subr.mxu0 0.0
    %2885 = vmatpush1.msra.mxu0 %v563
    %2886 = vmatprep.subr.mxu0 0.0
    %2887 = vmatpush1.msra.mxu0 %v564
    %2888 = vmatprep.subr.mxu0 0.0
    %2889 = vmatpush1.msra.mxu0 0.0
    %2890 = vmatprep.subr.mxu0 0.0
    %2891 = vmatpush1.msra.mxu0 0.0
    %2892 = vmatprep.subr.mxu0 0.0
    %2893 = vmatpush1.msra.mxu0 0.0
    %2894 = vmatprep.subr.mxu0 0.0
    %2895 = vmatpush1.msra.mxu0 0.0
    %2896 = vmatprep.subr.mxu0 0.0
    %2897 = vmatpush1.msra.mxu0 0.0
    %2898 = vmatprep.subr.mxu0 0.0
    %2899 = vmatpush1.msra.mxu0 0.0
    %2900 = vmatprep.subr.mxu0 0.0
    %2901 = vmatpush1.msra.mxu0 0.0
    %2902 = vmatprep.subr.mxu0 0.0
    %2903 = vmatpush1.msra.mxu0 0.0
    %2904 = vmatprep.subr.mxu0 0.0
    %2905 = vmatpush1.msra.mxu0 0.0
    %2906 = vmatprep.subr.mxu0 0.0
    %2907 = vmatpush1.msra.mxu0 0.0
    %2908 = vmatprep.subr.mxu0 0.0
    %2909 = vmatpush1.msra.mxu0 0.0
    %2910 = vmatprep.subr.mxu0 0.0
    %2911 = vmatpush1.msra.mxu0 0.0
    %2912 = vmatprep.subr.mxu0 0.0
    %2913 = vmatpush1.msra.mxu0 0.0
    %2914 = vmatprep.subr.mxu0 0.0
    %2915 = vmatpush1.msra.mxu0 0.0
    %2916 = vmatprep.subr.mxu0 0.0
    %2917 = vmatpush1.msra.mxu0 0.0
    %2918 = vmatprep.subr.mxu0 0.0
    %2919 = vmatpush1.msra.mxu0 0.0
    %2920 = vmatprep.subr.mxu0 0.0
    %2921 = vmatpush1.msra.mxu0 0.0
    %2922 = vmatprep.subr.mxu0 0.0
    %2923 = vmatpush1.msra.mxu0 0.0
    %2924 = vmatprep.subr.mxu0 0.0
    %2925 = vmatpush1.msra.mxu0 0.0
    %2926 = vmatprep.subr.mxu0 0.0
    %2927 = vmatpush1.msra.mxu0 0.0
    %2928 = vmatprep.subr.mxu0 0.0
    %2929 = vmatpush1.msra.mxu0 0.0
    %2930 = vmatprep.subr.mxu0 0.0
    %2931 = vmatpush1.msra.mxu0 0.0
    %2932 = vmatprep.subr.mxu0 0.0
    %2933 = vmatpush1.msra.mxu0 0.0
    %2934 = vmatprep.subr.mxu0 0.0
    %2935 = vmatpush1.msra.mxu0 0.0
    %2936 = vmatprep.subr.mxu0 0.0
    %2937 = vmatpush1.msra.mxu0 0.0
    %2938 = vmatprep.subr.mxu0 0.0
    %2939 = vmatpush1.msra.mxu0 0.0
    %2940 = vmatprep.subr.mxu0 0.0
    %2941 = vmatpush1.msra.mxu0 0.0
    %2942 = vmatprep.subr.mxu0 0.0
    %2943 = vmatpush1.msra.mxu0 0.0
    %2944 = vmatprep.mubr.f32.mxu0 0.0
    %2945 = vmatmul.mubr.f32.gmra.mrb[0].mxu0 %v2878
    %v2946 = vpop.f32.mrb[0].mxu0
    %v2947 = vadd.f32 %v756, %v2946
    %v2948 = vpop.f32.mrb[0].mxu0
    %2949 = vdwg.mxu0
    %v2950 = vmul.f32 %v2696, 1.7129476
    %v2951 = vmul.f32 %v2947, 1.3907514
    %v2952 = vsub.f32 %v2950, %v2951
    %v2953 = vmax.f32 %v2952, -1.0
    %v2954 = vmin.f32 %v2953, 1.0
    %v2955 = vmul.f32 %v2954, 0.17751624
    %v2956 = vmul.f32 %v2696, 0.8011557
    %v2957 = vadd.f32 %v2955, %v2956
    %s2958 = scalar_lea.vmem %s3, 16
    %v2959 = vld [vmem:[%s2958] sm:$0x3]
    %v2960 = vmul.f32 %v2959, 0.40073285
    %v2961 = vadd.f32 %v2957, %v2960
    %s2962 = scalar_lea.vmem [#allocation14], 16
    %2963 = vst.msk [vmem:[%s2962] sm:$0x3] %vm842, %v2961
    %v2965 = vsel %vm567, %v2961, 0
    %2967 = vmatprep.subr.mxu0 0.0
    %2968 = vmatpush1.msra.mxu0 %v552
    %2969 = vmatprep.subr.mxu0 0.0
    %2970 = vmatpush1.msra.mxu0 %v553
    %2971 = vmatprep.subr.mxu0 0.0
    %2972 = vmatpush1.msra.mxu0 %v554
    %2973 = vmatprep.subr.mxu0 0.0
    %2974 = vmatpush1.msra.mxu0 %v555
    %2975 = vmatprep.subr.mxu0 0.0
    %2976 = vmatpush1.msra.mxu0 0.0
    %2977 = vmatprep.subr.mxu0 0.0
    %2978 = vmatpush1.msra.mxu0 0.0
    %2979 = vmatprep.subr.mxu0 0.0
    %2980 = vmatpush1.msra.mxu0 0.0
    %2981 = vmatprep.subr.mxu0 0.0
    %2982 = vmatpush1.msra.mxu0 0.0
    %2983 = vmatprep.subr.mxu0 0.0
    %2984 = vmatpush1.msra.mxu0 0.0
    %2985 = vmatprep.subr.mxu0 0.0
    %2986 = vmatpush1.msra.mxu0 0.0
    %2987 = vmatprep.subr.mxu0 0.0
    %2988 = vmatpush1.msra.mxu0 0.0
    %2989 = vmatprep.subr.mxu0 0.0
    %2990 = vmatpush1.msra.mxu0 0.0
    %2991 = vmatprep.subr.mxu0 0.0
    %2992 = vmatpush1.msra.mxu0 0.0
    %2993 = vmatprep.subr.mxu0 0.0
    %2994 = vmatpush1.msra.mxu0 0.0
    %2995 = vmatprep.subr.mxu0 0.0
    %2996 = vmatpush1.msra.mxu0 0.0
    %2997 = vmatprep.subr.mxu0 0.0
    %2998 = vmatpush1.msra.mxu0 0.0
    %2999 = vmatprep.subr.mxu0 0.0
    %3000 = vmatpush1.msra.mxu0 0.0
    %3001 = vmatprep.subr.mxu0 0.0
    %3002 = vmatpush1.msra.mxu0 0.0
    %3003 = vmatprep.subr.mxu0 0.0
    %3004 = vmatpush1.msra.mxu0 0.0
    %3005 = vmatprep.subr.mxu0 0.0
    %3006 = vmatpush1.msra.mxu0 0.0
    %3007 = vmatprep.subr.mxu0 0.0
    %3008 = vmatpush1.msra.mxu0 0.0
    %3009 = vmatprep.subr.mxu0 0.0
    %3010 = vmatpush1.msra.mxu0 0.0
    %3011 = vmatprep.subr.mxu0 0.0
    %3012 = vmatpush1.msra.mxu0 0.0
    %3013 = vmatprep.subr.mxu0 0.0
    %3014 = vmatpush1.msra.mxu0 0.0
    %3015 = vmatprep.subr.mxu0 0.0
    %3016 = vmatpush1.msra.mxu0 0.0
    %3017 = vmatprep.subr.mxu0 0.0
    %3018 = vmatpush1.msra.mxu0 0.0
    %3019 = vmatprep.subr.mxu0 0.0
    %3020 = vmatpush1.msra.mxu0 0.0
    %3021 = vmatprep.subr.mxu0 0.0
    %3022 = vmatpush1.msra.mxu0 0.0
    %3023 = vmatprep.subr.mxu0 0.0
    %3024 = vmatpush1.msra.mxu0 0.0
    %3025 = vmatprep.subr.mxu0 0.0
    %3026 = vmatpush1.msra.mxu0 0.0
    %3027 = vmatprep.subr.mxu0 0.0
    %3028 = vmatpush1.msra.mxu0 0.0
    %3029 = vmatprep.subr.mxu0 0.0
    %3030 = vmatpush1.msra.mxu0 0.0
    %3031 = vmatprep.mubr.f32.mxu0 0.0
    %3032 = vmatmul.mubr.f32.gmra.mrb[0].mxu0 %v2965
    %v3033 = vpop.f32.mrb[0].mxu0
    %v3034 = vadd.f32 %v541, %v3033
    %v3035 = vpop.f32.mrb[0].mxu0
    %3036 = vdwg.mxu0
    %vm3037 = vcmp.gt.f32.partialorder %v3034, 20.0
    %v3038 = vmin.f32 %v3034, 20.0
    %v3039 = vmul.f32 %v3038, 1.442695
    %v3040 = vpow.pop %v3039
    %v3041 = vadd.f32 %v3040, 1.0
    %v3042 = vlog2.pop %v3041
    %v3043 = vmul.f32 %v3042, 0.6931472
    %v3044 = vmul.f32 -0.5, %v3040
    %v3045 = vadd.f32 %v3044, 1.0
    %v3046 = vmul.f32 %v3045, %v3040
    %v3047 = vand.u32 2147483647, %v3040
    %vm3048 = vcmp.lt.f32.partialorder %v3047, 0.0004427343
    %v3049 = vsel %vm3048, %v3046, %v3043
    %v3050 = vsel %vm3037, %v3034, %v3049
    %v3051 = vtanh.pop %v3050
    %v3052 = vmul.f32 %v3034, %v3051
    %v3054 = vsel %vm567, %v3052, 0
    %3056 = vmatprep.subr.mxu0 0.0
    %3057 = vmatpush1.msra.mxu0 %v556
    %3058 = vmatprep.subr.mxu0 0.0
    %3059 = vmatpush1.msra.mxu0 %v557
    %3060 = vmatprep.subr.mxu0 0.0
    %3061 = vmatpush1.msra.mxu0 %v558
    %3062 = vmatprep.subr.mxu0 0.0
    %3063 = vmatpush1.msra.mxu0 %v559
    %3064 = vmatprep.subr.mxu0 0.0
    %3065 = vmatpush1.msra.mxu0 0.0
    %3066 = vmatprep.subr.mxu0 0.0
    %3067 = vmatpush1.msra.mxu0 0.0
    %3068 = vmatprep.subr.mxu0 0.0
    %3069 = vmatpush1.msra.mxu0 0.0
    %3070 = vmatprep.subr.mxu0 0.0
    %3071 = vmatpush1.msra.mxu0 0.0
    %3072 = vmatprep.subr.mxu0 0.0
    %3073 = vmatpush1.msra.mxu0 0.0
    %3074 = vmatprep.subr.mxu0 0.0
    %3075 = vmatpush1.msra.mxu0 0.0
    %3076 = vmatprep.subr.mxu0 0.0
    %3077 = vmatpush1.msra.mxu0 0.0
    %3078 = vmatprep.subr.mxu0 0.0
    %3079 = vmatpush1.msra.mxu0 0.0
    %3080 = vmatprep.subr.mxu0 0.0
    %3081 = vmatpush1.msra.mxu0 0.0
    %3082 = vmatprep.subr.mxu0 0.0
    %3083 = vmatpush1.msra.mxu0 0.0
    %3084 = vmatprep.subr.mxu0 0.0
    %3085 = vmatpush1.msra.mxu0 0.0
    %3086 = vmatprep.subr.mxu0 0.0
    %3087 = vmatpush1.msra.mxu0 0.0
    %3088 = vmatprep.subr.mxu0 0.0
    %3089 = vmatpush1.msra.mxu0 0.0
    %3090 = vmatprep.subr.mxu0 0.0
    %3091 = vmatpush1.msra.mxu0 0.0
    %3092 = vmatprep.subr.mxu0 0.0
    %3093 = vmatpush1.msra.mxu0 0.0
    %3094 = vmatprep.subr.mxu0 0.0
    %3095 = vmatpush1.msra.mxu0 0.0
    %3096 = vmatprep.subr.mxu0 0.0
    %3097 = vmatpush1.msra.mxu0 0.0
    %3098 = vmatprep.subr.mxu0 0.0
    %3099 = vmatpush1.msra.mxu0 0.0
    %3100 = vmatprep.subr.mxu0 0.0
    %3101 = vmatpush1.msra.mxu0 0.0
    %3102 = vmatprep.subr.mxu0 0.0
    %3103 = vmatpush1.msra.mxu0 0.0
    %3104 = vmatprep.subr.mxu0 0.0
    %3105 = vmatpush1.msra.mxu0 0.0
    %3106 = vmatprep.subr.mxu0 0.0
    %3107 = vmatpush1.msra.mxu0 0.0
    %3108 = vmatprep.subr.mxu0 0.0
    %3109 = vmatpush1.msra.mxu0 0.0
    %3110 = vmatprep.subr.mxu0 0.0
    %3111 = vmatpush1.msra.mxu0 0.0
    %3112 = vmatprep.subr.mxu0 0.0
    %3113 = vmatpush1.msra.mxu0 0.0
    %3114 = vmatprep.subr.mxu0 0.0
    %3115 = vmatpush1.msra.mxu0 0.0
    %3116 = vmatprep.subr.mxu0 0.0
    %3117 = vmatpush1.msra.mxu0 0.0
    %3118 = vmatprep.subr.mxu0 0.0
    %3119 = vmatpush1.msra.mxu0 0.0
    %3120 = vmatprep.mubr.f32.mxu0 0.0
    %3121 = vmatmul.mubr.f32.gmra.mrb[0].mxu0 %v3054
    %v3122 = vpop.f32.mrb[0].mxu0
    %v3123 = vadd.f32 %v661, %v3122
    %v3124 = vpop.f32.mrb[0].mxu0
    %3125 = vdwg.mxu0
    %vm3126 = vcmp.gt.f32.partialorder %v3123, 20.0
    %v3127 = vmin.f32 %v3123, 20.0
    %v3128 = vmul.f32 %v3127, 1.442695
    %v3129 = vpow.pop %v3128
    %v3130 = vadd.f32 %v3129, 1.0
    %v3131 = vlog2.pop %v3130
    %v3132 = vmul.f32 %v3131, 0.6931472
    %v3133 = vmul.f32 -0.5, %v3129
    %v3134 = vadd.f32 %v3133, 1.0
    %v3135 = vmul.f32 %v3134, %v3129
    %v3136 = vand.u32 2147483647, %v3129
    %vm3137 = vcmp.lt.f32.partialorder %v3136, 0.0004427343
    %v3138 = vsel %vm3137, %v3135, %v3132
    %v3139 = vsel %vm3126, %v3123, %v3138
    %v3140 = vtanh.pop %v3139
    %v3141 = vmul.f32 %v3123, %v3140
    %v3143 = vsel %vm567, %v3141, 0
    %3145 = vmatprep.subr.mxu0 0.0
    %3146 = vmatpush1.msra.mxu0 %v561
    %3147 = vmatprep.subr.mxu0 0.0
    %3148 = vmatpush1.msra.mxu0 %v562
    %3149 = vmatprep.subr.mxu0 0.0
    %3150 = vmatpush1.msra.mxu0 %v563
    %3151 = vmatprep.subr.mxu0 0.0
    %3152 = vmatpush1.msra.mxu0 %v564
    %3153 = vmatprep.subr.mxu0 0.0
    %3154 = vmatpush1.msra.mxu0 0.0
    %3155 = vmatprep.subr.mxu0 0.0
    %3156 = vmatpush1.msra.mxu0 0.0
    %3157 = vmatprep.subr.mxu0 0.0
    %3158 = vmatpush1.msra.mxu0 0.0
    %3159 = vmatprep.subr.mxu0 0.0
    %3160 = vmatpush1.msra.mxu0 0.0
    %3161 = vmatprep.subr.mxu0 0.0
    %3162 = vmatpush1.msra.mxu0 0.0
    %3163 = vmatprep.subr.mxu0 0.0
    %3164 = vmatpush1.msra.mxu0 0.0
    %3165 = vmatprep.subr.mxu0 0.0
    %3166 = vmatpush1.msra.mxu0 0.0
    %3167 = vmatprep.subr.mxu0 0.0
    %3168 = vmatpush1.msra.mxu0 0.0
    %3169 = vmatprep.subr.mxu0 0.0
    %3170 = vmatpush1.msra.mxu0 0.0
    %3171 = vmatprep.subr.mxu0 0.0
    %3172 = vmatpush1.msra.mxu0 0.0
    %3173 = vmatprep.subr.mxu0 0.0
    %3174 = vmatpush1.msra.mxu0 0.0
    %3175 = vmatprep.subr.mxu0 0.0
    %3176 = vmatpush1.msra.mxu0 0.0
    %3177 = vmatprep.subr.mxu0 0.0
    %3178 = vmatpush1.msra.mxu0 0.0
    %3179 = vmatprep.subr.mxu0 0.0
    %3180 = vmatpush1.msra.mxu0 0.0
    %3181 = vmatprep.subr.mxu0 0.0
    %3182 = vmatpush1.msra.mxu0 0.0
    %3183 = vmatprep.subr.mxu0 0.0
    %3184 = vmatpush1.msra.mxu0 0.0
    %3185 = vmatprep.subr.mxu0 0.0
    %3186 = vmatpush1.msra.mxu0 0.0
    %3187 = vmatprep.subr.mxu0 0.0
    %3188 = vmatpush1.msra.mxu0 0.0
    %3189 = vmatprep.subr.mxu0 0.0
    %3190 = vmatpush1.msra.mxu0 0.0
    %3191 = vmatprep.subr.mxu0 0.0
    %3192 = vmatpush1.msra.mxu0 0.0
    %3193 = vmatprep.subr.mxu0 0.0
    %3194 = vmatpush1.msra.mxu0 0.0
    %3195 = vmatprep.subr.mxu0 0.0
    %3196 = vmatpush1.msra.mxu0 0.0
    %3197 = vmatprep.subr.mxu0 0.0
    %3198 = vmatpush1.msra.mxu0 0.0
    %3199 = vmatprep.subr.mxu0 0.0
    %3200 = vmatpush1.msra.mxu0 0.0
    %3201 = vmatprep.subr.mxu0 0.0
    %3202 = vmatpush1.msra.mxu0 0.0
    %3203 = vmatprep.subr.mxu0 0.0
    %3204 = vmatpush1.msra.mxu0 0.0
    %3205 = vmatprep.subr.mxu0 0.0
    %3206 = vmatpush1.msra.mxu0 0.0
    %3207 = vmatprep.subr.mxu0 0.0
    %3208 = vmatpush1.msra.mxu0 0.0
    %3209 = vmatprep.mubr.f32.mxu0 0.0
    %3210 = vmatmul.mubr.f32.gmra.mrb[0].mxu0 %v3143
    %v3211 = vpop.f32.mrb[0].mxu0
    %v3212 = vadd.f32 %v756, %v3211
    %v3213 = vpop.f32.mrb[0].mxu0
    %3214 = vdwg.mxu0
    %v3215 = vmul.f32 %v2961, 1.5498538
    %v3216 = vmul.f32 %v3212, 1.1840806
    %v3217 = vsub.f32 %v3215, %v3216
    %v3218 = vmax.f32 %v3217, -1.0
    %v3219 = vmin.f32 %v3218, 1.0
    %v3220 = vmul.f32 %v3219, 0.1890189
    %v3221 = vmul.f32 %v2961, 0.7961927
    %v3222 = vadd.f32 %v3220, %v3221
    %s3223 = scalar_lea.vmem %s3, 18
    %v3224 = vld [vmem:[%s3223] sm:$0x3]
    %v3225 = vmul.f32 %v3224, 0.36897558
    %v3226 = vadd.f32 %v3222, %v3225
    %s3227 = scalar_lea.vmem [#allocation14], 18
    %3228 = vst.msk [vmem:[%s3227] sm:$0x3] %vm842, %v3226
    %v3230 = vsel %vm567, %v3226, 0
    %3232 = vmatprep.subr.mxu0 0.0
    %3233 = vmatpush1.msra.mxu0 %v552
    %3234 = vmatprep.subr.mxu0 0.0
    %3235 = vmatpush1.msra.mxu0 %v553
    %3236 = vmatprep.subr.mxu0 0.0
    %3237 = vmatpush1.msra.mxu0 %v554
    %3238 = vmatprep.subr.mxu0 0.0
    %3239 = vmatpush1.msra.mxu0 %v555
    %3240 = vmatprep.subr.mxu0 0.0
    %3241 = vmatpush1.msra.mxu0 0.0
    %3242 = vmatprep.subr.mxu0 0.0
    %3243 = vmatpush1.msra.mxu0 0.0
    %3244 = vmatprep.subr.mxu0 0.0
    %3245 = vmatpush1.msra.mxu0 0.0
    %3246 = vmatprep.subr.mxu0 0.0
    %3247 = vmatpush1.msra.mxu0 0.0
    %3248 = vmatprep.subr.mxu0 0.0
    %3249 = vmatpush1.msra.mxu0 0.0
    %3250 = vmatprep.subr.mxu0 0.0
    %3251 = vmatpush1.msra.mxu0 0.0
    %3252 = vmatprep.subr.mxu0 0.0
    %3253 = vmatpush1.msra.mxu0 0.0
    %3254 = vmatprep.subr.mxu0 0.0
    %3255 = vmatpush1.msra.mxu0 0.0
    %3256 = vmatprep.subr.mxu0 0.0
    %3257 = vmatpush1.msra.mxu0 0.0
    %3258 = vmatprep.subr.mxu0 0.0
    %3259 = vmatpush1.msra.mxu0 0.0
    %3260 = vmatprep.subr.mxu0 0.0
    %3261 = vmatpush1.msra.mxu0 0.0
    %3262 = vmatprep.subr.mxu0 0.0
    %3263 = vmatpush1.msra.mxu0 0.0
    %3264 = vmatprep.subr.mxu0 0.0
    %3265 = vmatpush1.msra.mxu0 0.0
    %3266 = vmatprep.subr.mxu0 0.0
    %3267 = vmatpush1.msra.mxu0 0.0
    %3268 = vmatprep.subr.mxu0 0.0
    %3269 = vmatpush1.msra.mxu0 0.0
    %3270 = vmatprep.subr.mxu0 0.0
    %3271 = vmatpush1.msra.mxu0 0.0
    %3272 = vmatprep.subr.mxu0 0.0
    %3273 = vmatpush1.msra.mxu0 0.0
    %3274 = vmatprep.subr.mxu0 0.0
    %3275 = vmatpush1.msra.mxu0 0.0
    %3276 = vmatprep.subr.mxu0 0.0
    %3277 = vmatpush1.msra.mxu0 0.0
    %3278 = vmatprep.subr.mxu0 0.0
    %3279 = vmatpush1.msra.mxu0 0.0
    %3280 = vmatprep.subr.mxu0 0.0
    %3281 = vmatpush1.msra.mxu0 0.0
    %3282 = vmatprep.subr.mxu0 0.0
    %3283 = vmatpush1.msra.mxu0 0.0
    %3284 = vmatprep.subr.mxu0 0.0
    %3285 = vmatpush1.msra.mxu0 0.0
    %3286 = vmatprep.subr.mxu0 0.0
    %3287 = vmatpush1.msra.mxu0 0.0
    %3288 = vmatprep.subr.mxu0 0.0
    %3289 = vmatpush1.msra.mxu0 0.0
    %3290 = vmatprep.subr.mxu0 0.0
    %3291 = vmatpush1.msra.mxu0 0.0
    %3292 = vmatprep.subr.mxu0 0.0
    %3293 = vmatpush1.msra.mxu0 0.0
    %3294 = vmatprep.subr.mxu0 0.0
    %3295 = vmatpush1.msra.mxu0 0.0
    %3296 = vmatprep.mubr.f32.mxu0 0.0
    %3297 = vmatmul.mubr.f32.gmra.mrb[0].mxu0 %v3230
    %v3298 = vpop.f32.mrb[0].mxu0
    %v3299 = vadd.f32 %v542, %v3298
    %v3300 = vpop.f32.mrb[0].mxu0
    %3301 = vdwg.mxu0
    %vm3302 = vcmp.gt.f32.partialorder %v3299, 20.0
    %v3303 = vmin.f32 %v3299, 20.0
    %v3304 = vmul.f32 %v3303, 1.442695
    %v3305 = vpow.pop %v3304
    %v3306 = vadd.f32 %v3305, 1.0
    %v3307 = vlog2.pop %v3306
    %v3308 = vmul.f32 %v3307, 0.6931472
    %v3309 = vmul.f32 -0.5, %v3305
    %v3310 = vadd.f32 %v3309, 1.0
    %v3311 = vmul.f32 %v3310, %v3305
    %v3312 = vand.u32 2147483647, %v3305
    %vm3313 = vcmp.lt.f32.partialorder %v3312, 0.0004427343
    %v3314 = vsel %vm3313, %v3311, %v3308
    %v3315 = vsel %vm3302, %v3299, %v3314
    %v3316 = vtanh.pop %v3315
    %v3317 = vmul.f32 %v3299, %v3316
    %v3319 = vsel %vm567, %v3317, 0
    %3321 = vmatprep.subr.mxu0 0.0
    %3322 = vmatpush1.msra.mxu0 %v556
    %3323 = vmatprep.subr.mxu0 0.0
    %3324 = vmatpush1.msra.mxu0 %v557
    %3325 = vmatprep.subr.mxu0 0.0
    %3326 = vmatpush1.msra.mxu0 %v558
    %3327 = vmatprep.subr.mxu0 0.0
    %3328 = vmatpush1.msra.mxu0 %v559
    %3329 = vmatprep.subr.mxu0 0.0
    %3330 = vmatpush1.msra.mxu0 0.0
    %3331 = vmatprep.subr.mxu0 0.0
    %3332 = vmatpush1.msra.mxu0 0.0
    %3333 = vmatprep.subr.mxu0 0.0
    %3334 = vmatpush1.msra.mxu0 0.0
    %3335 = vmatprep.subr.mxu0 0.0
    %3336 = vmatpush1.msra.mxu0 0.0
    %3337 = vmatprep.subr.mxu0 0.0
    %3338 = vmatpush1.msra.mxu0 0.0
    %3339 = vmatprep.subr.mxu0 0.0
    %3340 = vmatpush1.msra.mxu0 0.0
    %3341 = vmatprep.subr.mxu0 0.0
    %3342 = vmatpush1.msra.mxu0 0.0
    %3343 = vmatprep.subr.mxu0 0.0
    %3344 = vmatpush1.msra.mxu0 0.0
    %3345 = vmatprep.subr.mxu0 0.0
    %3346 = vmatpush1.msra.mxu0 0.0
    %3347 = vmatprep.subr.mxu0 0.0
    %3348 = vmatpush1.msra.mxu0 0.0
    %3349 = vmatprep.subr.mxu0 0.0
    %3350 = vmatpush1.msra.mxu0 0.0
    %3351 = vmatprep.subr.mxu0 0.0
    %3352 = vmatpush1.msra.mxu0 0.0
    %3353 = vmatprep.subr.mxu0 0.0
    %3354 = vmatpush1.msra.mxu0 0.0
    %3355 = vmatprep.subr.mxu0 0.0
    %3356 = vmatpush1.msra.mxu0 0.0
    %3357 = vmatprep.subr.mxu0 0.0
    %3358 = vmatpush1.msra.mxu0 0.0
    %3359 = vmatprep.subr.mxu0 0.0
    %3360 = vmatpush1.msra.mxu0 0.0
    %3361 = vmatprep.subr.mxu0 0.0
    %3362 = vmatpush1.msra.mxu0 0.0
    %3363 = vmatprep.subr.mxu0 0.0
    %3364 = vmatpush1.msra.mxu0 0.0
    %3365 = vmatprep.subr.mxu0 0.0
    %3366 = vmatpush1.msra.mxu0 0.0
    %3367 = vmatprep.subr.mxu0 0.0
    %3368 = vmatpush1.msra.mxu0 0.0
    %3369 = vmatprep.subr.mxu0 0.0
    %3370 = vmatpush1.msra.mxu0 0.0
    %3371 = vmatprep.subr.mxu0 0.0
    %3372 = vmatpush1.msra.mxu0 0.0
    %3373 = vmatprep.subr.mxu0 0.0
    %3374 = vmatpush1.msra.mxu0 0.0
    %3375 = vmatprep.subr.mxu0 0.0
    %3376 = vmatpush1.msra.mxu0 0.0
    %3377 = vmatprep.subr.mxu0 0.0
    %3378 = vmatpush1.msra.mxu0 0.0
    %3379 = vmatprep.subr.mxu0 0.0
    %3380 = vmatpush1.msra.mxu0 0.0
    %3381 = vmatprep.subr.mxu0 0.0
    %3382 = vmatpush1.msra.mxu0 0.0
    %3383 = vmatprep.subr.mxu0 0.0
    %3384 = vmatpush1.msra.mxu0 0.0
    %3385 = vmatprep.mubr.f32.mxu0 0.0
    %3386 = vmatmul.mubr.f32.gmra.mrb[0].mxu0 %v3319
    %v3387 = vpop.f32.mrb[0].mxu0
    %v3388 = vadd.f32 %v661, %v3387
    %v3389 = vpop.f32.mrb[0].mxu0
    %3390 = vdwg.mxu0
    %vm3391 = vcmp.gt.f32.partialorder %v3388, 20.0
    %v3392 = vmin.f32 %v3388, 20.0
    %v3393 = vmul.f32 %v3392, 1.442695
    %v3394 = vpow.pop %v3393
    %v3395 = vadd.f32 %v3394, 1.0
    %v3396 = vlog2.pop %v3395
    %v3397 = vmul.f32 %v3396, 0.6931472
    %v3398 = vmul.f32 -0.5, %v3394
    %v3399 = vadd.f32 %v3398, 1.0
    %v3400 = vmul.f32 %v3399, %v3394
    %v3401 = vand.u32 2147483647, %v3394
    %vm3402 = vcmp.lt.f32.partialorder %v3401, 0.0004427343
    %v3403 = vsel %vm3402, %v3400, %v3397
    %v3404 = vsel %vm3391, %v3388, %v3403
    %v3405 = vtanh.pop %v3404
    %v3406 = vmul.f32 %v3388, %v3405
    %v3408 = vsel %vm567, %v3406, 0
    %3410 = vmatprep.subr.mxu0 0.0
    %3411 = vmatpush1.msra.mxu0 %v561
    %3412 = vmatprep.subr.mxu0 0.0
    %3413 = vmatpush1.msra.mxu0 %v562
    %3414 = vmatprep.subr.mxu0 0.0
    %3415 = vmatpush1.msra.mxu0 %v563
    %3416 = vmatprep.subr.mxu0 0.0
    %3417 = vmatpush1.msra.mxu0 %v564
    %3418 = vmatprep.subr.mxu0 0.0
    %3419 = vmatpush1.msra.mxu0 0.0
    %3420 = vmatprep.subr.mxu0 0.0
    %3421 = vmatpush1.msra.mxu0 0.0
    %3422 = vmatprep.subr.mxu0 0.0
    %3423 = vmatpush1.msra.mxu0 0.0
    %3424 = vmatprep.subr.mxu0 0.0
    %3425 = vmatpush1.msra.mxu0 0.0
    %3426 = vmatprep.subr.mxu0 0.0
    %3427 = vmatpush1.msra.mxu0 0.0
    %3428 = vmatprep.subr.mxu0 0.0
    %3429 = vmatpush1.msra.mxu0 0.0
    %3430 = vmatprep.subr.mxu0 0.0
    %3431 = vmatpush1.msra.mxu0 0.0
    %3432 = vmatprep.subr.mxu0 0.0
    %3433 = vmatpush1.msra.mxu0 0.0
    %3434 = vmatprep.subr.mxu0 0.0
    %3435 = vmatpush1.msra.mxu0 0.0
    %3436 = vmatprep.subr.mxu0 0.0
    %3437 = vmatpush1.msra.mxu0 0.0
    %3438 = vmatprep.subr.mxu0 0.0
    %3439 = vmatpush1.msra.mxu0 0.0
    %3440 = vmatprep.subr.mxu0 0.0
    %3441 = vmatpush1.msra.mxu0 0.0
    %3442 = vmatprep.subr.mxu0 0.0
    %3443 = vmatpush1.msra.mxu0 0.0
    %3444 = vmatprep.subr.mxu0 0.0
    %3445 = vmatpush1.msra.mxu0 0.0
    %3446 = vmatprep.subr.mxu0 0.0
    %3447 = vmatpush1.msra.mxu0 0.0
    %3448 = vmatprep.subr.mxu0 0.0
    %3449 = vmatpush1.msra.mxu0 0.0
    %3450 = vmatprep.subr.mxu0 0.0
    %3451 = vmatpush1.msra.mxu0 0.0
    %3452 = vmatprep.subr.mxu0 0.0
    %3453 = vmatpush1.msra.mxu0 0.0
    %3454 = vmatprep.subr.mxu0 0.0
    %3455 = vmatpush1.msra.mxu0 0.0
    %3456 = vmatprep.subr.mxu0 0.0
    %3457 = vmatpush1.msra.mxu0 0.0
    %3458 = vmatprep.subr.mxu0 0.0
    %3459 = vmatpush1.msra.mxu0 0.0
    %3460 = vmatprep.subr.mxu0 0.0
    %3461 = vmatpush1.msra.mxu0 0.0
    %3462 = vmatprep.subr.mxu0 0.0
    %3463 = vmatpush1.msra.mxu0 0.0
    %3464 = vmatprep.subr.mxu0 0.0
    %3465 = vmatpush1.msra.mxu0 0.0
    %3466 = vmatprep.subr.mxu0 0.0
    %3467 = vmatpush1.msra.mxu0 0.0
    %3468 = vmatprep.subr.mxu0 0.0
    %3469 = vmatpush1.msra.mxu0 0.0
    %3470 = vmatprep.subr.mxu0 0.0
    %3471 = vmatpush1.msra.mxu0 0.0
    %3472 = vmatprep.subr.mxu0 0.0
    %3473 = vmatpush1.msra.mxu0 0.0
    %3474 = vmatprep.mubr.f32.mxu0 0.0
    %3475 = vmatmul.mubr.f32.gmra.mrb[0].mxu0 %v3408
    %v3476 = vpop.f32.mrb[0].mxu0
    %v3477 = vadd.f32 %v756, %v3476
    %v3478 = vpop.f32.mrb[0].mxu0
    %3479 = vdwg.mxu0
    %v3480 = vmul.f32 %v3226, 1.4230013
    %v3481 = vmul.f32 %v3477, 1.0123895
    %v3482 = vsub.f32 %v3480, %v3481
    %v3483 = vmax.f32 %v3482, -1.0
    %v3484 = vmin.f32 %v3483, 1.0
    %v3485 = vmul.f32 %v3484, 0.20301282
    %v3486 = vmul.f32 %v3226, 0.7868927
    %v3487 = vadd.f32 %v3485, %v3486
    %s3488 = scalar_lea.vmem %s3, 20
    %v3489 = vld [vmem:[%s3488] sm:$0x3]
    %v3490 = vmul.f32 %v3489, 0.33920676
    %v3491 = vadd.f32 %v3487, %v3490
    %s3492 = scalar_lea.vmem [#allocation14], 20
    %3493 = vst.msk [vmem:[%s3492] sm:$0x3] %vm842, %v3491
    %v3495 = vsel %vm567, %v3491, 0
    %3497 = vmatprep.subr.mxu0 0.0
    %3498 = vmatpush1.msra.mxu0 %v552
    %3499 = vmatprep.subr.mxu0 0.0
    %3500 = vmatpush1.msra.mxu0 %v553
    %3501 = vmatprep.subr.mxu0 0.0
    %3502 = vmatpush1.msra.mxu0 %v554
    %3503 = vmatprep.subr.mxu0 0.0
    %3504 = vmatpush1.msra.mxu0 %v555
    %3505 = vmatprep.subr.mxu0 0.0
    %3506 = vmatpush1.msra.mxu0 0.0
    %3507 = vmatprep.subr.mxu0 0.0
    %3508 = vmatpush1.msra.mxu0 0.0
    %3509 = vmatprep.subr.mxu0 0.0
    %3510 = vmatpush1.msra.mxu0 0.0
    %3511 = vmatprep.subr.mxu0 0.0
    %3512 = vmatpush1.msra.mxu0 0.0
    %3513 = vmatprep.subr.mxu0 0.0
    %3514 = vmatpush1.msra.mxu0 0.0
    %3515 = vmatprep.subr.mxu0 0.0
    %3516 = vmatpush1.msra.mxu0 0.0
    %3517 = vmatprep.subr.mxu0 0.0
    %3518 = vmatpush1.msra.mxu0 0.0
    %3519 = vmatprep.subr.mxu0 0.0
    %3520 = vmatpush1.msra.mxu0 0.0
    %3521 = vmatprep.subr.mxu0 0.0
    %3522 = vmatpush1.msra.mxu0 0.0
    %3523 = vmatprep.subr.mxu0 0.0
    %3524 = vmatpush1.msra.mxu0 0.0
    %3525 = vmatprep.subr.mxu0 0.0
    %3526 = vmatpush1.msra.mxu0 0.0
    %3527 = vmatprep.subr.mxu0 0.0
    %3528 = vmatpush1.msra.mxu0 0.0
    %3529 = vmatprep.subr.mxu0 0.0
    %3530 = vmatpush1.msra.mxu0 0.0
    %3531 = vmatprep.subr.mxu0 0.0
    %3532 = vmatpush1.msra.mxu0 0.0
    %3533 = vmatprep.subr.mxu0 0.0
    %3534 = vmatpush1.msra.mxu0 0.0
    %3535 = vmatprep.subr.mxu0 0.0
    %3536 = vmatpush1.msra.mxu0 0.0
    %3537 = vmatprep.subr.mxu0 0.0
    %3538 = vmatpush1.msra.mxu0 0.0
    %3539 = vmatprep.subr.mxu0 0.0
    %3540 = vmatpush1.msra.mxu0 0.0
    %3541 = vmatprep.subr.mxu0 0.0
    %3542 = vmatpush1.msra.mxu0 0.0
    %3543 = vmatprep.subr.mxu0 0.0
    %3544 = vmatpush1.msra.mxu0 0.0
    %3545 = vmatprep.subr.mxu0 0.0
    %3546 = vmatpush1.msra.mxu0 0.0
    %3547 = vmatprep.subr.mxu0 0.0
    %3548 = vmatpush1.msra.mxu0 0.0
    %3549 = vmatprep.subr.mxu0 0.0
    %3550 = vmatpush1.msra.mxu0 0.0
    %3551 = vmatprep.subr.mxu0 0.0
    %3552 = vmatpush1.msra.mxu0 0.0
    %3553 = vmatprep.subr.mxu0 0.0
    %3554 = vmatpush1.msra.mxu0 0.0
    %3555 = vmatprep.subr.mxu0 0.0
    %3556 = vmatpush1.msra.mxu0 0.0
    %3557 = vmatprep.subr.mxu0 0.0
    %3558 = vmatpush1.msra.mxu0 0.0
    %3559 = vmatprep.subr.mxu0 0.0
    %3560 = vmatpush1.msra.mxu0 0.0
    %3561 = vmatprep.mubr.f32.mxu0 0.0
    %3562 = vmatmul.mubr.f32.gmra.mrb[0].mxu0 %v3495
    %v3563 = vpop.f32.mrb[0].mxu0
    %v3564 = vadd.f32 %v543, %v3563
    %v3565 = vpop.f32.mrb[0].mxu0
    %3566 = vdwg.mxu0
    %vm3567 = vcmp.gt.f32.partialorder %v3564, 20.0
    %v3568 = vmin.f32 %v3564, 20.0
    %v3569 = vmul.f32 %v3568, 1.442695
    %v3570 = vpow.pop %v3569
    %v3571 = vadd.f32 %v3570, 1.0
    %v3572 = vlog2.pop %v3571
    %v3573 = vmul.f32 %v3572, 0.6931472
    %v3574 = vmul.f32 -0.5, %v3570
    %v3575 = vadd.f32 %v3574, 1.0
    %v3576 = vmul.f32 %v3575, %v3570
    %v3577 = vand.u32 2147483647, %v3570
    %vm3578 = vcmp.lt.f32.partialorder %v3577, 0.0004427343
    %v3579 = vsel %vm3578, %v3576, %v3573
    %v3580 = vsel %vm3567, %v3564, %v3579
    %v3581 = vtanh.pop %v3580
    %v3582 = vmul.f32 %v3564, %v3581
    %v3584 = vsel %vm567, %v3582, 0
    %3586 = vmatprep.subr.mxu0 0.0
    %3587 = vmatpush1.msra.mxu0 %v556
    %3588 = vmatprep.subr.mxu0 0.0
    %3589 = vmatpush1.msra.mxu0 %v557
    %3590 = vmatprep.subr.mxu0 0.0
    %3591 = vmatpush1.msra.mxu0 %v558
    %3592 = vmatprep.subr.mxu0 0.0
    %3593 = vmatpush1.msra.mxu0 %v559
    %3594 = vmatprep.subr.mxu0 0.0
    %3595 = vmatpush1.msra.mxu0 0.0
    %3596 = vmatprep.subr.mxu0 0.0
    %3597 = vmatpush1.msra.mxu0 0.0
    %3598 = vmatprep.subr.mxu0 0.0
    %3599 = vmatpush1.msra.mxu0 0.0
    %3600 = vmatprep.subr.mxu0 0.0
    %3601 = vmatpush1.msra.mxu0 0.0
    %3602 = vmatprep.subr.mxu0 0.0
    %3603 = vmatpush1.msra.mxu0 0.0
    %3604 = vmatprep.subr.mxu0 0.0
    %3605 = vmatpush1.msra.mxu0 0.0
    %3606 = vmatprep.subr.mxu0 0.0
    %3607 = vmatpush1.msra.mxu0 0.0
    %3608 = vmatprep.subr.mxu0 0.0
    %3609 = vmatpush1.msra.mxu0 0.0
    %3610 = vmatprep.subr.mxu0 0.0
    %3611 = vmatpush1.msra.mxu0 0.0
    %3612 = vmatprep.subr.mxu0 0.0
    %3613 = vmatpush1.msra.mxu0 0.0
    %3614 = vmatprep.subr.mxu0 0.0
    %3615 = vmatpush1.msra.mxu0 0.0
    %3616 = vmatprep.subr.mxu0 0.0
    %3617 = vmatpush1.msra.mxu0 0.0
    %3618 = vmatprep.subr.mxu0 0.0
    %3619 = vmatpush1.msra.mxu0 0.0
    %3620 = vmatprep.subr.mxu0 0.0
    %3621 = vmatpush1.msra.mxu0 0.0
    %3622 = vmatprep.subr.mxu0 0.0
    %3623 = vmatpush1.msra.mxu0 0.0
    %3624 = vmatprep.subr.mxu0 0.0
    %3625 = vmatpush1.msra.mxu0 0.0
    %3626 = vmatprep.subr.mxu0 0.0
    %3627 = vmatpush1.msra.mxu0 0.0
    %3628 = vmatprep.subr.mxu0 0.0
    %3629 = vmatpush1.msra.mxu0 0.0
    %3630 = vmatprep.subr.mxu0 0.0
    %3631 = vmatpush1.msra.mxu0 0.0
    %3632 = vmatprep.subr.mxu0 0.0
    %3633 = vmatpush1.msra.mxu0 0.0
    %3634 = vmatprep.subr.mxu0 0.0
    %3635 = vmatpush1.msra.mxu0 0.0
    %3636 = vmatprep.subr.mxu0 0.0
    %3637 = vmatpush1.msra.mxu0 0.0
    %3638 = vmatprep.subr.mxu0 0.0
    %3639 = vmatpush1.msra.mxu0 0.0
    %3640 = vmatprep.subr.mxu0 0.0
    %3641 = vmatpush1.msra.mxu0 0.0
    %3642 = vmatprep.subr.mxu0 0.0
    %3643 = vmatpush1.msra.mxu0 0.0
    %3644 = vmatprep.subr.mxu0 0.0
    %3645 = vmatpush1.msra.mxu0 0.0
    %3646 = vmatprep.subr.mxu0 0.0
    %3647 = vmatpush1.msra.mxu0 0.0
    %3648 = vmatprep.subr.mxu0 0.0
    %3649 = vmatpush1.msra.mxu0 0.0
    %3650 = vmatprep.mubr.f32.mxu0 0.0
    %3651 = vmatmul.mubr.f32.gmra.mrb[0].mxu0 %v3584
    %v3652 = vpop.f32.mrb[0].mxu0
    %v3653 = vadd.f32 %v661, %v3652
    %v3654 = vpop.f32.mrb[0].mxu0
    %3655 = vdwg.mxu0
    %vm3656 = vcmp.gt.f32.partialorder %v3653, 20.0
    %v3657 = vmin.f32 %v3653, 20.0
    %v3658 = vmul.f32 %v3657, 1.442695
    %v3659 = vpow.pop %v3658
    %v3660 = vadd.f32 %v3659, 1.0
    %v3661 = vlog2.pop %v3660
    %v3662 = vmul.f32 %v3661, 0.6931472
    %v3663 = vmul.f32 -0.5, %v3659
    %v3664 = vadd.f32 %v3663, 1.0
    %v3665 = vmul.f32 %v3664, %v3659
    %v3666 = vand.u32 2147483647, %v3659
    %vm3667 = vcmp.lt.f32.partialorder %v3666, 0.0004427343
    %v3668 = vsel %vm3667, %v3665, %v3662
    %v3669 = vsel %vm3656, %v3653, %v3668
    %v3670 = vtanh.pop %v3669
    %v3671 = vmul.f32 %v3653, %v3670
    %v3673 = vsel %vm567, %v3671, 0
    %3675 = vmatprep.subr.mxu0 0.0
    %3676 = vmatpush1.msra.mxu0 %v561
    %3677 = vmatprep.subr.mxu0 0.0
    %3678 = vmatpush1.msra.mxu0 %v562
    %3679 = vmatprep.subr.mxu0 0.0
    %3680 = vmatpush1.msra.mxu0 %v563
    %3681 = vmatprep.subr.mxu0 0.0
    %3682 = vmatpush1.msra.mxu0 %v564
    %3683 = vmatprep.subr.mxu0 0.0
    %3684 = vmatpush1.msra.mxu0 0.0
    %3685 = vmatprep.subr.mxu0 0.0
    %3686 = vmatpush1.msra.mxu0 0.0
    %3687 = vmatprep.subr.mxu0 0.0
    %3688 = vmatpush1.msra.mxu0 0.0
    %3689 = vmatprep.subr.mxu0 0.0
    %3690 = vmatpush1.msra.mxu0 0.0
    %3691 = vmatprep.subr.mxu0 0.0
    %3692 = vmatpush1.msra.mxu0 0.0
    %3693 = vmatprep.subr.mxu0 0.0
    %3694 = vmatpush1.msra.mxu0 0.0
    %3695 = vmatprep.subr.mxu0 0.0
    %3696 = vmatpush1.msra.mxu0 0.0
    %3697 = vmatprep.subr.mxu0 0.0
    %3698 = vmatpush1.msra.mxu0 0.0
    %3699 = vmatprep.subr.mxu0 0.0
    %3700 = vmatpush1.msra.mxu0 0.0
    %3701 = vmatprep.subr.mxu0 0.0
    %3702 = vmatpush1.msra.mxu0 0.0
    %3703 = vmatprep.subr.mxu0 0.0
    %3704 = vmatpush1.msra.mxu0 0.0
    %3705 = vmatprep.subr.mxu0 0.0
    %3706 = vmatpush1.msra.mxu0 0.0
    %3707 = vmatprep.subr.mxu0 0.0
    %3708 = vmatpush1.msra.mxu0 0.0
    %3709 = vmatprep.subr.mxu0 0.0
    %3710 = vmatpush1.msra.mxu0 0.0
    %3711 = vmatprep.subr.mxu0 0.0
    %3712 = vmatpush1.msra.mxu0 0.0
    %3713 = vmatprep.subr.mxu0 0.0
    %3714 = vmatpush1.msra.mxu0 0.0
    %3715 = vmatprep.subr.mxu0 0.0
    %3716 = vmatpush1.msra.mxu0 0.0
    %3717 = vmatprep.subr.mxu0 0.0
    %3718 = vmatpush1.msra.mxu0 0.0
    %3719 = vmatprep.subr.mxu0 0.0
    %3720 = vmatpush1.msra.mxu0 0.0
    %3721 = vmatprep.subr.mxu0 0.0
    %3722 = vmatpush1.msra.mxu0 0.0
    %3723 = vmatprep.subr.mxu0 0.0
    %3724 = vmatpush1.msra.mxu0 0.0
    %3725 = vmatprep.subr.mxu0 0.0
    %3726 = vmatpush1.msra.mxu0 0.0
    %3727 = vmatprep.subr.mxu0 0.0
    %3728 = vmatpush1.msra.mxu0 0.0
    %3729 = vmatprep.subr.mxu0 0.0
    %3730 = vmatpush1.msra.mxu0 0.0
    %3731 = vmatprep.subr.mxu0 0.0
    %3732 = vmatpush1.msra.mxu0 0.0
    %3733 = vmatprep.subr.mxu0 0.0
    %3734 = vmatpush1.msra.mxu0 0.0
    %3735 = vmatprep.subr.mxu0 0.0
    %3736 = vmatpush1.msra.mxu0 0.0
    %3737 = vmatprep.subr.mxu0 0.0
    %3738 = vmatpush1.msra.mxu0 0.0
    %3739 = vmatprep.mubr.f32.mxu0 0.0
    %3740 = vmatmul.mubr.f32.gmra.mrb[0].mxu0 %v3673
    %v3741 = vpop.f32.mrb[0].mxu0
    %v3742 = vadd.f32 %v756, %v3741
    %v3743 = vpop.f32.mrb[0].mxu0
    %3744 = vdwg.mxu0
    %v3745 = vmul.f32 %v3491, 1.3227621
    %v3746 = vmul.f32 %v3742, 0.86585194
    %v3747 = vsub.f32 %v3745, %v3746
    %v3748 = vmax.f32 %v3747, -1.0
    %v3749 = vmin.f32 %v3748, 1.0
    %v3750 = vmul.f32 %v3749, 0.22029275
    %v3751 = vmul.f32 %v3491, 0.77297926
    %v3752 = vadd.f32 %v3750, %v3751
    %s3753 = scalar_lea.vmem %s3, 22
    %v3754 = vld [vmem:[%s3753] sm:$0x3]
    %v3755 = vmul.f32 %v3754, 0.31066105
    %v3756 = vadd.f32 %v3752, %v3755
    %s3757 = scalar_lea.vmem [#allocation14], 22
    %3758 = vst.msk [vmem:[%s3757] sm:$0x3] %vm842, %v3756
    %v3760 = vsel %vm567, %v3756, 0
    %3762 = vmatprep.subr.mxu0 0.0
    %3763 = vmatpush1.msra.mxu0 %v552
    %3764 = vmatprep.subr.mxu0 0.0
    %3765 = vmatpush1.msra.mxu0 %v553
    %3766 = vmatprep.subr.mxu0 0.0
    %3767 = vmatpush1.msra.mxu0 %v554
    %3768 = vmatprep.subr.mxu0 0.0
    %3769 = vmatpush1.msra.mxu0 %v555
    %3770 = vmatprep.subr.mxu0 0.0
    %3771 = vmatpush1.msra.mxu0 0.0
    %3772 = vmatprep.subr.mxu0 0.0
    %3773 = vmatpush1.msra.mxu0 0.0
    %3774 = vmatprep.subr.mxu0 0.0
    %3775 = vmatpush1.msra.mxu0 0.0
    %3776 = vmatprep.subr.mxu0 0.0
    %3777 = vmatpush1.msra.mxu0 0.0
    %3778 = vmatprep.subr.mxu0 0.0
    %3779 = vmatpush1.msra.mxu0 0.0
    %3780 = vmatprep.subr.mxu0 0.0
    %3781 = vmatpush1.msra.mxu0 0.0
    %3782 = vmatprep.subr.mxu0 0.0
    %3783 = vmatpush1.msra.mxu0 0.0
    %3784 = vmatprep.subr.mxu0 0.0
    %3785 = vmatpush1.msra.mxu0 0.0
    %3786 = vmatprep.subr.mxu0 0.0
    %3787 = vmatpush1.msra.mxu0 0.0
    %3788 = vmatprep.subr.mxu0 0.0
    %3789 = vmatpush1.msra.mxu0 0.0
    %3790 = vmatprep.subr.mxu0 0.0
    %3791 = vmatpush1.msra.mxu0 0.0
    %3792 = vmatprep.subr.mxu0 0.0
    %3793 = vmatpush1.msra.mxu0 0.0
    %3794 = vmatprep.subr.mxu0 0.0
    %3795 = vmatpush1.msra.mxu0 0.0
    %3796 = vmatprep.subr.mxu0 0.0
    %3797 = vmatpush1.msra.mxu0 0.0
    %3798 = vmatprep.subr.mxu0 0.0
    %3799 = vmatpush1.msra.mxu0 0.0
    %3800 = vmatprep.subr.mxu0 0.0
    %3801 = vmatpush1.msra.mxu0 0.0
    %3802 = vmatprep.subr.mxu0 0.0
    %3803 = vmatpush1.msra.mxu0 0.0
    %3804 = vmatprep.subr.mxu0 0.0
    %3805 = vmatpush1.msra.mxu0 0.0
    %3806 = vmatprep.subr.mxu0 0.0
    %3807 = vmatpush1.msra.mxu0 0.0
    %3808 = vmatprep.subr.mxu0 0.0
    %3809 = vmatpush1.msra.mxu0 0.0
    %3810 = vmatprep.subr.mxu0 0.0
    %3811 = vmatpush1.msra.mxu0 0.0
    %3812 = vmatprep.subr.mxu0 0.0
    %3813 = vmatpush1.msra.mxu0 0.0
    %3814 = vmatprep.subr.mxu0 0.0
    %3815 = vmatpush1.msra.mxu0 0.0
    %3816 = vmatprep.subr.mxu0 0.0
    %3817 = vmatpush1.msra.mxu0 0.0
    %3818 = vmatprep.subr.mxu0 0.0
    %3819 = vmatpush1.msra.mxu0 0.0
    %3820 = vmatprep.subr.mxu0 0.0
    %3821 = vmatpush1.msra.mxu0 0.0
    %3822 = vmatprep.subr.mxu0 0.0
    %3823 = vmatpush1.msra.mxu0 0.0
    %3824 = vmatprep.subr.mxu0 0.0
    %3825 = vmatpush1.msra.mxu0 0.0
    %3826 = vmatprep.mubr.f32.mxu0 0.0
    %3827 = vmatmul.mubr.f32.gmra.mrb[0].mxu0 %v3760
    %v3828 = vpop.f32.mrb[0].mxu0
    %v3829 = vadd.f32 %v544, %v3828
    %v3830 = vpop.f32.mrb[0].mxu0
    %3831 = vdwg.mxu0
    %vm3832 = vcmp.gt.f32.partialorder %v3829, 20.0
    %v3833 = vmin.f32 %v3829, 20.0
    %v3834 = vmul.f32 %v3833, 1.442695
    %v3835 = vpow.pop %v3834
    %v3836 = vadd.f32 %v3835, 1.0
    %v3837 = vlog2.pop %v3836
    %v3838 = vmul.f32 %v3837, 0.6931472
    %v3839 = vmul.f32 -0.5, %v3835
    %v3840 = vadd.f32 %v3839, 1.0
    %v3841 = vmul.f32 %v3840, %v3835
    %v3842 = vand.u32 2147483647, %v3835
    %vm3843 = vcmp.lt.f32.partialorder %v3842, 0.0004427343
    %v3844 = vsel %vm3843, %v3841, %v3838
    %v3845 = vsel %vm3832, %v3829, %v3844
    %v3846 = vtanh.pop %v3845
    %v3847 = vmul.f32 %v3829, %v3846
    %v3849 = vsel %vm567, %v3847, 0
    %3851 = vmatprep.subr.mxu0 0.0
    %3852 = vmatpush1.msra.mxu0 %v556
    %3853 = vmatprep.subr.mxu0 0.0
    %3854 = vmatpush1.msra.mxu0 %v557
    %3855 = vmatprep.subr.mxu0 0.0
    %3856 = vmatpush1.msra.mxu0 %v558
    %3857 = vmatprep.subr.mxu0 0.0
    %3858 = vmatpush1.msra.mxu0 %v559
    %3859 = vmatprep.subr.mxu0 0.0
    %3860 = vmatpush1.msra.mxu0 0.0
    %3861 = vmatprep.subr.mxu0 0.0
    %3862 = vmatpush1.msra.mxu0 0.0
    %3863 = vmatprep.subr.mxu0 0.0
    %3864 = vmatpush1.msra.mxu0 0.0
    %3865 = vmatprep.subr.mxu0 0.0
    %3866 = vmatpush1.msra.mxu0 0.0
    %3867 = vmatprep.subr.mxu0 0.0
    %3868 = vmatpush1.msra.mxu0 0.0
    %3869 = vmatprep.subr.mxu0 0.0
    %3870 = vmatpush1.msra.mxu0 0.0
    %3871 = vmatprep.subr.mxu0 0.0
    %3872 = vmatpush1.msra.mxu0 0.0
    %3873 = vmatprep.subr.mxu0 0.0
    %3874 = vmatpush1.msra.mxu0 0.0
    %3875 = vmatprep.subr.mxu0 0.0
    %3876 = vmatpush1.msra.mxu0 0.0
    %3877 = vmatprep.subr.mxu0 0.0
    %3878 = vmatpush1.msra.mxu0 0.0
    %3879 = vmatprep.subr.mxu0 0.0
    %3880 = vmatpush1.msra.mxu0 0.0
    %3881 = vmatprep.subr.mxu0 0.0
    %3882 = vmatpush1.msra.mxu0 0.0
    %3883 = vmatprep.subr.mxu0 0.0
    %3884 = vmatpush1.msra.mxu0 0.0
    %3885 = vmatprep.subr.mxu0 0.0
    %3886 = vmatpush1.msra.mxu0 0.0
    %3887 = vmatprep.subr.mxu0 0.0
    %3888 = vmatpush1.msra.mxu0 0.0
    %3889 = vmatprep.subr.mxu0 0.0
    %3890 = vmatpush1.msra.mxu0 0.0
    %3891 = vmatprep.subr.mxu0 0.0
    %3892 = vmatpush1.msra.mxu0 0.0
    %3893 = vmatprep.subr.mxu0 0.0
    %3894 = vmatpush1.msra.mxu0 0.0
    %3895 = vmatprep.subr.mxu0 0.0
    %3896 = vmatpush1.msra.mxu0 0.0
    %3897 = vmatprep.subr.mxu0 0.0
    %3898 = vmatpush1.msra.mxu0 0.0
    %3899 = vmatprep.subr.mxu0 0.0
    %3900 = vmatpush1.msra.mxu0 0.0
    %3901 = vmatprep.subr.mxu0 0.0
    %3902 = vmatpush1.msra.mxu0 0.0
    %3903 = vmatprep.subr.mxu0 0.0
    %3904 = vmatpush1.msra.mxu0 0.0
    %3905 = vmatprep.subr.mxu0 0.0
    %3906 = vmatpush1.msra.mxu0 0.0
    %3907 = vmatprep.subr.mxu0 0.0
    %3908 = vmatpush1.msra.mxu0 0.0
    %3909 = vmatprep.subr.mxu0 0.0
    %3910 = vmatpush1.msra.mxu0 0.0
    %3911 = vmatprep.subr.mxu0 0.0
    %3912 = vmatpush1.msra.mxu0 0.0
    %3913 = vmatprep.subr.mxu0 0.0
    %3914 = vmatpush1.msra.mxu0 0.0
    %3915 = vmatprep.mubr.f32.mxu0 0.0
    %3916 = vmatmul.mubr.f32.gmra.mrb[0].mxu0 %v3849
    %v3917 = vpop.f32.mrb[0].mxu0
    %v3918 = vadd.f32 %v661, %v3917
    %v3919 = vpop.f32.mrb[0].mxu0
    %3920 = vdwg.mxu0
    %vm3921 = vcmp.gt.f32.partialorder %v3918, 20.0
    %v3922 = vmin.f32 %v3918, 20.0
    %v3923 = vmul.f32 %v3922, 1.442695
    %v3924 = vpow.pop %v3923
    %v3925 = vadd.f32 %v3924, 1.0
    %v3926 = vlog2.pop %v3925
    %v3927 = vmul.f32 %v3926, 0.6931472
    %v3928 = vmul.f32 -0.5, %v3924
    %v3929 = vadd.f32 %v3928, 1.0
    %v3930 = vmul.f32 %v3929, %v3924
    %v3931 = vand.u32 2147483647, %v3924
    %vm3932 = vcmp.lt.f32.partialorder %v3931, 0.0004427343
    %v3933 = vsel %vm3932, %v3930, %v3927
    %v3934 = vsel %vm3921, %v3918, %v3933
    %v3935 = vtanh.pop %v3934
    %v3936 = vmul.f32 %v3918, %v3935
    %v3938 = vsel %vm567, %v3936, 0
    %3940 = vmatprep.subr.mxu0 0.0
    %3941 = vmatpush1.msra.mxu0 %v561
    %3942 = vmatprep.subr.mxu0 0.0
    %3943 = vmatpush1.msra.mxu0 %v562
    %3944 = vmatprep.subr.mxu0 0.0
    %3945 = vmatpush1.msra.mxu0 %v563
    %3946 = vmatprep.subr.mxu0 0.0
    %3947 = vmatpush1.msra.mxu0 %v564
    %3948 = vmatprep.subr.mxu0 0.0
    %3949 = vmatpush1.msra.mxu0 0.0
    %3950 = vmatprep.subr.mxu0 0.0
    %3951 = vmatpush1.msra.mxu0 0.0
    %3952 = vmatprep.subr.mxu0 0.0
    %3953 = vmatpush1.msra.mxu0 0.0
    %3954 = vmatprep.subr.mxu0 0.0
    %3955 = vmatpush1.msra.mxu0 0.0
    %3956 = vmatprep.subr.mxu0 0.0
    %3957 = vmatpush1.msra.mxu0 0.0
    %3958 = vmatprep.subr.mxu0 0.0
    %3959 = vmatpush1.msra.mxu0 0.0
    %3960 = vmatprep.subr.mxu0 0.0
    %3961 = vmatpush1.msra.mxu0 0.0
    %3962 = vmatprep.subr.mxu0 0.0
    %3963 = vmatpush1.msra.mxu0 0.0
    %3964 = vmatprep.subr.mxu0 0.0
    %3965 = vmatpush1.msra.mxu0 0.0
    %3966 = vmatprep.subr.mxu0 0.0
    %3967 = vmatpush1.msra.mxu0 0.0
    %3968 = vmatprep.subr.mxu0 0.0
    %3969 = vmatpush1.msra.mxu0 0.0
    %3970 = vmatprep.subr.mxu0 0.0
    %3971 = vmatpush1.msra.mxu0 0.0
    %3972 = vmatprep.subr.mxu0 0.0
    %3973 = vmatpush1.msra.mxu0 0.0
    %3974 = vmatprep.subr.mxu0 0.0
    %3975 = vmatpush1.msra.mxu0 0.0
    %3976 = vmatprep.subr.mxu0 0.0
    %3977 = vmatpush1.msra.mxu0 0.0
    %3978 = vmatprep.subr.mxu0 0.0
    %3979 = vmatpush1.msra.mxu0 0.0
    %3980 = vmatprep.subr.mxu0 0.0
    %3981 = vmatpush1.msra.mxu0 0.0
    %3982 = vmatprep.subr.mxu0 0.0
    %3983 = vmatpush1.msra.mxu0 0.0
    %3984 = vmatprep.subr.mxu0 0.0
    %3985 = vmatpush1.msra.mxu0 0.0
    %3986 = vmatprep.subr.mxu0 0.0
    %3987 = vmatpush1.msra.mxu0 0.0
    %3988 = vmatprep.subr.mxu0 0.0
    %3989 = vmatpush1.msra.mxu0 0.0
    %3990 = vmatprep.subr.mxu0 0.0
    %3991 = vmatpush1.msra.mxu0 0.0
    %3992 = vmatprep.subr.mxu0 0.0
    %3993 = vmatpush1.msra.mxu0 0.0
    %3994 = vmatprep.subr.mxu0 0.0
    %3995 = vmatpush1.msra.mxu0 0.0
    %3996 = vmatprep.subr.mxu0 0.0
    %3997 = vmatpush1.msra.mxu0 0.0
    %3998 = vmatprep.subr.mxu0 0.0
    %3999 = vmatpush1.msra.mxu0 0.0
    %4000 = vmatprep.subr.mxu0 0.0
    %4001 = vmatpush1.msra.mxu0 0.0
    %4002 = vmatprep.subr.mxu0 0.0
    %4003 = vmatpush1.msra.mxu0 0.0
    %4004 = vmatprep.mubr.f32.mxu0 0.0
    %4005 = vmatmul.mubr.f32.gmra.mrb[0].mxu0 %v3938
    %v4006 = vpop.f32.mrb[0].mxu0
    %v4007 = vadd.f32 %v756, %v4006
    %v4008 = vpop.f32.mrb[0].mxu0
    %4009 = vdwg.mxu0
    %v4010 = vmul.f32 %v3756, 1.2427604
    %v4011 = vmul.f32 %v4007, 0.73787093
    %v4012 = vsub.f32 %v4010, %v4011
    %v4013 = vmax.f32 %v4012, -1.0
    %v4014 = vmin.f32 %v4013, 1.0
    %v4015 = vmul.f32 %v4014, 0.24199434
    %v4016 = vmul.f32 %v3756, 0.7536719
    %v4017 = vadd.f32 %v4015, %v4016
    %s4018 = scalar_lea.vmem %s3, 24
    %v4019 = vld [vmem:[%s4018] sm:$0x3]
    %v4020 = vmul.f32 %v4019, 0.28267047
    %v4021 = vadd.f32 %v4017, %v4020
    %s4022 = scalar_lea.vmem [#allocation14], 24
    %4023 = vst.msk [vmem:[%s4022] sm:$0x3] %vm842, %v4021
    %v4025 = vsel %vm567, %v4021, 0
    %4027 = vmatprep.subr.mxu0 0.0
    %4028 = vmatpush1.msra.mxu0 %v552
    %4029 = vmatprep.subr.mxu0 0.0
    %4030 = vmatpush1.msra.mxu0 %v553
    %4031 = vmatprep.subr.mxu0 0.0
    %4032 = vmatpush1.msra.mxu0 %v554
    %4033 = vmatprep.subr.mxu0 0.0
    %4034 = vmatpush1.msra.mxu0 %v555
    %4035 = vmatprep.subr.mxu0 0.0
    %4036 = vmatpush1.msra.mxu0 0.0
    %4037 = vmatprep.subr.mxu0 0.0
    %4038 = vmatpush1.msra.mxu0 0.0
    %4039 = vmatprep.subr.mxu0 0.0
    %4040 = vmatpush1.msra.mxu0 0.0
    %4041 = vmatprep.subr.mxu0 0.0
    %4042 = vmatpush1.msra.mxu0 0.0
    %4043 = vmatprep.subr.mxu0 0.0
    %4044 = vmatpush1.msra.mxu0 0.0
    %4045 = vmatprep.subr.mxu0 0.0
    %4046 = vmatpush1.msra.mxu0 0.0
    %4047 = vmatprep.subr.mxu0 0.0
    %4048 = vmatpush1.msra.mxu0 0.0
    %4049 = vmatprep.subr.mxu0 0.0
    %4050 = vmatpush1.msra.mxu0 0.0
    %4051 = vmatprep.subr.mxu0 0.0
    %4052 = vmatpush1.msra.mxu0 0.0
    %4053 = vmatprep.subr.mxu0 0.0
    %4054 = vmatpush1.msra.mxu0 0.0
    %4055 = vmatprep.subr.mxu0 0.0
    %4056 = vmatpush1.msra.mxu0 0.0
    %4057 = vmatprep.subr.mxu0 0.0
    %4058 = vmatpush1.msra.mxu0 0.0
    %4059 = vmatprep.subr.mxu0 0.0
    %4060 = vmatpush1.msra.mxu0 0.0
    %4061 = vmatprep.subr.mxu0 0.0
    %4062 = vmatpush1.msra.mxu0 0.0
    %4063 = vmatprep.subr.mxu0 0.0
    %4064 = vmatpush1.msra.mxu0 0.0
    %4065 = vmatprep.subr.mxu0 0.0
    %4066 = vmatpush1.msra.mxu0 0.0
    %4067 = vmatprep.subr.mxu0 0.0
    %4068 = vmatpush1.msra.mxu0 0.0
    %4069 = vmatprep.subr.mxu0 0.0
    %4070 = vmatpush1.msra.mxu0 0.0
    %4071 = vmatprep.subr.mxu0 0.0
    %4072 = vmatpush1.msra.mxu0 0.0
    %4073 = vmatprep.subr.mxu0 0.0
    %4074 = vmatpush1.msra.mxu0 0.0
    %4075 = vmatprep.subr.mxu0 0.0
    %4076 = vmatpush1.msra.mxu0 0.0
    %4077 = vmatprep.subr.mxu0 0.0
    %4078 = vmatpush1.msra.mxu0 0.0
    %4079 = vmatprep.subr.mxu0 0.0
    %4080 = vmatpush1.msra.mxu0 0.0
    %4081 = vmatprep.subr.mxu0 0.0
    %4082 = vmatpush1.msra.mxu0 0.0
    %4083 = vmatprep.subr.mxu0 0.0
    %4084 = vmatpush1.msra.mxu0 0.0
    %4085 = vmatprep.subr.mxu0 0.0
    %4086 = vmatpush1.msra.mxu0 0.0
    %4087 = vmatprep.subr.mxu0 0.0
    %4088 = vmatpush1.msra.mxu0 0.0
    %4089 = vmatprep.subr.mxu0 0.0
    %4090 = vmatpush1.msra.mxu0 0.0
    %4091 = vmatprep.mubr.f32.mxu0 0.0
    %4092 = vmatmul.mubr.f32.gmra.mrb[0].mxu0 %v4025
    %v4093 = vpop.f32.mrb[0].mxu0
    %v4094 = vadd.f32 %v545, %v4093
    %v4095 = vpop.f32.mrb[0].mxu0
    %4096 = vdwg.mxu0
    %vm4097 = vcmp.gt.f32.partialorder %v4094, 20.0
    %v4098 = vmin.f32 %v4094, 20.0
    %v4099 = vmul.f32 %v4098, 1.442695
    %v4100 = vpow.pop %v4099
    %v4101 = vadd.f32 %v4100, 1.0
    %v4102 = vlog2.pop %v4101
    %v4103 = vmul.f32 %v4102, 0.6931472
    %v4104 = vmul.f32 -0.5, %v4100
    %v4105 = vadd.f32 %v4104, 1.0
    %v4106 = vmul.f32 %v4105, %v4100
    %v4107 = vand.u32 2147483647, %v4100
    %vm4108 = vcmp.lt.f32.partialorder %v4107, 0.0004427343
    %v4109 = vsel %vm4108, %v4106, %v4103
    %v4110 = vsel %vm4097, %v4094, %v4109
    %v4111 = vtanh.pop %v4110
    %v4112 = vmul.f32 %v4094, %v4111
    %v4114 = vsel %vm567, %v4112, 0
    %4116 = vmatprep.subr.mxu0 0.0
    %4117 = vmatpush1.msra.mxu0 %v556
    %4118 = vmatprep.subr.mxu0 0.0
    %4119 = vmatpush1.msra.mxu0 %v557
    %4120 = vmatprep.subr.mxu0 0.0
    %4121 = vmatpush1.msra.mxu0 %v558
    %4122 = vmatprep.subr.mxu0 0.0
    %4123 = vmatpush1.msra.mxu0 %v559
    %4124 = vmatprep.subr.mxu0 0.0
    %4125 = vmatpush1.msra.mxu0 0.0
    %4126 = vmatprep.subr.mxu0 0.0
    %4127 = vmatpush1.msra.mxu0 0.0
    %4128 = vmatprep.subr.mxu0 0.0
    %4129 = vmatpush1.msra.mxu0 0.0
    %4130 = vmatprep.subr.mxu0 0.0
    %4131 = vmatpush1.msra.mxu0 0.0
    %4132 = vmatprep.subr.mxu0 0.0
    %4133 = vmatpush1.msra.mxu0 0.0
    %4134 = vmatprep.subr.mxu0 0.0
    %4135 = vmatpush1.msra.mxu0 0.0
    %4136 = vmatprep.subr.mxu0 0.0
    %4137 = vmatpush1.msra.mxu0 0.0
    %4138 = vmatprep.subr.mxu0 0.0
    %4139 = vmatpush1.msra.mxu0 0.0
    %4140 = vmatprep.subr.mxu0 0.0
    %4141 = vmatpush1.msra.mxu0 0.0
    %4142 = vmatprep.subr.mxu0 0.0
    %4143 = vmatpush1.msra.mxu0 0.0
    %4144 = vmatprep.subr.mxu0 0.0
    %4145 = vmatpush1.msra.mxu0 0.0
    %4146 = vmatprep.subr.mxu0 0.0
    %4147 = vmatpush1.msra.mxu0 0.0
    %4148 = vmatprep.subr.mxu0 0.0
    %4149 = vmatpush1.msra.mxu0 0.0
    %4150 = vmatprep.subr.mxu0 0.0
    %4151 = vmatpush1.msra.mxu0 0.0
    %4152 = vmatprep.subr.mxu0 0.0
    %4153 = vmatpush1.msra.mxu0 0.0
    %4154 = vmatprep.subr.mxu0 0.0
    %4155 = vmatpush1.msra.mxu0 0.0
    %4156 = vmatprep.subr.mxu0 0.0
    %4157 = vmatpush1.msra.mxu0 0.0
    %4158 = vmatprep.subr.mxu0 0.0
    %4159 = vmatpush1.msra.mxu0 0.0
    %4160 = vmatprep.subr.mxu0 0.0
    %4161 = vmatpush1.msra.mxu0 0.0
    %4162 = vmatprep.subr.mxu0 0.0
    %4163 = vmatpush1.msra.mxu0 0.0
    %4164 = vmatprep.subr.mxu0 0.0
    %4165 = vmatpush1.msra.mxu0 0.0
    %4166 = vmatprep.subr.mxu0 0.0
    %4167 = vmatpush1.msra.mxu0 0.0
    %4168 = vmatprep.subr.mxu0 0.0
    %4169 = vmatpush1.msra.mxu0 0.0
    %4170 = vmatprep.subr.mxu0 0.0
    %4171 = vmatpush1.msra.mxu0 0.0
    %4172 = vmatprep.subr.mxu0 0.0
    %4173 = vmatpush1.msra.mxu0 0.0
    %4174 = vmatprep.subr.mxu0 0.0
    %4175 = vmatpush1.msra.mxu0 0.0
    %4176 = vmatprep.subr.mxu0 0.0
    %4177 = vmatpush1.msra.mxu0 0.0
    %4178 = vmatprep.subr.mxu0 0.0
    %4179 = vmatpush1.msra.mxu0 0.0
    %4180 = vmatprep.mubr.f32.mxu0 0.0
    %4181 = vmatmul.mubr.f32.gmra.mrb[0].mxu0 %v4114
    %v4182 = vpop.f32.mrb[0].mxu0
    %v4183 = vadd.f32 %v661, %v4182
    %v4184 = vpop.f32.mrb[0].mxu0
    %4185 = vdwg.mxu0
    %vm4186 = vcmp.gt.f32.partialorder %v4183, 20.0
    %v4187 = vmin.f32 %v4183, 20.0
    %v4188 = vmul.f32 %v4187, 1.442695
    %v4189 = vpow.pop %v4188
    %v4190 = vadd.f32 %v4189, 1.0
    %v4191 = vlog2.pop %v4190
    %v4192 = vmul.f32 %v4191, 0.6931472
    %v4193 = vmul.f32 -0.5, %v4189
    %v4194 = vadd.f32 %v4193, 1.0
    %v4195 = vmul.f32 %v4194, %v4189
    %v4196 = vand.u32 2147483647, %v4189
    %vm4197 = vcmp.lt.f32.partialorder %v4196, 0.0004427343
    %v4198 = vsel %vm4197, %v4195, %v4192
    %v4199 = vsel %vm4186, %v4183, %v4198
    %v4200 = vtanh.pop %v4199
    %v4201 = vmul.f32 %v4183, %v4200
    %v4203 = vsel %vm567, %v4201, 0
    %4205 = vmatprep.subr.mxu0 0.0
    %4206 = vmatpush1.msra.mxu0 %v561
    %4207 = vmatprep.subr.mxu0 0.0
    %4208 = vmatpush1.msra.mxu0 %v562
    %4209 = vmatprep.subr.mxu0 0.0
    %4210 = vmatpush1.msra.mxu0 %v563
    %4211 = vmatprep.subr.mxu0 0.0
    %4212 = vmatpush1.msra.mxu0 %v564
    %4213 = vmatprep.subr.mxu0 0.0
    %4214 = vmatpush1.msra.mxu0 0.0
    %4215 = vmatprep.subr.mxu0 0.0
    %4216 = vmatpush1.msra.mxu0 0.0
    %4217 = vmatprep.subr.mxu0 0.0
    %4218 = vmatpush1.msra.mxu0 0.0
    %4219 = vmatprep.subr.mxu0 0.0
    %4220 = vmatpush1.msra.mxu0 0.0
    %4221 = vmatprep.subr.mxu0 0.0
    %4222 = vmatpush1.msra.mxu0 0.0
    %4223 = vmatprep.subr.mxu0 0.0
    %4224 = vmatpush1.msra.mxu0 0.0
    %4225 = vmatprep.subr.mxu0 0.0
    %4226 = vmatpush1.msra.mxu0 0.0
    %4227 = vmatprep.subr.mxu0 0.0
    %4228 = vmatpush1.msra.mxu0 0.0
    %4229 = vmatprep.subr.mxu0 0.0
    %4230 = vmatpush1.msra.mxu0 0.0
    %4231 = vmatprep.subr.mxu0 0.0
    %4232 = vmatpush1.msra.mxu0 0.0
    %4233 = vmatprep.subr.mxu0 0.0
    %4234 = vmatpush1.msra.mxu0 0.0
    %4235 = vmatprep.subr.mxu0 0.0
    %4236 = vmatpush1.msra.mxu0 0.0
    %4237 = vmatprep.subr.mxu0 0.0
    %4238 = vmatpush1.msra.mxu0 0.0
    %4239 = vmatprep.subr.mxu0 0.0
    %4240 = vmatpush1.msra.mxu0 0.0
    %4241 = vmatprep.subr.mxu0 0.0
    %4242 = vmatpush1.msra.mxu0 0.0
    %4243 = vmatprep.subr.mxu0 0.0
    %4244 = vmatpush1.msra.mxu0 0.0
    %4245 = vmatprep.subr.mxu0 0.0
    %4246 = vmatpush1.msra.mxu0 0.0
    %4247 = vmatprep.subr.mxu0 0.0
    %4248 = vmatpush1.msra.mxu0 0.0
    %4249 = vmatprep.subr.mxu0 0.0
    %4250 = vmatpush1.msra.mxu0 0.0
    %4251 = vmatprep.subr.mxu0 0.0
    %4252 = vmatpush1.msra.mxu0 0.0
    %4253 = vmatprep.subr.mxu0 0.0
    %4254 = vmatpush1.msra.mxu0 0.0
    %4255 = vmatprep.subr.mxu0 0.0
    %4256 = vmatpush1.msra.mxu0 0.0
    %4257 = vmatprep.subr.mxu0 0.0
    %4258 = vmatpush1.msra.mxu0 0.0
    %4259 = vmatprep.subr.mxu0 0.0
    %4260 = vmatpush1.msra.mxu0 0.0
    %4261 = vmatprep.subr.mxu0 0.0
    %4262 = vmatpush1.msra.mxu0 0.0
    %4263 = vmatprep.subr.mxu0 0.0
    %4264 = vmatpush1.msra.mxu0 0.0
    %4265 = vmatprep.subr.mxu0 0.0
    %4266 = vmatpush1.msra.mxu0 0.0
    %4267 = vmatprep.subr.mxu0 0.0
    %4268 = vmatpush1.msra.mxu0 0.0
    %4269 = vmatprep.mubr.f32.mxu0 0.0
    %4270 = vmatmul.mubr.f32.gmra.mrb[0].mxu0 %v4203
    %v4271 = vpop.f32.mrb[0].mxu0
    %v4272 = vadd.f32 %v756, %v4271
    %v4273 = vpop.f32.mrb[0].mxu0
    %4274 = vdwg.mxu0
    %v4275 = vmul.f32 %v4021, 1.178628
    %v4276 = vmul.f32 %v4272, 0.6238299
    %v4277 = vsub.f32 %v4275, %v4276
    %v4278 = vmax.f32 %v4277, -1.0
    %v4279 = vmin.f32 %v4278, 1.0
    %v4280 = vmul.f32 %v4279, 0.26982147
    %v4281 = vmul.f32 %v4021, 0.72751784
    %v4282 = vadd.f32 %v4280, %v4281
    %s4283 = scalar_lea.vmem %s3, 26
    %v4284 = vld [vmem:[%s4283] sm:$0x3]
    %v4285 = vmul.f32 %v4284, 0.254588
    %v4286 = vadd.f32 %v4282, %v4285
    %s4287 = scalar_lea.vmem [#allocation14], 26
    %4288 = vst.msk [vmem:[%s4287] sm:$0x3] %vm842, %v4286
    %v4290 = vsel %vm567, %v4286, 0
    %4292 = vmatprep.subr.mxu0 0.0
    %4293 = vmatpush1.msra.mxu0 %v552
    %4294 = vmatprep.subr.mxu0 0.0
    %4295 = vmatpush1.msra.mxu0 %v553
    %4296 = vmatprep.subr.mxu0 0.0
    %4297 = vmatpush1.msra.mxu0 %v554
    %4298 = vmatprep.subr.mxu0 0.0
    %4299 = vmatpush1.msra.mxu0 %v555
    %4300 = vmatprep.subr.mxu0 0.0
    %4301 = vmatpush1.msra.mxu0 0.0
    %4302 = vmatprep.subr.mxu0 0.0
    %4303 = vmatpush1.msra.mxu0 0.0
    %4304 = vmatprep.subr.mxu0 0.0
    %4305 = vmatpush1.msra.mxu0 0.0
    %4306 = vmatprep.subr.mxu0 0.0
    %4307 = vmatpush1.msra.mxu0 0.0
    %4308 = vmatprep.subr.mxu0 0.0
    %4309 = vmatpush1.msra.mxu0 0.0
    %4310 = vmatprep.subr.mxu0 0.0
    %4311 = vmatpush1.msra.mxu0 0.0
    %4312 = vmatprep.subr.mxu0 0.0
    %4313 = vmatpush1.msra.mxu0 0.0
    %4314 = vmatprep.subr.mxu0 0.0
    %4315 = vmatpush1.msra.mxu0 0.0
    %4316 = vmatprep.subr.mxu0 0.0
    %4317 = vmatpush1.msra.mxu0 0.0
    %4318 = vmatprep.subr.mxu0 0.0
    %4319 = vmatpush1.msra.mxu0 0.0
    %4320 = vmatprep.subr.mxu0 0.0
    %4321 = vmatpush1.msra.mxu0 0.0
    %4322 = vmatprep.subr.mxu0 0.0
    %4323 = vmatpush1.msra.mxu0 0.0
    %4324 = vmatprep.subr.mxu0 0.0
    %4325 = vmatpush1.msra.mxu0 0.0
    %4326 = vmatprep.subr.mxu0 0.0
    %4327 = vmatpush1.msra.mxu0 0.0
    %4328 = vmatprep.subr.mxu0 0.0
    %4329 = vmatpush1.msra.mxu0 0.0
    %4330 = vmatprep.subr.mxu0 0.0
    %4331 = vmatpush1.msra.mxu0 0.0
    %4332 = vmatprep.subr.mxu0 0.0
    %4333 = vmatpush1.msra.mxu0 0.0
    %4334 = vmatprep.subr.mxu0 0.0
    %4335 = vmatpush1.msra.mxu0 0.0
    %4336 = vmatprep.subr.mxu0 0.0
    %4337 = vmatpush1.msra.mxu0 0.0
    %4338 = vmatprep.subr.mxu0 0.0
    %4339 = vmatpush1.msra.mxu0 0.0
    %4340 = vmatprep.subr.mxu0 0.0
    %4341 = vmatpush1.msra.mxu0 0.0
    %4342 = vmatprep.subr.mxu0 0.0
    %4343 = vmatpush1.msra.mxu0 0.0
    %4344 = vmatprep.subr.mxu0 0.0
    %4345 = vmatpush1.msra.mxu0 0.0
    %4346 = vmatprep.subr.mxu0 0.0
    %4347 = vmatpush1.msra.mxu0 0.0
    %4348 = vmatprep.subr.mxu0 0.0
    %4349 = vmatpush1.msra.mxu0 0.0
    %4350 = vmatprep.subr.mxu0 0.0
    %4351 = vmatpush1.msra.mxu0 0.0
    %4352 = vmatprep.subr.mxu0 0.0
    %4353 = vmatpush1.msra.mxu0 0.0
    %4354 = vmatprep.subr.mxu0 0.0
    %4355 = vmatpush1.msra.mxu0 0.0
    %4356 = vmatprep.mubr.f32.mxu0 0.0
    %4357 = vmatmul.mubr.f32.gmra.mrb[0].mxu0 %v4290
    %v4358 = vpop.f32.mrb[0].mxu0
    %v4359 = vadd.f32 %v546, %v4358
    %v4360 = vpop.f32.mrb[0].mxu0
    %4361 = vdwg.mxu0
    %vm4362 = vcmp.gt.f32.partialorder %v4359, 20.0
    %v4363 = vmin.f32 %v4359, 20.0
    %v4364 = vmul.f32 %v4363, 1.442695
    %v4365 = vpow.pop %v4364
    %v4366 = vadd.f32 %v4365, 1.0
    %v4367 = vlog2.pop %v4366
    %v4368 = vmul.f32 %v4367, 0.6931472
    %v4369 = vmul.f32 -0.5, %v4365
    %v4370 = vadd.f32 %v4369, 1.0
    %v4371 = vmul.f32 %v4370, %v4365
    %v4372 = vand.u32 2147483647, %v4365
    %vm4373 = vcmp.lt.f32.partialorder %v4372, 0.0004427343
    %v4374 = vsel %vm4373, %v4371, %v4368
    %v4375 = vsel %vm4362, %v4359, %v4374
    %v4376 = vtanh.pop %v4375
    %v4377 = vmul.f32 %v4359, %v4376
    %v4379 = vsel %vm567, %v4377, 0
    %4381 = vmatprep.subr.mxu0 0.0
    %4382 = vmatpush1.msra.mxu0 %v556
    %4383 = vmatprep.subr.mxu0 0.0
    %4384 = vmatpush1.msra.mxu0 %v557
    %4385 = vmatprep.subr.mxu0 0.0
    %4386 = vmatpush1.msra.mxu0 %v558
    %4387 = vmatprep.subr.mxu0 0.0
    %4388 = vmatpush1.msra.mxu0 %v559
    %4389 = vmatprep.subr.mxu0 0.0
    %4390 = vmatpush1.msra.mxu0 0.0
    %4391 = vmatprep.subr.mxu0 0.0
    %4392 = vmatpush1.msra.mxu0 0.0
    %4393 = vmatprep.subr.mxu0 0.0
    %4394 = vmatpush1.msra.mxu0 0.0
    %4395 = vmatprep.subr.mxu0 0.0
    %4396 = vmatpush1.msra.mxu0 0.0
    %4397 = vmatprep.subr.mxu0 0.0
    %4398 = vmatpush1.msra.mxu0 0.0
    %4399 = vmatprep.subr.mxu0 0.0
    %4400 = vmatpush1.msra.mxu0 0.0
    %4401 = vmatprep.subr.mxu0 0.0
    %4402 = vmatpush1.msra.mxu0 0.0
    %4403 = vmatprep.subr.mxu0 0.0
    %4404 = vmatpush1.msra.mxu0 0.0
    %4405 = vmatprep.subr.mxu0 0.0
    %4406 = vmatpush1.msra.mxu0 0.0
    %4407 = vmatprep.subr.mxu0 0.0
    %4408 = vmatpush1.msra.mxu0 0.0
    %4409 = vmatprep.subr.mxu0 0.0
    %4410 = vmatpush1.msra.mxu0 0.0
    %4411 = vmatprep.subr.mxu0 0.0
    %4412 = vmatpush1.msra.mxu0 0.0
    %4413 = vmatprep.subr.mxu0 0.0
    %4414 = vmatpush1.msra.mxu0 0.0
    %4415 = vmatprep.subr.mxu0 0.0
    %4416 = vmatpush1.msra.mxu0 0.0
    %4417 = vmatprep.subr.mxu0 0.0
    %4418 = vmatpush1.msra.mxu0 0.0
    %4419 = vmatprep.subr.mxu0 0.0
    %4420 = vmatpush1.msra.mxu0 0.0
    %4421 = vmatprep.subr.mxu0 0.0
    %4422 = vmatpush1.msra.mxu0 0.0
    %4423 = vmatprep.subr.mxu0 0.0
    %4424 = vmatpush1.msra.mxu0 0.0
    %4425 = vmatprep.subr.mxu0 0.0
    %4426 = vmatpush1.msra.mxu0 0.0
    %4427 = vmatprep.subr.mxu0 0.0
    %4428 = vmatpush1.msra.mxu0 0.0
    %4429 = vmatprep.subr.mxu0 0.0
    %4430 = vmatpush1.msra.mxu0 0.0
    %4431 = vmatprep.subr.mxu0 0.0
    %4432 = vmatpush1.msra.mxu0 0.0
    %4433 = vmatprep.subr.mxu0 0.0
    %4434 = vmatpush1.msra.mxu0 0.0
    %4435 = vmatprep.subr.mxu0 0.0
    %4436 = vmatpush1.msra.mxu0 0.0
    %4437 = vmatprep.subr.mxu0 0.0
    %4438 = vmatpush1.msra.mxu0 0.0
    %4439 = vmatprep.subr.mxu0 0.0
    %4440 = vmatpush1.msra.mxu0 0.0
    %4441 = vmatprep.subr.mxu0 0.0
    %4442 = vmatpush1.msra.mxu0 0.0
    %4443 = vmatprep.subr.mxu0 0.0
    %4444 = vmatpush1.msra.mxu0 0.0
    %4445 = vmatprep.mubr.f32.mxu0 0.0
    %4446 = vmatmul.mubr.f32.gmra.mrb[0].mxu0 %v4379
    %v4447 = vpop.f32.mrb[0].mxu0
    %v4448 = vadd.f32 %v661, %v4447
    %v4449 = vpop.f32.mrb[0].mxu0
    %4450 = vdwg.mxu0
    %vm4451 = vcmp.gt.f32.partialorder %v4448, 20.0
    %v4452 = vmin.f32 %v4448, 20.0
    %v4453 = vmul.f32 %v4452, 1.442695
    %v4454 = vpow.pop %v4453
    %v4455 = vadd.f32 %v4454, 1.0
    %v4456 = vlog2.pop %v4455
    %v4457 = vmul.f32 %v4456, 0.6931472
    %v4458 = vmul.f32 -0.5, %v4454
    %v4459 = vadd.f32 %v4458, 1.0
    %v4460 = vmul.f32 %v4459, %v4454
    %v4461 = vand.u32 2147483647, %v4454
    %vm4462 = vcmp.lt.f32.partialorder %v4461, 0.0004427343
    %v4463 = vsel %vm4462, %v4460, %v4457
    %v4464 = vsel %vm4451, %v4448, %v4463
    %v4465 = vtanh.pop %v4464
    %v4466 = vmul.f32 %v4448, %v4465
    %v4468 = vsel %vm567, %v4466, 0
    %4470 = vmatprep.subr.mxu0 0.0
    %4471 = vmatpush1.msra.mxu0 %v561
    %4472 = vmatprep.subr.mxu0 0.0
    %4473 = vmatpush1.msra.mxu0 %v562
    %4474 = vmatprep.subr.mxu0 0.0
    %4475 = vmatpush1.msra.mxu0 %v563
    %4476 = vmatprep.subr.mxu0 0.0
    %4477 = vmatpush1.msra.mxu0 %v564
    %4478 = vmatprep.subr.mxu0 0.0
    %4479 = vmatpush1.msra.mxu0 0.0
    %4480 = vmatprep.subr.mxu0 0.0
    %4481 = vmatpush1.msra.mxu0 0.0
    %4482 = vmatprep.subr.mxu0 0.0
    %4483 = vmatpush1.msra.mxu0 0.0
    %4484 = vmatprep.subr.mxu0 0.0
    %4485 = vmatpush1.msra.mxu0 0.0
    %4486 = vmatprep.subr.mxu0 0.0
    %4487 = vmatpush1.msra.mxu0 0.0
    %4488 = vmatprep.subr.mxu0 0.0
    %4489 = vmatpush1.msra.mxu0 0.0
    %4490 = vmatprep.subr.mxu0 0.0
    %4491 = vmatpush1.msra.mxu0 0.0
    %4492 = vmatprep.subr.mxu0 0.0
    %4493 = vmatpush1.msra.mxu0 0.0
    %4494 = vmatprep.subr.mxu0 0.0
    %4495 = vmatpush1.msra.mxu0 0.0
    %4496 = vmatprep.subr.mxu0 0.0
    %4497 = vmatpush1.msra.mxu0 0.0
    %4498 = vmatprep.subr.mxu0 0.0
    %4499 = vmatpush1.msra.mxu0 0.0
    %4500 = vmatprep.subr.mxu0 0.0
    %4501 = vmatpush1.msra.mxu0 0.0
    %4502 = vmatprep.subr.mxu0 0.0
    %4503 = vmatpush1.msra.mxu0 0.0
    %4504 = vmatprep.subr.mxu0 0.0
    %4505 = vmatpush1.msra.mxu0 0.0
    %4506 = vmatprep.subr.mxu0 0.0
    %4507 = vmatpush1.msra.mxu0 0.0
    %4508 = vmatprep.subr.mxu0 0.0
    %4509 = vmatpush1.msra.mxu0 0.0
    %4510 = vmatprep.subr.mxu0 0.0
    %4511 = vmatpush1.msra.mxu0 0.0
    %4512 = vmatprep.subr.mxu0 0.0
    %4513 = vmatpush1.msra.mxu0 0.0
    %4514 = vmatprep.subr.mxu0 0.0
    %4515 = vmatpush1.msra.mxu0 0.0
    %4516 = vmatprep.subr.mxu0 0.0
    %4517 = vmatpush1.msra.mxu0 0.0
    %4518 = vmatprep.subr.mxu0 0.0
    %4519 = vmatpush1.msra.mxu0 0.0
    %4520 = vmatprep.subr.mxu0 0.0
    %4521 = vmatpush1.msra.mxu0 0.0
    %4522 = vmatprep.subr.mxu0 0.0
    %4523 = vmatpush1.msra.mxu0 0.0
    %4524 = vmatprep.subr.mxu0 0.0
    %4525 = vmatpush1.msra.mxu0 0.0
    %4526 = vmatprep.subr.mxu0 0.0
    %4527 = vmatpush1.msra.mxu0 0.0
    %4528 = vmatprep.subr.mxu0 0.0
    %4529 = vmatpush1.msra.mxu0 0.0
    %4530 = vmatprep.subr.mxu0 0.0
    %4531 = vmatpush1.msra.mxu0 0.0
    %4532 = vmatprep.subr.mxu0 0.0
    %4533 = vmatpush1.msra.mxu0 0.0
    %4534 = vmatprep.mubr.f32.mxu0 0.0
    %4535 = vmatmul.mubr.f32.gmra.mrb[0].mxu0 %v4468
    %v4536 = vpop.f32.mrb[0].mxu0
    %v4537 = vadd.f32 %v756, %v4536
    %v4538 = vpop.f32.mrb[0].mxu0
    %4539 = vdwg.mxu0
    %v4540 = vmul.f32 %v4286, 1.1272943
    %v4541 = vmul.f32 %v4537, 0.5203773
    %v4542 = vsub.f32 %v4540, %v4541
    %v4543 = vmax.f32 %v4542, -1.0
    %v4544 = vmin.f32 %v4543, 1.0
    %v4545 = vmul.f32 %v4544, 0.30646405
    %v4546 = vmul.f32 %v4286, 0.6920106
    %v4547 = vadd.f32 %v4545, %v4546
    %s4548 = scalar_lea.vmem %s3, 28
    %v4549 = vld [vmem:[%s4548] sm:$0x3]
    %v4550 = vmul.f32 %v4549, 0.22570741
    %v4551 = vadd.f32 %v4547, %v4550
    %s4552 = scalar_lea.vmem [#allocation14], 28
    %4553 = vst.msk [vmem:[%s4552] sm:$0x3] %vm842, %v4551
    %v4555 = vsel %vm567, %v4551, 0
    %4557 = vmatprep.subr.mxu0 0.0
    %4558 = vmatpush1.msra.mxu0 %v552
    %4559 = vmatprep.subr.mxu0 0.0
    %4560 = vmatpush1.msra.mxu0 %v553
    %4561 = vmatprep.subr.mxu0 0.0
    %4562 = vmatpush1.msra.mxu0 %v554
    %4563 = vmatprep.subr.mxu0 0.0
    %4564 = vmatpush1.msra.mxu0 %v555
    %4565 = vmatprep.subr.mxu0 0.0
    %4566 = vmatpush1.msra.mxu0 0.0
    %4567 = vmatprep.subr.mxu0 0.0
    %4568 = vmatpush1.msra.mxu0 0.0
    %4569 = vmatprep.subr.mxu0 0.0
    %4570 = vmatpush1.msra.mxu0 0.0
    %4571 = vmatprep.subr.mxu0 0.0
    %4572 = vmatpush1.msra.mxu0 0.0
    %4573 = vmatprep.subr.mxu0 0.0
    %4574 = vmatpush1.msra.mxu0 0.0
    %4575 = vmatprep.subr.mxu0 0.0
    %4576 = vmatpush1.msra.mxu0 0.0
    %4577 = vmatprep.subr.mxu0 0.0
    %4578 = vmatpush1.msra.mxu0 0.0
    %4579 = vmatprep.subr.mxu0 0.0
    %4580 = vmatpush1.msra.mxu0 0.0
    %4581 = vmatprep.subr.mxu0 0.0
    %4582 = vmatpush1.msra.mxu0 0.0
    %4583 = vmatprep.subr.mxu0 0.0
    %4584 = vmatpush1.msra.mxu0 0.0
    %4585 = vmatprep.subr.mxu0 0.0
    %4586 = vmatpush1.msra.mxu0 0.0
    %4587 = vmatprep.subr.mxu0 0.0
    %4588 = vmatpush1.msra.mxu0 0.0
    %4589 = vmatprep.subr.mxu0 0.0
    %4590 = vmatpush1.msra.mxu0 0.0
    %4591 = vmatprep.subr.mxu0 0.0
    %4592 = vmatpush1.msra.mxu0 0.0
    %4593 = vmatprep.subr.mxu0 0.0
    %4594 = vmatpush1.msra.mxu0 0.0
    %4595 = vmatprep.subr.mxu0 0.0
    %4596 = vmatpush1.msra.mxu0 0.0
    %4597 = vmatprep.subr.mxu0 0.0
    %4598 = vmatpush1.msra.mxu0 0.0
    %4599 = vmatprep.subr.mxu0 0.0
    %4600 = vmatpush1.msra.mxu0 0.0
    %4601 = vmatprep.subr.mxu0 0.0
    %4602 = vmatpush1.msra.mxu0 0.0
    %4603 = vmatprep.subr.mxu0 0.0
    %4604 = vmatpush1.msra.mxu0 0.0
    %4605 = vmatprep.subr.mxu0 0.0
    %4606 = vmatpush1.msra.mxu0 0.0
    %4607 = vmatprep.subr.mxu0 0.0
    %4608 = vmatpush1.msra.mxu0 0.0
    %4609 = vmatprep.subr.mxu0 0.0
    %4610 = vmatpush1.msra.mxu0 0.0
    %4611 = vmatprep.subr.mxu0 0.0
    %4612 = vmatpush1.msra.mxu0 0.0
    %4613 = vmatprep.subr.mxu0 0.0
    %4614 = vmatpush1.msra.mxu0 0.0
    %4615 = vmatprep.subr.mxu0 0.0
    %4616 = vmatpush1.msra.mxu0 0.0
    %4617 = vmatprep.subr.mxu0 0.0
    %4618 = vmatpush1.msra.mxu0 0.0
    %4619 = vmatprep.subr.mxu0 0.0
    %4620 = vmatpush1.msra.mxu0 0.0
    %4621 = vmatprep.mubr.f32.mxu0 0.0
    %4622 = vmatmul.mubr.f32.gmra.mrb[0].mxu0 %v4555
    %v4623 = vpop.f32.mrb[0].mxu0
    %v4624 = vadd.f32 %v547, %v4623
    %v4625 = vpop.f32.mrb[0].mxu0
    %4626 = vdwg.mxu0
    %vm4627 = vcmp.gt.f32.partialorder %v4624, 20.0
    %v4628 = vmin.f32 %v4624, 20.0
    %v4629 = vmul.f32 %v4628, 1.442695
    %v4630 = vpow.pop %v4629
    %v4631 = vadd.f32 %v4630, 1.0
    %v4632 = vlog2.pop %v4631
    %v4633 = vmul.f32 %v4632, 0.6931472
    %v4634 = vmul.f32 -0.5, %v4630
    %v4635 = vadd.f32 %v4634, 1.0
    %v4636 = vmul.f32 %v4635, %v4630
    %v4637 = vand.u32 2147483647, %v4630
    %vm4638 = vcmp.lt.f32.partialorder %v4637, 0.0004427343
    %v4639 = vsel %vm4638, %v4636, %v4633
    %v4640 = vsel %vm4627, %v4624, %v4639
    %v4641 = vtanh.pop %v4640
    %v4642 = vmul.f32 %v4624, %v4641
    %v4644 = vsel %vm567, %v4642, 0
    %4646 = vmatprep.subr.mxu0 0.0
    %4647 = vmatpush1.msra.mxu0 %v556
    %4648 = vmatprep.subr.mxu0 0.0
    %4649 = vmatpush1.msra.mxu0 %v557
    %4650 = vmatprep.subr.mxu0 0.0
    %4651 = vmatpush1.msra.mxu0 %v558
    %4652 = vmatprep.subr.mxu0 0.0
    %4653 = vmatpush1.msra.mxu0 %v559
    %4654 = vmatprep.subr.mxu0 0.0
    %4655 = vmatpush1.msra.mxu0 0.0
    %4656 = vmatprep.subr.mxu0 0.0
    %4657 = vmatpush1.msra.mxu0 0.0
    %4658 = vmatprep.subr.mxu0 0.0
    %4659 = vmatpush1.msra.mxu0 0.0
    %4660 = vmatprep.subr.mxu0 0.0
    %4661 = vmatpush1.msra.mxu0 0.0
    %4662 = vmatprep.subr.mxu0 0.0
    %4663 = vmatpush1.msra.mxu0 0.0
    %4664 = vmatprep.subr.mxu0 0.0
    %4665 = vmatpush1.msra.mxu0 0.0
    %4666 = vmatprep.subr.mxu0 0.0
    %4667 = vmatpush1.msra.mxu0 0.0
    %4668 = vmatprep.subr.mxu0 0.0
    %4669 = vmatpush1.msra.mxu0 0.0
    %4670 = vmatprep.subr.mxu0 0.0
    %4671 = vmatpush1.msra.mxu0 0.0
    %4672 = vmatprep.subr.mxu0 0.0
    %4673 = vmatpush1.msra.mxu0 0.0
    %4674 = vmatprep.subr.mxu0 0.0
    %4675 = vmatpush1.msra.mxu0 0.0
    %4676 = vmatprep.subr.mxu0 0.0
    %4677 = vmatpush1.msra.mxu0 0.0
    %4678 = vmatprep.subr.mxu0 0.0
    %4679 = vmatpush1.msra.mxu0 0.0
    %4680 = vmatprep.subr.mxu0 0.0
    %4681 = vmatpush1.msra.mxu0 0.0
    %4682 = vmatprep.subr.mxu0 0.0
    %4683 = vmatpush1.msra.mxu0 0.0
    %4684 = vmatprep.subr.mxu0 0.0
    %4685 = vmatpush1.msra.mxu0 0.0
    %4686 = vmatprep.subr.mxu0 0.0
    %4687 = vmatpush1.msra.mxu0 0.0
    %4688 = vmatprep.subr.mxu0 0.0
    %4689 = vmatpush1.msra.mxu0 0.0
    %4690 = vmatprep.subr.mxu0 0.0
    %4691 = vmatpush1.msra.mxu0 0.0
    %4692 = vmatprep.subr.mxu0 0.0
    %4693 = vmatpush1.msra.mxu0 0.0
    %4694 = vmatprep.subr.mxu0 0.0
    %4695 = vmatpush1.msra.mxu0 0.0
    %4696 = vmatprep.subr.mxu0 0.0
    %4697 = vmatpush1.msra.mxu0 0.0
    %4698 = vmatprep.subr.mxu0 0.0
    %4699 = vmatpush1.msra.mxu0 0.0
    %4700 = vmatprep.subr.mxu0 0.0
    %4701 = vmatpush1.msra.mxu0 0.0
    %4702 = vmatprep.subr.mxu0 0.0
    %4703 = vmatpush1.msra.mxu0 0.0
    %4704 = vmatprep.subr.mxu0 0.0
    %4705 = vmatpush1.msra.mxu0 0.0
    %4706 = vmatprep.subr.mxu0 0.0
    %4707 = vmatpush1.msra.mxu0 0.0
    %4708 = vmatprep.subr.mxu0 0.0
    %4709 = vmatpush1.msra.mxu0 0.0
    %4710 = vmatprep.mubr.f32.mxu0 0.0
    %4711 = vmatmul.mubr.f32.gmra.mrb[0].mxu0 %v4644
    %v4712 = vpop.f32.mrb[0].mxu0
    %v4713 = vadd.f32 %v661, %v4712
    %v4714 = vpop.f32.mrb[0].mxu0
    %4715 = vdwg.mxu0
    %vm4716 = vcmp.gt.f32.partialorder %v4713, 20.0
    %v4717 = vmin.f32 %v4713, 20.0
    %v4718 = vmul.f32 %v4717, 1.442695
    %v4719 = vpow.pop %v4718
    %v4720 = vadd.f32 %v4719, 1.0
    %v4721 = vlog2.pop %v4720
    %v4722 = vmul.f32 %v4721, 0.6931472
    %v4723 = vmul.f32 -0.5, %v4719
    %v4724 = vadd.f32 %v4723, 1.0
    %v4725 = vmul.f32 %v4724, %v4719
    %v4726 = vand.u32 2147483647, %v4719
    %vm4727 = vcmp.lt.f32.partialorder %v4726, 0.0004427343
    %v4728 = vsel %vm4727, %v4725, %v4722
    %v4729 = vsel %vm4716, %v4713, %v4728
    %v4730 = vtanh.pop %v4729
    %v4731 = vmul.f32 %v4713, %v4730
    %v4733 = vsel %vm567, %v4731, 0
    %4735 = vmatprep.subr.mxu0 0.0
    %4736 = vmatpush1.msra.mxu0 %v561
    %4737 = vmatprep.subr.mxu0 0.0
    %4738 = vmatpush1.msra.mxu0 %v562
    %4739 = vmatprep.subr.mxu0 0.0
    %4740 = vmatpush1.msra.mxu0 %v563
    %4741 = vmatprep.subr.mxu0 0.0
    %4742 = vmatpush1.msra.mxu0 %v564
    %4743 = vmatprep.subr.mxu0 0.0
    %4744 = vmatpush1.msra.mxu0 0.0
    %4745 = vmatprep.subr.mxu0 0.0
    %4746 = vmatpush1.msra.mxu0 0.0
    %4747 = vmatprep.subr.mxu0 0.0
    %4748 = vmatpush1.msra.mxu0 0.0
    %4749 = vmatprep.subr.mxu0 0.0
    %4750 = vmatpush1.msra.mxu0 0.0
    %4751 = vmatprep.subr.mxu0 0.0
    %4752 = vmatpush1.msra.mxu0 0.0
    %4753 = vmatprep.subr.mxu0 0.0
    %4754 = vmatpush1.msra.mxu0 0.0
    %4755 = vmatprep.subr.mxu0 0.0
    %4756 = vmatpush1.msra.mxu0 0.0
    %4757 = vmatprep.subr.mxu0 0.0
    %4758 = vmatpush1.msra.mxu0 0.0
    %4759 = vmatprep.subr.mxu0 0.0
    %4760 = vmatpush1.msra.mxu0 0.0
    %4761 = vmatprep.subr.mxu0 0.0
    %4762 = vmatpush1.msra.mxu0 0.0
    %4763 = vmatprep.subr.mxu0 0.0
    %4764 = vmatpush1.msra.mxu0 0.0
    %4765 = vmatprep.subr.mxu0 0.0
    %4766 = vmatpush1.msra.mxu0 0.0
    %4767 = vmatprep.subr.mxu0 0.0
    %4768 = vmatpush1.msra.mxu0 0.0
    %4769 = vmatprep.subr.mxu0 0.0
    %4770 = vmatpush1.msra.mxu0 0.0
    %4771 = vmatprep.subr.mxu0 0.0
    %4772 = vmatpush1.msra.mxu0 0.0
    %4773 = vmatprep.subr.mxu0 0.0
    %4774 = vmatpush1.msra.mxu0 0.0
    %4775 = vmatprep.subr.mxu0 0.0
    %4776 = vmatpush1.msra.mxu0 0.0
    %4777 = vmatprep.subr.mxu0 0.0
    %4778 = vmatpush1.msra.mxu0 0.0
    %4779 = vmatprep.subr.mxu0 0.0
    %4780 = vmatpush1.msra.mxu0 0.0
    %4781 = vmatprep.subr.mxu0 0.0
    %4782 = vmatpush1.msra.mxu0 0.0
    %4783 = vmatprep.subr.mxu0 0.0
    %4784 = vmatpush1.msra.mxu0 0.0
    %4785 = vmatprep.subr.mxu0 0.0
    %4786 = vmatpush1.msra.mxu0 0.0
    %4787 = vmatprep.subr.mxu0 0.0
    %4788 = vmatpush1.msra.mxu0 0.0
    %4789 = vmatprep.subr.mxu0 0.0
    %4790 = vmatpush1.msra.mxu0 0.0
    %4791 = vmatprep.subr.mxu0 0.0
    %4792 = vmatpush1.msra.mxu0 0.0
    %4793 = vmatprep.subr.mxu0 0.0
    %4794 = vmatpush1.msra.mxu0 0.0
    %4795 = vmatprep.subr.mxu0 0.0
    %4796 = vmatpush1.msra.mxu0 0.0
    %4797 = vmatprep.subr.mxu0 0.0
    %4798 = vmatpush1.msra.mxu0 0.0
    %4799 = vmatprep.mubr.f32.mxu0 0.0
    %4800 = vmatmul.mubr.f32.gmra.mrb[0].mxu0 %v4733
    %v4801 = vpop.f32.mrb[0].mxu0
    %v4802 = vadd.f32 %v756, %v4801
    %v4803 = vpop.f32.mrb[0].mxu0
    %4804 = vdwg.mxu0
    %v4805 = vmul.f32 %v4551, 1.0865637
    %v4806 = vmul.f32 %v4802, 0.42499483
    %v4807 = vsub.f32 %v4805, %v4806
    %v4808 = vmax.f32 %v4807, -1.0
    %v4809 = vmin.f32 %v4808, 1.0
    %v4810 = vmul.f32 %v4809, 0.3564285
    %v4811 = vmul.f32 %v4551, 0.6427812
    %v4812 = vadd.f32 %v4810, %v4811
    %s4813 = scalar_lea.vmem %s3, 30
    %v4814 = vld [vmem:[%s4813] sm:$0x3]
    %v4815 = vmul.f32 %v4814, 0.19515237
    %v4816 = vadd.f32 %v4812, %v4815
    %s4817 = scalar_lea.vmem [#allocation14], 30
    %4818 = vst.msk [vmem:[%s4817] sm:$0x3] %vm842, %v4816
    %v4820 = vsel %vm567, %v4816, 0
    %4822 = vmatprep.subr.mxu0 0.0
    %4823 = vmatpush1.msra.mxu0 %v552
    %4824 = vmatprep.subr.mxu0 0.0
    %4825 = vmatpush1.msra.mxu0 %v553
    %4826 = vmatprep.subr.mxu0 0.0
    %4827 = vmatpush1.msra.mxu0 %v554
    %4828 = vmatprep.subr.mxu0 0.0
    %4829 = vmatpush1.msra.mxu0 %v555
    %4830 = vmatprep.subr.mxu0 0.0
    %4831 = vmatpush1.msra.mxu0 0.0
    %4832 = vmatprep.subr.mxu0 0.0
    %4833 = vmatpush1.msra.mxu0 0.0
    %4834 = vmatprep.subr.mxu0 0.0
    %4835 = vmatpush1.msra.mxu0 0.0
    %4836 = vmatprep.subr.mxu0 0.0
    %4837 = vmatpush1.msra.mxu0 0.0
    %4838 = vmatprep.subr.mxu0 0.0
    %4839 = vmatpush1.msra.mxu0 0.0
    %4840 = vmatprep.subr.mxu0 0.0
    %4841 = vmatpush1.msra.mxu0 0.0
    %4842 = vmatprep.subr.mxu0 0.0
    %4843 = vmatpush1.msra.mxu0 0.0
    %4844 = vmatprep.subr.mxu0 0.0
    %4845 = vmatpush1.msra.mxu0 0.0
    %4846 = vmatprep.subr.mxu0 0.0
    %4847 = vmatpush1.msra.mxu0 0.0
    %4848 = vmatprep.subr.mxu0 0.0
    %4849 = vmatpush1.msra.mxu0 0.0
    %4850 = vmatprep.subr.mxu0 0.0
    %4851 = vmatpush1.msra.mxu0 0.0
    %4852 = vmatprep.subr.mxu0 0.0
    %4853 = vmatpush1.msra.mxu0 0.0
    %4854 = vmatprep.subr.mxu0 0.0
    %4855 = vmatpush1.msra.mxu0 0.0
    %4856 = vmatprep.subr.mxu0 0.0
    %4857 = vmatpush1.msra.mxu0 0.0
    %4858 = vmatprep.subr.mxu0 0.0
    %4859 = vmatpush1.msra.mxu0 0.0
    %4860 = vmatprep.subr.mxu0 0.0
    %4861 = vmatpush1.msra.mxu0 0.0
    %4862 = vmatprep.subr.mxu0 0.0
    %4863 = vmatpush1.msra.mxu0 0.0
    %4864 = vmatprep.subr.mxu0 0.0
    %4865 = vmatpush1.msra.mxu0 0.0
    %4866 = vmatprep.subr.mxu0 0.0
    %4867 = vmatpush1.msra.mxu0 0.0
    %4868 = vmatprep.subr.mxu0 0.0
    %4869 = vmatpush1.msra.mxu0 0.0
    %4870 = vmatprep.subr.mxu0 0.0
    %4871 = vmatpush1.msra.mxu0 0.0
    %4872 = vmatprep.subr.mxu0 0.0
    %4873 = vmatpush1.msra.mxu0 0.0
    %4874 = vmatprep.subr.mxu0 0.0
    %4875 = vmatpush1.msra.mxu0 0.0
    %4876 = vmatprep.subr.mxu0 0.0
    %4877 = vmatpush1.msra.mxu0 0.0
    %4878 = vmatprep.subr.mxu0 0.0
    %4879 = vmatpush1.msra.mxu0 0.0
    %4880 = vmatprep.subr.mxu0 0.0
    %4881 = vmatpush1.msra.mxu0 0.0
    %4882 = vmatprep.subr.mxu0 0.0
    %4883 = vmatpush1.msra.mxu0 0.0
    %4884 = vmatprep.subr.mxu0 0.0
    %4885 = vmatpush1.msra.mxu0 0.0
    %4886 = vmatprep.mubr.f32.mxu0 0.0
    %4887 = vmatmul.mubr.f32.gmra.mrb[0].mxu0 %v4820
    %v4888 = vpop.f32.mrb[0].mxu0
    %v4889 = vadd.f32 %v548, %v4888
    %v4890 = vpop.f32.mrb[0].mxu0
    %4891 = vdwg.mxu0
    %vm4892 = vcmp.gt.f32.partialorder %v4889, 20.0
    %v4893 = vmin.f32 %v4889, 20.0
    %v4894 = vmul.f32 %v4893, 1.442695
    %v4895 = vpow.pop %v4894
    %v4896 = vadd.f32 %v4895, 1.0
    %v4897 = vlog2.pop %v4896
    %v4898 = vmul.f32 %v4897, 0.6931472
    %v4899 = vmul.f32 -0.5, %v4895
    %v4900 = vadd.f32 %v4899, 1.0
    %v4901 = vmul.f32 %v4900, %v4895
    %v4902 = vand.u32 2147483647, %v4895
    %vm4903 = vcmp.lt.f32.partialorder %v4902, 0.0004427343
    %v4904 = vsel %vm4903, %v4901, %v4898
    %v4905 = vsel %vm4892, %v4889, %v4904
    %v4906 = vtanh.pop %v4905
    %v4907 = vmul.f32 %v4889, %v4906
    %v4909 = vsel %vm567, %v4907, 0
    %4911 = vmatprep.subr.mxu0 0.0
    %4912 = vmatpush1.msra.mxu0 %v556
    %4913 = vmatprep.subr.mxu0 0.0
    %4914 = vmatpush1.msra.mxu0 %v557
    %4915 = vmatprep.subr.mxu0 0.0
    %4916 = vmatpush1.msra.mxu0 %v558
    %4917 = vmatprep.subr.mxu0 0.0
    %4918 = vmatpush1.msra.mxu0 %v559
    %4919 = vmatprep.subr.mxu0 0.0
    %4920 = vmatpush1.msra.mxu0 0.0
    %4921 = vmatprep.subr.mxu0 0.0
    %4922 = vmatpush1.msra.mxu0 0.0
    %4923 = vmatprep.subr.mxu0 0.0
    %4924 = vmatpush1.msra.mxu0 0.0
    %4925 = vmatprep.subr.mxu0 0.0
    %4926 = vmatpush1.msra.mxu0 0.0
    %4927 = vmatprep.subr.mxu0 0.0
    %4928 = vmatpush1.msra.mxu0 0.0
    %4929 = vmatprep.subr.mxu0 0.0
    %4930 = vmatpush1.msra.mxu0 0.0
    %4931 = vmatprep.subr.mxu0 0.0
    %4932 = vmatpush1.msra.mxu0 0.0
    %4933 = vmatprep.subr.mxu0 0.0
    %4934 = vmatpush1.msra.mxu0 0.0
    %4935 = vmatprep.subr.mxu0 0.0
    %4936 = vmatpush1.msra.mxu0 0.0
    %4937 = vmatprep.subr.mxu0 0.0
    %4938 = vmatpush1.msra.mxu0 0.0
    %4939 = vmatprep.subr.mxu0 0.0
    %4940 = vmatpush1.msra.mxu0 0.0
    %4941 = vmatprep.subr.mxu0 0.0
    %4942 = vmatpush1.msra.mxu0 0.0
    %4943 = vmatprep.subr.mxu0 0.0
    %4944 = vmatpush1.msra.mxu0 0.0
    %4945 = vmatprep.subr.mxu0 0.0
    %4946 = vmatpush1.msra.mxu0 0.0
    %4947 = vmatprep.subr.mxu0 0.0
    %4948 = vmatpush1.msra.mxu0 0.0
    %4949 = vmatprep.subr.mxu0 0.0
    %4950 = vmatpush1.msra.mxu0 0.0
    %4951 = vmatprep.subr.mxu0 0.0
    %4952 = vmatpush1.msra.mxu0 0.0
    %4953 = vmatprep.subr.mxu0 0.0
    %4954 = vmatpush1.msra.mxu0 0.0
    %4955 = vmatprep.subr.mxu0 0.0
    %4956 = vmatpush1.msra.mxu0 0.0
    %4957 = vmatprep.subr.mxu0 0.0
    %4958 = vmatpush1.msra.mxu0 0.0
    %4959 = vmatprep.subr.mxu0 0.0
    %4960 = vmatpush1.msra.mxu0 0.0
    %4961 = vmatprep.subr.mxu0 0.0
    %4962 = vmatpush1.msra.mxu0 0.0
    %4963 = vmatprep.subr.mxu0 0.0
    %4964 = vmatpush1.msra.mxu0 0.0
    %4965 = vmatprep.subr.mxu0 0.0
    %4966 = vmatpush1.msra.mxu0 0.0
    %4967 = vmatprep.subr.mxu0 0.0
    %4968 = vmatpush1.msra.mxu0 0.0
    %4969 = vmatprep.subr.mxu0 0.0
    %4970 = vmatpush1.msra.mxu0 0.0
    %4971 = vmatprep.subr.mxu0 0.0
    %4972 = vmatpush1.msra.mxu0 0.0
    %4973 = vmatprep.subr.mxu0 0.0
    %4974 = vmatpush1.msra.mxu0 0.0
    %4975 = vmatprep.mubr.f32.mxu0 0.0
    %4976 = vmatmul.mubr.f32.gmra.mrb[0].mxu0 %v4909
    %v4977 = vpop.f32.mrb[0].mxu0
    %v4978 = vadd.f32 %v661, %v4977
    %v4979 = vpop.f32.mrb[0].mxu0
    %4980 = vdwg.mxu0
    %vm4981 = vcmp.gt.f32.partialorder %v4978, 20.0
    %v4982 = vmin.f32 %v4978, 20.0
    %v4983 = vmul.f32 %v4982, 1.442695
    %v4984 = vpow.pop %v4983
    %v4985 = vadd.f32 %v4984, 1.0
    %v4986 = vlog2.pop %v4985
    %v4987 = vmul.f32 %v4986, 0.6931472
    %v4988 = vmul.f32 -0.5, %v4984
    %v4989 = vadd.f32 %v4988, 1.0
    %v4990 = vmul.f32 %v4989, %v4984
    %v4991 = vand.u32 2147483647, %v4984
    %vm4992 = vcmp.lt.f32.partialorder %v4991, 0.0004427343
    %v4993 = vsel %vm4992, %v4990, %v4987
    %v4994 = vsel %vm4981, %v4978, %v4993
    %v4995 = vtanh.pop %v4994
    %v4996 = vmul.f32 %v4978, %v4995
    %v4998 = vsel %vm567, %v4996, 0
    %5000 = vmatprep.subr.mxu0 0.0
    %5001 = vmatpush1.msra.mxu0 %v561
    %5002 = vmatprep.subr.mxu0 0.0
    %5003 = vmatpush1.msra.mxu0 %v562
    %5004 = vmatprep.subr.mxu0 0.0
    %5005 = vmatpush1.msra.mxu0 %v563
    %5006 = vmatprep.subr.mxu0 0.0
    %5007 = vmatpush1.msra.mxu0 %v564
    %5008 = vmatprep.subr.mxu0 0.0
    %5009 = vmatpush1.msra.mxu0 0.0
    %5010 = vmatprep.subr.mxu0 0.0
    %5011 = vmatpush1.msra.mxu0 0.0
    %5012 = vmatprep.subr.mxu0 0.0
    %5013 = vmatpush1.msra.mxu0 0.0
    %5014 = vmatprep.subr.mxu0 0.0
    %5015 = vmatpush1.msra.mxu0 0.0
    %5016 = vmatprep.subr.mxu0 0.0
    %5017 = vmatpush1.msra.mxu0 0.0
    %5018 = vmatprep.subr.mxu0 0.0
    %5019 = vmatpush1.msra.mxu0 0.0
    %5020 = vmatprep.subr.mxu0 0.0
    %5021 = vmatpush1.msra.mxu0 0.0
    %5022 = vmatprep.subr.mxu0 0.0
    %5023 = vmatpush1.msra.mxu0 0.0
    %5024 = vmatprep.subr.mxu0 0.0
    %5025 = vmatpush1.msra.mxu0 0.0
    %5026 = vmatprep.subr.mxu0 0.0
    %5027 = vmatpush1.msra.mxu0 0.0
    %5028 = vmatprep.subr.mxu0 0.0
    %5029 = vmatpush1.msra.mxu0 0.0
    %5030 = vmatprep.subr.mxu0 0.0
    %5031 = vmatpush1.msra.mxu0 0.0
    %5032 = vmatprep.subr.mxu0 0.0
    %5033 = vmatpush1.msra.mxu0 0.0
    %5034 = vmatprep.subr.mxu0 0.0
    %5035 = vmatpush1.msra.mxu0 0.0
    %5036 = vmatprep.subr.mxu0 0.0
    %5037 = vmatpush1.msra.mxu0 0.0
    %5038 = vmatprep.subr.mxu0 0.0
    %5039 = vmatpush1.msra.mxu0 0.0
    %5040 = vmatprep.subr.mxu0 0.0
    %5041 = vmatpush1.msra.mxu0 0.0
    %5042 = vmatprep.subr.mxu0 0.0
    %5043 = vmatpush1.msra.mxu0 0.0
    %5044 = vmatprep.subr.mxu0 0.0
    %5045 = vmatpush1.msra.mxu0 0.0
    %5046 = vmatprep.subr.mxu0 0.0
    %5047 = vmatpush1.msra.mxu0 0.0
    %5048 = vmatprep.subr.mxu0 0.0
    %5049 = vmatpush1.msra.mxu0 0.0
    %5050 = vmatprep.subr.mxu0 0.0
    %5051 = vmatpush1.msra.mxu0 0.0
    %5052 = vmatprep.subr.mxu0 0.0
    %5053 = vmatpush1.msra.mxu0 0.0
    %5054 = vmatprep.subr.mxu0 0.0
    %5055 = vmatpush1.msra.mxu0 0.0
    %5056 = vmatprep.subr.mxu0 0.0
    %5057 = vmatpush1.msra.mxu0 0.0
    %5058 = vmatprep.subr.mxu0 0.0
    %5059 = vmatpush1.msra.mxu0 0.0
    %5060 = vmatprep.subr.mxu0 0.0
    %5061 = vmatpush1.msra.mxu0 0.0
    %5062 = vmatprep.subr.mxu0 0.0
    %5063 = vmatpush1.msra.mxu0 0.0
    %5064 = vmatprep.mubr.f32.mxu0 0.0
    %5065 = vmatmul.mubr.f32.gmra.mrb[0].mxu0 %v4998
    %v5066 = vpop.f32.mrb[0].mxu0
    %v5067 = vadd.f32 %v756, %v5066
    %v5068 = vpop.f32.mrb[0].mxu0
    %5069 = vdwg.mxu0
    %v5070 = vmul.f32 %v4816, 1.0548512
    %v5071 = vmul.f32 %v5067, 0.33572465
    %v5072 = vsub.f32 %v5070, %v5071
    %v5073 = vmax.f32 %v5072, -1.0
    %v5074 = vmin.f32 %v5073, 1.0
    %v5075 = vmul.f32 %v5074, 0.42783132
    %v5076 = vmul.f32 %v4816, 0.5718197
    %v5077 = vadd.f32 %v5075, %v5076
    %s5078 = scalar_lea.vmem %s3, 32
    %v5079 = vld [vmem:[%s5078] sm:$0x3]
    %v5080 = vmul.f32 %v5079, 0.16167895
    %v5081 = vadd.f32 %v5077, %v5080
    %s5082 = scalar_lea.vmem [#allocation14], 32
    %5083 = vst.msk [vmem:[%s5082] sm:$0x3] %vm842, %v5081
    %v5085 = vsel %vm567, %v5081, 0
    %5087 = vmatprep.subr.mxu0 0.0
    %5088 = vmatpush1.msra.mxu0 %v552
    %5089 = vmatprep.subr.mxu0 0.0
    %5090 = vmatpush1.msra.mxu0 %v553
    %5091 = vmatprep.subr.mxu0 0.0
    %5092 = vmatpush1.msra.mxu0 %v554
    %5093 = vmatprep.subr.mxu0 0.0
    %5094 = vmatpush1.msra.mxu0 %v555
    %5095 = vmatprep.subr.mxu0 0.0
    %5096 = vmatpush1.msra.mxu0 0.0
    %5097 = vmatprep.subr.mxu0 0.0
    %5098 = vmatpush1.msra.mxu0 0.0
    %5099 = vmatprep.subr.mxu0 0.0
    %5100 = vmatpush1.msra.mxu0 0.0
    %5101 = vmatprep.subr.mxu0 0.0
    %5102 = vmatpush1.msra.mxu0 0.0
    %5103 = vmatprep.subr.mxu0 0.0
    %5104 = vmatpush1.msra.mxu0 0.0
    %5105 = vmatprep.subr.mxu0 0.0
    %5106 = vmatpush1.msra.mxu0 0.0
    %5107 = vmatprep.subr.mxu0 0.0
    %5108 = vmatpush1.msra.mxu0 0.0
    %5109 = vmatprep.subr.mxu0 0.0
    %5110 = vmatpush1.msra.mxu0 0.0
    %5111 = vmatprep.subr.mxu0 0.0
    %5112 = vmatpush1.msra.mxu0 0.0
    %5113 = vmatprep.subr.mxu0 0.0
    %5114 = vmatpush1.msra.mxu0 0.0
    %5115 = vmatprep.subr.mxu0 0.0
    %5116 = vmatpush1.msra.mxu0 0.0
    %5117 = vmatprep.subr.mxu0 0.0
    %5118 = vmatpush1.msra.mxu0 0.0
    %5119 = vmatprep.subr.mxu0 0.0
    %5120 = vmatpush1.msra.mxu0 0.0
    %5121 = vmatprep.subr.mxu0 0.0
    %5122 = vmatpush1.msra.mxu0 0.0
    %5123 = vmatprep.subr.mxu0 0.0
    %5124 = vmatpush1.msra.mxu0 0.0
    %5125 = vmatprep.subr.mxu0 0.0
    %5126 = vmatpush1.msra.mxu0 0.0
    %5127 = vmatprep.subr.mxu0 0.0
    %5128 = vmatpush1.msra.mxu0 0.0
    %5129 = vmatprep.subr.mxu0 0.0
    %5130 = vmatpush1.msra.mxu0 0.0
    %5131 = vmatprep.subr.mxu0 0.0
    %5132 = vmatpush1.msra.mxu0 0.0
    %5133 = vmatprep.subr.mxu0 0.0
    %5134 = vmatpush1.msra.mxu0 0.0
    %5135 = vmatprep.subr.mxu0 0.0
    %5136 = vmatpush1.msra.mxu0 0.0
    %5137 = vmatprep.subr.mxu0 0.0
    %5138 = vmatpush1.msra.mxu0 0.0
    %5139 = vmatprep.subr.mxu0 0.0
    %5140 = vmatpush1.msra.mxu0 0.0
    %5141 = vmatprep.subr.mxu0 0.0
    %5142 = vmatpush1.msra.mxu0 0.0
    %5143 = vmatprep.subr.mxu0 0.0
    %5144 = vmatpush1.msra.mxu0 0.0
    %5145 = vmatprep.subr.mxu0 0.0
    %5146 = vmatpush1.msra.mxu0 0.0
    %5147 = vmatprep.subr.mxu0 0.0
    %5148 = vmatpush1.msra.mxu0 0.0
    %5149 = vmatprep.subr.mxu0 0.0
    %5150 = vmatpush1.msra.mxu0 0.0
    %5151 = vmatprep.mubr.f32.mxu0 0.0
    %5152 = vmatmul.mubr.f32.gmra.mrb[0].mxu0 %v5085
    %v5153 = vpop.f32.mrb[0].mxu0
    %v5154 = vadd.f32 %v549, %v5153
    %v5155 = vpop.f32.mrb[0].mxu0
    %5156 = vdwg.mxu0
    %vm5157 = vcmp.gt.f32.partialorder %v5154, 20.0
    %v5158 = vmin.f32 %v5154, 20.0
    %v5159 = vmul.f32 %v5158, 1.442695
    %v5160 = vpow.pop %v5159
    %v5161 = vadd.f32 %v5160, 1.0
    %v5162 = vlog2.pop %v5161
    %v5163 = vmul.f32 %v5162, 0.6931472
    %v5164 = vmul.f32 -0.5, %v5160
    %v5165 = vadd.f32 %v5164, 1.0
    %v5166 = vmul.f32 %v5165, %v5160
    %v5167 = vand.u32 2147483647, %v5160
    %vm5168 = vcmp.lt.f32.partialorder %v5167, 0.0004427343
    %v5169 = vsel %vm5168, %v5166, %v5163
    %v5170 = vsel %vm5157, %v5154, %v5169
    %v5171 = vtanh.pop %v5170
    %v5172 = vmul.f32 %v5154, %v5171
    %v5174 = vsel %vm567, %v5172, 0
    %5176 = vmatprep.subr.mxu0 0.0
    %5177 = vmatpush1.msra.mxu0 %v556
    %5178 = vmatprep.subr.mxu0 0.0
    %5179 = vmatpush1.msra.mxu0 %v557
    %5180 = vmatprep.subr.mxu0 0.0
    %5181 = vmatpush1.msra.mxu0 %v558
    %5182 = vmatprep.subr.mxu0 0.0
    %5183 = vmatpush1.msra.mxu0 %v559
    %5184 = vmatprep.subr.mxu0 0.0
    %5185 = vmatpush1.msra.mxu0 0.0
    %5186 = vmatprep.subr.mxu0 0.0
    %5187 = vmatpush1.msra.mxu0 0.0
    %5188 = vmatprep.subr.mxu0 0.0
    %5189 = vmatpush1.msra.mxu0 0.0
    %5190 = vmatprep.subr.mxu0 0.0
    %5191 = vmatpush1.msra.mxu0 0.0
    %5192 = vmatprep.subr.mxu0 0.0
    %5193 = vmatpush1.msra.mxu0 0.0
    %5194 = vmatprep.subr.mxu0 0.0
    %5195 = vmatpush1.msra.mxu0 0.0
    %5196 = vmatprep.subr.mxu0 0.0
    %5197 = vmatpush1.msra.mxu0 0.0
    %5198 = vmatprep.subr.mxu0 0.0
    %5199 = vmatpush1.msra.mxu0 0.0
    %5200 = vmatprep.subr.mxu0 0.0
    %5201 = vmatpush1.msra.mxu0 0.0
    %5202 = vmatprep.subr.mxu0 0.0
    %5203 = vmatpush1.msra.mxu0 0.0
    %5204 = vmatprep.subr.mxu0 0.0
    %5205 = vmatpush1.msra.mxu0 0.0
    %5206 = vmatprep.subr.mxu0 0.0
    %5207 = vmatpush1.msra.mxu0 0.0
    %5208 = vmatprep.subr.mxu0 0.0
    %5209 = vmatpush1.msra.mxu0 0.0
    %5210 = vmatprep.subr.mxu0 0.0
    %5211 = vmatpush1.msra.mxu0 0.0
    %5212 = vmatprep.subr.mxu0 0.0
    %5213 = vmatpush1.msra.mxu0 0.0
    %5214 = vmatprep.subr.mxu0 0.0
    %5215 = vmatpush1.msra.mxu0 0.0
    %5216 = vmatprep.subr.mxu0 0.0
    %5217 = vmatpush1.msra.mxu0 0.0
    %5218 = vmatprep.subr.mxu0 0.0
    %5219 = vmatpush1.msra.mxu0 0.0
    %5220 = vmatprep.subr.mxu0 0.0
    %5221 = vmatpush1.msra.mxu0 0.0
    %5222 = vmatprep.subr.mxu0 0.0
    %5223 = vmatpush1.msra.mxu0 0.0
    %5224 = vmatprep.subr.mxu0 0.0
    %5225 = vmatpush1.msra.mxu0 0.0
    %5226 = vmatprep.subr.mxu0 0.0
    %5227 = vmatpush1.msra.mxu0 0.0
    %5228 = vmatprep.subr.mxu0 0.0
    %5229 = vmatpush1.msra.mxu0 0.0
    %5230 = vmatprep.subr.mxu0 0.0
    %5231 = vmatpush1.msra.mxu0 0.0
    %5232 = vmatprep.subr.mxu0 0.0
    %5233 = vmatpush1.msra.mxu0 0.0
    %5234 = vmatprep.subr.mxu0 0.0
    %5235 = vmatpush1.msra.mxu0 0.0
    %5236 = vmatprep.subr.mxu0 0.0
    %5237 = vmatpush1.msra.mxu0 0.0
    %5238 = vmatprep.subr.mxu0 0.0
    %5239 = vmatpush1.msra.mxu0 0.0
    %5240 = vmatprep.mubr.f32.mxu0 0.0
    %5241 = vmatmul.mubr.f32.gmra.mrb[0].mxu0 %v5174
    %v5242 = vpop.f32.mrb[0].mxu0
    %v5243 = vadd.f32 %v661, %v5242
    %v5244 = vpop.f32.mrb[0].mxu0
    %5245 = vdwg.mxu0
    %vm5246 = vcmp.gt.f32.partialorder %v5243, 20.0
    %v5247 = vmin.f32 %v5243, 20.0
    %v5248 = vmul.f32 %v5247, 1.442695
    %v5249 = vpow.pop %v5248
    %v5250 = vadd.f32 %v5249, 1.0
    %v5251 = vlog2.pop %v5250
    %v5252 = vmul.f32 %v5251, 0.6931472
    %v5253 = vmul.f32 -0.5, %v5249
    %v5254 = vadd.f32 %v5253, 1.0
    %v5255 = vmul.f32 %v5254, %v5249
    %v5256 = vand.u32 2147483647, %v5249
    %vm5257 = vcmp.lt.f32.partialorder %v5256, 0.0004427343
    %v5258 = vsel %vm5257, %v5255, %v5252
    %v5259 = vsel %vm5246, %v5243, %v5258
    %v5260 = vtanh.pop %v5259
    %v5261 = vmul.f32 %v5243, %v5260
    %v5263 = vsel %vm567, %v5261, 0
    %5265 = vmatprep.subr.mxu0 0.0
    %5266 = vmatpush1.msra.mxu0 %v561
    %5267 = vmatprep.subr.mxu0 0.0
    %5268 = vmatpush1.msra.mxu0 %v562
    %5269 = vmatprep.subr.mxu0 0.0
    %5270 = vmatpush1.msra.mxu0 %v563
    %5271 = vmatprep.subr.mxu0 0.0
    %5272 = vmatpush1.msra.mxu0 %v564
    %5273 = vmatprep.subr.mxu0 0.0
    %5274 = vmatpush1.msra.mxu0 0.0
    %5275 = vmatprep.subr.mxu0 0.0
    %5276 = vmatpush1.msra.mxu0 0.0
    %5277 = vmatprep.subr.mxu0 0.0
    %5278 = vmatpush1.msra.mxu0 0.0
    %5279 = vmatprep.subr.mxu0 0.0
    %5280 = vmatpush1.msra.mxu0 0.0
    %5281 = vmatprep.subr.mxu0 0.0
    %5282 = vmatpush1.msra.mxu0 0.0
    %5283 = vmatprep.subr.mxu0 0.0
    %5284 = vmatpush1.msra.mxu0 0.0
    %5285 = vmatprep.subr.mxu0 0.0
    %5286 = vmatpush1.msra.mxu0 0.0
    %5287 = vmatprep.subr.mxu0 0.0
    %5288 = vmatpush1.msra.mxu0 0.0
    %5289 = vmatprep.subr.mxu0 0.0
    %5290 = vmatpush1.msra.mxu0 0.0
    %5291 = vmatprep.subr.mxu0 0.0
    %5292 = vmatpush1.msra.mxu0 0.0
    %5293 = vmatprep.subr.mxu0 0.0
    %5294 = vmatpush1.msra.mxu0 0.0
    %5295 = vmatprep.subr.mxu0 0.0
    %5296 = vmatpush1.msra.mxu0 0.0
    %5297 = vmatprep.subr.mxu0 0.0
    %5298 = vmatpush1.msra.mxu0 0.0
    %5299 = vmatprep.subr.mxu0 0.0
    %5300 = vmatpush1.msra.mxu0 0.0
    %5301 = vmatprep.subr.mxu0 0.0
    %5302 = vmatpush1.msra.mxu0 0.0
    %5303 = vmatprep.subr.mxu0 0.0
    %5304 = vmatpush1.msra.mxu0 0.0
    %5305 = vmatprep.subr.mxu0 0.0
    %5306 = vmatpush1.msra.mxu0 0.0
    %5307 = vmatprep.subr.mxu0 0.0
    %5308 = vmatpush1.msra.mxu0 0.0
    %5309 = vmatprep.subr.mxu0 0.0
    %5310 = vmatpush1.msra.mxu0 0.0
    %5311 = vmatprep.subr.mxu0 0.0
    %5312 = vmatpush1.msra.mxu0 0.0
    %5313 = vmatprep.subr.mxu0 0.0
    %5314 = vmatpush1.msra.mxu0 0.0
    %5315 = vmatprep.subr.mxu0 0.0
    %5316 = vmatpush1.msra.mxu0 0.0
    %5317 = vmatprep.subr.mxu0 0.0
    %5318 = vmatpush1.msra.mxu0 0.0
    %5319 = vmatprep.subr.mxu0 0.0
    %5320 = vmatpush1.msra.mxu0 0.0
    %5321 = vmatprep.subr.mxu0 0.0
    %5322 = vmatpush1.msra.mxu0 0.0
    %5323 = vmatprep.subr.mxu0 0.0
    %5324 = vmatpush1.msra.mxu0 0.0
    %5325 = vmatprep.subr.mxu0 0.0
    %5326 = vmatpush1.msra.mxu0 0.0
    %5327 = vmatprep.subr.mxu0 0.0
    %5328 = vmatpush1.msra.mxu0 0.0
    %5329 = vmatprep.mubr.f32.mxu0 0.0
    %5330 = vmatmul.mubr.f32.gmra.mrb[0].mxu0 %v5263
    %v5331 = vpop.f32.mrb[0].mxu0
    %v5332 = vadd.f32 %v756, %v5331
    %v5333 = vpop.f32.mrb[0].mxu0
    %5334 = vdwg.mxu0
    %v5335 = vmul.f32 %v5081, 1.031016
    %v5336 = vmul.f32 %v5332, 0.25098625
    %v5337 = vsub.f32 %v5335, %v5336
    %v5338 = vmax.f32 %v5337, -1.0
    %v5339 = vmin.f32 %v5338, 1.0
    %v5340 = vmul.f32 %v5339, 0.53661954
    %v5341 = vmul.f32 %v5081, 0.46326447
    %v5342 = vadd.f32 %v5340, %v5341
    %s5343 = scalar_lea.vmem %s3, 34
    %v5344 = vld [vmem:[%s5343] sm:$0x3]
    %v5345 = vmul.f32 %v5344, 0.12324376
    %v5346 = vadd.f32 %v5342, %v5345
    %s5347 = scalar_lea.vmem [#allocation14], 34
    %5348 = vst.msk [vmem:[%s5347] sm:$0x3] %vm842, %v5346
    %v5350 = vsel %vm567, %v5346, 0
    %5352 = vmatprep.subr.mxu0 0.0
    %5353 = vmatpush1.msra.mxu0 %v552
    %5354 = vmatprep.subr.mxu0 0.0
    %5355 = vmatpush1.msra.mxu0 %v553
    %5356 = vmatprep.subr.mxu0 0.0
    %5357 = vmatpush1.msra.mxu0 %v554
    %5358 = vmatprep.subr.mxu0 0.0
    %5359 = vmatpush1.msra.mxu0 %v555
    %5360 = vmatprep.subr.mxu0 0.0
    %5361 = vmatpush1.msra.mxu0 0.0
    %5362 = vmatprep.subr.mxu0 0.0
    %5363 = vmatpush1.msra.mxu0 0.0
    %5364 = vmatprep.subr.mxu0 0.0
    %5365 = vmatpush1.msra.mxu0 0.0
    %5366 = vmatprep.subr.mxu0 0.0
    %5367 = vmatpush1.msra.mxu0 0.0
    %5368 = vmatprep.subr.mxu0 0.0
    %5369 = vmatpush1.msra.mxu0 0.0
    %5370 = vmatprep.subr.mxu0 0.0
    %5371 = vmatpush1.msra.mxu0 0.0
    %5372 = vmatprep.subr.mxu0 0.0
    %5373 = vmatpush1.msra.mxu0 0.0
    %5374 = vmatprep.subr.mxu0 0.0
    %5375 = vmatpush1.msra.mxu0 0.0
    %5376 = vmatprep.subr.mxu0 0.0
    %5377 = vmatpush1.msra.mxu0 0.0
    %5378 = vmatprep.subr.mxu0 0.0
    %5379 = vmatpush1.msra.mxu0 0.0
    %5380 = vmatprep.subr.mxu0 0.0
    %5381 = vmatpush1.msra.mxu0 0.0
    %5382 = vmatprep.subr.mxu0 0.0
    %5383 = vmatpush1.msra.mxu0 0.0
    %5384 = vmatprep.subr.mxu0 0.0
    %5385 = vmatpush1.msra.mxu0 0.0
    %5386 = vmatprep.subr.mxu0 0.0
    %5387 = vmatpush1.msra.mxu0 0.0
    %5388 = vmatprep.subr.mxu0 0.0
    %5389 = vmatpush1.msra.mxu0 0.0
    %5390 = vmatprep.subr.mxu0 0.0
    %5391 = vmatpush1.msra.mxu0 0.0
    %5392 = vmatprep.subr.mxu0 0.0
    %5393 = vmatpush1.msra.mxu0 0.0
    %5394 = vmatprep.subr.mxu0 0.0
    %5395 = vmatpush1.msra.mxu0 0.0
    %5396 = vmatprep.subr.mxu0 0.0
    %5397 = vmatpush1.msra.mxu0 0.0
    %5398 = vmatprep.subr.mxu0 0.0
    %5399 = vmatpush1.msra.mxu0 0.0
    %5400 = vmatprep.subr.mxu0 0.0
    %5401 = vmatpush1.msra.mxu0 0.0
    %5402 = vmatprep.subr.mxu0 0.0
    %5403 = vmatpush1.msra.mxu0 0.0
    %5404 = vmatprep.subr.mxu0 0.0
    %5405 = vmatpush1.msra.mxu0 0.0
    %5406 = vmatprep.subr.mxu0 0.0
    %5407 = vmatpush1.msra.mxu0 0.0
    %5408 = vmatprep.subr.mxu0 0.0
    %5409 = vmatpush1.msra.mxu0 0.0
    %5410 = vmatprep.subr.mxu0 0.0
    %5411 = vmatpush1.msra.mxu0 0.0
    %5412 = vmatprep.subr.mxu0 0.0
    %5413 = vmatpush1.msra.mxu0 0.0
    %5414 = vmatprep.subr.mxu0 0.0
    %5415 = vmatpush1.msra.mxu0 0.0
    %5416 = vmatprep.mubr.f32.mxu0 0.0
    %5417 = vmatmul.mubr.f32.gmra.mrb[0].mxu0 %v5350
    %v5418 = vpop.f32.mrb[0].mxu0
    %v5419 = vadd.f32 %v550, %v5418
    %v5420 = vpop.f32.mrb[0].mxu0
    %5421 = vdwg.mxu0
    %vm5422 = vcmp.gt.f32.partialorder %v5419, 20.0
    %v5423 = vmin.f32 %v5419, 20.0
    %v5424 = vmul.f32 %v5423, 1.442695
    %v5425 = vpow.pop %v5424
    %v5426 = vadd.f32 %v5425, 1.0
    %v5427 = vlog2.pop %v5426
    %v5428 = vmul.f32 %v5427, 0.6931472
    %v5429 = vmul.f32 -0.5, %v5425
    %v5430 = vadd.f32 %v5429, 1.0
    %v5431 = vmul.f32 %v5430, %v5425
    %v5432 = vand.u32 2147483647, %v5425
    %vm5433 = vcmp.lt.f32.partialorder %v5432, 0.0004427343
    %v5434 = vsel %vm5433, %v5431, %v5428
    %v5435 = vsel %vm5422, %v5419, %v5434
    %v5436 = vtanh.pop %v5435
    %v5437 = vmul.f32 %v5419, %v5436
    %v5439 = vsel %vm567, %v5437, 0
    %5441 = vmatprep.subr.mxu0 0.0
    %5442 = vmatpush1.msra.mxu0 %v556
    %5443 = vmatprep.subr.mxu0 0.0
    %5444 = vmatpush1.msra.mxu0 %v557
    %5445 = vmatprep.subr.mxu0 0.0
    %5446 = vmatpush1.msra.mxu0 %v558
    %5447 = vmatprep.subr.mxu0 0.0
    %5448 = vmatpush1.msra.mxu0 %v559
    %5449 = vmatprep.subr.mxu0 0.0
    %5450 = vmatpush1.msra.mxu0 0.0
    %5451 = vmatprep.subr.mxu0 0.0
    %5452 = vmatpush1.msra.mxu0 0.0
    %5453 = vmatprep.subr.mxu0 0.0
    %5454 = vmatpush1.msra.mxu0 0.0
    %5455 = vmatprep.subr.mxu0 0.0
    %5456 = vmatpush1.msra.mxu0 0.0
    %5457 = vmatprep.subr.mxu0 0.0
    %5458 = vmatpush1.msra.mxu0 0.0
    %5459 = vmatprep.subr.mxu0 0.0
    %5460 = vmatpush1.msra.mxu0 0.0
    %5461 = vmatprep.subr.mxu0 0.0
    %5462 = vmatpush1.msra.mxu0 0.0
    %5463 = vmatprep.subr.mxu0 0.0
    %5464 = vmatpush1.msra.mxu0 0.0
    %5465 = vmatprep.subr.mxu0 0.0
    %5466 = vmatpush1.msra.mxu0 0.0
    %5467 = vmatprep.subr.mxu0 0.0
    %5468 = vmatpush1.msra.mxu0 0.0
    %5469 = vmatprep.subr.mxu0 0.0
    %5470 = vmatpush1.msra.mxu0 0.0
    %5471 = vmatprep.subr.mxu0 0.0
    %5472 = vmatpush1.msra.mxu0 0.0
    %5473 = vmatprep.subr.mxu0 0.0
    %5474 = vmatpush1.msra.mxu0 0.0
    %5475 = vmatprep.subr.mxu0 0.0
    %5476 = vmatpush1.msra.mxu0 0.0
    %5477 = vmatprep.subr.mxu0 0.0
    %5478 = vmatpush1.msra.mxu0 0.0
    %5479 = vmatprep.subr.mxu0 0.0
    %5480 = vmatpush1.msra.mxu0 0.0
    %5481 = vmatprep.subr.mxu0 0.0
    %5482 = vmatpush1.msra.mxu0 0.0
    %5483 = vmatprep.subr.mxu0 0.0
    %5484 = vmatpush1.msra.mxu0 0.0
    %5485 = vmatprep.subr.mxu0 0.0
    %5486 = vmatpush1.msra.mxu0 0.0
    %5487 = vmatprep.subr.mxu0 0.0
    %5488 = vmatpush1.msra.mxu0 0.0
    %5489 = vmatprep.subr.mxu0 0.0
    %5490 = vmatpush1.msra.mxu0 0.0
    %5491 = vmatprep.subr.mxu0 0.0
    %5492 = vmatpush1.msra.mxu0 0.0
    %5493 = vmatprep.subr.mxu0 0.0
    %5494 = vmatpush1.msra.mxu0 0.0
    %5495 = vmatprep.subr.mxu0 0.0
    %5496 = vmatpush1.msra.mxu0 0.0
    %5497 = vmatprep.subr.mxu0 0.0
    %5498 = vmatpush1.msra.mxu0 0.0
    %5499 = vmatprep.subr.mxu0 0.0
    %5500 = vmatpush1.msra.mxu0 0.0
    %5501 = vmatprep.subr.mxu0 0.0
    %5502 = vmatpush1.msra.mxu0 0.0
    %5503 = vmatprep.subr.mxu0 0.0
    %5504 = vmatpush1.msra.mxu0 0.0
    %5505 = vmatprep.mubr.f32.mxu0 0.0
    %5506 = vmatmul.mubr.f32.gmra.mrb[0].mxu0 %v5439
    %v5507 = vpop.f32.mrb[0].mxu0
    %v5508 = vadd.f32 %v661, %v5507
    %v5509 = vpop.f32.mrb[0].mxu0
    %5510 = vdwg.mxu0
    %vm5511 = vcmp.gt.f32.partialorder %v5508, 20.0
    %v5512 = vmin.f32 %v5508, 20.0
    %v5513 = vmul.f32 %v5512, 1.442695
    %v5514 = vpow.pop %v5513
    %v5515 = vadd.f32 %v5514, 1.0
    %v5516 = vlog2.pop %v5515
    %v5517 = vmul.f32 %v5516, 0.6931472
    %v5518 = vmul.f32 -0.5, %v5514
    %v5519 = vadd.f32 %v5518, 1.0
    %v5520 = vmul.f32 %v5519, %v5514
    %v5521 = vand.u32 2147483647, %v5514
    %vm5522 = vcmp.lt.f32.partialorder %v5521, 0.0004427343
    %v5523 = vsel %vm5522, %v5520, %v5517
    %v5524 = vsel %vm5511, %v5508, %v5523
    %v5525 = vtanh.pop %v5524
    %v5526 = vmul.f32 %v5508, %v5525
    %v5528 = vsel %vm567, %v5526, 0
    %5530 = vmatprep.subr.mxu0 0.0
    %5531 = vmatpush1.msra.mxu0 %v561
    %5532 = vmatprep.subr.mxu0 0.0
    %5533 = vmatpush1.msra.mxu0 %v562
    %5534 = vmatprep.subr.mxu0 0.0
    %5535 = vmatpush1.msra.mxu0 %v563
    %5536 = vmatprep.subr.mxu0 0.0
    %5537 = vmatpush1.msra.mxu0 %v564
    %5538 = vmatprep.subr.mxu0 0.0
    %5539 = vmatpush1.msra.mxu0 0.0
    %5540 = vmatprep.subr.mxu0 0.0
    %5541 = vmatpush1.msra.mxu0 0.0
    %5542 = vmatprep.subr.mxu0 0.0
    %5543 = vmatpush1.msra.mxu0 0.0
    %5544 = vmatprep.subr.mxu0 0.0
    %5545 = vmatpush1.msra.mxu0 0.0
    %5546 = vmatprep.subr.mxu0 0.0
    %5547 = vmatpush1.msra.mxu0 0.0
    %5548 = vmatprep.subr.mxu0 0.0
    %5549 = vmatpush1.msra.mxu0 0.0
    %5550 = vmatprep.subr.mxu0 0.0
    %5551 = vmatpush1.msra.mxu0 0.0
    %5552 = vmatprep.subr.mxu0 0.0
    %5553 = vmatpush1.msra.mxu0 0.0
    %5554 = vmatprep.subr.mxu0 0.0
    %5555 = vmatpush1.msra.mxu0 0.0
    %5556 = vmatprep.subr.mxu0 0.0
    %5557 = vmatpush1.msra.mxu0 0.0
    %5558 = vmatprep.subr.mxu0 0.0
    %5559 = vmatpush1.msra.mxu0 0.0
    %5560 = vmatprep.subr.mxu0 0.0
    %5561 = vmatpush1.msra.mxu0 0.0
    %5562 = vmatprep.subr.mxu0 0.0
    %5563 = vmatpush1.msra.mxu0 0.0
    %5564 = vmatprep.subr.mxu0 0.0
    %5565 = vmatpush1.msra.mxu0 0.0
    %5566 = vmatprep.subr.mxu0 0.0
    %5567 = vmatpush1.msra.mxu0 0.0
    %5568 = vmatprep.subr.mxu0 0.0
    %5569 = vmatpush1.msra.mxu0 0.0
    %5570 = vmatprep.subr.mxu0 0.0
    %5571 = vmatpush1.msra.mxu0 0.0
    %5572 = vmatprep.subr.mxu0 0.0
    %5573 = vmatpush1.msra.mxu0 0.0
    %5574 = vmatprep.subr.mxu0 0.0
    %5575 = vmatpush1.msra.mxu0 0.0
    %5576 = vmatprep.subr.mxu0 0.0
    %5577 = vmatpush1.msra.mxu0 0.0
    %5578 = vmatprep.subr.mxu0 0.0
    %5579 = vmatpush1.msra.mxu0 0.0
    %5580 = vmatprep.subr.mxu0 0.0
    %5581 = vmatpush1.msra.mxu0 0.0
    %5582 = vmatprep.subr.mxu0 0.0
    %5583 = vmatpush1.msra.mxu0 0.0
    %5584 = vmatprep.subr.mxu0 0.0
    %5585 = vmatpush1.msra.mxu0 0.0
    %5586 = vmatprep.subr.mxu0 0.0
    %5587 = vmatpush1.msra.mxu0 0.0
    %5588 = vmatprep.subr.mxu0 0.0
    %5589 = vmatpush1.msra.mxu0 0.0
    %5590 = vmatprep.subr.mxu0 0.0
    %5591 = vmatpush1.msra.mxu0 0.0
    %5592 = vmatprep.subr.mxu0 0.0
    %5593 = vmatpush1.msra.mxu0 0.0
    %5594 = vmatprep.mubr.f32.mxu0 0.0
    %5595 = vmatmul.mubr.f32.gmra.mrb[0].mxu0 %v5528
    %v5596 = vpop.f32.mrb[0].mxu0
    %v5597 = vadd.f32 %v756, %v5596
    %v5598 = vpop.f32.mrb[0].mxu0
    %5599 = vdwg.mxu0
    %v5600 = vmul.f32 %v5346, 1.0142527
    %v5601 = vmul.f32 %v5597, 0.16943564
    %v5602 = vsub.f32 %v5600, %v5601
    %v5603 = vmax.f32 %v5602, -1.0
    %v5604 = vmin.f32 %v5603, 1.0
    %v5605 = vmul.f32 %v5604, 0.71646607
    %v5606 = vmul.f32 %v5346, 0.28351358
    %v5607 = vadd.f32 %v5605, %v5606
    %s5608 = scalar_lea.vmem %s3, 36
    %v5609 = vld [vmem:[%s5608] sm:$0x3]
    %v5610 = vmul.f32 %v5609, 0.0758257
    %v5611 = vadd.f32 %v5607, %v5610
    %s5612 = scalar_lea.vmem [#allocation14], 36
    %5613 = vst.msk [vmem:[%s5612] sm:$0x3] %vm842, %v5611
    %v5615 = vsel %vm567, %v5611, 0
    %5617 = vmatprep.subr.mxu0 0.0
    %5618 = vmatpush1.msra.mxu0 %v552
    %5619 = vmatprep.subr.mxu0 0.0
    %5620 = vmatpush1.msra.mxu0 %v553
    %5621 = vmatprep.subr.mxu0 0.0
    %5622 = vmatpush1.msra.mxu0 %v554
    %5623 = vmatprep.subr.mxu0 0.0
    %5624 = vmatpush1.msra.mxu0 %v555
    %5625 = vmatprep.subr.mxu0 0.0
    %5626 = vmatpush1.msra.mxu0 0.0
    %5627 = vmatprep.subr.mxu0 0.0
    %5628 = vmatpush1.msra.mxu0 0.0
    %5629 = vmatprep.subr.mxu0 0.0
    %5630 = vmatpush1.msra.mxu0 0.0
    %5631 = vmatprep.subr.mxu0 0.0
    %5632 = vmatpush1.msra.mxu0 0.0
    %5633 = vmatprep.subr.mxu0 0.0
    %5634 = vmatpush1.msra.mxu0 0.0
    %5635 = vmatprep.subr.mxu0 0.0
    %5636 = vmatpush1.msra.mxu0 0.0
    %5637 = vmatprep.subr.mxu0 0.0
    %5638 = vmatpush1.msra.mxu0 0.0
    %5639 = vmatprep.subr.mxu0 0.0
    %5640 = vmatpush1.msra.mxu0 0.0
    %5641 = vmatprep.subr.mxu0 0.0
    %5642 = vmatpush1.msra.mxu0 0.0
    %5643 = vmatprep.subr.mxu0 0.0
    %5644 = vmatpush1.msra.mxu0 0.0
    %5645 = vmatprep.subr.mxu0 0.0
    %5646 = vmatpush1.msra.mxu0 0.0
    %5647 = vmatprep.subr.mxu0 0.0
    %5648 = vmatpush1.msra.mxu0 0.0
    %5649 = vmatprep.subr.mxu0 0.0
    %5650 = vmatpush1.msra.mxu0 0.0
    %5651 = vmatprep.subr.mxu0 0.0
    %5652 = vmatpush1.msra.mxu0 0.0
    %5653 = vmatprep.subr.mxu0 0.0
    %5654 = vmatpush1.msra.mxu0 0.0
    %5655 = vmatprep.subr.mxu0 0.0
    %5656 = vmatpush1.msra.mxu0 0.0
    %5657 = vmatprep.subr.mxu0 0.0
    %5658 = vmatpush1.msra.mxu0 0.0
    %5659 = vmatprep.subr.mxu0 0.0
    %5660 = vmatpush1.msra.mxu0 0.0
    %5661 = vmatprep.subr.mxu0 0.0
    %5662 = vmatpush1.msra.mxu0 0.0
    %5663 = vmatprep.subr.mxu0 0.0
    %5664 = vmatpush1.msra.mxu0 0.0
    %5665 = vmatprep.subr.mxu0 0.0
    %5666 = vmatpush1.msra.mxu0 0.0
    %5667 = vmatprep.subr.mxu0 0.0
    %5668 = vmatpush1.msra.mxu0 0.0
    %5669 = vmatprep.subr.mxu0 0.0
    %5670 = vmatpush1.msra.mxu0 0.0
    %5671 = vmatprep.subr.mxu0 0.0
    %5672 = vmatpush1.msra.mxu0 0.0
    %5673 = vmatprep.subr.mxu0 0.0
    %5674 = vmatpush1.msra.mxu0 0.0
    %5675 = vmatprep.subr.mxu0 0.0
    %5676 = vmatpush1.msra.mxu0 0.0
    %5677 = vmatprep.subr.mxu0 0.0
    %5678 = vmatpush1.msra.mxu0 0.0
    %5679 = vmatprep.subr.mxu0 0.0
    %5680 = vmatpush1.msra.mxu0 0.0
    %5681 = vmatprep.mubr.f32.mxu0 0.0
    %5682 = vmatmul.mubr.f32.gmra.mrb[0].mxu0 %v5615
    %v5683 = vpop.f32.mrb[0].mxu0
    %v5684 = vadd.f32 %v551, %v5683
    %v5685 = vpop.f32.mrb[0].mxu0
    %5686 = vdwg.mxu0
    %vm5687 = vcmp.gt.f32.partialorder %v5684, 20.0
    %v5688 = vmin.f32 %v5684, 20.0
    %v5689 = vmul.f32 %v5688, 1.442695
    %v5690 = vpow.pop %v5689
    %v5691 = vadd.f32 %v5690, 1.0
    %v5692 = vlog2.pop %v5691
    %v5693 = vmul.f32 %v5692, 0.6931472
    %v5694 = vmul.f32 -0.5, %v5690
    %v5695 = vadd.f32 %v5694, 1.0
    %v5696 = vmul.f32 %v5695, %v5690
    %v5697 = vand.u32 2147483647, %v5690
    %vm5698 = vcmp.lt.f32.partialorder %v5697, 0.0004427343
    %v5699 = vsel %vm5698, %v5696, %v5693
    %v5700 = vsel %vm5687, %v5684, %v5699
    %v5701 = vtanh.pop %v5700
    %v5702 = vmul.f32 %v5684, %v5701
    %v5704 = vsel %vm567, %v5702, 0
    %5706 = vmatprep.subr.mxu0 0.0
    %5707 = vmatpush1.msra.mxu0 %v556
    %5708 = vmatprep.subr.mxu0 0.0
    %5709 = vmatpush1.msra.mxu0 %v557
    %5710 = vmatprep.subr.mxu0 0.0
    %5711 = vmatpush1.msra.mxu0 %v558
    %5712 = vmatprep.subr.mxu0 0.0
    %5713 = vmatpush1.msra.mxu0 %v559
    %5714 = vmatprep.subr.mxu0 0.0
    %5715 = vmatpush1.msra.mxu0 0.0
    %5716 = vmatprep.subr.mxu0 0.0
    %5717 = vmatpush1.msra.mxu0 0.0
    %5718 = vmatprep.subr.mxu0 0.0
    %5719 = vmatpush1.msra.mxu0 0.0
    %5720 = vmatprep.subr.mxu0 0.0
    %5721 = vmatpush1.msra.mxu0 0.0
    %5722 = vmatprep.subr.mxu0 0.0
    %5723 = vmatpush1.msra.mxu0 0.0
    %5724 = vmatprep.subr.mxu0 0.0
    %5725 = vmatpush1.msra.mxu0 0.0
    %5726 = vmatprep.subr.mxu0 0.0
    %5727 = vmatpush1.msra.mxu0 0.0
    %5728 = vmatprep.subr.mxu0 0.0
    %5729 = vmatpush1.msra.mxu0 0.0
    %5730 = vmatprep.subr.mxu0 0.0
    %5731 = vmatpush1.msra.mxu0 0.0
    %5732 = vmatprep.subr.mxu0 0.0
    %5733 = vmatpush1.msra.mxu0 0.0
    %5734 = vmatprep.subr.mxu0 0.0
    %5735 = vmatpush1.msra.mxu0 0.0
    %5736 = vmatprep.subr.mxu0 0.0
    %5737 = vmatpush1.msra.mxu0 0.0
    %5738 = vmatprep.subr.mxu0 0.0
    %5739 = vmatpush1.msra.mxu0 0.0
    %5740 = vmatprep.subr.mxu0 0.0
    %5741 = vmatpush1.msra.mxu0 0.0
    %5742 = vmatprep.subr.mxu0 0.0
    %5743 = vmatpush1.msra.mxu0 0.0
    %5744 = vmatprep.subr.mxu0 0.0
    %5745 = vmatpush1.msra.mxu0 0.0
    %5746 = vmatprep.subr.mxu0 0.0
    %5747 = vmatpush1.msra.mxu0 0.0
    %5748 = vmatprep.subr.mxu0 0.0
    %5749 = vmatpush1.msra.mxu0 0.0
    %5750 = vmatprep.subr.mxu0 0.0
    %5751 = vmatpush1.msra.mxu0 0.0
    %5752 = vmatprep.subr.mxu0 0.0
    %5753 = vmatpush1.msra.mxu0 0.0
    %5754 = vmatprep.subr.mxu0 0.0
    %5755 = vmatpush1.msra.mxu0 0.0
    %5756 = vmatprep.subr.mxu0 0.0
    %5757 = vmatpush1.msra.mxu0 0.0
    %5758 = vmatprep.subr.mxu0 0.0
    %5759 = vmatpush1.msra.mxu0 0.0
    %5760 = vmatprep.subr.mxu0 0.0
    %5761 = vmatpush1.msra.mxu0 0.0
    %5762 = vmatprep.subr.mxu0 0.0
    %5763 = vmatpush1.msra.mxu0 0.0
    %5764 = vmatprep.subr.mxu0 0.0
    %5765 = vmatpush1.msra.mxu0 0.0
    %5766 = vmatprep.subr.mxu0 0.0
    %5767 = vmatpush1.msra.mxu0 0.0
    %5768 = vmatprep.subr.mxu0 0.0
    %5769 = vmatpush1.msra.mxu0 0.0
    %5770 = vmatprep.mubr.f32.mxu0 0.0
    %5771 = vmatmul.mubr.f32.gmra.mrb[0].mxu0 %v5704
    %v5772 = vpop.f32.mrb[0].mxu0
    %v5773 = vadd.f32 %v661, %v5772
    %v5774 = vpop.f32.mrb[0].mxu0
    %5775 = vdwg.mxu0
    %vm5776 = vcmp.gt.f32.partialorder %v5773, 20.0
    %v5777 = vmin.f32 %v5773, 20.0
    %v5778 = vmul.f32 %v5777, 1.442695
    %v5779 = vpow.pop %v5778
    %v5780 = vadd.f32 %v5779, 1.0
    %v5781 = vlog2.pop %v5780
    %v5782 = vmul.f32 %v5781, 0.6931472
    %v5783 = vmul.f32 -0.5, %v5779
    %v5784 = vadd.f32 %v5783, 1.0
    %v5785 = vmul.f32 %v5784, %v5779
    %v5786 = vand.u32 2147483647, %v5779
    %vm5787 = vcmp.lt.f32.partialorder %v5786, 0.0004427343
    %v5788 = vsel %vm5787, %v5785, %v5782
    %v5789 = vsel %vm5776, %v5773, %v5788
    %v5790 = vtanh.pop %v5789
    %v5791 = vmul.f32 %v5773, %v5790
    %v5793 = vsel %vm567, %v5791, 0
    %5795 = vmatprep.subr.mxu0 0.0
    %5796 = vmatpush1.msra.mxu0 %v561
    %5797 = vmatprep.subr.mxu0 0.0
    %5798 = vmatpush1.msra.mxu0 %v562
    %5799 = vmatprep.subr.mxu0 0.0
    %5800 = vmatpush1.msra.mxu0 %v563
    %5801 = vmatprep.subr.mxu0 0.0
    %5802 = vmatpush1.msra.mxu0 %v564
    %5803 = vmatprep.subr.mxu0 0.0
    %5804 = vmatpush1.msra.mxu0 0.0
    %5805 = vmatprep.subr.mxu0 0.0
    %5806 = vmatpush1.msra.mxu0 0.0
    %5807 = vmatprep.subr.mxu0 0.0
    %5808 = vmatpush1.msra.mxu0 0.0
    %5809 = vmatprep.subr.mxu0 0.0
    %5810 = vmatpush1.msra.mxu0 0.0
    %5811 = vmatprep.subr.mxu0 0.0
    %5812 = vmatpush1.msra.mxu0 0.0
    %5813 = vmatprep.subr.mxu0 0.0
    %5814 = vmatpush1.msra.mxu0 0.0
    %5815 = vmatprep.subr.mxu0 0.0
    %5816 = vmatpush1.msra.mxu0 0.0
    %5817 = vmatprep.subr.mxu0 0.0
    %5818 = vmatpush1.msra.mxu0 0.0
    %5819 = vmatprep.subr.mxu0 0.0
    %5820 = vmatpush1.msra.mxu0 0.0
    %5821 = vmatprep.subr.mxu0 0.0
    %5822 = vmatpush1.msra.mxu0 0.0
    %5823 = vmatprep.subr.mxu0 0.0
    %5824 = vmatpush1.msra.mxu0 0.0
    %5825 = vmatprep.subr.mxu0 0.0
    %5826 = vmatpush1.msra.mxu0 0.0
    %5827 = vmatprep.subr.mxu0 0.0
    %5828 = vmatpush1.msra.mxu0 0.0
    %5829 = vmatprep.subr.mxu0 0.0
    %5830 = vmatpush1.msra.mxu0 0.0
    %5831 = vmatprep.subr.mxu0 0.0
    %5832 = vmatpush1.msra.mxu0 0.0
    %5833 = vmatprep.subr.mxu0 0.0
    %5834 = vmatpush1.msra.mxu0 0.0
    %5835 = vmatprep.subr.mxu0 0.0
    %5836 = vmatpush1.msra.mxu0 0.0
    %5837 = vmatprep.subr.mxu0 0.0
    %5838 = vmatpush1.msra.mxu0 0.0
    %5839 = vmatprep.subr.mxu0 0.0
    %5840 = vmatpush1.msra.mxu0 0.0
    %5841 = vmatprep.subr.mxu0 0.0
    %5842 = vmatpush1.msra.mxu0 0.0
    %5843 = vmatprep.subr.mxu0 0.0
    %5844 = vmatpush1.msra.mxu0 0.0
    %5845 = vmatprep.subr.mxu0 0.0
    %5846 = vmatpush1.msra.mxu0 0.0
    %5847 = vmatprep.subr.mxu0 0.0
    %5848 = vmatpush1.msra.mxu0 0.0
    %5849 = vmatprep.subr.mxu0 0.0
    %5850 = vmatpush1.msra.mxu0 0.0
    %5851 = vmatprep.subr.mxu0 0.0
    %5852 = vmatpush1.msra.mxu0 0.0
    %5853 = vmatprep.subr.mxu0 0.0
    %5854 = vmatpush1.msra.mxu0 0.0
    %5855 = vmatprep.subr.mxu0 0.0
    %5856 = vmatpush1.msra.mxu0 0.0
    %5857 = vmatprep.subr.mxu0 0.0
    %5858 = vmatpush1.msra.mxu0 0.0
    %5859 = vmatprep.mubr.f32.mxu0 0.0
    %5860 = vmatmul.mubr.f32.gmra.mrb[0].mxu0 %v5793
    %v5861 = vpop.f32.mrb[0].mxu0
    %v5862 = vadd.f32 %v756, %v5861
    %v5863 = vpop.f32.mrb[0].mxu0
    %5864 = vdwg.mxu0
    %v5865 = vmul.f32 %v5611, 1.0040205
    %v5866 = vmul.f32 %v5862, 0.08976146
    %v5867 = vsub.f32 %v5865, %v5866
    %v5868 = vmax.f32 %v5867, -1.0
    %v5869 = vmin.f32 %v5868, 1.0
    %v5870 = vmul.f32 %v5611, 0.0
    %v5871 = vadd.f32 %v5869, %v5870
    %s5872 = scalar_lea.vmem [#allocation14], 38
    %5873 = vst.msk [vmem:[%s5872] sm:$0x3] %vm842, %v5871
    // Predicated region
    $region78: #{tpu_custom_call.1} parent=1 // pred_check
      _
    $region79: #{tpu_custom_call.1} parent=1 // pred_check_branch
      %5875 = sbr.rel (0) target = $region81
    $region80: #{tpu_custom_call.1} parent=1 // pred_region
      %s5877 = ssub.s32 640, 640
      %5878 = vsyncadd [#allocation4], %s5877
      %s5879 = sshll.u32 [#allocation14], 4
      %s5880 = int_to_ptr.vmem [resolvable:$true] %s5879
      %5885 = dma.vmem_to_hbm [thread:$0]  %s5880, 640, %s12, [#allocation4], 32, 32, 2
    $region81: #{tpu_custom_call.1} parent=1 // pred_fallthru
      _
    // Predicated region
    $region82: #{tpu_custom_call.1} parent=1 // pred_check
      _
    $region83: #{tpu_custom_call.1} parent=1 // pred_check_branch
      %5887 = sbr.rel (0) target = $region85
    $region84: #{tpu_custom_call.1} parent=1 // pred_region
      %5888 = dma.done [#allocation4], 640
    $region85: #{tpu_custom_call.1} parent=1 // pred_fallthru
      _
    %5889 = vsyncpa [#allocation3], 1
    %5890 = vsyncpa [#allocation6], 1
    %5891 = vsyncpa [#allocation9], 1
    %5892 = vsyncpa [#allocation12], 1
    %5893 = vsyncpa [#allocation4], 1

</llo_original>
